<compile_context>
chip_gen: v7x
topology: tpu7x:2x2x1
jax: 0.10.0
libtpu: 0.0.40
codegen_flags: <defaults>
</compile_context>

<pallas_src>
import jax
import jax.numpy as jnp
from jax.experimental import pallas as pl
from jax.experimental.pallas import tpu as pltpu


# ---------------------------------------------------------------------------
# Architecture config (representative SVHN stack; (Cin, Cout, pad, Hin) per block)
# ---------------------------------------------------------------------------
_LAYER_CFG = (
    (3, 8, 1, 16),
    (8, 16, 1, 8),
    (16, 32, 0, 4),
)
_KSIZE = 3
_IN_HW = 16
_IN_C = 3
_IN_FEATS = _IN_HW * _IN_HW * _IN_C      # 768
_NUM_CLASSES = 10
_OUT_LANES = 128                         # lane-dense classifier output width
_BN_EPS = 1e-5


def _conv_out_hw(hin, pad):
    return hin + 2 * pad - _KSIZE + 1


def _pool_feats(cfg):
    _, cout, pad, hin = cfg
    hp = _conv_out_hw(hin, pad) // 2
    return hp * hp * cout


_N_POOL = tuple(_pool_feats(c) for c in _LAYER_CFG)   # per-tap chunk: (512, 256, 32)
_N_CHANNEL = _N_POOL[-1]                               # 32 (classifier input)


# ---------------------------------------------------------------------------
# Fused Pallas kernel: whole forward for one batch tile
# ---------------------------------------------------------------------------
def _svhn_fused_kernel(x_ref, w0_ref, s0_ref, w1_ref, s1_ref, w2_ref, s2_ref,
                       wfc_ref, bfc_ref, o_ref):
    """conv0..2 (+BN+ReLU+pool) + classifier, all in VMEM for one row tile."""

    def conv_pool_block(h, w_ref, s_ref, n):
        # Four per-tap MXU dots with a running max: the 2x2 max-pool is hoisted
        # ahead of the (tap-invariant) BN shift + ReLU, and the wide (BT, 4n)
        # f32 pre-pool tensor is never materialized.
        w = w_ref[...]                                            # (K, 4n) bf16
        m = jnp.dot(h, w[:, :n], preferred_element_type=jnp.float32)
        for t in range(1, 4):
            m = jnp.maximum(
                m, jnp.dot(h, w[:, t * n:(t + 1) * n],
                           preferred_element_type=jnp.float32))
        return jnp.maximum(m + s_ref[...], 0.0)                   # (BT, n) f32

    h = x_ref[...]                                                       # (BT, 768) bf16
    h = conv_pool_block(h, w0_ref, s0_ref, _N_POOL[0]).astype(jnp.bfloat16)  # (BT, 512)
    h = conv_pool_block(h, w1_ref, s1_ref, _N_POOL[1]).astype(jnp.bfloat16)  # (BT, 256)

    # Layer 2: one 128-lane dot; its 4 pool taps repeat the 32 channels every
    # 32 lanes, so the 2x2 pool max is 3 XLU lane-rolls + maxes (no sub-128
    # lane slices / relayouts).
    acc = jnp.dot(h, w2_ref[...], preferred_element_type=jnp.float32)   # (BT, 128)
    m = jnp.maximum(jnp.maximum(acc, pltpu.roll(acc, 32, axis=1)),
                    jnp.maximum(pltpu.roll(acc, 64, axis=1),
                                pltpu.roll(acc, 96, axis=1)))
    h2 = jnp.maximum(m + s2_ref[...], 0.0)                              # (BT, 128)

    # Classifier: clean K=128 dot (rows 32..127 of wfc are zero).
    out = jnp.dot(h2, wfc_ref[...], preferred_element_type=jnp.float32)
    o_ref[...] = out + bfc_ref[...]                                     # (BT, 128) f32


# ---------------------------------------------------------------------------
# One-time weight folding (tiny tensors only; activations never touch this).
# Call ONCE at model load and reuse the result across forward calls.
# ---------------------------------------------------------------------------
def _conv_pool_tap_matrix(w_oihw, scale, pad, hin):
    """Dense matrices for Conv3x3 (BN scale folded) + the 4 taps of a 2x2 pool.

    Returns D of shape (hin*hin*Cin, 4 * hp*hp*Cout): for an NHWC image x,
    flatten(x) @ D[:, t*N:(t+1)*N] is the flattened pre-activation conv output
    sampled at pool-tap t (t enumerates the 2x2 window positions).
    """
    cout, cin, k, _ = w_oihw.shape
    n_in = hin * hin * cin
    ho = _conv_out_hw(hin, pad)
    # Apply the conv to the canonical basis -> explicit matrix of the linear map.
    basis = jnp.eye(n_in, dtype=jnp.float32).reshape(n_in, hin, hin, cin)
    xp = jnp.pad(basis, ((0, 0), (pad, pad), (pad, pad), (0, 0)))
    wmat = (jnp.transpose(w_oihw, (2, 3, 1, 0)).reshape(k * k * cin, cout)
            * scale[None, :])                                   # fold BN scale
    taps = [xp[:, kh:kh + ho, kw:kw + ho, :]
            for kh in range(k) for kw in range(k)]
    patches = jnp.concatenate(taps, axis=-1)                    # (n, ho, ho, k*k*cin)
    y = jnp.tensordot(patches, wmat, axes=[[3], [0]])           # (n, ho, ho, cout)
    cols = [y[:, ph::2, pw::2, :].reshape(n_in, -1)
            for ph in range(2) for pw in range(2)]
    return jnp.concatenate(cols, axis=-1)                       # (n, 4*hp*hp*cout)


def fold_params(params):
    """Fold conv+BN(+pool taps) and the classifier into kernel-ready operands."""
    folded = {}
    for i, (_, _, pad, hin) in enumerate(_LAYER_CFG):
        scale = params[f"bn{i}_gamma"] / jnp.sqrt(params[f"bn{i}_var"] + _BN_EPS)
        shift = (params[f"conv{i}_b"] - params[f"bn{i}_mean"]) * scale \
            + params[f"bn{i}_beta"]
        d = _conv_pool_tap_matrix(params[f"conv{i}_w"], scale, pad, hin)
        hp = _conv_out_hw(hin, pad) // 2
        folded[f"w{i}"] = d.astype(jnp.bfloat16)
        if i < 2:
            # Per-tap chunk shift (1, hp*hp*cout): pool max is hoisted in-kernel.
            folded[f"s{i}"] = jnp.tile(shift, hp * hp)[None, :].astype(jnp.float32)
        else:
            # Layer 2 stays 128 lanes wide (channel pattern repeats every 32).
            folded[f"s{i}"] = jnp.tile(shift, 4 * hp * hp)[None, :].astype(jnp.float32)
    # Classifier: zero-padded to a lane-dense (128, 128) weight / 128-wide bias.
    wfc = jnp.zeros((_OUT_LANES, _OUT_LANES), jnp.float32)
    wfc = wfc.at[:_N_CHANNEL, :_NUM_CLASSES].set(jnp.transpose(params["fc_w"]))
    bfc = jnp.zeros((1, _OUT_LANES), jnp.float32)
    bfc = bfc.at[0, :_NUM_CLASSES].set(params["fc_b"])
    folded["wfc"] = wfc
    folded["bfc"] = bfc
    return folded


# ---------------------------------------------------------------------------
# Forward (jittable; takes pre-folded operands)
# ---------------------------------------------------------------------------
def _round_up(x, m):
    return ((x + m - 1) // m) * m


def _choose_batch_tile(b):
    # >= 2 tiles whenever possible so both v7x TensorCores get work; rows are a
    # multiple of 16 (bf16 packs 16 sublanes/vreg); cap 512 rows -> ~13 MiB VMEM
    # peak incl. double-buffered I/O, safe under the 32 MiB scoped default on
    # v5e/v6e/v7x while filling the 256-wide v6e/v7x MXU and amortizing the
    # ~0.35 us per-grid-step overhead.
    return max(16, min(512, _round_up(-(-b // 2), 16)))


def svhn_forward(folded, x_nchw):
    b = x_nchw.shape[0]
    # NCHW (PyTorch) -> NHWC -> flat rows; pad batch rows to a tile multiple.
    x = jnp.transpose(x_nchw, (0, 2, 3, 1)).reshape(b, _IN_FEATS)
    bt = _choose_batch_tile(b)
    n_tiles = -(-b // bt)
    bp = n_tiles * bt
    if bp != b:
        x = jnp.pad(x, ((0, bp - b), (0, 0)))
    x = x.astype(jnp.bfloat16)

    w0, s0 = folded["w0"], folded["s0"]
    w1, s1 = folded["w1"], folded["s1"]
    w2, s2 = folded["w2"], folded["s2"]
    wfc, bfc = folded["wfc"], folded["bfc"]

    def _resident(a):   # whole-array, VMEM-resident (constant index_map)
        return pl.BlockSpec(a.shape, lambda i: (0, 0))

    out = pl.pallas_call(
        _svhn_fused_kernel,
        out_shape=jax.ShapeDtypeStruct((bp, _OUT_LANES), jnp.float32),
        grid=(n_tiles,),
        in_specs=[
            pl.BlockSpec((bt, _IN_FEATS), lambda i: (i, 0)),   # activations: tiled
            _resident(w0), _resident(s0),
            _resident(w1), _resident(s1),
            _resident(w2), _resident(s2),
            _resident(wfc), _resident(bfc),
        ],
        out_specs=pl.BlockSpec((bt, _OUT_LANES), lambda i: (i, 0)),
        compiler_params=pltpu.CompilerParams(
            dimension_semantics=("parallel",),      # batch tiles -> both v7x TCs
            vmem_limit_bytes=32 * 1024 * 1024,
        ),
    )(x, w0, s0, w1, s1, w2, s2, wfc, bfc)

    return out[:b, :_NUM_CLASSES]


# ---------------------------------------------------------------------------
# Params + pure-JAX reference (reference used only for the self-check in main)
# ---------------------------------------------------------------------------
def init_params(key):
    def nrm(k, shape, s=0.1):
        return s * jax.random.normal(k, shape, dtype=jnp.float32)

    keys = iter(jax.random.split(key, 6 * len(_LAYER_CFG) + 2))
    params = {}
    for i, (cin, cout, _, _) in enumerate(_LAYER_CFG):
        params[f"conv{i}_w"] = nrm(next(keys), (cout, cin, _KSIZE, _KSIZE))
        params[f"conv{i}_b"] = nrm(next(keys), (cout,))
        params[f"bn{i}_gamma"] = 1.0 + nrm(next(keys), (cout,), 0.05)
        params[f"bn{i}_beta"] = nrm(next(keys), (cout,), 0.05)
        params[f"bn{i}_mean"] = nrm(next(keys), (cout,), 0.05)
        params[f"bn{i}_var"] = 1.0 + jnp.abs(nrm(next(keys), (cout,), 0.05))
    params["fc_w"] = nrm(next(keys), (_NUM_CLASSES, _N_CHANNEL))
    params["fc_b"] = nrm(next(keys), (_NUM_CLASSES,))
    return params


def _reference_forward(params, x_nchw):
    x = jnp.transpose(x_nchw, (0, 2, 3, 1)).astype(jnp.float32)
    for i, (cin, cout, pad, hin) in enumerate(_LAYER_CFG):
        scale = params[f"bn{i}_gamma"] / jnp.sqrt(params[f"bn{i}_var"] + _BN_EPS)
        shift = (params[f"conv{i}_b"] - params[f"bn{i}_mean"]) * scale \
            + params[f"bn{i}_beta"]
        ho = _conv_out_hw(hin, pad)
        xp = jnp.pad(x, ((0, 0), (pad, pad), (pad, pad), (0, 0)))
        wmat = jnp.transpose(params[f"conv{i}_w"], (2, 3, 1, 0)).reshape(
            _KSIZE * _KSIZE * cin, cout)
        taps = [xp[:, kh:kh + ho, kw:kw + ho, :]
                for kh in range(_KSIZE) for kw in range(_KSIZE)]
        p = jnp.concatenate(taps, axis=-1)
        y = jnp.tensordot(p, wmat, axes=[[3], [0]]) * scale + shift
        y = jnp.maximum(y, 0.0)
        x = jnp.maximum(
            jnp.maximum(y[:, 0::2, 0::2, :], y[:, 0::2, 1::2, :]),
            jnp.maximum(y[:, 1::2, 0::2, :], y[:, 1::2, 1::2, :]))
    h = x.reshape(x.shape[0], -1)
    return h @ params["fc_w"].T + params["fc_b"]


if __name__ == "__main__":
    key = jax.random.PRNGKey(0)
    pkey, xkey = jax.random.split(key)
    params = init_params(pkey)
    x = jax.random.normal(xkey, (2, _IN_C, _IN_HW, _IN_HW), dtype=jnp.float32)  # NCHW

    folded = fold_params(params)            # one-time folding, outside the jitted step
    fwd = jax.jit(svhn_forward)
    out = jax.block_until_ready(fwd(folded, x))
    assert out.shape == (2, _NUM_CLASSES), out.shape

    # Light numerical self-check (kernel uses bf16 operands -> loose tolerance).
    ref = jax.block_until_ready(_reference_forward(params, x))
    err = float(jnp.max(jnp.abs(out - ref)))
    assert err < 7.5e-2, f"max abs err {err}"
    print("KERNEL_OK")
</pallas_src>

<mosaic_0001>
module attributes {stable_mosaic.version = 11 : i64} {
  func.func @_svhn_fused_kernel(%arg0: i32, %arg1: memref<16x768xbf16, #tpu.memory_space<vmem>>, %arg2: memref<768x2048xbf16, #tpu.memory_space<vmem>>, %arg3: memref<1x512xf32, #tpu.memory_space<vmem>>, %arg4: memref<512x1024xbf16, #tpu.memory_space<vmem>>, %arg5: memref<1x256xf32, #tpu.memory_space<vmem>>, %arg6: memref<256x128xbf16, #tpu.memory_space<vmem>>, %arg7: memref<1x128xf32, #tpu.memory_space<vmem>>, %arg8: memref<128x128xf32, #tpu.memory_space<vmem>>, %arg9: memref<1x128xf32, #tpu.memory_space<vmem>>, %arg10: memref<16x128xf32, #tpu.memory_space<vmem>>) attributes {dimension_semantics = [#tpu.dimension_semantics<parallel>], iteration_bounds = array<i64: 1>, scalar_prefetch = 0 : i64, scratch_operands = 0 : i64, tpu.core_type = #tpu.core_type<tc>, window_params = [{transform_indices = @transform_0, window_bounds = array<i64: 16, 768>}, {pipeline_mode = #tpu.pipeline_mode<synchronous>, transform_indices = @transform_1, window_bounds = array<i64: 768, 2048>}, {pipeline_mode = #tpu.pipeline_mode<synchronous>, transform_indices = @transform_2, window_bounds = array<i64: 1, 512>}, {pipeline_mode = #tpu.pipeline_mode<synchronous>, transform_indices = @transform_3, window_bounds = array<i64: 512, 1024>}, {pipeline_mode = #tpu.pipeline_mode<synchronous>, transform_indices = @transform_4, window_bounds = array<i64: 1, 256>}, {pipeline_mode = #tpu.pipeline_mode<synchronous>, transform_indices = @transform_5, window_bounds = array<i64: 256, 128>}, {pipeline_mode = #tpu.pipeline_mode<synchronous>, transform_indices = @transform_6, window_bounds = array<i64: 1, 128>}, {pipeline_mode = #tpu.pipeline_mode<synchronous>, transform_indices = @transform_7, window_bounds = array<i64: 128, 128>}, {pipeline_mode = #tpu.pipeline_mode<synchronous>, transform_indices = @transform_8, window_bounds = array<i64: 1, 128>}, {transform_indices = @transform_9, window_bounds = array<i64: 16, 128>}]} {
    %c0 = arith.constant 0 : index
    %c0_0 = arith.constant 0 : index
    %0 = vector.load %arg1[%c0, %c0_0] : memref<16x768xbf16, #tpu.memory_space<vmem>>, vector<16x768xbf16>
    %c0_1 = arith.constant 0 : index
    %c0_2 = arith.constant 0 : index
    %1 = vector.load %arg2[%c0_1, %c0_2] : memref<768x2048xbf16, #tpu.memory_space<vmem>>, vector<768x2048xbf16>
    %2 = vector.extract_strided_slice %1 {offsets = [0, 0], sizes = [768, 512], strides = [1, 1]} : vector<768x2048xbf16> to vector<768x512xbf16>
    %cst = arith.constant dense<0.000000e+00> : vector<16x512xf32>
    %3 = tpu.matmul %0, %2, %cst {dimension_numbers = #tpu.dot_dimension_numbers<[1], [0], [0], [1], [0, 0, 1, 1], [], []>} : vector<16x768xbf16>, vector<768x512xbf16>, vector<16x512xf32> -> vector<16x512xf32>
    %4 = vector.extract_strided_slice %1 {offsets = [0, 512], sizes = [768, 512], strides = [1, 1]} : vector<768x2048xbf16> to vector<768x512xbf16>
    %cst_3 = arith.constant dense<0.000000e+00> : vector<16x512xf32>
    %5 = tpu.matmul %0, %4, %cst_3 {dimension_numbers = #tpu.dot_dimension_numbers<[1], [0], [0], [1], [0, 0, 1, 1], [], []>} : vector<16x768xbf16>, vector<768x512xbf16>, vector<16x512xf32> -> vector<16x512xf32>
    %6 = arith.maximumf %3, %5 : vector<16x512xf32>
    %7 = vector.extract_strided_slice %1 {offsets = [0, 1024], sizes = [768, 512], strides = [1, 1]} : vector<768x2048xbf16> to vector<768x512xbf16>
    %cst_4 = arith.constant dense<0.000000e+00> : vector<16x512xf32>
    %8 = tpu.matmul %0, %7, %cst_4 {dimension_numbers = #tpu.dot_dimension_numbers<[1], [0], [0], [1], [0, 0, 1, 1], [], []>} : vector<16x768xbf16>, vector<768x512xbf16>, vector<16x512xf32> -> vector<16x512xf32>
    %9 = arith.maximumf %6, %8 : vector<16x512xf32>
    %10 = vector.extract_strided_slice %1 {offsets = [0, 1536], sizes = [768, 512], strides = [1, 1]} : vector<768x2048xbf16> to vector<768x512xbf16>
    %cst_5 = arith.constant dense<0.000000e+00> : vector<16x512xf32>
    %11 = tpu.matmul %0, %10, %cst_5 {dimension_numbers = #tpu.dot_dimension_numbers<[1], [0], [0], [1], [0, 0, 1, 1], [], []>} : vector<16x768xbf16>, vector<768x512xbf16>, vector<16x512xf32> -> vector<16x512xf32>
    %12 = arith.maximumf %9, %11 : vector<16x512xf32>
    %c0_6 = arith.constant 0 : index
    %c0_7 = arith.constant 0 : index
    %13 = vector.load %arg3[%c0_6, %c0_7] : memref<1x512xf32, #tpu.memory_space<vmem>>, vector<1x512xf32>
    %14 = vector.broadcast %13 : vector<1x512xf32> to vector<16x512xf32>
    %15 = arith.addf %12, %14 : vector<16x512xf32>
    %cst_8 = arith.constant 0.000000e+00 : f32
    %16 = vector.broadcast %cst_8 : f32 to vector<16x512xf32>
    %17 = arith.maximumf %15, %16 : vector<16x512xf32>
    %18 = arith.truncf %17 : vector<16x512xf32> to vector<16x512xbf16>
    %c0_9 = arith.constant 0 : index
    %c0_10 = arith.constant 0 : index
    %19 = vector.load %arg4[%c0_9, %c0_10] : memref<512x1024xbf16, #tpu.memory_space<vmem>>, vector<512x1024xbf16>
    %20 = vector.extract_strided_slice %19 {offsets = [0, 0], sizes = [512, 256], strides = [1, 1]} : vector<512x1024xbf16> to vector<512x256xbf16>
    %cst_11 = arith.constant dense<0.000000e+00> : vector<16x256xf32>
    %21 = tpu.matmul %18, %20, %cst_11 {dimension_numbers = #tpu.dot_dimension_numbers<[1], [0], [0], [1], [0, 0, 1, 1], [], []>} : vector<16x512xbf16>, vector<512x256xbf16>, vector<16x256xf32> -> vector<16x256xf32>
    %22 = vector.extract_strided_slice %19 {offsets = [0, 256], sizes = [512, 256], strides = [1, 1]} : vector<512x1024xbf16> to vector<512x256xbf16>
    %cst_12 = arith.constant dense<0.000000e+00> : vector<16x256xf32>
    %23 = tpu.matmul %18, %22, %cst_12 {dimension_numbers = #tpu.dot_dimension_numbers<[1], [0], [0], [1], [0, 0, 1, 1], [], []>} : vector<16x512xbf16>, vector<512x256xbf16>, vector<16x256xf32> -> vector<16x256xf32>
    %24 = arith.maximumf %21, %23 : vector<16x256xf32>
    %25 = vector.extract_strided_slice %19 {offsets = [0, 512], sizes = [512, 256], strides = [1, 1]} : vector<512x1024xbf16> to vector<512x256xbf16>
    %cst_13 = arith.constant dense<0.000000e+00> : vector<16x256xf32>
    %26 = tpu.matmul %18, %25, %cst_13 {dimension_numbers = #tpu.dot_dimension_numbers<[1], [0], [0], [1], [0, 0, 1, 1], [], []>} : vector<16x512xbf16>, vector<512x256xbf16>, vector<16x256xf32> -> vector<16x256xf32>
    %27 = arith.maximumf %24, %26 : vector<16x256xf32>
    %28 = vector.extract_strided_slice %19 {offsets = [0, 768], sizes = [512, 256], strides = [1, 1]} : vector<512x1024xbf16> to vector<512x256xbf16>
    %cst_14 = arith.constant dense<0.000000e+00> : vector<16x256xf32>
    %29 = tpu.matmul %18, %28, %cst_14 {dimension_numbers = #tpu.dot_dimension_numbers<[1], [0], [0], [1], [0, 0, 1, 1], [], []>} : vector<16x512xbf16>, vector<512x256xbf16>, vector<16x256xf32> -> vector<16x256xf32>
    %30 = arith.maximumf %27, %29 : vector<16x256xf32>
    %c0_15 = arith.constant 0 : index
    %c0_16 = arith.constant 0 : index
    %31 = vector.load %arg5[%c0_15, %c0_16] : memref<1x256xf32, #tpu.memory_space<vmem>>, vector<1x256xf32>
    %32 = vector.broadcast %31 : vector<1x256xf32> to vector<16x256xf32>
    %33 = arith.addf %30, %32 : vector<16x256xf32>
    %cst_17 = arith.constant 0.000000e+00 : f32
    %34 = vector.broadcast %cst_17 : f32 to vector<16x256xf32>
    %35 = arith.maximumf %33, %34 : vector<16x256xf32>
    %36 = arith.truncf %35 : vector<16x256xf32> to vector<16x256xbf16>
    %c0_18 = arith.constant 0 : index
    %c0_19 = arith.constant 0 : index
    %37 = vector.load %arg6[%c0_18, %c0_19] : memref<256x128xbf16, #tpu.memory_space<vmem>>, vector<256x128xbf16>
    %cst_20 = arith.constant dense<0.000000e+00> : vector<16x128xf32>
    %38 = tpu.matmul %36, %37, %cst_20 {dimension_numbers = #tpu.dot_dimension_numbers<[1], [0], [0], [1], [0, 0, 1, 1], [], []>} : vector<16x256xbf16>, vector<256x128xbf16>, vector<16x128xf32> -> vector<16x128xf32>
    %c32_i32 = arith.constant 32 : i32
    %39 = tpu.dynamic_rotate %38 by %c32_i32 dim 1 : vector<16x128xf32>, i32 -> vector<16x128xf32>
    %40 = arith.maximumf %38, %39 : vector<16x128xf32>
    %c64_i32 = arith.constant 64 : i32
    %41 = tpu.dynamic_rotate %38 by %c64_i32 dim 1 : vector<16x128xf32>, i32 -> vector<16x128xf32>
    %c96_i32 = arith.constant 96 : i32
    %42 = tpu.dynamic_rotate %38 by %c96_i32 dim 1 : vector<16x128xf32>, i32 -> vector<16x128xf32>
    %43 = arith.maximumf %41, %42 : vector<16x128xf32>
    %44 = arith.maximumf %40, %43 : vector<16x128xf32>
    %c0_21 = arith.constant 0 : index
    %c0_22 = arith.constant 0 : index
    %45 = vector.load %arg7[%c0_21, %c0_22] : memref<1x128xf32, #tpu.memory_space<vmem>>, vector<1x128xf32>
    %46 = vector.broadcast %45 : vector<1x128xf32> to vector<16x128xf32>
    %47 = arith.addf %44, %46 : vector<16x128xf32>
    %cst_23 = arith.constant 0.000000e+00 : f32
    %48 = vector.broadcast %cst_23 : f32 to vector<16x128xf32>
    %49 = arith.maximumf %47, %48 : vector<16x128xf32>
    %c0_24 = arith.constant 0 : index
    %c0_25 = arith.constant 0 : index
    %50 = vector.load %arg8[%c0_24, %c0_25] : memref<128x128xf32, #tpu.memory_space<vmem>>, vector<128x128xf32>
    %cst_26 = arith.constant dense<0.000000e+00> : vector<16x128xf32>
    %51 = tpu.matmul %49, %50, %cst_26 {dimension_numbers = #tpu.dot_dimension_numbers<[1], [0], [0], [1], [0, 0, 1, 1], [], []>} : vector<16x128xf32>, vector<128x128xf32>, vector<16x128xf32> -> vector<16x128xf32>
    %c0_27 = arith.constant 0 : index
    %c0_28 = arith.constant 0 : index
    %52 = vector.load %arg9[%c0_27, %c0_28] : memref<1x128xf32, #tpu.memory_space<vmem>>, vector<1x128xf32>
    %53 = vector.broadcast %52 : vector<1x128xf32> to vector<16x128xf32>
    %54 = arith.addf %51, %53 : vector<16x128xf32>
    %c0_29 = arith.constant 0 : index
    %c0_30 = arith.constant 0 : index
    %55 = vector.load %arg10[%c0_29, %c0_30] : memref<16x128xf32, #tpu.memory_space<vmem>>, vector<16x128xf32>
    tpu.vector_store %arg10[%c0_29, %c0_30], %54 {strides = array<i32>} : memref<16x128xf32, #tpu.memory_space<vmem>>, vector<16x128xf32>,
    return
  }
  func.func @transform_0(%arg0: i32) -> (i32, i32) {
    %c0_i32 = arith.constant 0 : i32
    %c0_i32_0 = arith.constant 0 : i32
    return %arg0, %c0_i32 : i32, i32
  }
  func.func @transform_1(%arg0: i32) -> (i32, i32) {
    %c0_i32 = arith.constant 0 : i32
    %c0_i32_0 = arith.constant 0 : i32
    %c0_i32_1 = arith.constant 0 : i32
    return %c0_i32, %c0_i32_0 : i32, i32
  }
  func.func @transform_2(%arg0: i32) -> (i32, i32) {
    %c0_i32 = arith.constant 0 : i32
    %c0_i32_0 = arith.constant 0 : i32
    %c0_i32_1 = arith.constant 0 : i32
    return %c0_i32, %c0_i32_0 : i32, i32
  }
  func.func @transform_3(%arg0: i32) -> (i32, i32) {
    %c0_i32 = arith.constant 0 : i32
    %c0_i32_0 = arith.constant 0 : i32
    %c0_i32_1 = arith.constant 0 : i32
    return %c0_i32, %c0_i32_0 : i32, i32
  }
  func.func @transform_4(%arg0: i32) -> (i32, i32) {
    %c0_i32 = arith.constant 0 : i32
    %c0_i32_0 = arith.constant 0 : i32
    %c0_i32_1 = arith.constant 0 : i32
    return %c0_i32, %c0_i32_0 : i32, i32
  }
  func.func @transform_5(%arg0: i32) -> (i32, i32) {
    %c0_i32 = arith.constant 0 : i32
    %c0_i32_0 = arith.constant 0 : i32
    %c0_i32_1 = arith.constant 0 : i32
    return %c0_i32, %c0_i32_0 : i32, i32
  }
  func.func @transform_6(%arg0: i32) -> (i32, i32) {
    %c0_i32 = arith.constant 0 : i32
    %c0_i32_0 = arith.constant 0 : i32
    %c0_i32_1 = arith.constant 0 : i32
    return %c0_i32, %c0_i32_0 : i32, i32
  }
  func.func @transform_7(%arg0: i32) -> (i32, i32) {
    %c0_i32 = arith.constant 0 : i32
    %c0_i32_0 = arith.constant 0 : i32
    %c0_i32_1 = arith.constant 0 : i32
    return %c0_i32, %c0_i32_0 : i32, i32
  }
  func.func @transform_8(%arg0: i32) -> (i32, i32) {
    %c0_i32 = arith.constant 0 : i32
    %c0_i32_0 = arith.constant 0 : i32
    %c0_i32_1 = arith.constant 0 : i32
    return %c0_i32, %c0_i32_0 : i32, i32
  }
  func.func @transform_9(%arg0: i32) -> (i32, i32) {
    %c0_i32 = arith.constant 0 : i32
    %c0_i32_0 = arith.constant 0 : i32
    return %arg0, %c0_i32 : i32, i32
  }
}

</mosaic_0001>

<llo_original>
// kernel: svhn_forward.1
$region0: #{svhn_forward.1}
  #allocation0 [shape = 'u32[]', space=smem, size = 0x4, offset = 0x4, fixed_abs, tag = 'smem constant byte address 0x4 - core index']
  #allocation1 [shape = 'u32[144,128]{1,0:T(1,128)}', space=vmem, size = 0x12000, scoped, tag = 'internal scratch']
  %s0 = inlined_call_operand.vmem [shape: bf16[16,768], index: 0, kind: input, shape index: {}]
  %s1 = inlined_call_operand.hbm [shape: bf16[768,2048], index: 1, kind: input, shape index: {}]
  %s2 = inlined_call_operand.hbm [shape: f32[1,512], index: 2, kind: input, shape index: {}]
  %s3 = inlined_call_operand.hbm [shape: bf16[512,1024], index: 3, kind: input, shape index: {}]
  %s4 = inlined_call_operand.hbm [shape: f32[1,256], index: 4, kind: input, shape index: {}]
  %s5 = inlined_call_operand.hbm [shape: bf16[256,128], index: 5, kind: input, shape index: {}]
  %s6 = inlined_call_operand.hbm [shape: f32[1,128], index: 6, kind: input, shape index: {}]
  %s7 = inlined_call_operand.hbm [shape: f32[128,128], index: 7, kind: input, shape index: {}]
  %s8 = inlined_call_operand.hbm [shape: f32[1,128], index: 8, kind: input, shape index: {}]
  %s9 = inlined_call_operand.vmem [shape: f32[16,128], index: 9, kind: output, shape index: {}]
  %s10 = sld [smem:[#allocation0]]
  $region78: #{svhn_forward.1} parent=0
    _
  %s12 = ssub.s32 1, %s10
  %s13 = scalar_select 0, %s12, %s10
  $region1: #{svhn_forward.1} parent=0
    #allocation2 [shape = 'u8[3145728]{0}', space=vmem, size = 0x300000, scoped, tag = 'input window, operand 1, single buffered']
    #allocation3 [shape = 's32[1]{0}', space=sflag, size = 0x4, scoped, tag = 'scoped memory for svhn_forward.1']
    #allocation4 [shape = 'u8[2048]{0}', space=vmem, size = 0x800, scoped, tag = 'input window, operand 2, single buffered']
    #allocation5 [shape = 's32[1]{0}', space=sflag, size = 0x4, scoped, tag = 'scoped memory for svhn_forward.1']
    #allocation6 [shape = 'u8[1048576]{0}', space=vmem, size = 0x100000, scoped, tag = 'input window, operand 3, single buffered']
    #allocation7 [shape = 'u8[1024]{0}', space=vmem, size = 0x400, scoped, tag = 'input window, operand 4, single buffered']
    #allocation8 [shape = 's32[1]{0}', space=sflag, size = 0x4, scoped, tag = 'scoped memory for svhn_forward.1']
    #allocation9 [shape = 'u8[65536]{0}', space=vmem, size = 0x10000, scoped, tag = 'input window, operand 5, single buffered']
    #allocation10 [shape = 'u8[512]{0}', space=vmem, size = 0x400, scoped, tag = 'input window, operand 6, single buffered']
    #allocation11 [shape = 's32[1]{0}', space=sflag, size = 0x4, scoped, tag = 'scoped memory for svhn_forward.1']
    #allocation12 [shape = 'u8[65536]{0}', space=vmem, size = 0x10000, scoped, tag = 'input window, operand 7, single buffered']
    #allocation13 [shape = 'u8[512]{0}', space=vmem, size = 0x400, scoped, tag = 'input window, operand 8, single buffered']
    #allocation14 [shape = 's32[1]{0}', space=sflag, size = 0x4, scoped, tag = 'scoped memory for svhn_forward.1']
    %14 = vsyncpa [#allocation3], 0
    %15 = vsyncpa [#allocation5], 0
    %16 = vsyncpa [#allocation8], 0
    %17 = vsyncpa [#allocation11], 0
    %18 = vsyncpa [#allocation14], 0
    // Predicated region
    $region2: #{svhn_forward.1} parent=1 // pred_check
      _
    $region3: #{svhn_forward.1} parent=1 // pred_check_branch
      %20 = sbr.rel (0) target = $region5
    $region4: #{svhn_forward.1} parent=1 // pred_region
      _
    $region5: #{svhn_forward.1} parent=1 // pred_fallthru
      _
    // Predicated region
    $region6: #{svhn_forward.1} parent=1 // pred_check
      _
    $region7: #{svhn_forward.1} parent=1 // pred_check_branch
      %22 = sbr.rel (0) target = $region9
    $region8: #{svhn_forward.1} parent=1 // pred_region
      %s24 = ssub.s32 98304, 98304
      %25 = vsyncadd [#allocation3], %s24
      %s26 = sshll.u32 [#allocation2], 4
      %s27 = int_to_ptr.vmem [resolvable:$true] %s26
      %32 = dma.hbm_to_vmem [thread:$0]  %s1, 98304, %s27, [#allocation3], 1024, 1024, 64
    $region9: #{svhn_forward.1} parent=1 // pred_fallthru
      _
    // Predicated region
    $region10: #{svhn_forward.1} parent=1 // pred_check
      _
    $region11: #{svhn_forward.1} parent=1 // pred_check_branch
      %34 = sbr.rel (0) target = $region13
    $region12: #{svhn_forward.1} parent=1 // pred_region
      %s36 = ssub.s32 64, 64
      %37 = vsyncadd [#allocation5], %s36
      %s39 = sshll.u32 [#allocation4], 4
      %s40 = int_to_ptr.vmem [resolvable:$true] %s39
      %42 = dma.hbm_to_vmem [thread:$0]  %s2, 64, %s40, [#allocation5]
    $region13: #{svhn_forward.1} parent=1 // pred_fallthru
      _
    // Predicated region
    $region14: #{svhn_forward.1} parent=1 // pred_check
      _
    $region15: #{svhn_forward.1} parent=1 // pred_check_branch
      %44 = sbr.rel (0) target = $region17
    $region16: #{svhn_forward.1} parent=1 // pred_region
      %s46 = ssub.s32 32768, 32768
      %47 = vsyncadd [#allocation5], %s46
      %s48 = sshll.u32 [#allocation6], 4
      %s49 = int_to_ptr.vmem [resolvable:$true] %s48
      %54 = dma.hbm_to_vmem [thread:$0]  %s3, 32768, %s49, [#allocation5], 512, 512, 32
    $region17: #{svhn_forward.1} parent=1 // pred_fallthru
      _
    // Predicated region
    $region18: #{svhn_forward.1} parent=1 // pred_check
      _
    $region19: #{svhn_forward.1} parent=1 // pred_check_branch
      %56 = sbr.rel (0) target = $region21
    $region20: #{svhn_forward.1} parent=1 // pred_region
      %s58 = ssub.s32 32, 32
      %59 = vsyncadd [#allocation8], %s58
      %s61 = sshll.u32 [#allocation7], 4
      %s62 = int_to_ptr.vmem [resolvable:$true] %s61
      %64 = dma.hbm_to_vmem [thread:$0]  %s4, 32, %s62, [#allocation8]
    $region21: #{svhn_forward.1} parent=1 // pred_fallthru
      _
    // Predicated region
    $region22: #{svhn_forward.1} parent=1 // pred_check
      _
    $region23: #{svhn_forward.1} parent=1 // pred_check_branch
      %66 = sbr.rel (0) target = $region25
    $region24: #{svhn_forward.1} parent=1 // pred_region
      %s68 = ssub.s32 2048, 2048
      %69 = vsyncadd [#allocation8], %s68
      %s70 = sshll.u32 [#allocation9], 4
      %s71 = int_to_ptr.vmem [resolvable:$true] %s70
      %76 = dma.hbm_to_vmem [thread:$0]  %s5, 2048, %s71, [#allocation8], 64, 64, 4
    $region25: #{svhn_forward.1} parent=1 // pred_fallthru
      _
    // Predicated region
    $region26: #{svhn_forward.1} parent=1 // pred_check
      _
    $region27: #{svhn_forward.1} parent=1 // pred_check_branch
      %78 = sbr.rel (0) target = $region29
    $region28: #{svhn_forward.1} parent=1 // pred_region
      %s80 = ssub.s32 16, 16
      %81 = vsyncadd [#allocation11], %s80
      %s83 = sshll.u32 [#allocation10], 4
      %s84 = int_to_ptr.vmem [resolvable:$true] %s83
      %86 = dma.hbm_to_vmem [thread:$0]  %s6, 16, %s84, [#allocation11]
    $region29: #{svhn_forward.1} parent=1 // pred_fallthru
      _
    // Predicated region
    $region30: #{svhn_forward.1} parent=1 // pred_check
      _
    $region31: #{svhn_forward.1} parent=1 // pred_check_branch
      %88 = sbr.rel (0) target = $region33
    $region32: #{svhn_forward.1} parent=1 // pred_region
      %s90 = ssub.s32 2048, 2048
      %91 = vsyncadd [#allocation11], %s90
      %s92 = sshll.u32 [#allocation12], 4
      %s93 = int_to_ptr.vmem [resolvable:$true] %s92
      %98 = dma.hbm_to_vmem [thread:$0]  %s7, 2048, %s93, [#allocation11], 128, 128, 8
    $region33: #{svhn_forward.1} parent=1 // pred_fallthru
      _
    // Predicated region
    $region34: #{svhn_forward.1} parent=1 // pred_check
      _
    $region35: #{svhn_forward.1} parent=1 // pred_check_branch
      %100 = sbr.rel (0) target = $region37
    $region36: #{svhn_forward.1} parent=1 // pred_region
      %s102 = ssub.s32 16, 16
      %103 = vsyncadd [#allocation14], %s102
      %s105 = sshll.u32 [#allocation13], 4
      %s106 = int_to_ptr.vmem [resolvable:$true] %s105
      %108 = dma.hbm_to_vmem [thread:$0]  %s8, 16, %s106, [#allocation14]
    $region37: #{svhn_forward.1} parent=1 // pred_fallthru
      _
    // Predicated region
    $region38: #{svhn_forward.1} parent=1 // pred_check
      _
    $region39: #{svhn_forward.1} parent=1 // pred_check_branch
      %110 = sbr.rel (0) target = $region41
    $region40: #{svhn_forward.1} parent=1 // pred_region
      %111 = dma.done [#allocation3], 98304
    $region41: #{svhn_forward.1} parent=1 // pred_fallthru
      _
    // Predicated region
    $region42: #{svhn_forward.1} parent=1 // pred_check
      _
    $region43: #{svhn_forward.1} parent=1 // pred_check_branch
      %113 = sbr.rel (0) target = $region45
    $region44: #{svhn_forward.1} parent=1 // pred_region
      %114 = dma.done [#allocation5], 64
    $region45: #{svhn_forward.1} parent=1 // pred_fallthru
      _
    // Predicated region
    $region46: #{svhn_forward.1} parent=1 // pred_check
      _
    $region47: #{svhn_forward.1} parent=1 // pred_check_branch
      %116 = sbr.rel (0) target = $region49
    $region48: #{svhn_forward.1} parent=1 // pred_region
      %117 = dma.done [#allocation5], 32768
    $region49: #{svhn_forward.1} parent=1 // pred_fallthru
      _
    // Predicated region
    $region50: #{svhn_forward.1} parent=1 // pred_check
      _
    $region51: #{svhn_forward.1} parent=1 // pred_check_branch
      %119 = sbr.rel (0) target = $region53
    $region52: #{svhn_forward.1} parent=1 // pred_region
      %120 = dma.done [#allocation8], 32
    $region53: #{svhn_forward.1} parent=1 // pred_fallthru
      _
    // Predicated region
    $region54: #{svhn_forward.1} parent=1 // pred_check
      _
    $region55: #{svhn_forward.1} parent=1 // pred_check_branch
      %122 = sbr.rel (0) target = $region57
    $region56: #{svhn_forward.1} parent=1 // pred_region
      %123 = dma.done [#allocation8], 2048
    $region57: #{svhn_forward.1} parent=1 // pred_fallthru
      _
    // Predicated region
    $region58: #{svhn_forward.1} parent=1 // pred_check
      _
    $region59: #{svhn_forward.1} parent=1 // pred_check_branch
      %125 = sbr.rel (0) target = $region61
    $region60: #{svhn_forward.1} parent=1 // pred_region
      %126 = dma.done [#allocation11], 16
    $region61: #{svhn_forward.1} parent=1 // pred_fallthru
      _
    // Predicated region
    $region62: #{svhn_forward.1} parent=1 // pred_check
      _
    $region63: #{svhn_forward.1} parent=1 // pred_check_branch
      %128 = sbr.rel (0) target = $region65
    $region64: #{svhn_forward.1} parent=1 // pred_region
      %129 = dma.done [#allocation11], 2048
    $region65: #{svhn_forward.1} parent=1 // pred_fallthru
      _
    // Predicated region
    $region66: #{svhn_forward.1} parent=1 // pred_check
      _
    $region67: #{svhn_forward.1} parent=1 // pred_check_branch
      %131 = sbr.rel (0) target = $region69
    $region68: #{svhn_forward.1} parent=1 // pred_region
      %132 = dma.done [#allocation14], 16
    $region69: #{svhn_forward.1} parent=1 // pred_fallthru
      _
    %v134 = vld [vmem:[%s0] sm:$0xff]
    %v135 = vld [vmem:[%s0 + $0x8] sm:$0xff]
    %v136 = vld [vmem:[%s0 + $0x10] sm:$0xff]
    %v137 = vld [vmem:[%s0 + $0x18] sm:$0xff]
    %v138 = vld [vmem:[%s0 + $0x20] sm:$0xff]
    %v139 = vld [vmem:[%s0 + $0x28] sm:$0xff]
    %v140 = vld [vmem:[#allocation2] sm:$0xff]
    %v141 = vld [vmem:[#allocation2 + $0x8] sm:$0xff]
    %v142 = vld [vmem:[#allocation2 + $0x10] sm:$0xff]
    %v143 = vld [vmem:[#allocation2 + $0x18] sm:$0xff]
    %v144 = vld [vmem:[#allocation2 + $0x20] sm:$0xff]
    %v145 = vld [vmem:[#allocation2 + $0x28] sm:$0xff]
    %v146 = vld [vmem:[#allocation2 + $0x30] sm:$0xff]
    %v147 = vld [vmem:[#allocation2 + $0x38] sm:$0xff]
    %v148 = vld [vmem:[#allocation2 + $0x40] sm:$0xff]
    %v149 = vld [vmem:[#allocation2 + $0x48] sm:$0xff]
    %v150 = vld [vmem:[#allocation2 + $0x50] sm:$0xff]
    %v151 = vld [vmem:[#allocation2 + $0x58] sm:$0xff]
    %v152 = vld [vmem:[#allocation2 + $0x60] sm:$0xff]
    %v153 = vld [vmem:[#allocation2 + $0x68] sm:$0xff]
    %v154 = vld [vmem:[#allocation2 + $0x70] sm:$0xff]
    %v155 = vld [vmem:[#allocation2 + $0x78] sm:$0xff]
    %v156 = vld [vmem:[#allocation2 + $0x80] sm:$0xff]
    %v157 = vld [vmem:[#allocation2 + $0x88] sm:$0xff]
    %v158 = vld [vmem:[#allocation2 + $0x90] sm:$0xff]
    %v159 = vld [vmem:[#allocation2 + $0x98] sm:$0xff]
    %v160 = vld [vmem:[#allocation2 + $0xa0] sm:$0xff]
    %v161 = vld [vmem:[#allocation2 + $0xa8] sm:$0xff]
    %v162 = vld [vmem:[#allocation2 + $0xb0] sm:$0xff]
    %v163 = vld [vmem:[#allocation2 + $0xb8] sm:$0xff]
    %v164 = vld [vmem:[#allocation2 + $0xc0] sm:$0xff]
    %v165 = vld [vmem:[#allocation2 + $0xc8] sm:$0xff]
    %v166 = vld [vmem:[#allocation2 + $0xd0] sm:$0xff]
    %v167 = vld [vmem:[#allocation2 + $0xd8] sm:$0xff]
    %v168 = vld [vmem:[#allocation2 + $0xe0] sm:$0xff]
    %v169 = vld [vmem:[#allocation2 + $0xe8] sm:$0xff]
    %v170 = vld [vmem:[#allocation2 + $0xf0] sm:$0xff]
    %v171 = vld [vmem:[#allocation2 + $0xf8] sm:$0xff]
    %v172 = vld [vmem:[#allocation2 + $0x100] sm:$0xff]
    %v173 = vld [vmem:[#allocation2 + $0x108] sm:$0xff]
    %v174 = vld [vmem:[#allocation2 + $0x110] sm:$0xff]
    %v175 = vld [vmem:[#allocation2 + $0x118] sm:$0xff]
    %v176 = vld [vmem:[#allocation2 + $0x120] sm:$0xff]
    %v177 = vld [vmem:[#allocation2 + $0x128] sm:$0xff]
    %v178 = vld [vmem:[#allocation2 + $0x130] sm:$0xff]
    %v179 = vld [vmem:[#allocation2 + $0x138] sm:$0xff]
    %v180 = vld [vmem:[#allocation2 + $0x140] sm:$0xff]
    %v181 = vld [vmem:[#allocation2 + $0x148] sm:$0xff]
    %v182 = vld [vmem:[#allocation2 + $0x150] sm:$0xff]
    %v183 = vld [vmem:[#allocation2 + $0x158] sm:$0xff]
    %v184 = vld [vmem:[#allocation2 + $0x160] sm:$0xff]
    %v185 = vld [vmem:[#allocation2 + $0x168] sm:$0xff]
    %v186 = vld [vmem:[#allocation2 + $0x170] sm:$0xff]
    %v187 = vld [vmem:[#allocation2 + $0x178] sm:$0xff]
    %v188 = vld [vmem:[#allocation2 + $0x180] sm:$0xff]
    %v189 = vld [vmem:[#allocation2 + $0x188] sm:$0xff]
    %v190 = vld [vmem:[#allocation2 + $0x190] sm:$0xff]
    %v191 = vld [vmem:[#allocation2 + $0x198] sm:$0xff]
    %v192 = vld [vmem:[#allocation2 + $0x1a0] sm:$0xff]
    %v193 = vld [vmem:[#allocation2 + $0x1a8] sm:$0xff]
    %v194 = vld [vmem:[#allocation2 + $0x1b0] sm:$0xff]
    %v195 = vld [vmem:[#allocation2 + $0x1b8] sm:$0xff]
    %v196 = vld [vmem:[#allocation2 + $0x1c0] sm:$0xff]
    %v197 = vld [vmem:[#allocation2 + $0x1c8] sm:$0xff]
    %v198 = vld [vmem:[#allocation2 + $0x1d0] sm:$0xff]
    %v199 = vld [vmem:[#allocation2 + $0x1d8] sm:$0xff]
    %v200 = vld [vmem:[#allocation2 + $0x1e0] sm:$0xff]
    %v201 = vld [vmem:[#allocation2 + $0x1e8] sm:$0xff]
    %v202 = vld [vmem:[#allocation2 + $0x1f0] sm:$0xff]
    %v203 = vld [vmem:[#allocation2 + $0x1f8] sm:$0xff]
    %v204 = vld [vmem:[#allocation2 + $0x200] sm:$0xff]
    %v205 = vld [vmem:[#allocation2 + $0x208] sm:$0xff]
    %v206 = vld [vmem:[#allocation2 + $0x210] sm:$0xff]
    %v207 = vld [vmem:[#allocation2 + $0x218] sm:$0xff]
    %v208 = vld [vmem:[#allocation2 + $0x220] sm:$0xff]
    %v209 = vld [vmem:[#allocation2 + $0x228] sm:$0xff]
    %v210 = vld [vmem:[#allocation2 + $0x230] sm:$0xff]
    %v211 = vld [vmem:[#allocation2 + $0x238] sm:$0xff]
    %v212 = vld [vmem:[#allocation2 + $0x240] sm:$0xff]
    %v213 = vld [vmem:[#allocation2 + $0x248] sm:$0xff]
    %v214 = vld [vmem:[#allocation2 + $0x250] sm:$0xff]
    %v215 = vld [vmem:[#allocation2 + $0x258] sm:$0xff]
    %v216 = vld [vmem:[#allocation2 + $0x260] sm:$0xff]
    %v217 = vld [vmem:[#allocation2 + $0x268] sm:$0xff]
    %v218 = vld [vmem:[#allocation2 + $0x270] sm:$0xff]
    %v219 = vld [vmem:[#allocation2 + $0x278] sm:$0xff]
    %v220 = vld [vmem:[#allocation2 + $0x280] sm:$0xff]
    %v221 = vld [vmem:[#allocation2 + $0x288] sm:$0xff]
    %v222 = vld [vmem:[#allocation2 + $0x290] sm:$0xff]
    %v223 = vld [vmem:[#allocation2 + $0x298] sm:$0xff]
    %v224 = vld [vmem:[#allocation2 + $0x2a0] sm:$0xff]
    %v225 = vld [vmem:[#allocation2 + $0x2a8] sm:$0xff]
    %v226 = vld [vmem:[#allocation2 + $0x2b0] sm:$0xff]
    %v227 = vld [vmem:[#allocation2 + $0x2b8] sm:$0xff]
    %v228 = vld [vmem:[#allocation2 + $0x2c0] sm:$0xff]
    %v229 = vld [vmem:[#allocation2 + $0x2c8] sm:$0xff]
    %v230 = vld [vmem:[#allocation2 + $0x2d0] sm:$0xff]
    %v231 = vld [vmem:[#allocation2 + $0x2d8] sm:$0xff]
    %v232 = vld [vmem:[#allocation2 + $0x2e0] sm:$0xff]
    %v233 = vld [vmem:[#allocation2 + $0x2e8] sm:$0xff]
    %v234 = vld [vmem:[#allocation2 + $0x2f0] sm:$0xff]
    %v235 = vld [vmem:[#allocation2 + $0x2f8] sm:$0xff]
    %v236 = vld [vmem:[#allocation2 + $0x300] sm:$0xff]
    %v237 = vld [vmem:[#allocation2 + $0x308] sm:$0xff]
    %v238 = vld [vmem:[#allocation2 + $0x310] sm:$0xff]
    %v239 = vld [vmem:[#allocation2 + $0x318] sm:$0xff]
    %v240 = vld [vmem:[#allocation2 + $0x320] sm:$0xff]
    %v241 = vld [vmem:[#allocation2 + $0x328] sm:$0xff]
    %v242 = vld [vmem:[#allocation2 + $0x330] sm:$0xff]
    %v243 = vld [vmem:[#allocation2 + $0x338] sm:$0xff]
    %v244 = vld [vmem:[#allocation2 + $0x340] sm:$0xff]
    %v245 = vld [vmem:[#allocation2 + $0x348] sm:$0xff]
    %v246 = vld [vmem:[#allocation2 + $0x350] sm:$0xff]
    %v247 = vld [vmem:[#allocation2 + $0x358] sm:$0xff]
    %v248 = vld [vmem:[#allocation2 + $0x360] sm:$0xff]
    %v249 = vld [vmem:[#allocation2 + $0x368] sm:$0xff]
    %v250 = vld [vmem:[#allocation2 + $0x370] sm:$0xff]
    %v251 = vld [vmem:[#allocation2 + $0x378] sm:$0xff]
    %v252 = vld [vmem:[#allocation2 + $0x380] sm:$0xff]
    %v253 = vld [vmem:[#allocation2 + $0x388] sm:$0xff]
    %v254 = vld [vmem:[#allocation2 + $0x390] sm:$0xff]
    %v255 = vld [vmem:[#allocation2 + $0x398] sm:$0xff]
    %v256 = vld [vmem:[#allocation2 + $0x3a0] sm:$0xff]
    %v257 = vld [vmem:[#allocation2 + $0x3a8] sm:$0xff]
    %v258 = vld [vmem:[#allocation2 + $0x3b0] sm:$0xff]
    %v259 = vld [vmem:[#allocation2 + $0x3b8] sm:$0xff]
    %v260 = vld [vmem:[#allocation2 + $0x3c0] sm:$0xff]
    %v261 = vld [vmem:[#allocation2 + $0x3c8] sm:$0xff]
    %v262 = vld [vmem:[#allocation2 + $0x3d0] sm:$0xff]
    %v263 = vld [vmem:[#allocation2 + $0x3d8] sm:$0xff]
    %v264 = vld [vmem:[#allocation2 + $0x3e0] sm:$0xff]
    %v265 = vld [vmem:[#allocation2 + $0x3e8] sm:$0xff]
    %v266 = vld [vmem:[#allocation2 + $0x3f0] sm:$0xff]
    %v267 = vld [vmem:[#allocation2 + $0x3f8] sm:$0xff]
    %v268 = vld [vmem:[#allocation2 + $0x400] sm:$0xff]
    %v269 = vld [vmem:[#allocation2 + $0x408] sm:$0xff]
    %v270 = vld [vmem:[#allocation2 + $0x410] sm:$0xff]
    %v271 = vld [vmem:[#allocation2 + $0x418] sm:$0xff]
    %v272 = vld [vmem:[#allocation2 + $0x420] sm:$0xff]
    %v273 = vld [vmem:[#allocation2 + $0x428] sm:$0xff]
    %v274 = vld [vmem:[#allocation2 + $0x430] sm:$0xff]
    %v275 = vld [vmem:[#allocation2 + $0x438] sm:$0xff]
    %v276 = vld [vmem:[#allocation2 + $0x440] sm:$0xff]
    %v277 = vld [vmem:[#allocation2 + $0x448] sm:$0xff]
    %v278 = vld [vmem:[#allocation2 + $0x450] sm:$0xff]
    %v279 = vld [vmem:[#allocation2 + $0x458] sm:$0xff]
    %v280 = vld [vmem:[#allocation2 + $0x460] sm:$0xff]
    %v281 = vld [vmem:[#allocation2 + $0x468] sm:$0xff]
    %v282 = vld [vmem:[#allocation2 + $0x470] sm:$0xff]
    %v283 = vld [vmem:[#allocation2 + $0x478] sm:$0xff]
    %v284 = vld [vmem:[#allocation2 + $0x480] sm:$0xff]
    %v285 = vld [vmem:[#allocation2 + $0x488] sm:$0xff]
    %v286 = vld [vmem:[#allocation2 + $0x490] sm:$0xff]
    %v287 = vld [vmem:[#allocation2 + $0x498] sm:$0xff]
    %v288 = vld [vmem:[#allocation2 + $0x4a0] sm:$0xff]
    %v289 = vld [vmem:[#allocation2 + $0x4a8] sm:$0xff]
    %v290 = vld [vmem:[#allocation2 + $0x4b0] sm:$0xff]
    %v291 = vld [vmem:[#allocation2 + $0x4b8] sm:$0xff]
    %v292 = vld [vmem:[#allocation2 + $0x4c0] sm:$0xff]
    %v293 = vld [vmem:[#allocation2 + $0x4c8] sm:$0xff]
    %v294 = vld [vmem:[#allocation2 + $0x4d0] sm:$0xff]
    %v295 = vld [vmem:[#allocation2 + $0x4d8] sm:$0xff]
    %v296 = vld [vmem:[#allocation2 + $0x4e0] sm:$0xff]
    %v297 = vld [vmem:[#allocation2 + $0x4e8] sm:$0xff]
    %v298 = vld [vmem:[#allocation2 + $0x4f0] sm:$0xff]
    %v299 = vld [vmem:[#allocation2 + $0x4f8] sm:$0xff]
    %v300 = vld [vmem:[#allocation2 + $0x500] sm:$0xff]
    %v301 = vld [vmem:[#allocation2 + $0x508] sm:$0xff]
    %v302 = vld [vmem:[#allocation2 + $0x510] sm:$0xff]
    %v303 = vld [vmem:[#allocation2 + $0x518] sm:$0xff]
    %v304 = vld [vmem:[#allocation2 + $0x520] sm:$0xff]
    %v305 = vld [vmem:[#allocation2 + $0x528] sm:$0xff]
    %v306 = vld [vmem:[#allocation2 + $0x530] sm:$0xff]
    %v307 = vld [vmem:[#allocation2 + $0x538] sm:$0xff]
    %v308 = vld [vmem:[#allocation2 + $0x540] sm:$0xff]
    %v309 = vld [vmem:[#allocation2 + $0x548] sm:$0xff]
    %v310 = vld [vmem:[#allocation2 + $0x550] sm:$0xff]
    %v311 = vld [vmem:[#allocation2 + $0x558] sm:$0xff]
    %v312 = vld [vmem:[#allocation2 + $0x560] sm:$0xff]
    %v313 = vld [vmem:[#allocation2 + $0x568] sm:$0xff]
    %v314 = vld [vmem:[#allocation2 + $0x570] sm:$0xff]
    %v315 = vld [vmem:[#allocation2 + $0x578] sm:$0xff]
    %v316 = vld [vmem:[#allocation2 + $0x580] sm:$0xff]
    %v317 = vld [vmem:[#allocation2 + $0x588] sm:$0xff]
    %v318 = vld [vmem:[#allocation2 + $0x590] sm:$0xff]
    %v319 = vld [vmem:[#allocation2 + $0x598] sm:$0xff]
    %v320 = vld [vmem:[#allocation2 + $0x5a0] sm:$0xff]
    %v321 = vld [vmem:[#allocation2 + $0x5a8] sm:$0xff]
    %v322 = vld [vmem:[#allocation2 + $0x5b0] sm:$0xff]
    %v323 = vld [vmem:[#allocation2 + $0x5b8] sm:$0xff]
    %v324 = vld [vmem:[#allocation2 + $0x5c0] sm:$0xff]
    %v325 = vld [vmem:[#allocation2 + $0x5c8] sm:$0xff]
    %v326 = vld [vmem:[#allocation2 + $0x5d0] sm:$0xff]
    %v327 = vld [vmem:[#allocation2 + $0x5d8] sm:$0xff]
    %v328 = vld [vmem:[#allocation2 + $0x5e0] sm:$0xff]
    %v329 = vld [vmem:[#allocation2 + $0x5e8] sm:$0xff]
    %v330 = vld [vmem:[#allocation2 + $0x5f0] sm:$0xff]
    %v331 = vld [vmem:[#allocation2 + $0x5f8] sm:$0xff]
    %v332 = vld [vmem:[#allocation2 + $0x600] sm:$0xff]
    %v333 = vld [vmem:[#allocation2 + $0x608] sm:$0xff]
    %v334 = vld [vmem:[#allocation2 + $0x610] sm:$0xff]
    %v335 = vld [vmem:[#allocation2 + $0x618] sm:$0xff]
    %v336 = vld [vmem:[#allocation2 + $0x620] sm:$0xff]
    %v337 = vld [vmem:[#allocation2 + $0x628] sm:$0xff]
    %v338 = vld [vmem:[#allocation2 + $0x630] sm:$0xff]
    %v339 = vld [vmem:[#allocation2 + $0x638] sm:$0xff]
    %v340 = vld [vmem:[#allocation2 + $0x640] sm:$0xff]
    %v341 = vld [vmem:[#allocation2 + $0x648] sm:$0xff]
    %v342 = vld [vmem:[#allocation2 + $0x650] sm:$0xff]
    %v343 = vld [vmem:[#allocation2 + $0x658] sm:$0xff]
    %v344 = vld [vmem:[#allocation2 + $0x660] sm:$0xff]
    %v345 = vld [vmem:[#allocation2 + $0x668] sm:$0xff]
    %v346 = vld [vmem:[#allocation2 + $0x670] sm:$0xff]
    %v347 = vld [vmem:[#allocation2 + $0x678] sm:$0xff]
    %v348 = vld [vmem:[#allocation2 + $0x680] sm:$0xff]
    %v349 = vld [vmem:[#allocation2 + $0x688] sm:$0xff]
    %v350 = vld [vmem:[#allocation2 + $0x690] sm:$0xff]
    %v351 = vld [vmem:[#allocation2 + $0x698] sm:$0xff]
    %v352 = vld [vmem:[#allocation2 + $0x6a0] sm:$0xff]
    %v353 = vld [vmem:[#allocation2 + $0x6a8] sm:$0xff]
    %v354 = vld [vmem:[#allocation2 + $0x6b0] sm:$0xff]
    %v355 = vld [vmem:[#allocation2 + $0x6b8] sm:$0xff]
    %v356 = vld [vmem:[#allocation2 + $0x6c0] sm:$0xff]
    %v357 = vld [vmem:[#allocation2 + $0x6c8] sm:$0xff]
    %v358 = vld [vmem:[#allocation2 + $0x6d0] sm:$0xff]
    %v359 = vld [vmem:[#allocation2 + $0x6d8] sm:$0xff]
    %v360 = vld [vmem:[#allocation2 + $0x6e0] sm:$0xff]
    %v361 = vld [vmem:[#allocation2 + $0x6e8] sm:$0xff]
    %v362 = vld [vmem:[#allocation2 + $0x6f0] sm:$0xff]
    %v363 = vld [vmem:[#allocation2 + $0x6f8] sm:$0xff]
    %v364 = vld [vmem:[#allocation2 + $0x700] sm:$0xff]
    %v365 = vld [vmem:[#allocation2 + $0x708] sm:$0xff]
    %v366 = vld [vmem:[#allocation2 + $0x710] sm:$0xff]
    %v367 = vld [vmem:[#allocation2 + $0x718] sm:$0xff]
    %v368 = vld [vmem:[#allocation2 + $0x720] sm:$0xff]
    %v369 = vld [vmem:[#allocation2 + $0x728] sm:$0xff]
    %v370 = vld [vmem:[#allocation2 + $0x730] sm:$0xff]
    %v371 = vld [vmem:[#allocation2 + $0x738] sm:$0xff]
    %v372 = vld [vmem:[#allocation2 + $0x740] sm:$0xff]
    %v373 = vld [vmem:[#allocation2 + $0x748] sm:$0xff]
    %v374 = vld [vmem:[#allocation2 + $0x750] sm:$0xff]
    %v375 = vld [vmem:[#allocation2 + $0x758] sm:$0xff]
    %v376 = vld [vmem:[#allocation2 + $0x760] sm:$0xff]
    %v377 = vld [vmem:[#allocation2 + $0x768] sm:$0xff]
    %v378 = vld [vmem:[#allocation2 + $0x770] sm:$0xff]
    %v379 = vld [vmem:[#allocation2 + $0x778] sm:$0xff]
    %v380 = vld [vmem:[#allocation2 + $0x780] sm:$0xff]
    %v381 = vld [vmem:[#allocation2 + $0x788] sm:$0xff]
    %v382 = vld [vmem:[#allocation2 + $0x790] sm:$0xff]
    %v383 = vld [vmem:[#allocation2 + $0x798] sm:$0xff]
    %v384 = vld [vmem:[#allocation2 + $0x7a0] sm:$0xff]
    %v385 = vld [vmem:[#allocation2 + $0x7a8] sm:$0xff]
    %v386 = vld [vmem:[#allocation2 + $0x7b0] sm:$0xff]
    %v387 = vld [vmem:[#allocation2 + $0x7b8] sm:$0xff]
    %v388 = vld [vmem:[#allocation2 + $0x7c0] sm:$0xff]
    %v389 = vld [vmem:[#allocation2 + $0x7c8] sm:$0xff]
    %v390 = vld [vmem:[#allocation2 + $0x7d0] sm:$0xff]
    %v391 = vld [vmem:[#allocation2 + $0x7d8] sm:$0xff]
    %v392 = vld [vmem:[#allocation2 + $0x7e0] sm:$0xff]
    %v393 = vld [vmem:[#allocation2 + $0x7e8] sm:$0xff]
    %v394 = vld [vmem:[#allocation2 + $0x7f0] sm:$0xff]
    %v395 = vld [vmem:[#allocation2 + $0x7f8] sm:$0xff]
    %v396 = vld [vmem:[#allocation2 + $0x800] sm:$0xff]
    %v397 = vld [vmem:[#allocation2 + $0x808] sm:$0xff]
    %v398 = vld [vmem:[#allocation2 + $0x810] sm:$0xff]
    %v399 = vld [vmem:[#allocation2 + $0x818] sm:$0xff]
    %v400 = vld [vmem:[#allocation2 + $0x820] sm:$0xff]
    %v401 = vld [vmem:[#allocation2 + $0x828] sm:$0xff]
    %v402 = vld [vmem:[#allocation2 + $0x830] sm:$0xff]
    %v403 = vld [vmem:[#allocation2 + $0x838] sm:$0xff]
    %v404 = vld [vmem:[#allocation2 + $0x840] sm:$0xff]
    %v405 = vld [vmem:[#allocation2 + $0x848] sm:$0xff]
    %v406 = vld [vmem:[#allocation2 + $0x850] sm:$0xff]
    %v407 = vld [vmem:[#allocation2 + $0x858] sm:$0xff]
    %v408 = vld [vmem:[#allocation2 + $0x860] sm:$0xff]
    %v409 = vld [vmem:[#allocation2 + $0x868] sm:$0xff]
    %v410 = vld [vmem:[#allocation2 + $0x870] sm:$0xff]
    %v411 = vld [vmem:[#allocation2 + $0x878] sm:$0xff]
    %v412 = vld [vmem:[#allocation2 + $0x880] sm:$0xff]
    %v413 = vld [vmem:[#allocation2 + $0x888] sm:$0xff]
    %v414 = vld [vmem:[#allocation2 + $0x890] sm:$0xff]
    %v415 = vld [vmem:[#allocation2 + $0x898] sm:$0xff]
    %v416 = vld [vmem:[#allocation2 + $0x8a0] sm:$0xff]
    %v417 = vld [vmem:[#allocation2 + $0x8a8] sm:$0xff]
    %v418 = vld [vmem:[#allocation2 + $0x8b0] sm:$0xff]
    %v419 = vld [vmem:[#allocation2 + $0x8b8] sm:$0xff]
    %v420 = vld [vmem:[#allocation2 + $0x8c0] sm:$0xff]
    %v421 = vld [vmem:[#allocation2 + $0x8c8] sm:$0xff]
    %v422 = vld [vmem:[#allocation2 + $0x8d0] sm:$0xff]
    %v423 = vld [vmem:[#allocation2 + $0x8d8] sm:$0xff]
    %v424 = vld [vmem:[#allocation2 + $0x8e0] sm:$0xff]
    %v425 = vld [vmem:[#allocation2 + $0x8e8] sm:$0xff]
    %v426 = vld [vmem:[#allocation2 + $0x8f0] sm:$0xff]
    %v427 = vld [vmem:[#allocation2 + $0x8f8] sm:$0xff]
    %v428 = vld [vmem:[#allocation2 + $0x900] sm:$0xff]
    %v429 = vld [vmem:[#allocation2 + $0x908] sm:$0xff]
    %v430 = vld [vmem:[#allocation2 + $0x910] sm:$0xff]
    %v431 = vld [vmem:[#allocation2 + $0x918] sm:$0xff]
    %v432 = vld [vmem:[#allocation2 + $0x920] sm:$0xff]
    %v433 = vld [vmem:[#allocation2 + $0x928] sm:$0xff]
    %v434 = vld [vmem:[#allocation2 + $0x930] sm:$0xff]
    %v435 = vld [vmem:[#allocation2 + $0x938] sm:$0xff]
    %v436 = vld [vmem:[#allocation2 + $0x940] sm:$0xff]
    %v437 = vld [vmem:[#allocation2 + $0x948] sm:$0xff]
    %v438 = vld [vmem:[#allocation2 + $0x950] sm:$0xff]
    %v439 = vld [vmem:[#allocation2 + $0x958] sm:$0xff]
    %v440 = vld [vmem:[#allocation2 + $0x960] sm:$0xff]
    %v441 = vld [vmem:[#allocation2 + $0x968] sm:$0xff]
    %v442 = vld [vmem:[#allocation2 + $0x970] sm:$0xff]
    %v443 = vld [vmem:[#allocation2 + $0x978] sm:$0xff]
    %v444 = vld [vmem:[#allocation2 + $0x980] sm:$0xff]
    %v445 = vld [vmem:[#allocation2 + $0x988] sm:$0xff]
    %v446 = vld [vmem:[#allocation2 + $0x990] sm:$0xff]
    %v447 = vld [vmem:[#allocation2 + $0x998] sm:$0xff]
    %v448 = vld [vmem:[#allocation2 + $0x9a0] sm:$0xff]
    %v449 = vld [vmem:[#allocation2 + $0x9a8] sm:$0xff]
    %v450 = vld [vmem:[#allocation2 + $0x9b0] sm:$0xff]
    %v451 = vld [vmem:[#allocation2 + $0x9b8] sm:$0xff]
    %v452 = vld [vmem:[#allocation2 + $0x9c0] sm:$0xff]
    %v453 = vld [vmem:[#allocation2 + $0x9c8] sm:$0xff]
    %v454 = vld [vmem:[#allocation2 + $0x9d0] sm:$0xff]
    %v455 = vld [vmem:[#allocation2 + $0x9d8] sm:$0xff]
    %v456 = vld [vmem:[#allocation2 + $0x9e0] sm:$0xff]
    %v457 = vld [vmem:[#allocation2 + $0x9e8] sm:$0xff]
    %v458 = vld [vmem:[#allocation2 + $0x9f0] sm:$0xff]
    %v459 = vld [vmem:[#allocation2 + $0x9f8] sm:$0xff]
    %v460 = vld [vmem:[#allocation2 + $0xa00] sm:$0xff]
    %v461 = vld [vmem:[#allocation2 + $0xa08] sm:$0xff]
    %v462 = vld [vmem:[#allocation2 + $0xa10] sm:$0xff]
    %v463 = vld [vmem:[#allocation2 + $0xa18] sm:$0xff]
    %v464 = vld [vmem:[#allocation2 + $0xa20] sm:$0xff]
    %v465 = vld [vmem:[#allocation2 + $0xa28] sm:$0xff]
    %v466 = vld [vmem:[#allocation2 + $0xa30] sm:$0xff]
    %v467 = vld [vmem:[#allocation2 + $0xa38] sm:$0xff]
    %v468 = vld [vmem:[#allocation2 + $0xa40] sm:$0xff]
    %v469 = vld [vmem:[#allocation2 + $0xa48] sm:$0xff]
    %v470 = vld [vmem:[#allocation2 + $0xa50] sm:$0xff]
    %v471 = vld [vmem:[#allocation2 + $0xa58] sm:$0xff]
    %v472 = vld [vmem:[#allocation2 + $0xa60] sm:$0xff]
    %v473 = vld [vmem:[#allocation2 + $0xa68] sm:$0xff]
    %v474 = vld [vmem:[#allocation2 + $0xa70] sm:$0xff]
    %v475 = vld [vmem:[#allocation2 + $0xa78] sm:$0xff]
    %v476 = vld [vmem:[#allocation2 + $0xa80] sm:$0xff]
    %v477 = vld [vmem:[#allocation2 + $0xa88] sm:$0xff]
    %v478 = vld [vmem:[#allocation2 + $0xa90] sm:$0xff]
    %v479 = vld [vmem:[#allocation2 + $0xa98] sm:$0xff]
    %v480 = vld [vmem:[#allocation2 + $0xaa0] sm:$0xff]
    %v481 = vld [vmem:[#allocation2 + $0xaa8] sm:$0xff]
    %v482 = vld [vmem:[#allocation2 + $0xab0] sm:$0xff]
    %v483 = vld [vmem:[#allocation2 + $0xab8] sm:$0xff]
    %v484 = vld [vmem:[#allocation2 + $0xac0] sm:$0xff]
    %v485 = vld [vmem:[#allocation2 + $0xac8] sm:$0xff]
    %v486 = vld [vmem:[#allocation2 + $0xad0] sm:$0xff]
    %v487 = vld [vmem:[#allocation2 + $0xad8] sm:$0xff]
    %v488 = vld [vmem:[#allocation2 + $0xae0] sm:$0xff]
    %v489 = vld [vmem:[#allocation2 + $0xae8] sm:$0xff]
    %v490 = vld [vmem:[#allocation2 + $0xaf0] sm:$0xff]
    %v491 = vld [vmem:[#allocation2 + $0xaf8] sm:$0xff]
    %v492 = vld [vmem:[#allocation2 + $0xb00] sm:$0xff]
    %v493 = vld [vmem:[#allocation2 + $0xb08] sm:$0xff]
    %v494 = vld [vmem:[#allocation2 + $0xb10] sm:$0xff]
    %v495 = vld [vmem:[#allocation2 + $0xb18] sm:$0xff]
    %v496 = vld [vmem:[#allocation2 + $0xb20] sm:$0xff]
    %v497 = vld [vmem:[#allocation2 + $0xb28] sm:$0xff]
    %v498 = vld [vmem:[#allocation2 + $0xb30] sm:$0xff]
    %v499 = vld [vmem:[#allocation2 + $0xb38] sm:$0xff]
    %v500 = vld [vmem:[#allocation2 + $0xb40] sm:$0xff]
    %v501 = vld [vmem:[#allocation2 + $0xb48] sm:$0xff]
    %v502 = vld [vmem:[#allocation2 + $0xb50] sm:$0xff]
    %v503 = vld [vmem:[#allocation2 + $0xb58] sm:$0xff]
    %v504 = vld [vmem:[#allocation2 + $0xb60] sm:$0xff]
    %v505 = vld [vmem:[#allocation2 + $0xb68] sm:$0xff]
    %v506 = vld [vmem:[#allocation2 + $0xb70] sm:$0xff]
    %v507 = vld [vmem:[#allocation2 + $0xb78] sm:$0xff]
    %v508 = vld [vmem:[#allocation2 + $0xb80] sm:$0xff]
    %v509 = vld [vmem:[#allocation2 + $0xb88] sm:$0xff]
    %v510 = vld [vmem:[#allocation2 + $0xb90] sm:$0xff]
    %v511 = vld [vmem:[#allocation2 + $0xb98] sm:$0xff]
    %v512 = vld [vmem:[#allocation2 + $0xba0] sm:$0xff]
    %v513 = vld [vmem:[#allocation2 + $0xba8] sm:$0xff]
    %v514 = vld [vmem:[#allocation2 + $0xbb0] sm:$0xff]
    %v515 = vld [vmem:[#allocation2 + $0xbb8] sm:$0xff]
    %v516 = vld [vmem:[#allocation2 + $0xbc0] sm:$0xff]
    %v517 = vld [vmem:[#allocation2 + $0xbc8] sm:$0xff]
    %v518 = vld [vmem:[#allocation2 + $0xbd0] sm:$0xff]
    %v519 = vld [vmem:[#allocation2 + $0xbd8] sm:$0xff]
    %v520 = vld [vmem:[#allocation2 + $0xbe0] sm:$0xff]
    %v521 = vld [vmem:[#allocation2 + $0xbe8] sm:$0xff]
    %v522 = vld [vmem:[#allocation2 + $0xbf0] sm:$0xff]
    %v523 = vld [vmem:[#allocation2 + $0xbf8] sm:$0xff]
    %v524 = vld [vmem:[#allocation2 + $0xc00] sm:$0xff]
    %v525 = vld [vmem:[#allocation2 + $0xc08] sm:$0xff]
    %v526 = vld [vmem:[#allocation2 + $0xc10] sm:$0xff]
    %v527 = vld [vmem:[#allocation2 + $0xc18] sm:$0xff]
    %v528 = vld [vmem:[#allocation2 + $0xc20] sm:$0xff]
    %v529 = vld [vmem:[#allocation2 + $0xc28] sm:$0xff]
    %v530 = vld [vmem:[#allocation2 + $0xc30] sm:$0xff]
    %v531 = vld [vmem:[#allocation2 + $0xc38] sm:$0xff]
    %v532 = vld [vmem:[#allocation2 + $0xc40] sm:$0xff]
    %v533 = vld [vmem:[#allocation2 + $0xc48] sm:$0xff]
    %v534 = vld [vmem:[#allocation2 + $0xc50] sm:$0xff]
    %v535 = vld [vmem:[#allocation2 + $0xc58] sm:$0xff]
    %v536 = vld [vmem:[#allocation2 + $0xc60] sm:$0xff]
    %v537 = vld [vmem:[#allocation2 + $0xc68] sm:$0xff]
    %v538 = vld [vmem:[#allocation2 + $0xc70] sm:$0xff]
    %v539 = vld [vmem:[#allocation2 + $0xc78] sm:$0xff]
    %v540 = vld [vmem:[#allocation2 + $0xc80] sm:$0xff]
    %v541 = vld [vmem:[#allocation2 + $0xc88] sm:$0xff]
    %v542 = vld [vmem:[#allocation2 + $0xc90] sm:$0xff]
    %v543 = vld [vmem:[#allocation2 + $0xc98] sm:$0xff]
    %v544 = vld [vmem:[#allocation2 + $0xca0] sm:$0xff]
    %v545 = vld [vmem:[#allocation2 + $0xca8] sm:$0xff]
    %v546 = vld [vmem:[#allocation2 + $0xcb0] sm:$0xff]
    %v547 = vld [vmem:[#allocation2 + $0xcb8] sm:$0xff]
    %v548 = vld [vmem:[#allocation2 + $0xcc0] sm:$0xff]
    %v549 = vld [vmem:[#allocation2 + $0xcc8] sm:$0xff]
    %v550 = vld [vmem:[#allocation2 + $0xcd0] sm:$0xff]
    %v551 = vld [vmem:[#allocation2 + $0xcd8] sm:$0xff]
    %v552 = vld [vmem:[#allocation2 + $0xce0] sm:$0xff]
    %v553 = vld [vmem:[#allocation2 + $0xce8] sm:$0xff]
    %v554 = vld [vmem:[#allocation2 + $0xcf0] sm:$0xff]
    %v555 = vld [vmem:[#allocation2 + $0xcf8] sm:$0xff]
    %v556 = vld [vmem:[#allocation2 + $0xd00] sm:$0xff]
    %v557 = vld [vmem:[#allocation2 + $0xd08] sm:$0xff]
    %v558 = vld [vmem:[#allocation2 + $0xd10] sm:$0xff]
    %v559 = vld [vmem:[#allocation2 + $0xd18] sm:$0xff]
    %v560 = vld [vmem:[#allocation2 + $0xd20] sm:$0xff]
    %v561 = vld [vmem:[#allocation2 + $0xd28] sm:$0xff]
    %v562 = vld [vmem:[#allocation2 + $0xd30] sm:$0xff]
    %v563 = vld [vmem:[#allocation2 + $0xd38] sm:$0xff]
    %v564 = vld [vmem:[#allocation2 + $0xd40] sm:$0xff]
    %v565 = vld [vmem:[#allocation2 + $0xd48] sm:$0xff]
    %v566 = vld [vmem:[#allocation2 + $0xd50] sm:$0xff]
    %v567 = vld [vmem:[#allocation2 + $0xd58] sm:$0xff]
    %v568 = vld [vmem:[#allocation2 + $0xd60] sm:$0xff]
    %v569 = vld [vmem:[#allocation2 + $0xd68] sm:$0xff]
    %v570 = vld [vmem:[#allocation2 + $0xd70] sm:$0xff]
    %v571 = vld [vmem:[#allocation2 + $0xd78] sm:$0xff]
    %v572 = vld [vmem:[#allocation2 + $0xd80] sm:$0xff]
    %v573 = vld [vmem:[#allocation2 + $0xd88] sm:$0xff]
    %v574 = vld [vmem:[#allocation2 + $0xd90] sm:$0xff]
    %v575 = vld [vmem:[#allocation2 + $0xd98] sm:$0xff]
    %v576 = vld [vmem:[#allocation2 + $0xda0] sm:$0xff]
    %v577 = vld [vmem:[#allocation2 + $0xda8] sm:$0xff]
    %v578 = vld [vmem:[#allocation2 + $0xdb0] sm:$0xff]
    %v579 = vld [vmem:[#allocation2 + $0xdb8] sm:$0xff]
    %v580 = vld [vmem:[#allocation2 + $0xdc0] sm:$0xff]
    %v581 = vld [vmem:[#allocation2 + $0xdc8] sm:$0xff]
    %v582 = vld [vmem:[#allocation2 + $0xdd0] sm:$0xff]
    %v583 = vld [vmem:[#allocation2 + $0xdd8] sm:$0xff]
    %v584 = vld [vmem:[#allocation2 + $0xde0] sm:$0xff]
    %v585 = vld [vmem:[#allocation2 + $0xde8] sm:$0xff]
    %v586 = vld [vmem:[#allocation2 + $0xdf0] sm:$0xff]
    %v587 = vld [vmem:[#allocation2 + $0xdf8] sm:$0xff]
    %v588 = vld [vmem:[#allocation2 + $0xe00] sm:$0xff]
    %v589 = vld [vmem:[#allocation2 + $0xe08] sm:$0xff]
    %v590 = vld [vmem:[#allocation2 + $0xe10] sm:$0xff]
    %v591 = vld [vmem:[#allocation2 + $0xe18] sm:$0xff]
    %v592 = vld [vmem:[#allocation2 + $0xe20] sm:$0xff]
    %v593 = vld [vmem:[#allocation2 + $0xe28] sm:$0xff]
    %v594 = vld [vmem:[#allocation2 + $0xe30] sm:$0xff]
    %v595 = vld [vmem:[#allocation2 + $0xe38] sm:$0xff]
    %v596 = vld [vmem:[#allocation2 + $0xe40] sm:$0xff]
    %v597 = vld [vmem:[#allocation2 + $0xe48] sm:$0xff]
    %v598 = vld [vmem:[#allocation2 + $0xe50] sm:$0xff]
    %v599 = vld [vmem:[#allocation2 + $0xe58] sm:$0xff]
    %v600 = vld [vmem:[#allocation2 + $0xe60] sm:$0xff]
    %v601 = vld [vmem:[#allocation2 + $0xe68] sm:$0xff]
    %v602 = vld [vmem:[#allocation2 + $0xe70] sm:$0xff]
    %v603 = vld [vmem:[#allocation2 + $0xe78] sm:$0xff]
    %v604 = vld [vmem:[#allocation2 + $0xe80] sm:$0xff]
    %v605 = vld [vmem:[#allocation2 + $0xe88] sm:$0xff]
    %v606 = vld [vmem:[#allocation2 + $0xe90] sm:$0xff]
    %v607 = vld [vmem:[#allocation2 + $0xe98] sm:$0xff]
    %v608 = vld [vmem:[#allocation2 + $0xea0] sm:$0xff]
    %v609 = vld [vmem:[#allocation2 + $0xea8] sm:$0xff]
    %v610 = vld [vmem:[#allocation2 + $0xeb0] sm:$0xff]
    %v611 = vld [vmem:[#allocation2 + $0xeb8] sm:$0xff]
    %v612 = vld [vmem:[#allocation2 + $0xec0] sm:$0xff]
    %v613 = vld [vmem:[#allocation2 + $0xec8] sm:$0xff]
    %v614 = vld [vmem:[#allocation2 + $0xed0] sm:$0xff]
    %v615 = vld [vmem:[#allocation2 + $0xed8] sm:$0xff]
    %v616 = vld [vmem:[#allocation2 + $0xee0] sm:$0xff]
    %v617 = vld [vmem:[#allocation2 + $0xee8] sm:$0xff]
    %v618 = vld [vmem:[#allocation2 + $0xef0] sm:$0xff]
    %v619 = vld [vmem:[#allocation2 + $0xef8] sm:$0xff]
    %v620 = vld [vmem:[#allocation2 + $0xf00] sm:$0xff]
    %v621 = vld [vmem:[#allocation2 + $0xf08] sm:$0xff]
    %v622 = vld [vmem:[#allocation2 + $0xf10] sm:$0xff]
    %v623 = vld [vmem:[#allocation2 + $0xf18] sm:$0xff]
    %v624 = vld [vmem:[#allocation2 + $0xf20] sm:$0xff]
    %v625 = vld [vmem:[#allocation2 + $0xf28] sm:$0xff]
    %v626 = vld [vmem:[#allocation2 + $0xf30] sm:$0xff]
    %v627 = vld [vmem:[#allocation2 + $0xf38] sm:$0xff]
    %v628 = vld [vmem:[#allocation2 + $0xf40] sm:$0xff]
    %v629 = vld [vmem:[#allocation2 + $0xf48] sm:$0xff]
    %v630 = vld [vmem:[#allocation2 + $0xf50] sm:$0xff]
    %v631 = vld [vmem:[#allocation2 + $0xf58] sm:$0xff]
    %v632 = vld [vmem:[#allocation2 + $0xf60] sm:$0xff]
    %v633 = vld [vmem:[#allocation2 + $0xf68] sm:$0xff]
    %v634 = vld [vmem:[#allocation2 + $0xf70] sm:$0xff]
    %v635 = vld [vmem:[#allocation2 + $0xf78] sm:$0xff]
    %v636 = vld [vmem:[#allocation2 + $0xf80] sm:$0xff]
    %v637 = vld [vmem:[#allocation2 + $0xf88] sm:$0xff]
    %v638 = vld [vmem:[#allocation2 + $0xf90] sm:$0xff]
    %v639 = vld [vmem:[#allocation2 + $0xf98] sm:$0xff]
    %v640 = vld [vmem:[#allocation2 + $0xfa0] sm:$0xff]
    %v641 = vld [vmem:[#allocation2 + $0xfa8] sm:$0xff]
    %v642 = vld [vmem:[#allocation2 + $0xfb0] sm:$0xff]
    %v643 = vld [vmem:[#allocation2 + $0xfb8] sm:$0xff]
    %v644 = vld [vmem:[#allocation2 + $0xfc0] sm:$0xff]
    %v645 = vld [vmem:[#allocation2 + $0xfc8] sm:$0xff]
    %v646 = vld [vmem:[#allocation2 + $0xfd0] sm:$0xff]
    %v647 = vld [vmem:[#allocation2 + $0xfd8] sm:$0xff]
    %v648 = vld [vmem:[#allocation2 + $0xfe0] sm:$0xff]
    %v649 = vld [vmem:[#allocation2 + $0xfe8] sm:$0xff]
    %v650 = vld [vmem:[#allocation2 + $0xff0] sm:$0xff]
    %v651 = vld [vmem:[#allocation2 + $0xff8] sm:$0xff]
    %v652 = vld [vmem:[#allocation2 + $0x1000] sm:$0xff]
    %v653 = vld [vmem:[#allocation2 + $0x1008] sm:$0xff]
    %v654 = vld [vmem:[#allocation2 + $0x1010] sm:$0xff]
    %v655 = vld [vmem:[#allocation2 + $0x1018] sm:$0xff]
    %v656 = vld [vmem:[#allocation2 + $0x1020] sm:$0xff]
    %v657 = vld [vmem:[#allocation2 + $0x1028] sm:$0xff]
    %v658 = vld [vmem:[#allocation2 + $0x1030] sm:$0xff]
    %v659 = vld [vmem:[#allocation2 + $0x1038] sm:$0xff]
    %v660 = vld [vmem:[#allocation2 + $0x1040] sm:$0xff]
    %v661 = vld [vmem:[#allocation2 + $0x1048] sm:$0xff]
    %v662 = vld [vmem:[#allocation2 + $0x1050] sm:$0xff]
    %v663 = vld [vmem:[#allocation2 + $0x1058] sm:$0xff]
    %v664 = vld [vmem:[#allocation2 + $0x1060] sm:$0xff]
    %v665 = vld [vmem:[#allocation2 + $0x1068] sm:$0xff]
    %v666 = vld [vmem:[#allocation2 + $0x1070] sm:$0xff]
    %v667 = vld [vmem:[#allocation2 + $0x1078] sm:$0xff]
    %v668 = vld [vmem:[#allocation2 + $0x1080] sm:$0xff]
    %v669 = vld [vmem:[#allocation2 + $0x1088] sm:$0xff]
    %v670 = vld [vmem:[#allocation2 + $0x1090] sm:$0xff]
    %v671 = vld [vmem:[#allocation2 + $0x1098] sm:$0xff]
    %v672 = vld [vmem:[#allocation2 + $0x10a0] sm:$0xff]
    %v673 = vld [vmem:[#allocation2 + $0x10a8] sm:$0xff]
    %v674 = vld [vmem:[#allocation2 + $0x10b0] sm:$0xff]
    %v675 = vld [vmem:[#allocation2 + $0x10b8] sm:$0xff]
    %v676 = vld [vmem:[#allocation2 + $0x10c0] sm:$0xff]
    %v677 = vld [vmem:[#allocation2 + $0x10c8] sm:$0xff]
    %v678 = vld [vmem:[#allocation2 + $0x10d0] sm:$0xff]
    %v679 = vld [vmem:[#allocation2 + $0x10d8] sm:$0xff]
    %v680 = vld [vmem:[#allocation2 + $0x10e0] sm:$0xff]
    %v681 = vld [vmem:[#allocation2 + $0x10e8] sm:$0xff]
    %v682 = vld [vmem:[#allocation2 + $0x10f0] sm:$0xff]
    %v683 = vld [vmem:[#allocation2 + $0x10f8] sm:$0xff]
    %v684 = vld [vmem:[#allocation2 + $0x1100] sm:$0xff]
    %v685 = vld [vmem:[#allocation2 + $0x1108] sm:$0xff]
    %v686 = vld [vmem:[#allocation2 + $0x1110] sm:$0xff]
    %v687 = vld [vmem:[#allocation2 + $0x1118] sm:$0xff]
    %v688 = vld [vmem:[#allocation2 + $0x1120] sm:$0xff]
    %v689 = vld [vmem:[#allocation2 + $0x1128] sm:$0xff]
    %v690 = vld [vmem:[#allocation2 + $0x1130] sm:$0xff]
    %v691 = vld [vmem:[#allocation2 + $0x1138] sm:$0xff]
    %v692 = vld [vmem:[#allocation2 + $0x1140] sm:$0xff]
    %v693 = vld [vmem:[#allocation2 + $0x1148] sm:$0xff]
    %v694 = vld [vmem:[#allocation2 + $0x1150] sm:$0xff]
    %v695 = vld [vmem:[#allocation2 + $0x1158] sm:$0xff]
    %v696 = vld [vmem:[#allocation2 + $0x1160] sm:$0xff]
    %v697 = vld [vmem:[#allocation2 + $0x1168] sm:$0xff]
    %v698 = vld [vmem:[#allocation2 + $0x1170] sm:$0xff]
    %v699 = vld [vmem:[#allocation2 + $0x1178] sm:$0xff]
    %v700 = vld [vmem:[#allocation2 + $0x1180] sm:$0xff]
    %v701 = vld [vmem:[#allocation2 + $0x1188] sm:$0xff]
    %v702 = vld [vmem:[#allocation2 + $0x1190] sm:$0xff]
    %v703 = vld [vmem:[#allocation2 + $0x1198] sm:$0xff]
    %v704 = vld [vmem:[#allocation2 + $0x11a0] sm:$0xff]
    %v705 = vld [vmem:[#allocation2 + $0x11a8] sm:$0xff]
    %v706 = vld [vmem:[#allocation2 + $0x11b0] sm:$0xff]
    %v707 = vld [vmem:[#allocation2 + $0x11b8] sm:$0xff]
    %v708 = vld [vmem:[#allocation2 + $0x11c0] sm:$0xff]
    %v709 = vld [vmem:[#allocation2 + $0x11c8] sm:$0xff]
    %v710 = vld [vmem:[#allocation2 + $0x11d0] sm:$0xff]
    %v711 = vld [vmem:[#allocation2 + $0x11d8] sm:$0xff]
    %v712 = vld [vmem:[#allocation2 + $0x11e0] sm:$0xff]
    %v713 = vld [vmem:[#allocation2 + $0x11e8] sm:$0xff]
    %v714 = vld [vmem:[#allocation2 + $0x11f0] sm:$0xff]
    %v715 = vld [vmem:[#allocation2 + $0x11f8] sm:$0xff]
    %v716 = vld [vmem:[#allocation2 + $0x1200] sm:$0xff]
    %v717 = vld [vmem:[#allocation2 + $0x1208] sm:$0xff]
    %v718 = vld [vmem:[#allocation2 + $0x1210] sm:$0xff]
    %v719 = vld [vmem:[#allocation2 + $0x1218] sm:$0xff]
    %v720 = vld [vmem:[#allocation2 + $0x1220] sm:$0xff]
    %v721 = vld [vmem:[#allocation2 + $0x1228] sm:$0xff]
    %v722 = vld [vmem:[#allocation2 + $0x1230] sm:$0xff]
    %v723 = vld [vmem:[#allocation2 + $0x1238] sm:$0xff]
    %v724 = vld [vmem:[#allocation2 + $0x1240] sm:$0xff]
    %v725 = vld [vmem:[#allocation2 + $0x1248] sm:$0xff]
    %v726 = vld [vmem:[#allocation2 + $0x1250] sm:$0xff]
    %v727 = vld [vmem:[#allocation2 + $0x1258] sm:$0xff]
    %v728 = vld [vmem:[#allocation2 + $0x1260] sm:$0xff]
    %v729 = vld [vmem:[#allocation2 + $0x1268] sm:$0xff]
    %v730 = vld [vmem:[#allocation2 + $0x1270] sm:$0xff]
    %v731 = vld [vmem:[#allocation2 + $0x1278] sm:$0xff]
    %v732 = vld [vmem:[#allocation2 + $0x1280] sm:$0xff]
    %v733 = vld [vmem:[#allocation2 + $0x1288] sm:$0xff]
    %v734 = vld [vmem:[#allocation2 + $0x1290] sm:$0xff]
    %v735 = vld [vmem:[#allocation2 + $0x1298] sm:$0xff]
    %v736 = vld [vmem:[#allocation2 + $0x12a0] sm:$0xff]
    %v737 = vld [vmem:[#allocation2 + $0x12a8] sm:$0xff]
    %v738 = vld [vmem:[#allocation2 + $0x12b0] sm:$0xff]
    %v739 = vld [vmem:[#allocation2 + $0x12b8] sm:$0xff]
    %v740 = vld [vmem:[#allocation2 + $0x12c0] sm:$0xff]
    %v741 = vld [vmem:[#allocation2 + $0x12c8] sm:$0xff]
    %v742 = vld [vmem:[#allocation2 + $0x12d0] sm:$0xff]
    %v743 = vld [vmem:[#allocation2 + $0x12d8] sm:$0xff]
    %v744 = vld [vmem:[#allocation2 + $0x12e0] sm:$0xff]
    %v745 = vld [vmem:[#allocation2 + $0x12e8] sm:$0xff]
    %v746 = vld [vmem:[#allocation2 + $0x12f0] sm:$0xff]
    %v747 = vld [vmem:[#allocation2 + $0x12f8] sm:$0xff]
    %v748 = vld [vmem:[#allocation2 + $0x1300] sm:$0xff]
    %v749 = vld [vmem:[#allocation2 + $0x1308] sm:$0xff]
    %v750 = vld [vmem:[#allocation2 + $0x1310] sm:$0xff]
    %v751 = vld [vmem:[#allocation2 + $0x1318] sm:$0xff]
    %v752 = vld [vmem:[#allocation2 + $0x1320] sm:$0xff]
    %v753 = vld [vmem:[#allocation2 + $0x1328] sm:$0xff]
    %v754 = vld [vmem:[#allocation2 + $0x1330] sm:$0xff]
    %v755 = vld [vmem:[#allocation2 + $0x1338] sm:$0xff]
    %v756 = vld [vmem:[#allocation2 + $0x1340] sm:$0xff]
    %v757 = vld [vmem:[#allocation2 + $0x1348] sm:$0xff]
    %v758 = vld [vmem:[#allocation2 + $0x1350] sm:$0xff]
    %v759 = vld [vmem:[#allocation2 + $0x1358] sm:$0xff]
    %v760 = vld [vmem:[#allocation2 + $0x1360] sm:$0xff]
    %v761 = vld [vmem:[#allocation2 + $0x1368] sm:$0xff]
    %v762 = vld [vmem:[#allocation2 + $0x1370] sm:$0xff]
    %v763 = vld [vmem:[#allocation2 + $0x1378] sm:$0xff]
    %v764 = vld [vmem:[#allocation2 + $0x1380] sm:$0xff]
    %v765 = vld [vmem:[#allocation2 + $0x1388] sm:$0xff]
    %v766 = vld [vmem:[#allocation2 + $0x1390] sm:$0xff]
    %v767 = vld [vmem:[#allocation2 + $0x1398] sm:$0xff]
    %v768 = vld [vmem:[#allocation2 + $0x13a0] sm:$0xff]
    %v769 = vld [vmem:[#allocation2 + $0x13a8] sm:$0xff]
    %v770 = vld [vmem:[#allocation2 + $0x13b0] sm:$0xff]
    %v771 = vld [vmem:[#allocation2 + $0x13b8] sm:$0xff]
    %v772 = vld [vmem:[#allocation2 + $0x13c0] sm:$0xff]
    %v773 = vld [vmem:[#allocation2 + $0x13c8] sm:$0xff]
    %v774 = vld [vmem:[#allocation2 + $0x13d0] sm:$0xff]
    %v775 = vld [vmem:[#allocation2 + $0x13d8] sm:$0xff]
    %v776 = vld [vmem:[#allocation2 + $0x13e0] sm:$0xff]
    %v777 = vld [vmem:[#allocation2 + $0x13e8] sm:$0xff]
    %v778 = vld [vmem:[#allocation2 + $0x13f0] sm:$0xff]
    %v779 = vld [vmem:[#allocation2 + $0x13f8] sm:$0xff]
    %v780 = vld [vmem:[#allocation2 + $0x1400] sm:$0xff]
    %v781 = vld [vmem:[#allocation2 + $0x1408] sm:$0xff]
    %v782 = vld [vmem:[#allocation2 + $0x1410] sm:$0xff]
    %v783 = vld [vmem:[#allocation2 + $0x1418] sm:$0xff]
    %v784 = vld [vmem:[#allocation2 + $0x1420] sm:$0xff]
    %v785 = vld [vmem:[#allocation2 + $0x1428] sm:$0xff]
    %v786 = vld [vmem:[#allocation2 + $0x1430] sm:$0xff]
    %v787 = vld [vmem:[#allocation2 + $0x1438] sm:$0xff]
    %v788 = vld [vmem:[#allocation2 + $0x1440] sm:$0xff]
    %v789 = vld [vmem:[#allocation2 + $0x1448] sm:$0xff]
    %v790 = vld [vmem:[#allocation2 + $0x1450] sm:$0xff]
    %v791 = vld [vmem:[#allocation2 + $0x1458] sm:$0xff]
    %v792 = vld [vmem:[#allocation2 + $0x1460] sm:$0xff]
    %v793 = vld [vmem:[#allocation2 + $0x1468] sm:$0xff]
    %v794 = vld [vmem:[#allocation2 + $0x1470] sm:$0xff]
    %v795 = vld [vmem:[#allocation2 + $0x1478] sm:$0xff]
    %v796 = vld [vmem:[#allocation2 + $0x1480] sm:$0xff]
    %v797 = vld [vmem:[#allocation2 + $0x1488] sm:$0xff]
    %v798 = vld [vmem:[#allocation2 + $0x1490] sm:$0xff]
    %v799 = vld [vmem:[#allocation2 + $0x1498] sm:$0xff]
    %v800 = vld [vmem:[#allocation2 + $0x14a0] sm:$0xff]
    %v801 = vld [vmem:[#allocation2 + $0x14a8] sm:$0xff]
    %v802 = vld [vmem:[#allocation2 + $0x14b0] sm:$0xff]
    %v803 = vld [vmem:[#allocation2 + $0x14b8] sm:$0xff]
    %v804 = vld [vmem:[#allocation2 + $0x14c0] sm:$0xff]
    %v805 = vld [vmem:[#allocation2 + $0x14c8] sm:$0xff]
    %v806 = vld [vmem:[#allocation2 + $0x14d0] sm:$0xff]
    %v807 = vld [vmem:[#allocation2 + $0x14d8] sm:$0xff]
    %v808 = vld [vmem:[#allocation2 + $0x14e0] sm:$0xff]
    %v809 = vld [vmem:[#allocation2 + $0x14e8] sm:$0xff]
    %v810 = vld [vmem:[#allocation2 + $0x14f0] sm:$0xff]
    %v811 = vld [vmem:[#allocation2 + $0x14f8] sm:$0xff]
    %v812 = vld [vmem:[#allocation2 + $0x1500] sm:$0xff]
    %v813 = vld [vmem:[#allocation2 + $0x1508] sm:$0xff]
    %v814 = vld [vmem:[#allocation2 + $0x1510] sm:$0xff]
    %v815 = vld [vmem:[#allocation2 + $0x1518] sm:$0xff]
    %v816 = vld [vmem:[#allocation2 + $0x1520] sm:$0xff]
    %v817 = vld [vmem:[#allocation2 + $0x1528] sm:$0xff]
    %v818 = vld [vmem:[#allocation2 + $0x1530] sm:$0xff]
    %v819 = vld [vmem:[#allocation2 + $0x1538] sm:$0xff]
    %v820 = vld [vmem:[#allocation2 + $0x1540] sm:$0xff]
    %v821 = vld [vmem:[#allocation2 + $0x1548] sm:$0xff]
    %v822 = vld [vmem:[#allocation2 + $0x1550] sm:$0xff]
    %v823 = vld [vmem:[#allocation2 + $0x1558] sm:$0xff]
    %v824 = vld [vmem:[#allocation2 + $0x1560] sm:$0xff]
    %v825 = vld [vmem:[#allocation2 + $0x1568] sm:$0xff]
    %v826 = vld [vmem:[#allocation2 + $0x1570] sm:$0xff]
    %v827 = vld [vmem:[#allocation2 + $0x1578] sm:$0xff]
    %v828 = vld [vmem:[#allocation2 + $0x1580] sm:$0xff]
    %v829 = vld [vmem:[#allocation2 + $0x1588] sm:$0xff]
    %v830 = vld [vmem:[#allocation2 + $0x1590] sm:$0xff]
    %v831 = vld [vmem:[#allocation2 + $0x1598] sm:$0xff]
    %v832 = vld [vmem:[#allocation2 + $0x15a0] sm:$0xff]
    %v833 = vld [vmem:[#allocation2 + $0x15a8] sm:$0xff]
    %v834 = vld [vmem:[#allocation2 + $0x15b0] sm:$0xff]
    %v835 = vld [vmem:[#allocation2 + $0x15b8] sm:$0xff]
    %v836 = vld [vmem:[#allocation2 + $0x15c0] sm:$0xff]
    %v837 = vld [vmem:[#allocation2 + $0x15c8] sm:$0xff]
    %v838 = vld [vmem:[#allocation2 + $0x15d0] sm:$0xff]
    %v839 = vld [vmem:[#allocation2 + $0x15d8] sm:$0xff]
    %v840 = vld [vmem:[#allocation2 + $0x15e0] sm:$0xff]
    %v841 = vld [vmem:[#allocation2 + $0x15e8] sm:$0xff]
    %v842 = vld [vmem:[#allocation2 + $0x15f0] sm:$0xff]
    %v843 = vld [vmem:[#allocation2 + $0x15f8] sm:$0xff]
    %v844 = vld [vmem:[#allocation2 + $0x1600] sm:$0xff]
    %v845 = vld [vmem:[#allocation2 + $0x1608] sm:$0xff]
    %v846 = vld [vmem:[#allocation2 + $0x1610] sm:$0xff]
    %v847 = vld [vmem:[#allocation2 + $0x1618] sm:$0xff]
    %v848 = vld [vmem:[#allocation2 + $0x1620] sm:$0xff]
    %v849 = vld [vmem:[#allocation2 + $0x1628] sm:$0xff]
    %v850 = vld [vmem:[#allocation2 + $0x1630] sm:$0xff]
    %v851 = vld [vmem:[#allocation2 + $0x1638] sm:$0xff]
    %v852 = vld [vmem:[#allocation2 + $0x1640] sm:$0xff]
    %v853 = vld [vmem:[#allocation2 + $0x1648] sm:$0xff]
    %v854 = vld [vmem:[#allocation2 + $0x1650] sm:$0xff]
    %v855 = vld [vmem:[#allocation2 + $0x1658] sm:$0xff]
    %v856 = vld [vmem:[#allocation2 + $0x1660] sm:$0xff]
    %v857 = vld [vmem:[#allocation2 + $0x1668] sm:$0xff]
    %v858 = vld [vmem:[#allocation2 + $0x1670] sm:$0xff]
    %v859 = vld [vmem:[#allocation2 + $0x1678] sm:$0xff]
    %v860 = vld [vmem:[#allocation2 + $0x1680] sm:$0xff]
    %v861 = vld [vmem:[#allocation2 + $0x1688] sm:$0xff]
    %v862 = vld [vmem:[#allocation2 + $0x1690] sm:$0xff]
    %v863 = vld [vmem:[#allocation2 + $0x1698] sm:$0xff]
    %v864 = vld [vmem:[#allocation2 + $0x16a0] sm:$0xff]
    %v865 = vld [vmem:[#allocation2 + $0x16a8] sm:$0xff]
    %v866 = vld [vmem:[#allocation2 + $0x16b0] sm:$0xff]
    %v867 = vld [vmem:[#allocation2 + $0x16b8] sm:$0xff]
    %v868 = vld [vmem:[#allocation2 + $0x16c0] sm:$0xff]
    %v869 = vld [vmem:[#allocation2 + $0x16c8] sm:$0xff]
    %v870 = vld [vmem:[#allocation2 + $0x16d0] sm:$0xff]
    %v871 = vld [vmem:[#allocation2 + $0x16d8] sm:$0xff]
    %v872 = vld [vmem:[#allocation2 + $0x16e0] sm:$0xff]
    %v873 = vld [vmem:[#allocation2 + $0x16e8] sm:$0xff]
    %v874 = vld [vmem:[#allocation2 + $0x16f0] sm:$0xff]
    %v875 = vld [vmem:[#allocation2 + $0x16f8] sm:$0xff]
    %v876 = vld [vmem:[#allocation2 + $0x1700] sm:$0xff]
    %v877 = vld [vmem:[#allocation2 + $0x1708] sm:$0xff]
    %v878 = vld [vmem:[#allocation2 + $0x1710] sm:$0xff]
    %v879 = vld [vmem:[#allocation2 + $0x1718] sm:$0xff]
    %v880 = vld [vmem:[#allocation2 + $0x1720] sm:$0xff]
    %v881 = vld [vmem:[#allocation2 + $0x1728] sm:$0xff]
    %v882 = vld [vmem:[#allocation2 + $0x1730] sm:$0xff]
    %v883 = vld [vmem:[#allocation2 + $0x1738] sm:$0xff]
    %v884 = vld [vmem:[#allocation2 + $0x1740] sm:$0xff]
    %v885 = vld [vmem:[#allocation2 + $0x1748] sm:$0xff]
    %v886 = vld [vmem:[#allocation2 + $0x1750] sm:$0xff]
    %v887 = vld [vmem:[#allocation2 + $0x1758] sm:$0xff]
    %v888 = vld [vmem:[#allocation2 + $0x1760] sm:$0xff]
    %v889 = vld [vmem:[#allocation2 + $0x1768] sm:$0xff]
    %v890 = vld [vmem:[#allocation2 + $0x1770] sm:$0xff]
    %v891 = vld [vmem:[#allocation2 + $0x1778] sm:$0xff]
    %v892 = vld [vmem:[#allocation2 + $0x1780] sm:$0xff]
    %v893 = vld [vmem:[#allocation2 + $0x1788] sm:$0xff]
    %v894 = vld [vmem:[#allocation2 + $0x1790] sm:$0xff]
    %v895 = vld [vmem:[#allocation2 + $0x1798] sm:$0xff]
    %v896 = vld [vmem:[#allocation2 + $0x17a0] sm:$0xff]
    %v897 = vld [vmem:[#allocation2 + $0x17a8] sm:$0xff]
    %v898 = vld [vmem:[#allocation2 + $0x17b0] sm:$0xff]
    %v899 = vld [vmem:[#allocation2 + $0x17b8] sm:$0xff]
    %v900 = vld [vmem:[#allocation2 + $0x17c0] sm:$0xff]
    %v901 = vld [vmem:[#allocation2 + $0x17c8] sm:$0xff]
    %v902 = vld [vmem:[#allocation2 + $0x17d0] sm:$0xff]
    %v903 = vld [vmem:[#allocation2 + $0x17d8] sm:$0xff]
    %v904 = vld [vmem:[#allocation2 + $0x17e0] sm:$0xff]
    %v905 = vld [vmem:[#allocation2 + $0x17e8] sm:$0xff]
    %v906 = vld [vmem:[#allocation2 + $0x17f0] sm:$0xff]
    %v907 = vld [vmem:[#allocation2 + $0x17f8] sm:$0xff]
    %v914 = vunpack.c.l.b16 %v134
    %v915 = vunpack.c.h.b16 %v134
    %v916 = vunpack.c.l.b16 %v135
    %v917 = vunpack.c.h.b16 %v135
    %v918 = vunpack.c.l.b16 %v136
    %v919 = vunpack.c.h.b16 %v136
    %v920 = vunpack.c.l.b16 %v137
    %v921 = vunpack.c.h.b16 %v137
    %v922 = vunpack.c.l.b16 %v138
    %v923 = vunpack.c.h.b16 %v138
    %v924 = vunpack.c.l.b16 %v139
    %v925 = vunpack.c.h.b16 %v139
    %v926 = vpack.c.b16 %v920, %v914
    %v927 = vpack.c.b16 %v921, %v915
    %v928 = vpack.c.b16 %v922, %v916
    %v929 = vpack.c.b16 %v923, %v917
    %v930 = vpack.c.b16 %v924, %v918
    %v931 = vpack.c.b16 %v925, %v919
    %v1130 = vunpack.c.l.b16 %v140
    %v1131 = vunpack.c.h.b16 %v140
    %v1132 = vunpack.c.l.b16 %v141
    %v1133 = vunpack.c.h.b16 %v141
    %v1134 = vunpack.c.l.b16 %v148
    %v1135 = vunpack.c.h.b16 %v148
    %v1136 = vunpack.c.l.b16 %v149
    %v1137 = vunpack.c.h.b16 %v149
    %v1138 = vunpack.c.l.b16 %v156
    %v1139 = vunpack.c.h.b16 %v156
    %v1140 = vunpack.c.l.b16 %v157
    %v1141 = vunpack.c.h.b16 %v157
    %v1142 = vunpack.c.l.b16 %v164
    %v1143 = vunpack.c.h.b16 %v164
    %v1144 = vunpack.c.l.b16 %v165
    %v1145 = vunpack.c.h.b16 %v165
    %v1146 = vunpack.c.l.b16 %v172
    %v1147 = vunpack.c.h.b16 %v172
    %v1148 = vunpack.c.l.b16 %v173
    %v1149 = vunpack.c.h.b16 %v173
    %v1150 = vunpack.c.l.b16 %v180
    %v1151 = vunpack.c.h.b16 %v180
    %v1152 = vunpack.c.l.b16 %v181
    %v1153 = vunpack.c.h.b16 %v181
    %v1154 = vunpack.c.l.b16 %v188
    %v1155 = vunpack.c.h.b16 %v188
    %v1156 = vunpack.c.l.b16 %v189
    %v1157 = vunpack.c.h.b16 %v189
    %v1158 = vunpack.c.l.b16 %v196
    %v1159 = vunpack.c.h.b16 %v196
    %v1160 = vunpack.c.l.b16 %v197
    %v1161 = vunpack.c.h.b16 %v197
    %v1162 = vunpack.c.l.b16 %v204
    %v1163 = vunpack.c.h.b16 %v204
    %v1164 = vunpack.c.l.b16 %v205
    %v1165 = vunpack.c.h.b16 %v205
    %v1166 = vunpack.c.l.b16 %v212
    %v1167 = vunpack.c.h.b16 %v212
    %v1168 = vunpack.c.l.b16 %v213
    %v1169 = vunpack.c.h.b16 %v213
    %v1170 = vunpack.c.l.b16 %v220
    %v1171 = vunpack.c.h.b16 %v220
    %v1172 = vunpack.c.l.b16 %v221
    %v1173 = vunpack.c.h.b16 %v221
    %v1174 = vunpack.c.l.b16 %v228
    %v1175 = vunpack.c.h.b16 %v228
    %v1176 = vunpack.c.l.b16 %v229
    %v1177 = vunpack.c.h.b16 %v229
    %v1178 = vunpack.c.l.b16 %v236
    %v1179 = vunpack.c.h.b16 %v236
    %v1180 = vunpack.c.l.b16 %v237
    %v1181 = vunpack.c.h.b16 %v237
    %v1182 = vunpack.c.l.b16 %v244
    %v1183 = vunpack.c.h.b16 %v244
    %v1184 = vunpack.c.l.b16 %v245
    %v1185 = vunpack.c.h.b16 %v245
    %v1186 = vunpack.c.l.b16 %v252
    %v1187 = vunpack.c.h.b16 %v252
    %v1188 = vunpack.c.l.b16 %v253
    %v1189 = vunpack.c.h.b16 %v253
    %v1190 = vunpack.c.l.b16 %v260
    %v1191 = vunpack.c.h.b16 %v260
    %v1192 = vunpack.c.l.b16 %v261
    %v1193 = vunpack.c.h.b16 %v261
    %v1194 = vunpack.c.l.b16 %v268
    %v1195 = vunpack.c.h.b16 %v268
    %v1196 = vunpack.c.l.b16 %v269
    %v1197 = vunpack.c.h.b16 %v269
    %v1198 = vunpack.c.l.b16 %v276
    %v1199 = vunpack.c.h.b16 %v276
    %v1200 = vunpack.c.l.b16 %v277
    %v1201 = vunpack.c.h.b16 %v277
    %v1202 = vunpack.c.l.b16 %v284
    %v1203 = vunpack.c.h.b16 %v284
    %v1204 = vunpack.c.l.b16 %v285
    %v1205 = vunpack.c.h.b16 %v285
    %v1206 = vunpack.c.l.b16 %v292
    %v1207 = vunpack.c.h.b16 %v292
    %v1208 = vunpack.c.l.b16 %v293
    %v1209 = vunpack.c.h.b16 %v293
    %v1210 = vunpack.c.l.b16 %v300
    %v1211 = vunpack.c.h.b16 %v300
    %v1212 = vunpack.c.l.b16 %v301
    %v1213 = vunpack.c.h.b16 %v301
    %v1214 = vunpack.c.l.b16 %v308
    %v1215 = vunpack.c.h.b16 %v308
    %v1216 = vunpack.c.l.b16 %v309
    %v1217 = vunpack.c.h.b16 %v309
    %v1218 = vunpack.c.l.b16 %v316
    %v1219 = vunpack.c.h.b16 %v316
    %v1220 = vunpack.c.l.b16 %v317
    %v1221 = vunpack.c.h.b16 %v317
    %v1222 = vunpack.c.l.b16 %v324
    %v1223 = vunpack.c.h.b16 %v324
    %v1224 = vunpack.c.l.b16 %v325
    %v1225 = vunpack.c.h.b16 %v325
    %v1226 = vunpack.c.l.b16 %v332
    %v1227 = vunpack.c.h.b16 %v332
    %v1228 = vunpack.c.l.b16 %v333
    %v1229 = vunpack.c.h.b16 %v333
    %v1230 = vunpack.c.l.b16 %v340
    %v1231 = vunpack.c.h.b16 %v340
    %v1232 = vunpack.c.l.b16 %v341
    %v1233 = vunpack.c.h.b16 %v341
    %v1234 = vunpack.c.l.b16 %v348
    %v1235 = vunpack.c.h.b16 %v348
    %v1236 = vunpack.c.l.b16 %v349
    %v1237 = vunpack.c.h.b16 %v349
    %v1238 = vunpack.c.l.b16 %v356
    %v1239 = vunpack.c.h.b16 %v356
    %v1240 = vunpack.c.l.b16 %v357
    %v1241 = vunpack.c.h.b16 %v357
    %v1242 = vunpack.c.l.b16 %v364
    %v1243 = vunpack.c.h.b16 %v364
    %v1244 = vunpack.c.l.b16 %v365
    %v1245 = vunpack.c.h.b16 %v365
    %v1246 = vunpack.c.l.b16 %v372
    %v1247 = vunpack.c.h.b16 %v372
    %v1248 = vunpack.c.l.b16 %v373
    %v1249 = vunpack.c.h.b16 %v373
    %v1250 = vunpack.c.l.b16 %v380
    %v1251 = vunpack.c.h.b16 %v380
    %v1252 = vunpack.c.l.b16 %v381
    %v1253 = vunpack.c.h.b16 %v381
    %v1254 = vunpack.c.l.b16 %v388
    %v1255 = vunpack.c.h.b16 %v388
    %v1256 = vunpack.c.l.b16 %v389
    %v1257 = vunpack.c.h.b16 %v389
    %v1258 = vunpack.c.l.b16 %v396
    %v1259 = vunpack.c.h.b16 %v396
    %v1260 = vunpack.c.l.b16 %v397
    %v1261 = vunpack.c.h.b16 %v397
    %v1262 = vunpack.c.l.b16 %v404
    %v1263 = vunpack.c.h.b16 %v404
    %v1264 = vunpack.c.l.b16 %v405
    %v1265 = vunpack.c.h.b16 %v405
    %v1266 = vunpack.c.l.b16 %v412
    %v1267 = vunpack.c.h.b16 %v412
    %v1268 = vunpack.c.l.b16 %v413
    %v1269 = vunpack.c.h.b16 %v413
    %v1270 = vunpack.c.l.b16 %v420
    %v1271 = vunpack.c.h.b16 %v420
    %v1272 = vunpack.c.l.b16 %v421
    %v1273 = vunpack.c.h.b16 %v421
    %v1274 = vunpack.c.l.b16 %v428
    %v1275 = vunpack.c.h.b16 %v428
    %v1276 = vunpack.c.l.b16 %v429
    %v1277 = vunpack.c.h.b16 %v429
    %v1278 = vunpack.c.l.b16 %v436
    %v1279 = vunpack.c.h.b16 %v436
    %v1280 = vunpack.c.l.b16 %v437
    %v1281 = vunpack.c.h.b16 %v437
    %v1282 = vunpack.c.l.b16 %v444
    %v1283 = vunpack.c.h.b16 %v444
    %v1284 = vunpack.c.l.b16 %v445
    %v1285 = vunpack.c.h.b16 %v445
    %v1286 = vunpack.c.l.b16 %v452
    %v1287 = vunpack.c.h.b16 %v452
    %v1288 = vunpack.c.l.b16 %v453
    %v1289 = vunpack.c.h.b16 %v453
    %v1290 = vunpack.c.l.b16 %v460
    %v1291 = vunpack.c.h.b16 %v460
    %v1292 = vunpack.c.l.b16 %v461
    %v1293 = vunpack.c.h.b16 %v461
    %v1294 = vunpack.c.l.b16 %v468
    %v1295 = vunpack.c.h.b16 %v468
    %v1296 = vunpack.c.l.b16 %v469
    %v1297 = vunpack.c.h.b16 %v469
    %v1298 = vunpack.c.l.b16 %v476
    %v1299 = vunpack.c.h.b16 %v476
    %v1300 = vunpack.c.l.b16 %v477
    %v1301 = vunpack.c.h.b16 %v477
    %v1302 = vunpack.c.l.b16 %v484
    %v1303 = vunpack.c.h.b16 %v484
    %v1304 = vunpack.c.l.b16 %v485
    %v1305 = vunpack.c.h.b16 %v485
    %v1306 = vunpack.c.l.b16 %v492
    %v1307 = vunpack.c.h.b16 %v492
    %v1308 = vunpack.c.l.b16 %v493
    %v1309 = vunpack.c.h.b16 %v493
    %v1310 = vunpack.c.l.b16 %v500
    %v1311 = vunpack.c.h.b16 %v500
    %v1312 = vunpack.c.l.b16 %v501
    %v1313 = vunpack.c.h.b16 %v501
    %v1314 = vunpack.c.l.b16 %v508
    %v1315 = vunpack.c.h.b16 %v508
    %v1316 = vunpack.c.l.b16 %v509
    %v1317 = vunpack.c.h.b16 %v509
    %v1318 = vunpack.c.l.b16 %v516
    %v1319 = vunpack.c.h.b16 %v516
    %v1320 = vunpack.c.l.b16 %v517
    %v1321 = vunpack.c.h.b16 %v517
    %v1322 = vunpack.c.l.b16 %v524
    %v1323 = vunpack.c.h.b16 %v524
    %v1324 = vunpack.c.l.b16 %v525
    %v1325 = vunpack.c.h.b16 %v525
    %v1326 = vunpack.c.l.b16 %v532
    %v1327 = vunpack.c.h.b16 %v532
    %v1328 = vunpack.c.l.b16 %v533
    %v1329 = vunpack.c.h.b16 %v533
    %v1330 = vunpack.c.l.b16 %v540
    %v1331 = vunpack.c.h.b16 %v540
    %v1332 = vunpack.c.l.b16 %v541
    %v1333 = vunpack.c.h.b16 %v541
    %v1334 = vunpack.c.l.b16 %v548
    %v1335 = vunpack.c.h.b16 %v548
    %v1336 = vunpack.c.l.b16 %v549
    %v1337 = vunpack.c.h.b16 %v549
    %v1338 = vunpack.c.l.b16 %v556
    %v1339 = vunpack.c.h.b16 %v556
    %v1340 = vunpack.c.l.b16 %v557
    %v1341 = vunpack.c.h.b16 %v557
    %v1342 = vunpack.c.l.b16 %v564
    %v1343 = vunpack.c.h.b16 %v564
    %v1344 = vunpack.c.l.b16 %v565
    %v1345 = vunpack.c.h.b16 %v565
    %v1346 = vunpack.c.l.b16 %v572
    %v1347 = vunpack.c.h.b16 %v572
    %v1348 = vunpack.c.l.b16 %v573
    %v1349 = vunpack.c.h.b16 %v573
    %v1350 = vunpack.c.l.b16 %v580
    %v1351 = vunpack.c.h.b16 %v580
    %v1352 = vunpack.c.l.b16 %v581
    %v1353 = vunpack.c.h.b16 %v581
    %v1354 = vunpack.c.l.b16 %v588
    %v1355 = vunpack.c.h.b16 %v588
    %v1356 = vunpack.c.l.b16 %v589
    %v1357 = vunpack.c.h.b16 %v589
    %v1358 = vunpack.c.l.b16 %v596
    %v1359 = vunpack.c.h.b16 %v596
    %v1360 = vunpack.c.l.b16 %v597
    %v1361 = vunpack.c.h.b16 %v597
    %v1362 = vunpack.c.l.b16 %v604
    %v1363 = vunpack.c.h.b16 %v604
    %v1364 = vunpack.c.l.b16 %v605
    %v1365 = vunpack.c.h.b16 %v605
    %v1366 = vunpack.c.l.b16 %v612
    %v1367 = vunpack.c.h.b16 %v612
    %v1368 = vunpack.c.l.b16 %v613
    %v1369 = vunpack.c.h.b16 %v613
    %v1370 = vunpack.c.l.b16 %v620
    %v1371 = vunpack.c.h.b16 %v620
    %v1372 = vunpack.c.l.b16 %v621
    %v1373 = vunpack.c.h.b16 %v621
    %v1374 = vunpack.c.l.b16 %v628
    %v1375 = vunpack.c.h.b16 %v628
    %v1376 = vunpack.c.l.b16 %v629
    %v1377 = vunpack.c.h.b16 %v629
    %v1378 = vunpack.c.l.b16 %v636
    %v1379 = vunpack.c.h.b16 %v636
    %v1380 = vunpack.c.l.b16 %v637
    %v1381 = vunpack.c.h.b16 %v637
    %v1382 = vunpack.c.l.b16 %v644
    %v1383 = vunpack.c.h.b16 %v644
    %v1384 = vunpack.c.l.b16 %v645
    %v1385 = vunpack.c.h.b16 %v645
    %v1386 = vunpack.c.l.b16 %v652
    %v1387 = vunpack.c.h.b16 %v652
    %v1388 = vunpack.c.l.b16 %v653
    %v1389 = vunpack.c.h.b16 %v653
    %v1390 = vunpack.c.l.b16 %v660
    %v1391 = vunpack.c.h.b16 %v660
    %v1392 = vunpack.c.l.b16 %v661
    %v1393 = vunpack.c.h.b16 %v661
    %v1394 = vunpack.c.l.b16 %v668
    %v1395 = vunpack.c.h.b16 %v668
    %v1396 = vunpack.c.l.b16 %v669
    %v1397 = vunpack.c.h.b16 %v669
    %v1398 = vunpack.c.l.b16 %v676
    %v1399 = vunpack.c.h.b16 %v676
    %v1400 = vunpack.c.l.b16 %v677
    %v1401 = vunpack.c.h.b16 %v677
    %v1402 = vunpack.c.l.b16 %v684
    %v1403 = vunpack.c.h.b16 %v684
    %v1404 = vunpack.c.l.b16 %v685
    %v1405 = vunpack.c.h.b16 %v685
    %v1406 = vunpack.c.l.b16 %v692
    %v1407 = vunpack.c.h.b16 %v692
    %v1408 = vunpack.c.l.b16 %v693
    %v1409 = vunpack.c.h.b16 %v693
    %v1410 = vunpack.c.l.b16 %v700
    %v1411 = vunpack.c.h.b16 %v700
    %v1412 = vunpack.c.l.b16 %v701
    %v1413 = vunpack.c.h.b16 %v701
    %v1414 = vunpack.c.l.b16 %v708
    %v1415 = vunpack.c.h.b16 %v708
    %v1416 = vunpack.c.l.b16 %v709
    %v1417 = vunpack.c.h.b16 %v709
    %v1418 = vunpack.c.l.b16 %v716
    %v1419 = vunpack.c.h.b16 %v716
    %v1420 = vunpack.c.l.b16 %v717
    %v1421 = vunpack.c.h.b16 %v717
    %v1422 = vunpack.c.l.b16 %v724
    %v1423 = vunpack.c.h.b16 %v724
    %v1424 = vunpack.c.l.b16 %v725
    %v1425 = vunpack.c.h.b16 %v725
    %v1426 = vunpack.c.l.b16 %v732
    %v1427 = vunpack.c.h.b16 %v732
    %v1428 = vunpack.c.l.b16 %v733
    %v1429 = vunpack.c.h.b16 %v733
    %v1430 = vunpack.c.l.b16 %v740
    %v1431 = vunpack.c.h.b16 %v740
    %v1432 = vunpack.c.l.b16 %v741
    %v1433 = vunpack.c.h.b16 %v741
    %v1434 = vunpack.c.l.b16 %v748
    %v1435 = vunpack.c.h.b16 %v748
    %v1436 = vunpack.c.l.b16 %v749
    %v1437 = vunpack.c.h.b16 %v749
    %v1438 = vunpack.c.l.b16 %v756
    %v1439 = vunpack.c.h.b16 %v756
    %v1440 = vunpack.c.l.b16 %v757
    %v1441 = vunpack.c.h.b16 %v757
    %v1442 = vunpack.c.l.b16 %v764
    %v1443 = vunpack.c.h.b16 %v764
    %v1444 = vunpack.c.l.b16 %v765
    %v1445 = vunpack.c.h.b16 %v765
    %v1446 = vunpack.c.l.b16 %v772
    %v1447 = vunpack.c.h.b16 %v772
    %v1448 = vunpack.c.l.b16 %v773
    %v1449 = vunpack.c.h.b16 %v773
    %v1450 = vunpack.c.l.b16 %v780
    %v1451 = vunpack.c.h.b16 %v780
    %v1452 = vunpack.c.l.b16 %v781
    %v1453 = vunpack.c.h.b16 %v781
    %v1454 = vunpack.c.l.b16 %v788
    %v1455 = vunpack.c.h.b16 %v788
    %v1456 = vunpack.c.l.b16 %v789
    %v1457 = vunpack.c.h.b16 %v789
    %v1458 = vunpack.c.l.b16 %v796
    %v1459 = vunpack.c.h.b16 %v796
    %v1460 = vunpack.c.l.b16 %v797
    %v1461 = vunpack.c.h.b16 %v797
    %v1462 = vunpack.c.l.b16 %v804
    %v1463 = vunpack.c.h.b16 %v804
    %v1464 = vunpack.c.l.b16 %v805
    %v1465 = vunpack.c.h.b16 %v805
    %v1466 = vunpack.c.l.b16 %v812
    %v1467 = vunpack.c.h.b16 %v812
    %v1468 = vunpack.c.l.b16 %v813
    %v1469 = vunpack.c.h.b16 %v813
    %v1470 = vunpack.c.l.b16 %v820
    %v1471 = vunpack.c.h.b16 %v820
    %v1472 = vunpack.c.l.b16 %v821
    %v1473 = vunpack.c.h.b16 %v821
    %v1474 = vunpack.c.l.b16 %v828
    %v1475 = vunpack.c.h.b16 %v828
    %v1476 = vunpack.c.l.b16 %v829
    %v1477 = vunpack.c.h.b16 %v829
    %v1478 = vunpack.c.l.b16 %v836
    %v1479 = vunpack.c.h.b16 %v836
    %v1480 = vunpack.c.l.b16 %v837
    %v1481 = vunpack.c.h.b16 %v837
    %v1482 = vunpack.c.l.b16 %v844
    %v1483 = vunpack.c.h.b16 %v844
    %v1484 = vunpack.c.l.b16 %v845
    %v1485 = vunpack.c.h.b16 %v845
    %v1486 = vunpack.c.l.b16 %v852
    %v1487 = vunpack.c.h.b16 %v852
    %v1488 = vunpack.c.l.b16 %v853
    %v1489 = vunpack.c.h.b16 %v853
    %v1490 = vunpack.c.l.b16 %v860
    %v1491 = vunpack.c.h.b16 %v860
    %v1492 = vunpack.c.l.b16 %v861
    %v1493 = vunpack.c.h.b16 %v861
    %v1494 = vunpack.c.l.b16 %v868
    %v1495 = vunpack.c.h.b16 %v868
    %v1496 = vunpack.c.l.b16 %v869
    %v1497 = vunpack.c.h.b16 %v869
    %v1498 = vunpack.c.l.b16 %v876
    %v1499 = vunpack.c.h.b16 %v876
    %v1500 = vunpack.c.l.b16 %v877
    %v1501 = vunpack.c.h.b16 %v877
    %v1502 = vunpack.c.l.b16 %v884
    %v1503 = vunpack.c.h.b16 %v884
    %v1504 = vunpack.c.l.b16 %v885
    %v1505 = vunpack.c.h.b16 %v885
    %v1506 = vunpack.c.l.b16 %v892
    %v1507 = vunpack.c.h.b16 %v892
    %v1508 = vunpack.c.l.b16 %v893
    %v1509 = vunpack.c.h.b16 %v893
    %v1510 = vunpack.c.l.b16 %v900
    %v1511 = vunpack.c.h.b16 %v900
    %v1512 = vunpack.c.l.b16 %v901
    %v1513 = vunpack.c.h.b16 %v901
    %v1514 = vpack.c.b16 %v1134, %v1130
    %v1515 = vpack.c.b16 %v1135, %v1131
    %v1516 = vpack.c.b16 %v1136, %v1132
    %v1517 = vpack.c.b16 %v1137, %v1133
    %v1518 = vpack.c.b16 %v1142, %v1138
    %v1519 = vpack.c.b16 %v1143, %v1139
    %v1520 = vpack.c.b16 %v1144, %v1140
    %v1521 = vpack.c.b16 %v1145, %v1141
    %v1522 = vpack.c.b16 %v1150, %v1146
    %v1523 = vpack.c.b16 %v1151, %v1147
    %v1524 = vpack.c.b16 %v1152, %v1148
    %v1525 = vpack.c.b16 %v1153, %v1149
    %v1526 = vpack.c.b16 %v1158, %v1154
    %v1527 = vpack.c.b16 %v1159, %v1155
    %v1528 = vpack.c.b16 %v1160, %v1156
    %v1529 = vpack.c.b16 %v1161, %v1157
    %v1530 = vpack.c.b16 %v1166, %v1162
    %v1531 = vpack.c.b16 %v1167, %v1163
    %v1532 = vpack.c.b16 %v1168, %v1164
    %v1533 = vpack.c.b16 %v1169, %v1165
    %v1534 = vpack.c.b16 %v1174, %v1170
    %v1535 = vpack.c.b16 %v1175, %v1171
    %v1536 = vpack.c.b16 %v1176, %v1172
    %v1537 = vpack.c.b16 %v1177, %v1173
    %v1538 = vpack.c.b16 %v1182, %v1178
    %v1539 = vpack.c.b16 %v1183, %v1179
    %v1540 = vpack.c.b16 %v1184, %v1180
    %v1541 = vpack.c.b16 %v1185, %v1181
    %v1542 = vpack.c.b16 %v1190, %v1186
    %v1543 = vpack.c.b16 %v1191, %v1187
    %v1544 = vpack.c.b16 %v1192, %v1188
    %v1545 = vpack.c.b16 %v1193, %v1189
    %v1546 = vpack.c.b16 %v1198, %v1194
    %v1547 = vpack.c.b16 %v1199, %v1195
    %v1548 = vpack.c.b16 %v1200, %v1196
    %v1549 = vpack.c.b16 %v1201, %v1197
    %v1550 = vpack.c.b16 %v1206, %v1202
    %v1551 = vpack.c.b16 %v1207, %v1203
    %v1552 = vpack.c.b16 %v1208, %v1204
    %v1553 = vpack.c.b16 %v1209, %v1205
    %v1554 = vpack.c.b16 %v1214, %v1210
    %v1555 = vpack.c.b16 %v1215, %v1211
    %v1556 = vpack.c.b16 %v1216, %v1212
    %v1557 = vpack.c.b16 %v1217, %v1213
    %v1558 = vpack.c.b16 %v1222, %v1218
    %v1559 = vpack.c.b16 %v1223, %v1219
    %v1560 = vpack.c.b16 %v1224, %v1220
    %v1561 = vpack.c.b16 %v1225, %v1221
    %v1562 = vpack.c.b16 %v1230, %v1226
    %v1563 = vpack.c.b16 %v1231, %v1227
    %v1564 = vpack.c.b16 %v1232, %v1228
    %v1565 = vpack.c.b16 %v1233, %v1229
    %v1566 = vpack.c.b16 %v1238, %v1234
    %v1567 = vpack.c.b16 %v1239, %v1235
    %v1568 = vpack.c.b16 %v1240, %v1236
    %v1569 = vpack.c.b16 %v1241, %v1237
    %v1570 = vpack.c.b16 %v1246, %v1242
    %v1571 = vpack.c.b16 %v1247, %v1243
    %v1572 = vpack.c.b16 %v1248, %v1244
    %v1573 = vpack.c.b16 %v1249, %v1245
    %v1574 = vpack.c.b16 %v1254, %v1250
    %v1575 = vpack.c.b16 %v1255, %v1251
    %v1576 = vpack.c.b16 %v1256, %v1252
    %v1577 = vpack.c.b16 %v1257, %v1253
    %v1578 = vpack.c.b16 %v1262, %v1258
    %v1579 = vpack.c.b16 %v1263, %v1259
    %v1580 = vpack.c.b16 %v1264, %v1260
    %v1581 = vpack.c.b16 %v1265, %v1261
    %v1582 = vpack.c.b16 %v1270, %v1266
    %v1583 = vpack.c.b16 %v1271, %v1267
    %v1584 = vpack.c.b16 %v1272, %v1268
    %v1585 = vpack.c.b16 %v1273, %v1269
    %v1586 = vpack.c.b16 %v1278, %v1274
    %v1587 = vpack.c.b16 %v1279, %v1275
    %v1588 = vpack.c.b16 %v1280, %v1276
    %v1589 = vpack.c.b16 %v1281, %v1277
    %v1590 = vpack.c.b16 %v1286, %v1282
    %v1591 = vpack.c.b16 %v1287, %v1283
    %v1592 = vpack.c.b16 %v1288, %v1284
    %v1593 = vpack.c.b16 %v1289, %v1285
    %v1594 = vpack.c.b16 %v1294, %v1290
    %v1595 = vpack.c.b16 %v1295, %v1291
    %v1596 = vpack.c.b16 %v1296, %v1292
    %v1597 = vpack.c.b16 %v1297, %v1293
    %v1598 = vpack.c.b16 %v1302, %v1298
    %v1599 = vpack.c.b16 %v1303, %v1299
    %v1600 = vpack.c.b16 %v1304, %v1300
    %v1601 = vpack.c.b16 %v1305, %v1301
    %v1602 = vpack.c.b16 %v1310, %v1306
    %v1603 = vpack.c.b16 %v1311, %v1307
    %v1604 = vpack.c.b16 %v1312, %v1308
    %v1605 = vpack.c.b16 %v1313, %v1309
    %v1606 = vpack.c.b16 %v1318, %v1314
    %v1607 = vpack.c.b16 %v1319, %v1315
    %v1608 = vpack.c.b16 %v1320, %v1316
    %v1609 = vpack.c.b16 %v1321, %v1317
    %v1610 = vpack.c.b16 %v1326, %v1322
    %v1611 = vpack.c.b16 %v1327, %v1323
    %v1612 = vpack.c.b16 %v1328, %v1324
    %v1613 = vpack.c.b16 %v1329, %v1325
    %v1614 = vpack.c.b16 %v1334, %v1330
    %v1615 = vpack.c.b16 %v1335, %v1331
    %v1616 = vpack.c.b16 %v1336, %v1332
    %v1617 = vpack.c.b16 %v1337, %v1333
    %v1618 = vpack.c.b16 %v1342, %v1338
    %v1619 = vpack.c.b16 %v1343, %v1339
    %v1620 = vpack.c.b16 %v1344, %v1340
    %v1621 = vpack.c.b16 %v1345, %v1341
    %v1622 = vpack.c.b16 %v1350, %v1346
    %v1623 = vpack.c.b16 %v1351, %v1347
    %v1624 = vpack.c.b16 %v1352, %v1348
    %v1625 = vpack.c.b16 %v1353, %v1349
    %v1626 = vpack.c.b16 %v1358, %v1354
    %v1627 = vpack.c.b16 %v1359, %v1355
    %v1628 = vpack.c.b16 %v1360, %v1356
    %v1629 = vpack.c.b16 %v1361, %v1357
    %v1630 = vpack.c.b16 %v1366, %v1362
    %v1631 = vpack.c.b16 %v1367, %v1363
    %v1632 = vpack.c.b16 %v1368, %v1364
    %v1633 = vpack.c.b16 %v1369, %v1365
    %v1634 = vpack.c.b16 %v1374, %v1370
    %v1635 = vpack.c.b16 %v1375, %v1371
    %v1636 = vpack.c.b16 %v1376, %v1372
    %v1637 = vpack.c.b16 %v1377, %v1373
    %v1638 = vpack.c.b16 %v1382, %v1378
    %v1639 = vpack.c.b16 %v1383, %v1379
    %v1640 = vpack.c.b16 %v1384, %v1380
    %v1641 = vpack.c.b16 %v1385, %v1381
    %v1642 = vpack.c.b16 %v1390, %v1386
    %v1643 = vpack.c.b16 %v1391, %v1387
    %v1644 = vpack.c.b16 %v1392, %v1388
    %v1645 = vpack.c.b16 %v1393, %v1389
    %v1646 = vpack.c.b16 %v1398, %v1394
    %v1647 = vpack.c.b16 %v1399, %v1395
    %v1648 = vpack.c.b16 %v1400, %v1396
    %v1649 = vpack.c.b16 %v1401, %v1397
    %v1650 = vpack.c.b16 %v1406, %v1402
    %v1651 = vpack.c.b16 %v1407, %v1403
    %v1652 = vpack.c.b16 %v1408, %v1404
    %v1653 = vpack.c.b16 %v1409, %v1405
    %v1654 = vpack.c.b16 %v1414, %v1410
    %v1655 = vpack.c.b16 %v1415, %v1411
    %v1656 = vpack.c.b16 %v1416, %v1412
    %v1657 = vpack.c.b16 %v1417, %v1413
    %v1658 = vpack.c.b16 %v1422, %v1418
    %v1659 = vpack.c.b16 %v1423, %v1419
    %v1660 = vpack.c.b16 %v1424, %v1420
    %v1661 = vpack.c.b16 %v1425, %v1421
    %v1662 = vpack.c.b16 %v1430, %v1426
    %v1663 = vpack.c.b16 %v1431, %v1427
    %v1664 = vpack.c.b16 %v1432, %v1428
    %v1665 = vpack.c.b16 %v1433, %v1429
    %v1666 = vpack.c.b16 %v1438, %v1434
    %v1667 = vpack.c.b16 %v1439, %v1435
    %v1668 = vpack.c.b16 %v1440, %v1436
    %v1669 = vpack.c.b16 %v1441, %v1437
    %v1670 = vpack.c.b16 %v1446, %v1442
    %v1671 = vpack.c.b16 %v1447, %v1443
    %v1672 = vpack.c.b16 %v1448, %v1444
    %v1673 = vpack.c.b16 %v1449, %v1445
    %v1674 = vpack.c.b16 %v1454, %v1450
    %v1675 = vpack.c.b16 %v1455, %v1451
    %v1676 = vpack.c.b16 %v1456, %v1452
    %v1677 = vpack.c.b16 %v1457, %v1453
    %v1678 = vpack.c.b16 %v1462, %v1458
    %v1679 = vpack.c.b16 %v1463, %v1459
    %v1680 = vpack.c.b16 %v1464, %v1460
    %v1681 = vpack.c.b16 %v1465, %v1461
    %v1682 = vpack.c.b16 %v1470, %v1466
    %v1683 = vpack.c.b16 %v1471, %v1467
    %v1684 = vpack.c.b16 %v1472, %v1468
    %v1685 = vpack.c.b16 %v1473, %v1469
    %v1686 = vpack.c.b16 %v1478, %v1474
    %v1687 = vpack.c.b16 %v1479, %v1475
    %v1688 = vpack.c.b16 %v1480, %v1476
    %v1689 = vpack.c.b16 %v1481, %v1477
    %v1690 = vpack.c.b16 %v1486, %v1482
    %v1691 = vpack.c.b16 %v1487, %v1483
    %v1692 = vpack.c.b16 %v1488, %v1484
    %v1693 = vpack.c.b16 %v1489, %v1485
    %v1694 = vpack.c.b16 %v1494, %v1490
    %v1695 = vpack.c.b16 %v1495, %v1491
    %v1696 = vpack.c.b16 %v1496, %v1492
    %v1697 = vpack.c.b16 %v1497, %v1493
    %v1698 = vpack.c.b16 %v1502, %v1498
    %v1699 = vpack.c.b16 %v1503, %v1499
    %v1700 = vpack.c.b16 %v1504, %v1500
    %v1701 = vpack.c.b16 %v1505, %v1501
    %v1702 = vpack.c.b16 %v1510, %v1506
    %v1703 = vpack.c.b16 %v1511, %v1507
    %v1704 = vpack.c.b16 %v1512, %v1508
    %v1705 = vpack.c.b16 %v1513, %v1509
    %1898 = vmatprep.subr.bf16.mxu0 %v1515
    %1899 = vmatpush1.bf16.msra.mxu0 %v1514
    %1900 = vmatprep.subr.bf16.mxu0 %v1519
    %1901 = vmatpush1.bf16.msra.mxu0 %v1518
    %1902 = vmatprep.subr.bf16.mxu0 %v1523
    %1903 = vmatpush1.bf16.msra.mxu0 %v1522
    %1904 = vmatprep.subr.bf16.mxu0 %v1527
    %1905 = vmatpush1.bf16.msra.mxu0 %v1526
    %1906 = vmatprep.subr.bf16.mxu0 %v1531
    %1907 = vmatpush1.bf16.msra.mxu0 %v1530
    %1908 = vmatprep.subr.bf16.mxu0 %v1535
    %1909 = vmatpush1.bf16.msra.mxu0 %v1534
    %1910 = vmatprep.subr.bf16.mxu0 %v1539
    %1911 = vmatpush1.bf16.msra.mxu0 %v1538
    %1912 = vmatprep.subr.bf16.mxu0 %v1543
    %1913 = vmatpush1.bf16.msra.mxu0 %v1542
    %1914 = vmatprep.subr.bf16.mxu0 %v1547
    %1915 = vmatpush1.bf16.msra.mxu0 %v1546
    %1916 = vmatprep.subr.bf16.mxu0 %v1551
    %1917 = vmatpush1.bf16.msra.mxu0 %v1550
    %1918 = vmatprep.subr.bf16.mxu0 %v1555
    %1919 = vmatpush1.bf16.msra.mxu0 %v1554
    %1920 = vmatprep.subr.bf16.mxu0 %v1559
    %1921 = vmatpush1.bf16.msra.mxu0 %v1558
    %1922 = vmatprep.subr.bf16.mxu0 %v1563
    %1923 = vmatpush1.bf16.msra.mxu0 %v1562
    %1924 = vmatprep.subr.bf16.mxu0 %v1567
    %1925 = vmatpush1.bf16.msra.mxu0 %v1566
    %1926 = vmatprep.subr.bf16.mxu0 %v1571
    %1927 = vmatpush1.bf16.msra.mxu0 %v1570
    %1928 = vmatprep.subr.bf16.mxu0 %v1575
    %1929 = vmatpush1.bf16.msra.mxu0 %v1574
    %1930 = vmatprep.mubr.bf16.mxu0 %v927
    %1931 = vmatmul.mubr.bf16.gmra.mrb[0].mxu0 %v926
    %v1932 = vpop.f32.mrb[0].mxu0
    %v1933 = vadd.f32 0.0, %v1932
    %v1934 = vpop.f32.mrb[0].mxu0
    %v1935 = vadd.f32 0.0, %v1934
    %v1936 = vpop.f32.mrb[0].mxu0
    %v1937 = vadd.f32 0.0, %v1936
    %v1938 = vpop.f32.mrb[0].mxu0
    %v1939 = vadd.f32 0.0, %v1938
    %1940 = vdwg.mxu0
    %1941 = vmatprep.subr.bf16.mxu0 %v1579
    %1942 = vmatpush1.bf16.msra.mxu0 %v1578
    %1943 = vmatprep.subr.bf16.mxu0 %v1583
    %1944 = vmatpush1.bf16.msra.mxu0 %v1582
    %1945 = vmatprep.subr.bf16.mxu0 %v1587
    %1946 = vmatpush1.bf16.msra.mxu0 %v1586
    %1947 = vmatprep.subr.bf16.mxu0 %v1591
    %1948 = vmatpush1.bf16.msra.mxu0 %v1590
    %1949 = vmatprep.subr.bf16.mxu0 %v1595
    %1950 = vmatpush1.bf16.msra.mxu0 %v1594
    %1951 = vmatprep.subr.bf16.mxu0 %v1599
    %1952 = vmatpush1.bf16.msra.mxu0 %v1598
    %1953 = vmatprep.subr.bf16.mxu0 %v1603
    %1954 = vmatpush1.bf16.msra.mxu0 %v1602
    %1955 = vmatprep.subr.bf16.mxu0 %v1607
    %1956 = vmatpush1.bf16.msra.mxu0 %v1606
    %1957 = vmatprep.subr.bf16.mxu0 %v1611
    %1958 = vmatpush1.bf16.msra.mxu0 %v1610
    %1959 = vmatprep.subr.bf16.mxu0 %v1615
    %1960 = vmatpush1.bf16.msra.mxu0 %v1614
    %1961 = vmatprep.subr.bf16.mxu0 %v1619
    %1962 = vmatpush1.bf16.msra.mxu0 %v1618
    %1963 = vmatprep.subr.bf16.mxu0 %v1623
    %1964 = vmatpush1.bf16.msra.mxu0 %v1622
    %1965 = vmatprep.subr.bf16.mxu0 %v1627
    %1966 = vmatpush1.bf16.msra.mxu0 %v1626
    %1967 = vmatprep.subr.bf16.mxu0 %v1631
    %1968 = vmatpush1.bf16.msra.mxu0 %v1630
    %1969 = vmatprep.subr.bf16.mxu0 %v1635
    %1970 = vmatpush1.bf16.msra.mxu0 %v1634
    %1971 = vmatprep.subr.bf16.mxu0 %v1639
    %1972 = vmatpush1.bf16.msra.mxu0 %v1638
    %1973 = vmatprep.mubr.bf16.mxu0 %v929
    %1974 = vmatmul.mubr.bf16.gmra.mrb[0].mxu0 %v928
    %v1975 = vpop.f32.mrb[0].mxu0
    %v1976 = vadd.f32 %v1933, %v1975
    %v1977 = vpop.f32.mrb[0].mxu0
    %v1978 = vadd.f32 %v1935, %v1977
    %v1979 = vpop.f32.mrb[0].mxu0
    %v1980 = vadd.f32 %v1937, %v1979
    %v1981 = vpop.f32.mrb[0].mxu0
    %v1982 = vadd.f32 %v1939, %v1981
    %1983 = vdwg.mxu0
    %1984 = vmatprep.subr.bf16.mxu0 %v1643
    %1985 = vmatpush1.bf16.msra.mxu0 %v1642
    %1986 = vmatprep.subr.bf16.mxu0 %v1647
    %1987 = vmatpush1.bf16.msra.mxu0 %v1646
    %1988 = vmatprep.subr.bf16.mxu0 %v1651
    %1989 = vmatpush1.bf16.msra.mxu0 %v1650
    %1990 = vmatprep.subr.bf16.mxu0 %v1655
    %1991 = vmatpush1.bf16.msra.mxu0 %v1654
    %1992 = vmatprep.subr.bf16.mxu0 %v1659
    %1993 = vmatpush1.bf16.msra.mxu0 %v1658
    %1994 = vmatprep.subr.bf16.mxu0 %v1663
    %1995 = vmatpush1.bf16.msra.mxu0 %v1662
    %1996 = vmatprep.subr.bf16.mxu0 %v1667
    %1997 = vmatpush1.bf16.msra.mxu0 %v1666
    %1998 = vmatprep.subr.bf16.mxu0 %v1671
    %1999 = vmatpush1.bf16.msra.mxu0 %v1670
    %2000 = vmatprep.subr.bf16.mxu0 %v1675
    %2001 = vmatpush1.bf16.msra.mxu0 %v1674
    %2002 = vmatprep.subr.bf16.mxu0 %v1679
    %2003 = vmatpush1.bf16.msra.mxu0 %v1678
    %2004 = vmatprep.subr.bf16.mxu0 %v1683
    %2005 = vmatpush1.bf16.msra.mxu0 %v1682
    %2006 = vmatprep.subr.bf16.mxu0 %v1687
    %2007 = vmatpush1.bf16.msra.mxu0 %v1686
    %2008 = vmatprep.subr.bf16.mxu0 %v1691
    %2009 = vmatpush1.bf16.msra.mxu0 %v1690
    %2010 = vmatprep.subr.bf16.mxu0 %v1695
    %2011 = vmatpush1.bf16.msra.mxu0 %v1694
    %2012 = vmatprep.subr.bf16.mxu0 %v1699
    %2013 = vmatpush1.bf16.msra.mxu0 %v1698
    %2014 = vmatprep.subr.bf16.mxu0 %v1703
    %2015 = vmatpush1.bf16.msra.mxu0 %v1702
    %2016 = vmatprep.mubr.bf16.mxu0 %v931
    %2017 = vmatmul.mubr.bf16.gmra.mrb[0].mxu0 %v930
    %v2018 = vpop.f32.mrb[0].mxu0
    %v2019 = vadd.f32 %v1976, %v2018
    %v2020 = vpop.f32.mrb[0].mxu0
    %v2021 = vadd.f32 %v1978, %v2020
    %v2022 = vpop.f32.mrb[0].mxu0
    %v2023 = vadd.f32 %v1980, %v2022
    %v2024 = vpop.f32.mrb[0].mxu0
    %v2025 = vadd.f32 %v1982, %v2024
    %2026 = vdwg.mxu0
    %2027 = vmatprep.subr.bf16.mxu0 %v1517
    %2028 = vmatpush1.bf16.msra.mxu0 %v1516
    %2029 = vmatprep.subr.bf16.mxu0 %v1521
    %2030 = vmatpush1.bf16.msra.mxu0 %v1520
    %2031 = vmatprep.subr.bf16.mxu0 %v1525
    %2032 = vmatpush1.bf16.msra.mxu0 %v1524
    %2033 = vmatprep.subr.bf16.mxu0 %v1529
    %2034 = vmatpush1.bf16.msra.mxu0 %v1528
    %2035 = vmatprep.subr.bf16.mxu0 %v1533
    %2036 = vmatpush1.bf16.msra.mxu0 %v1532
    %2037 = vmatprep.subr.bf16.mxu0 %v1537
    %2038 = vmatpush1.bf16.msra.mxu0 %v1536
    %2039 = vmatprep.subr.bf16.mxu0 %v1541
    %2040 = vmatpush1.bf16.msra.mxu0 %v1540
    %2041 = vmatprep.subr.bf16.mxu0 %v1545
    %2042 = vmatpush1.bf16.msra.mxu0 %v1544
    %2043 = vmatprep.subr.bf16.mxu0 %v1549
    %2044 = vmatpush1.bf16.msra.mxu0 %v1548
    %2045 = vmatprep.subr.bf16.mxu0 %v1553
    %2046 = vmatpush1.bf16.msra.mxu0 %v1552
    %2047 = vmatprep.subr.bf16.mxu0 %v1557
    %2048 = vmatpush1.bf16.msra.mxu0 %v1556
    %2049 = vmatprep.subr.bf16.mxu0 %v1561
    %2050 = vmatpush1.bf16.msra.mxu0 %v1560
    %2051 = vmatprep.subr.bf16.mxu0 %v1565
    %2052 = vmatpush1.bf16.msra.mxu0 %v1564
    %2053 = vmatprep.subr.bf16.mxu0 %v1569
    %2054 = vmatpush1.bf16.msra.mxu0 %v1568
    %2055 = vmatprep.subr.bf16.mxu0 %v1573
    %2056 = vmatpush1.bf16.msra.mxu0 %v1572
    %2057 = vmatprep.subr.bf16.mxu0 %v1577
    %2058 = vmatpush1.bf16.msra.mxu0 %v1576
    %2059 = vmatprep.mubr.bf16.mxu0 %v927
    %2060 = vmatmul.mubr.bf16.gmra.mrb[0].mxu0 %v926
    %v2061 = vpop.f32.mrb[0].mxu0
    %v2062 = vadd.f32 0.0, %v2061
    %v2063 = vpop.f32.mrb[0].mxu0
    %v2064 = vadd.f32 0.0, %v2063
    %v2065 = vpop.f32.mrb[0].mxu0
    %v2066 = vadd.f32 0.0, %v2065
    %v2067 = vpop.f32.mrb[0].mxu0
    %v2068 = vadd.f32 0.0, %v2067
    %2069 = vdwg.mxu0
    %2070 = vmatprep.subr.bf16.mxu0 %v1581
    %2071 = vmatpush1.bf16.msra.mxu0 %v1580
    %2072 = vmatprep.subr.bf16.mxu0 %v1585
    %2073 = vmatpush1.bf16.msra.mxu0 %v1584
    %2074 = vmatprep.subr.bf16.mxu0 %v1589
    %2075 = vmatpush1.bf16.msra.mxu0 %v1588
    %2076 = vmatprep.subr.bf16.mxu0 %v1593
    %2077 = vmatpush1.bf16.msra.mxu0 %v1592
    %2078 = vmatprep.subr.bf16.mxu0 %v1597
    %2079 = vmatpush1.bf16.msra.mxu0 %v1596
    %2080 = vmatprep.subr.bf16.mxu0 %v1601
    %2081 = vmatpush1.bf16.msra.mxu0 %v1600
    %2082 = vmatprep.subr.bf16.mxu0 %v1605
    %2083 = vmatpush1.bf16.msra.mxu0 %v1604
    %2084 = vmatprep.subr.bf16.mxu0 %v1609
    %2085 = vmatpush1.bf16.msra.mxu0 %v1608
    %2086 = vmatprep.subr.bf16.mxu0 %v1613
    %2087 = vmatpush1.bf16.msra.mxu0 %v1612
    %2088 = vmatprep.subr.bf16.mxu0 %v1617
    %2089 = vmatpush1.bf16.msra.mxu0 %v1616
    %2090 = vmatprep.subr.bf16.mxu0 %v1621
    %2091 = vmatpush1.bf16.msra.mxu0 %v1620
    %2092 = vmatprep.subr.bf16.mxu0 %v1625
    %2093 = vmatpush1.bf16.msra.mxu0 %v1624
    %2094 = vmatprep.subr.bf16.mxu0 %v1629
    %2095 = vmatpush1.bf16.msra.mxu0 %v1628
    %2096 = vmatprep.subr.bf16.mxu0 %v1633
    %2097 = vmatpush1.bf16.msra.mxu0 %v1632
    %2098 = vmatprep.subr.bf16.mxu0 %v1637
    %2099 = vmatpush1.bf16.msra.mxu0 %v1636
    %2100 = vmatprep.subr.bf16.mxu0 %v1641
    %2101 = vmatpush1.bf16.msra.mxu0 %v1640
    %2102 = vmatprep.mubr.bf16.mxu0 %v929
    %2103 = vmatmul.mubr.bf16.gmra.mrb[0].mxu0 %v928
    %v2104 = vpop.f32.mrb[0].mxu0
    %v2105 = vadd.f32 %v2062, %v2104
    %v2106 = vpop.f32.mrb[0].mxu0
    %v2107 = vadd.f32 %v2064, %v2106
    %v2108 = vpop.f32.mrb[0].mxu0
    %v2109 = vadd.f32 %v2066, %v2108
    %v2110 = vpop.f32.mrb[0].mxu0
    %v2111 = vadd.f32 %v2068, %v2110
    %2112 = vdwg.mxu0
    %2113 = vmatprep.subr.bf16.mxu0 %v1645
    %2114 = vmatpush1.bf16.msra.mxu0 %v1644
    %2115 = vmatprep.subr.bf16.mxu0 %v1649
    %2116 = vmatpush1.bf16.msra.mxu0 %v1648
    %2117 = vmatprep.subr.bf16.mxu0 %v1653
    %2118 = vmatpush1.bf16.msra.mxu0 %v1652
    %2119 = vmatprep.subr.bf16.mxu0 %v1657
    %2120 = vmatpush1.bf16.msra.mxu0 %v1656
    %2121 = vmatprep.subr.bf16.mxu0 %v1661
    %2122 = vmatpush1.bf16.msra.mxu0 %v1660
    %2123 = vmatprep.subr.bf16.mxu0 %v1665
    %2124 = vmatpush1.bf16.msra.mxu0 %v1664
    %2125 = vmatprep.subr.bf16.mxu0 %v1669
    %2126 = vmatpush1.bf16.msra.mxu0 %v1668
    %2127 = vmatprep.subr.bf16.mxu0 %v1673
    %2128 = vmatpush1.bf16.msra.mxu0 %v1672
    %2129 = vmatprep.subr.bf16.mxu0 %v1677
    %2130 = vmatpush1.bf16.msra.mxu0 %v1676
    %2131 = vmatprep.subr.bf16.mxu0 %v1681
    %2132 = vmatpush1.bf16.msra.mxu0 %v1680
    %2133 = vmatprep.subr.bf16.mxu0 %v1685
    %2134 = vmatpush1.bf16.msra.mxu0 %v1684
    %2135 = vmatprep.subr.bf16.mxu0 %v1689
    %2136 = vmatpush1.bf16.msra.mxu0 %v1688
    %2137 = vmatprep.subr.bf16.mxu0 %v1693
    %2138 = vmatpush1.bf16.msra.mxu0 %v1692
    %2139 = vmatprep.subr.bf16.mxu0 %v1697
    %2140 = vmatpush1.bf16.msra.mxu0 %v1696
    %2141 = vmatprep.subr.bf16.mxu0 %v1701
    %2142 = vmatpush1.bf16.msra.mxu0 %v1700
    %2143 = vmatprep.subr.bf16.mxu0 %v1705
    %2144 = vmatpush1.bf16.msra.mxu0 %v1704
    %2145 = vmatprep.mubr.bf16.mxu0 %v931
    %2146 = vmatmul.mubr.bf16.gmra.mrb[0].mxu0 %v930
    %v2147 = vpop.f32.mrb[0].mxu0
    %v2148 = vadd.f32 %v2105, %v2147
    %v2149 = vpop.f32.mrb[0].mxu0
    %v2150 = vadd.f32 %v2107, %v2149
    %v2151 = vpop.f32.mrb[0].mxu0
    %v2152 = vadd.f32 %v2109, %v2151
    %v2153 = vpop.f32.mrb[0].mxu0
    %v2154 = vadd.f32 %v2111, %v2153
    %2155 = vdwg.mxu0
    %v2348 = vunpack.c.l.b16 %v142
    %v2349 = vunpack.c.h.b16 %v142
    %v2350 = vunpack.c.l.b16 %v143
    %v2351 = vunpack.c.h.b16 %v143
    %v2352 = vunpack.c.l.b16 %v150
    %v2353 = vunpack.c.h.b16 %v150
    %v2354 = vunpack.c.l.b16 %v151
    %v2355 = vunpack.c.h.b16 %v151
    %v2356 = vunpack.c.l.b16 %v158
    %v2357 = vunpack.c.h.b16 %v158
    %v2358 = vunpack.c.l.b16 %v159
    %v2359 = vunpack.c.h.b16 %v159
    %v2360 = vunpack.c.l.b16 %v166
    %v2361 = vunpack.c.h.b16 %v166
    %v2362 = vunpack.c.l.b16 %v167
    %v2363 = vunpack.c.h.b16 %v167
    %v2364 = vunpack.c.l.b16 %v174
    %v2365 = vunpack.c.h.b16 %v174
    %v2366 = vunpack.c.l.b16 %v175
    %v2367 = vunpack.c.h.b16 %v175
    %v2368 = vunpack.c.l.b16 %v182
    %v2369 = vunpack.c.h.b16 %v182
    %v2370 = vunpack.c.l.b16 %v183
    %v2371 = vunpack.c.h.b16 %v183
    %v2372 = vunpack.c.l.b16 %v190
    %v2373 = vunpack.c.h.b16 %v190
    %v2374 = vunpack.c.l.b16 %v191
    %v2375 = vunpack.c.h.b16 %v191
    %v2376 = vunpack.c.l.b16 %v198
    %v2377 = vunpack.c.h.b16 %v198
    %v2378 = vunpack.c.l.b16 %v199
    %v2379 = vunpack.c.h.b16 %v199
    %v2380 = vunpack.c.l.b16 %v206
    %v2381 = vunpack.c.h.b16 %v206
    %v2382 = vunpack.c.l.b16 %v207
    %v2383 = vunpack.c.h.b16 %v207
    %v2384 = vunpack.c.l.b16 %v214
    %v2385 = vunpack.c.h.b16 %v214
    %v2386 = vunpack.c.l.b16 %v215
    %v2387 = vunpack.c.h.b16 %v215
    %v2388 = vunpack.c.l.b16 %v222
    %v2389 = vunpack.c.h.b16 %v222
    %v2390 = vunpack.c.l.b16 %v223
    %v2391 = vunpack.c.h.b16 %v223
    %v2392 = vunpack.c.l.b16 %v230
    %v2393 = vunpack.c.h.b16 %v230
    %v2394 = vunpack.c.l.b16 %v231
    %v2395 = vunpack.c.h.b16 %v231
    %v2396 = vunpack.c.l.b16 %v238
    %v2397 = vunpack.c.h.b16 %v238
    %v2398 = vunpack.c.l.b16 %v239
    %v2399 = vunpack.c.h.b16 %v239
    %v2400 = vunpack.c.l.b16 %v246
    %v2401 = vunpack.c.h.b16 %v246
    %v2402 = vunpack.c.l.b16 %v247
    %v2403 = vunpack.c.h.b16 %v247
    %v2404 = vunpack.c.l.b16 %v254
    %v2405 = vunpack.c.h.b16 %v254
    %v2406 = vunpack.c.l.b16 %v255
    %v2407 = vunpack.c.h.b16 %v255
    %v2408 = vunpack.c.l.b16 %v262
    %v2409 = vunpack.c.h.b16 %v262
    %v2410 = vunpack.c.l.b16 %v263
    %v2411 = vunpack.c.h.b16 %v263
    %v2412 = vunpack.c.l.b16 %v270
    %v2413 = vunpack.c.h.b16 %v270
    %v2414 = vunpack.c.l.b16 %v271
    %v2415 = vunpack.c.h.b16 %v271
    %v2416 = vunpack.c.l.b16 %v278
    %v2417 = vunpack.c.h.b16 %v278
    %v2418 = vunpack.c.l.b16 %v279
    %v2419 = vunpack.c.h.b16 %v279
    %v2420 = vunpack.c.l.b16 %v286
    %v2421 = vunpack.c.h.b16 %v286
    %v2422 = vunpack.c.l.b16 %v287
    %v2423 = vunpack.c.h.b16 %v287
    %v2424 = vunpack.c.l.b16 %v294
    %v2425 = vunpack.c.h.b16 %v294
    %v2426 = vunpack.c.l.b16 %v295
    %v2427 = vunpack.c.h.b16 %v295
    %v2428 = vunpack.c.l.b16 %v302
    %v2429 = vunpack.c.h.b16 %v302
    %v2430 = vunpack.c.l.b16 %v303
    %v2431 = vunpack.c.h.b16 %v303
    %v2432 = vunpack.c.l.b16 %v310
    %v2433 = vunpack.c.h.b16 %v310
    %v2434 = vunpack.c.l.b16 %v311
    %v2435 = vunpack.c.h.b16 %v311
    %v2436 = vunpack.c.l.b16 %v318
    %v2437 = vunpack.c.h.b16 %v318
    %v2438 = vunpack.c.l.b16 %v319
    %v2439 = vunpack.c.h.b16 %v319
    %v2440 = vunpack.c.l.b16 %v326
    %v2441 = vunpack.c.h.b16 %v326
    %v2442 = vunpack.c.l.b16 %v327
    %v2443 = vunpack.c.h.b16 %v327
    %v2444 = vunpack.c.l.b16 %v334
    %v2445 = vunpack.c.h.b16 %v334
    %v2446 = vunpack.c.l.b16 %v335
    %v2447 = vunpack.c.h.b16 %v335
    %v2448 = vunpack.c.l.b16 %v342
    %v2449 = vunpack.c.h.b16 %v342
    %v2450 = vunpack.c.l.b16 %v343
    %v2451 = vunpack.c.h.b16 %v343
    %v2452 = vunpack.c.l.b16 %v350
    %v2453 = vunpack.c.h.b16 %v350
    %v2454 = vunpack.c.l.b16 %v351
    %v2455 = vunpack.c.h.b16 %v351
    %v2456 = vunpack.c.l.b16 %v358
    %v2457 = vunpack.c.h.b16 %v358
    %v2458 = vunpack.c.l.b16 %v359
    %v2459 = vunpack.c.h.b16 %v359
    %v2460 = vunpack.c.l.b16 %v366
    %v2461 = vunpack.c.h.b16 %v366
    %v2462 = vunpack.c.l.b16 %v367
    %v2463 = vunpack.c.h.b16 %v367
    %v2464 = vunpack.c.l.b16 %v374
    %v2465 = vunpack.c.h.b16 %v374
    %v2466 = vunpack.c.l.b16 %v375
    %v2467 = vunpack.c.h.b16 %v375
    %v2468 = vunpack.c.l.b16 %v382
    %v2469 = vunpack.c.h.b16 %v382
    %v2470 = vunpack.c.l.b16 %v383
    %v2471 = vunpack.c.h.b16 %v383
    %v2472 = vunpack.c.l.b16 %v390
    %v2473 = vunpack.c.h.b16 %v390
    %v2474 = vunpack.c.l.b16 %v391
    %v2475 = vunpack.c.h.b16 %v391
    %v2476 = vunpack.c.l.b16 %v398
    %v2477 = vunpack.c.h.b16 %v398
    %v2478 = vunpack.c.l.b16 %v399
    %v2479 = vunpack.c.h.b16 %v399
    %v2480 = vunpack.c.l.b16 %v406
    %v2481 = vunpack.c.h.b16 %v406
    %v2482 = vunpack.c.l.b16 %v407
    %v2483 = vunpack.c.h.b16 %v407
    %v2484 = vunpack.c.l.b16 %v414
    %v2485 = vunpack.c.h.b16 %v414
    %v2486 = vunpack.c.l.b16 %v415
    %v2487 = vunpack.c.h.b16 %v415
    %v2488 = vunpack.c.l.b16 %v422
    %v2489 = vunpack.c.h.b16 %v422
    %v2490 = vunpack.c.l.b16 %v423
    %v2491 = vunpack.c.h.b16 %v423
    %v2492 = vunpack.c.l.b16 %v430
    %v2493 = vunpack.c.h.b16 %v430
    %v2494 = vunpack.c.l.b16 %v431
    %v2495 = vunpack.c.h.b16 %v431
    %v2496 = vunpack.c.l.b16 %v438
    %v2497 = vunpack.c.h.b16 %v438
    %v2498 = vunpack.c.l.b16 %v439
    %v2499 = vunpack.c.h.b16 %v439
    %v2500 = vunpack.c.l.b16 %v446
    %v2501 = vunpack.c.h.b16 %v446
    %v2502 = vunpack.c.l.b16 %v447
    %v2503 = vunpack.c.h.b16 %v447
    %v2504 = vunpack.c.l.b16 %v454
    %v2505 = vunpack.c.h.b16 %v454
    %v2506 = vunpack.c.l.b16 %v455
    %v2507 = vunpack.c.h.b16 %v455
    %v2508 = vunpack.c.l.b16 %v462
    %v2509 = vunpack.c.h.b16 %v462
    %v2510 = vunpack.c.l.b16 %v463
    %v2511 = vunpack.c.h.b16 %v463
    %v2512 = vunpack.c.l.b16 %v470
    %v2513 = vunpack.c.h.b16 %v470
    %v2514 = vunpack.c.l.b16 %v471
    %v2515 = vunpack.c.h.b16 %v471
    %v2516 = vunpack.c.l.b16 %v478
    %v2517 = vunpack.c.h.b16 %v478
    %v2518 = vunpack.c.l.b16 %v479
    %v2519 = vunpack.c.h.b16 %v479
    %v2520 = vunpack.c.l.b16 %v486
    %v2521 = vunpack.c.h.b16 %v486
    %v2522 = vunpack.c.l.b16 %v487
    %v2523 = vunpack.c.h.b16 %v487
    %v2524 = vunpack.c.l.b16 %v494
    %v2525 = vunpack.c.h.b16 %v494
    %v2526 = vunpack.c.l.b16 %v495
    %v2527 = vunpack.c.h.b16 %v495
    %v2528 = vunpack.c.l.b16 %v502
    %v2529 = vunpack.c.h.b16 %v502
    %v2530 = vunpack.c.l.b16 %v503
    %v2531 = vunpack.c.h.b16 %v503
    %v2532 = vunpack.c.l.b16 %v510
    %v2533 = vunpack.c.h.b16 %v510
    %v2534 = vunpack.c.l.b16 %v511
    %v2535 = vunpack.c.h.b16 %v511
    %v2536 = vunpack.c.l.b16 %v518
    %v2537 = vunpack.c.h.b16 %v518
    %v2538 = vunpack.c.l.b16 %v519
    %v2539 = vunpack.c.h.b16 %v519
    %v2540 = vunpack.c.l.b16 %v526
    %v2541 = vunpack.c.h.b16 %v526
    %v2542 = vunpack.c.l.b16 %v527
    %v2543 = vunpack.c.h.b16 %v527
    %v2544 = vunpack.c.l.b16 %v534
    %v2545 = vunpack.c.h.b16 %v534
    %v2546 = vunpack.c.l.b16 %v535
    %v2547 = vunpack.c.h.b16 %v535
    %v2548 = vunpack.c.l.b16 %v542
    %v2549 = vunpack.c.h.b16 %v542
    %v2550 = vunpack.c.l.b16 %v543
    %v2551 = vunpack.c.h.b16 %v543
    %v2552 = vunpack.c.l.b16 %v550
    %v2553 = vunpack.c.h.b16 %v550
    %v2554 = vunpack.c.l.b16 %v551
    %v2555 = vunpack.c.h.b16 %v551
    %v2556 = vunpack.c.l.b16 %v558
    %v2557 = vunpack.c.h.b16 %v558
    %v2558 = vunpack.c.l.b16 %v559
    %v2559 = vunpack.c.h.b16 %v559
    %v2560 = vunpack.c.l.b16 %v566
    %v2561 = vunpack.c.h.b16 %v566
    %v2562 = vunpack.c.l.b16 %v567
    %v2563 = vunpack.c.h.b16 %v567
    %v2564 = vunpack.c.l.b16 %v574
    %v2565 = vunpack.c.h.b16 %v574
    %v2566 = vunpack.c.l.b16 %v575
    %v2567 = vunpack.c.h.b16 %v575
    %v2568 = vunpack.c.l.b16 %v582
    %v2569 = vunpack.c.h.b16 %v582
    %v2570 = vunpack.c.l.b16 %v583
    %v2571 = vunpack.c.h.b16 %v583
    %v2572 = vunpack.c.l.b16 %v590
    %v2573 = vunpack.c.h.b16 %v590
    %v2574 = vunpack.c.l.b16 %v591
    %v2575 = vunpack.c.h.b16 %v591
    %v2576 = vunpack.c.l.b16 %v598
    %v2577 = vunpack.c.h.b16 %v598
    %v2578 = vunpack.c.l.b16 %v599
    %v2579 = vunpack.c.h.b16 %v599
    %v2580 = vunpack.c.l.b16 %v606
    %v2581 = vunpack.c.h.b16 %v606
    %v2582 = vunpack.c.l.b16 %v607
    %v2583 = vunpack.c.h.b16 %v607
    %v2584 = vunpack.c.l.b16 %v614
    %v2585 = vunpack.c.h.b16 %v614
    %v2586 = vunpack.c.l.b16 %v615
    %v2587 = vunpack.c.h.b16 %v615
    %v2588 = vunpack.c.l.b16 %v622
    %v2589 = vunpack.c.h.b16 %v622
    %v2590 = vunpack.c.l.b16 %v623
    %v2591 = vunpack.c.h.b16 %v623
    %v2592 = vunpack.c.l.b16 %v630
    %v2593 = vunpack.c.h.b16 %v630
    %v2594 = vunpack.c.l.b16 %v631
    %v2595 = vunpack.c.h.b16 %v631
    %v2596 = vunpack.c.l.b16 %v638
    %v2597 = vunpack.c.h.b16 %v638
    %v2598 = vunpack.c.l.b16 %v639
    %v2599 = vunpack.c.h.b16 %v639
    %v2600 = vunpack.c.l.b16 %v646
    %v2601 = vunpack.c.h.b16 %v646
    %v2602 = vunpack.c.l.b16 %v647
    %v2603 = vunpack.c.h.b16 %v647
    %v2604 = vunpack.c.l.b16 %v654
    %v2605 = vunpack.c.h.b16 %v654
    %v2606 = vunpack.c.l.b16 %v655
    %v2607 = vunpack.c.h.b16 %v655
    %v2608 = vunpack.c.l.b16 %v662
    %v2609 = vunpack.c.h.b16 %v662
    %v2610 = vunpack.c.l.b16 %v663
    %v2611 = vunpack.c.h.b16 %v663
    %v2612 = vunpack.c.l.b16 %v670
    %v2613 = vunpack.c.h.b16 %v670
    %v2614 = vunpack.c.l.b16 %v671
    %v2615 = vunpack.c.h.b16 %v671
    %v2616 = vunpack.c.l.b16 %v678
    %v2617 = vunpack.c.h.b16 %v678
    %v2618 = vunpack.c.l.b16 %v679
    %v2619 = vunpack.c.h.b16 %v679
    %v2620 = vunpack.c.l.b16 %v686
    %v2621 = vunpack.c.h.b16 %v686
    %v2622 = vunpack.c.l.b16 %v687
    %v2623 = vunpack.c.h.b16 %v687
    %v2624 = vunpack.c.l.b16 %v694
    %v2625 = vunpack.c.h.b16 %v694
    %v2626 = vunpack.c.l.b16 %v695
    %v2627 = vunpack.c.h.b16 %v695
    %v2628 = vunpack.c.l.b16 %v702
    %v2629 = vunpack.c.h.b16 %v702
    %v2630 = vunpack.c.l.b16 %v703
    %v2631 = vunpack.c.h.b16 %v703
    %v2632 = vunpack.c.l.b16 %v710
    %v2633 = vunpack.c.h.b16 %v710
    %v2634 = vunpack.c.l.b16 %v711
    %v2635 = vunpack.c.h.b16 %v711
    %v2636 = vunpack.c.l.b16 %v718
    %v2637 = vunpack.c.h.b16 %v718
    %v2638 = vunpack.c.l.b16 %v719
    %v2639 = vunpack.c.h.b16 %v719
    %v2640 = vunpack.c.l.b16 %v726
    %v2641 = vunpack.c.h.b16 %v726
    %v2642 = vunpack.c.l.b16 %v727
    %v2643 = vunpack.c.h.b16 %v727
    %v2644 = vunpack.c.l.b16 %v734
    %v2645 = vunpack.c.h.b16 %v734
    %v2646 = vunpack.c.l.b16 %v735
    %v2647 = vunpack.c.h.b16 %v735
    %v2648 = vunpack.c.l.b16 %v742
    %v2649 = vunpack.c.h.b16 %v742
    %v2650 = vunpack.c.l.b16 %v743
    %v2651 = vunpack.c.h.b16 %v743
    %v2652 = vunpack.c.l.b16 %v750
    %v2653 = vunpack.c.h.b16 %v750
    %v2654 = vunpack.c.l.b16 %v751
    %v2655 = vunpack.c.h.b16 %v751
    %v2656 = vunpack.c.l.b16 %v758
    %v2657 = vunpack.c.h.b16 %v758
    %v2658 = vunpack.c.l.b16 %v759
    %v2659 = vunpack.c.h.b16 %v759
    %v2660 = vunpack.c.l.b16 %v766
    %v2661 = vunpack.c.h.b16 %v766
    %v2662 = vunpack.c.l.b16 %v767
    %v2663 = vunpack.c.h.b16 %v767
    %v2664 = vunpack.c.l.b16 %v774
    %v2665 = vunpack.c.h.b16 %v774
    %v2666 = vunpack.c.l.b16 %v775
    %v2667 = vunpack.c.h.b16 %v775
    %v2668 = vunpack.c.l.b16 %v782
    %v2669 = vunpack.c.h.b16 %v782
    %v2670 = vunpack.c.l.b16 %v783
    %v2671 = vunpack.c.h.b16 %v783
    %v2672 = vunpack.c.l.b16 %v790
    %v2673 = vunpack.c.h.b16 %v790
    %v2674 = vunpack.c.l.b16 %v791
    %v2675 = vunpack.c.h.b16 %v791
    %v2676 = vunpack.c.l.b16 %v798
    %v2677 = vunpack.c.h.b16 %v798
    %v2678 = vunpack.c.l.b16 %v799
    %v2679 = vunpack.c.h.b16 %v799
    %v2680 = vunpack.c.l.b16 %v806
    %v2681 = vunpack.c.h.b16 %v806
    %v2682 = vunpack.c.l.b16 %v807
    %v2683 = vunpack.c.h.b16 %v807
    %v2684 = vunpack.c.l.b16 %v814
    %v2685 = vunpack.c.h.b16 %v814
    %v2686 = vunpack.c.l.b16 %v815
    %v2687 = vunpack.c.h.b16 %v815
    %v2688 = vunpack.c.l.b16 %v822
    %v2689 = vunpack.c.h.b16 %v822
    %v2690 = vunpack.c.l.b16 %v823
    %v2691 = vunpack.c.h.b16 %v823
    %v2692 = vunpack.c.l.b16 %v830
    %v2693 = vunpack.c.h.b16 %v830
    %v2694 = vunpack.c.l.b16 %v831
    %v2695 = vunpack.c.h.b16 %v831
    %v2696 = vunpack.c.l.b16 %v838
    %v2697 = vunpack.c.h.b16 %v838
    %v2698 = vunpack.c.l.b16 %v839
    %v2699 = vunpack.c.h.b16 %v839
    %v2700 = vunpack.c.l.b16 %v846
    %v2701 = vunpack.c.h.b16 %v846
    %v2702 = vunpack.c.l.b16 %v847
    %v2703 = vunpack.c.h.b16 %v847
    %v2704 = vunpack.c.l.b16 %v854
    %v2705 = vunpack.c.h.b16 %v854
    %v2706 = vunpack.c.l.b16 %v855
    %v2707 = vunpack.c.h.b16 %v855
    %v2708 = vunpack.c.l.b16 %v862
    %v2709 = vunpack.c.h.b16 %v862
    %v2710 = vunpack.c.l.b16 %v863
    %v2711 = vunpack.c.h.b16 %v863
    %v2712 = vunpack.c.l.b16 %v870
    %v2713 = vunpack.c.h.b16 %v870
    %v2714 = vunpack.c.l.b16 %v871
    %v2715 = vunpack.c.h.b16 %v871
    %v2716 = vunpack.c.l.b16 %v878
    %v2717 = vunpack.c.h.b16 %v878
    %v2718 = vunpack.c.l.b16 %v879
    %v2719 = vunpack.c.h.b16 %v879
    %v2720 = vunpack.c.l.b16 %v886
    %v2721 = vunpack.c.h.b16 %v886
    %v2722 = vunpack.c.l.b16 %v887
    %v2723 = vunpack.c.h.b16 %v887
    %v2724 = vunpack.c.l.b16 %v894
    %v2725 = vunpack.c.h.b16 %v894
    %v2726 = vunpack.c.l.b16 %v895
    %v2727 = vunpack.c.h.b16 %v895
    %v2728 = vunpack.c.l.b16 %v902
    %v2729 = vunpack.c.h.b16 %v902
    %v2730 = vunpack.c.l.b16 %v903
    %v2731 = vunpack.c.h.b16 %v903
    %v2732 = vpack.c.b16 %v2352, %v2348
    %v2733 = vpack.c.b16 %v2353, %v2349
    %v2734 = vpack.c.b16 %v2354, %v2350
    %v2735 = vpack.c.b16 %v2355, %v2351
    %v2736 = vpack.c.b16 %v2360, %v2356
    %v2737 = vpack.c.b16 %v2361, %v2357
    %v2738 = vpack.c.b16 %v2362, %v2358
    %v2739 = vpack.c.b16 %v2363, %v2359
    %v2740 = vpack.c.b16 %v2368, %v2364
    %v2741 = vpack.c.b16 %v2369, %v2365
    %v2742 = vpack.c.b16 %v2370, %v2366
    %v2743 = vpack.c.b16 %v2371, %v2367
    %v2744 = vpack.c.b16 %v2376, %v2372
    %v2745 = vpack.c.b16 %v2377, %v2373
    %v2746 = vpack.c.b16 %v2378, %v2374
    %v2747 = vpack.c.b16 %v2379, %v2375
    %v2748 = vpack.c.b16 %v2384, %v2380
    %v2749 = vpack.c.b16 %v2385, %v2381
    %v2750 = vpack.c.b16 %v2386, %v2382
    %v2751 = vpack.c.b16 %v2387, %v2383
    %v2752 = vpack.c.b16 %v2392, %v2388
    %v2753 = vpack.c.b16 %v2393, %v2389
    %v2754 = vpack.c.b16 %v2394, %v2390
    %v2755 = vpack.c.b16 %v2395, %v2391
    %v2756 = vpack.c.b16 %v2400, %v2396
    %v2757 = vpack.c.b16 %v2401, %v2397
    %v2758 = vpack.c.b16 %v2402, %v2398
    %v2759 = vpack.c.b16 %v2403, %v2399
    %v2760 = vpack.c.b16 %v2408, %v2404
    %v2761 = vpack.c.b16 %v2409, %v2405
    %v2762 = vpack.c.b16 %v2410, %v2406
    %v2763 = vpack.c.b16 %v2411, %v2407
    %v2764 = vpack.c.b16 %v2416, %v2412
    %v2765 = vpack.c.b16 %v2417, %v2413
    %v2766 = vpack.c.b16 %v2418, %v2414
    %v2767 = vpack.c.b16 %v2419, %v2415
    %v2768 = vpack.c.b16 %v2424, %v2420
    %v2769 = vpack.c.b16 %v2425, %v2421
    %v2770 = vpack.c.b16 %v2426, %v2422
    %v2771 = vpack.c.b16 %v2427, %v2423
    %v2772 = vpack.c.b16 %v2432, %v2428
    %v2773 = vpack.c.b16 %v2433, %v2429
    %v2774 = vpack.c.b16 %v2434, %v2430
    %v2775 = vpack.c.b16 %v2435, %v2431
    %v2776 = vpack.c.b16 %v2440, %v2436
    %v2777 = vpack.c.b16 %v2441, %v2437
    %v2778 = vpack.c.b16 %v2442, %v2438
    %v2779 = vpack.c.b16 %v2443, %v2439
    %v2780 = vpack.c.b16 %v2448, %v2444
    %v2781 = vpack.c.b16 %v2449, %v2445
    %v2782 = vpack.c.b16 %v2450, %v2446
    %v2783 = vpack.c.b16 %v2451, %v2447
    %v2784 = vpack.c.b16 %v2456, %v2452
    %v2785 = vpack.c.b16 %v2457, %v2453
    %v2786 = vpack.c.b16 %v2458, %v2454
    %v2787 = vpack.c.b16 %v2459, %v2455
    %v2788 = vpack.c.b16 %v2464, %v2460
    %v2789 = vpack.c.b16 %v2465, %v2461
    %v2790 = vpack.c.b16 %v2466, %v2462
    %v2791 = vpack.c.b16 %v2467, %v2463
    %v2792 = vpack.c.b16 %v2472, %v2468
    %v2793 = vpack.c.b16 %v2473, %v2469
    %v2794 = vpack.c.b16 %v2474, %v2470
    %v2795 = vpack.c.b16 %v2475, %v2471
    %v2796 = vpack.c.b16 %v2480, %v2476
    %v2797 = vpack.c.b16 %v2481, %v2477
    %v2798 = vpack.c.b16 %v2482, %v2478
    %v2799 = vpack.c.b16 %v2483, %v2479
    %v2800 = vpack.c.b16 %v2488, %v2484
    %v2801 = vpack.c.b16 %v2489, %v2485
    %v2802 = vpack.c.b16 %v2490, %v2486
    %v2803 = vpack.c.b16 %v2491, %v2487
    %v2804 = vpack.c.b16 %v2496, %v2492
    %v2805 = vpack.c.b16 %v2497, %v2493
    %v2806 = vpack.c.b16 %v2498, %v2494
    %v2807 = vpack.c.b16 %v2499, %v2495
    %v2808 = vpack.c.b16 %v2504, %v2500
    %v2809 = vpack.c.b16 %v2505, %v2501
    %v2810 = vpack.c.b16 %v2506, %v2502
    %v2811 = vpack.c.b16 %v2507, %v2503
    %v2812 = vpack.c.b16 %v2512, %v2508
    %v2813 = vpack.c.b16 %v2513, %v2509
    %v2814 = vpack.c.b16 %v2514, %v2510
    %v2815 = vpack.c.b16 %v2515, %v2511
    %v2816 = vpack.c.b16 %v2520, %v2516
    %v2817 = vpack.c.b16 %v2521, %v2517
    %v2818 = vpack.c.b16 %v2522, %v2518
    %v2819 = vpack.c.b16 %v2523, %v2519
    %v2820 = vpack.c.b16 %v2528, %v2524
    %v2821 = vpack.c.b16 %v2529, %v2525
    %v2822 = vpack.c.b16 %v2530, %v2526
    %v2823 = vpack.c.b16 %v2531, %v2527
    %v2824 = vpack.c.b16 %v2536, %v2532
    %v2825 = vpack.c.b16 %v2537, %v2533
    %v2826 = vpack.c.b16 %v2538, %v2534
    %v2827 = vpack.c.b16 %v2539, %v2535
    %v2828 = vpack.c.b16 %v2544, %v2540
    %v2829 = vpack.c.b16 %v2545, %v2541
    %v2830 = vpack.c.b16 %v2546, %v2542
    %v2831 = vpack.c.b16 %v2547, %v2543
    %v2832 = vpack.c.b16 %v2552, %v2548
    %v2833 = vpack.c.b16 %v2553, %v2549
    %v2834 = vpack.c.b16 %v2554, %v2550
    %v2835 = vpack.c.b16 %v2555, %v2551
    %v2836 = vpack.c.b16 %v2560, %v2556
    %v2837 = vpack.c.b16 %v2561, %v2557
    %v2838 = vpack.c.b16 %v2562, %v2558
    %v2839 = vpack.c.b16 %v2563, %v2559
    %v2840 = vpack.c.b16 %v2568, %v2564
    %v2841 = vpack.c.b16 %v2569, %v2565
    %v2842 = vpack.c.b16 %v2570, %v2566
    %v2843 = vpack.c.b16 %v2571, %v2567
    %v2844 = vpack.c.b16 %v2576, %v2572
    %v2845 = vpack.c.b16 %v2577, %v2573
    %v2846 = vpack.c.b16 %v2578, %v2574
    %v2847 = vpack.c.b16 %v2579, %v2575
    %v2848 = vpack.c.b16 %v2584, %v2580
    %v2849 = vpack.c.b16 %v2585, %v2581
    %v2850 = vpack.c.b16 %v2586, %v2582
    %v2851 = vpack.c.b16 %v2587, %v2583
    %v2852 = vpack.c.b16 %v2592, %v2588
    %v2853 = vpack.c.b16 %v2593, %v2589
    %v2854 = vpack.c.b16 %v2594, %v2590
    %v2855 = vpack.c.b16 %v2595, %v2591
    %v2856 = vpack.c.b16 %v2600, %v2596
    %v2857 = vpack.c.b16 %v2601, %v2597
    %v2858 = vpack.c.b16 %v2602, %v2598
    %v2859 = vpack.c.b16 %v2603, %v2599
    %v2860 = vpack.c.b16 %v2608, %v2604
    %v2861 = vpack.c.b16 %v2609, %v2605
    %v2862 = vpack.c.b16 %v2610, %v2606
    %v2863 = vpack.c.b16 %v2611, %v2607
    %v2864 = vpack.c.b16 %v2616, %v2612
    %v2865 = vpack.c.b16 %v2617, %v2613
    %v2866 = vpack.c.b16 %v2618, %v2614
    %v2867 = vpack.c.b16 %v2619, %v2615
    %v2868 = vpack.c.b16 %v2624, %v2620
    %v2869 = vpack.c.b16 %v2625, %v2621
    %v2870 = vpack.c.b16 %v2626, %v2622
    %v2871 = vpack.c.b16 %v2627, %v2623
    %v2872 = vpack.c.b16 %v2632, %v2628
    %v2873 = vpack.c.b16 %v2633, %v2629
    %v2874 = vpack.c.b16 %v2634, %v2630
    %v2875 = vpack.c.b16 %v2635, %v2631
    %v2876 = vpack.c.b16 %v2640, %v2636
    %v2877 = vpack.c.b16 %v2641, %v2637
    %v2878 = vpack.c.b16 %v2642, %v2638
    %v2879 = vpack.c.b16 %v2643, %v2639
    %v2880 = vpack.c.b16 %v2648, %v2644
    %v2881 = vpack.c.b16 %v2649, %v2645
    %v2882 = vpack.c.b16 %v2650, %v2646
    %v2883 = vpack.c.b16 %v2651, %v2647
    %v2884 = vpack.c.b16 %v2656, %v2652
    %v2885 = vpack.c.b16 %v2657, %v2653
    %v2886 = vpack.c.b16 %v2658, %v2654
    %v2887 = vpack.c.b16 %v2659, %v2655
    %v2888 = vpack.c.b16 %v2664, %v2660
    %v2889 = vpack.c.b16 %v2665, %v2661
    %v2890 = vpack.c.b16 %v2666, %v2662
    %v2891 = vpack.c.b16 %v2667, %v2663
    %v2892 = vpack.c.b16 %v2672, %v2668
    %v2893 = vpack.c.b16 %v2673, %v2669
    %v2894 = vpack.c.b16 %v2674, %v2670
    %v2895 = vpack.c.b16 %v2675, %v2671
    %v2896 = vpack.c.b16 %v2680, %v2676
    %v2897 = vpack.c.b16 %v2681, %v2677
    %v2898 = vpack.c.b16 %v2682, %v2678
    %v2899 = vpack.c.b16 %v2683, %v2679
    %v2900 = vpack.c.b16 %v2688, %v2684
    %v2901 = vpack.c.b16 %v2689, %v2685
    %v2902 = vpack.c.b16 %v2690, %v2686
    %v2903 = vpack.c.b16 %v2691, %v2687
    %v2904 = vpack.c.b16 %v2696, %v2692
    %v2905 = vpack.c.b16 %v2697, %v2693
    %v2906 = vpack.c.b16 %v2698, %v2694
    %v2907 = vpack.c.b16 %v2699, %v2695
    %v2908 = vpack.c.b16 %v2704, %v2700
    %v2909 = vpack.c.b16 %v2705, %v2701
    %v2910 = vpack.c.b16 %v2706, %v2702
    %v2911 = vpack.c.b16 %v2707, %v2703
    %v2912 = vpack.c.b16 %v2712, %v2708
    %v2913 = vpack.c.b16 %v2713, %v2709
    %v2914 = vpack.c.b16 %v2714, %v2710
    %v2915 = vpack.c.b16 %v2715, %v2711
    %v2916 = vpack.c.b16 %v2720, %v2716
    %v2917 = vpack.c.b16 %v2721, %v2717
    %v2918 = vpack.c.b16 %v2722, %v2718
    %v2919 = vpack.c.b16 %v2723, %v2719
    %v2920 = vpack.c.b16 %v2728, %v2724
    %v2921 = vpack.c.b16 %v2729, %v2725
    %v2922 = vpack.c.b16 %v2730, %v2726
    %v2923 = vpack.c.b16 %v2731, %v2727
    %3116 = vmatprep.subr.bf16.mxu0 %v2733
    %3117 = vmatpush1.bf16.msra.mxu0 %v2732
    %3118 = vmatprep.subr.bf16.mxu0 %v2737
    %3119 = vmatpush1.bf16.msra.mxu0 %v2736
    %3120 = vmatprep.subr.bf16.mxu0 %v2741
    %3121 = vmatpush1.bf16.msra.mxu0 %v2740
    %3122 = vmatprep.subr.bf16.mxu0 %v2745
    %3123 = vmatpush1.bf16.msra.mxu0 %v2744
    %3124 = vmatprep.subr.bf16.mxu0 %v2749
    %3125 = vmatpush1.bf16.msra.mxu0 %v2748
    %3126 = vmatprep.subr.bf16.mxu0 %v2753
    %3127 = vmatpush1.bf16.msra.mxu0 %v2752
    %3128 = vmatprep.subr.bf16.mxu0 %v2757
    %3129 = vmatpush1.bf16.msra.mxu0 %v2756
    %3130 = vmatprep.subr.bf16.mxu0 %v2761
    %3131 = vmatpush1.bf16.msra.mxu0 %v2760
    %3132 = vmatprep.subr.bf16.mxu0 %v2765
    %3133 = vmatpush1.bf16.msra.mxu0 %v2764
    %3134 = vmatprep.subr.bf16.mxu0 %v2769
    %3135 = vmatpush1.bf16.msra.mxu0 %v2768
    %3136 = vmatprep.subr.bf16.mxu0 %v2773
    %3137 = vmatpush1.bf16.msra.mxu0 %v2772
    %3138 = vmatprep.subr.bf16.mxu0 %v2777
    %3139 = vmatpush1.bf16.msra.mxu0 %v2776
    %3140 = vmatprep.subr.bf16.mxu0 %v2781
    %3141 = vmatpush1.bf16.msra.mxu0 %v2780
    %3142 = vmatprep.subr.bf16.mxu0 %v2785
    %3143 = vmatpush1.bf16.msra.mxu0 %v2784
    %3144 = vmatprep.subr.bf16.mxu0 %v2789
    %3145 = vmatpush1.bf16.msra.mxu0 %v2788
    %3146 = vmatprep.subr.bf16.mxu0 %v2793
    %3147 = vmatpush1.bf16.msra.mxu0 %v2792
    %3148 = vmatprep.mubr.bf16.mxu0 %v927
    %3149 = vmatmul.mubr.bf16.gmra.mrb[0].mxu0 %v926
    %v3150 = vpop.f32.mrb[0].mxu0
    %v3151 = vadd.f32 0.0, %v3150
    %v3152 = vpop.f32.mrb[0].mxu0
    %v3153 = vadd.f32 0.0, %v3152
    %v3154 = vpop.f32.mrb[0].mxu0
    %v3155 = vadd.f32 0.0, %v3154
    %v3156 = vpop.f32.mrb[0].mxu0
    %v3157 = vadd.f32 0.0, %v3156
    %3158 = vdwg.mxu0
    %3159 = vmatprep.subr.bf16.mxu0 %v2797
    %3160 = vmatpush1.bf16.msra.mxu0 %v2796
    %3161 = vmatprep.subr.bf16.mxu0 %v2801
    %3162 = vmatpush1.bf16.msra.mxu0 %v2800
    %3163 = vmatprep.subr.bf16.mxu0 %v2805
    %3164 = vmatpush1.bf16.msra.mxu0 %v2804
    %3165 = vmatprep.subr.bf16.mxu0 %v2809
    %3166 = vmatpush1.bf16.msra.mxu0 %v2808
    %3167 = vmatprep.subr.bf16.mxu0 %v2813
    %3168 = vmatpush1.bf16.msra.mxu0 %v2812
    %3169 = vmatprep.subr.bf16.mxu0 %v2817
    %3170 = vmatpush1.bf16.msra.mxu0 %v2816
    %3171 = vmatprep.subr.bf16.mxu0 %v2821
    %3172 = vmatpush1.bf16.msra.mxu0 %v2820
    %3173 = vmatprep.subr.bf16.mxu0 %v2825
    %3174 = vmatpush1.bf16.msra.mxu0 %v2824
    %3175 = vmatprep.subr.bf16.mxu0 %v2829
    %3176 = vmatpush1.bf16.msra.mxu0 %v2828
    %3177 = vmatprep.subr.bf16.mxu0 %v2833
    %3178 = vmatpush1.bf16.msra.mxu0 %v2832
    %3179 = vmatprep.subr.bf16.mxu0 %v2837
    %3180 = vmatpush1.bf16.msra.mxu0 %v2836
    %3181 = vmatprep.subr.bf16.mxu0 %v2841
    %3182 = vmatpush1.bf16.msra.mxu0 %v2840
    %3183 = vmatprep.subr.bf16.mxu0 %v2845
    %3184 = vmatpush1.bf16.msra.mxu0 %v2844
    %3185 = vmatprep.subr.bf16.mxu0 %v2849
    %3186 = vmatpush1.bf16.msra.mxu0 %v2848
    %3187 = vmatprep.subr.bf16.mxu0 %v2853
    %3188 = vmatpush1.bf16.msra.mxu0 %v2852
    %3189 = vmatprep.subr.bf16.mxu0 %v2857
    %3190 = vmatpush1.bf16.msra.mxu0 %v2856
    %3191 = vmatprep.mubr.bf16.mxu0 %v929
    %3192 = vmatmul.mubr.bf16.gmra.mrb[0].mxu0 %v928
    %v3193 = vpop.f32.mrb[0].mxu0
    %v3194 = vadd.f32 %v3151, %v3193
    %v3195 = vpop.f32.mrb[0].mxu0
    %v3196 = vadd.f32 %v3153, %v3195
    %v3197 = vpop.f32.mrb[0].mxu0
    %v3198 = vadd.f32 %v3155, %v3197
    %v3199 = vpop.f32.mrb[0].mxu0
    %v3200 = vadd.f32 %v3157, %v3199
    %3201 = vdwg.mxu0
    %3202 = vmatprep.subr.bf16.mxu0 %v2861
    %3203 = vmatpush1.bf16.msra.mxu0 %v2860
    %3204 = vmatprep.subr.bf16.mxu0 %v2865
    %3205 = vmatpush1.bf16.msra.mxu0 %v2864
    %3206 = vmatprep.subr.bf16.mxu0 %v2869
    %3207 = vmatpush1.bf16.msra.mxu0 %v2868
    %3208 = vmatprep.subr.bf16.mxu0 %v2873
    %3209 = vmatpush1.bf16.msra.mxu0 %v2872
    %3210 = vmatprep.subr.bf16.mxu0 %v2877
    %3211 = vmatpush1.bf16.msra.mxu0 %v2876
    %3212 = vmatprep.subr.bf16.mxu0 %v2881
    %3213 = vmatpush1.bf16.msra.mxu0 %v2880
    %3214 = vmatprep.subr.bf16.mxu0 %v2885
    %3215 = vmatpush1.bf16.msra.mxu0 %v2884
    %3216 = vmatprep.subr.bf16.mxu0 %v2889
    %3217 = vmatpush1.bf16.msra.mxu0 %v2888
    %3218 = vmatprep.subr.bf16.mxu0 %v2893
    %3219 = vmatpush1.bf16.msra.mxu0 %v2892
    %3220 = vmatprep.subr.bf16.mxu0 %v2897
    %3221 = vmatpush1.bf16.msra.mxu0 %v2896
    %3222 = vmatprep.subr.bf16.mxu0 %v2901
    %3223 = vmatpush1.bf16.msra.mxu0 %v2900
    %3224 = vmatprep.subr.bf16.mxu0 %v2905
    %3225 = vmatpush1.bf16.msra.mxu0 %v2904
    %3226 = vmatprep.subr.bf16.mxu0 %v2909
    %3227 = vmatpush1.bf16.msra.mxu0 %v2908
    %3228 = vmatprep.subr.bf16.mxu0 %v2913
    %3229 = vmatpush1.bf16.msra.mxu0 %v2912
    %3230 = vmatprep.subr.bf16.mxu0 %v2917
    %3231 = vmatpush1.bf16.msra.mxu0 %v2916
    %3232 = vmatprep.subr.bf16.mxu0 %v2921
    %3233 = vmatpush1.bf16.msra.mxu0 %v2920
    %3234 = vmatprep.mubr.bf16.mxu0 %v931
    %3235 = vmatmul.mubr.bf16.gmra.mrb[0].mxu0 %v930
    %v3236 = vpop.f32.mrb[0].mxu0
    %v3237 = vadd.f32 %v3194, %v3236
    %v3238 = vpop.f32.mrb[0].mxu0
    %v3239 = vadd.f32 %v3196, %v3238
    %v3240 = vpop.f32.mrb[0].mxu0
    %v3241 = vadd.f32 %v3198, %v3240
    %v3242 = vpop.f32.mrb[0].mxu0
    %v3243 = vadd.f32 %v3200, %v3242
    %3244 = vdwg.mxu0
    %3245 = vmatprep.subr.bf16.mxu0 %v2735
    %3246 = vmatpush1.bf16.msra.mxu0 %v2734
    %3247 = vmatprep.subr.bf16.mxu0 %v2739
    %3248 = vmatpush1.bf16.msra.mxu0 %v2738
    %3249 = vmatprep.subr.bf16.mxu0 %v2743
    %3250 = vmatpush1.bf16.msra.mxu0 %v2742
    %3251 = vmatprep.subr.bf16.mxu0 %v2747
    %3252 = vmatpush1.bf16.msra.mxu0 %v2746
    %3253 = vmatprep.subr.bf16.mxu0 %v2751
    %3254 = vmatpush1.bf16.msra.mxu0 %v2750
    %3255 = vmatprep.subr.bf16.mxu0 %v2755
    %3256 = vmatpush1.bf16.msra.mxu0 %v2754
    %3257 = vmatprep.subr.bf16.mxu0 %v2759
    %3258 = vmatpush1.bf16.msra.mxu0 %v2758
    %3259 = vmatprep.subr.bf16.mxu0 %v2763
    %3260 = vmatpush1.bf16.msra.mxu0 %v2762
    %3261 = vmatprep.subr.bf16.mxu0 %v2767
    %3262 = vmatpush1.bf16.msra.mxu0 %v2766
    %3263 = vmatprep.subr.bf16.mxu0 %v2771
    %3264 = vmatpush1.bf16.msra.mxu0 %v2770
    %3265 = vmatprep.subr.bf16.mxu0 %v2775
    %3266 = vmatpush1.bf16.msra.mxu0 %v2774
    %3267 = vmatprep.subr.bf16.mxu0 %v2779
    %3268 = vmatpush1.bf16.msra.mxu0 %v2778
    %3269 = vmatprep.subr.bf16.mxu0 %v2783
    %3270 = vmatpush1.bf16.msra.mxu0 %v2782
    %3271 = vmatprep.subr.bf16.mxu0 %v2787
    %3272 = vmatpush1.bf16.msra.mxu0 %v2786
    %3273 = vmatprep.subr.bf16.mxu0 %v2791
    %3274 = vmatpush1.bf16.msra.mxu0 %v2790
    %3275 = vmatprep.subr.bf16.mxu0 %v2795
    %3276 = vmatpush1.bf16.msra.mxu0 %v2794
    %3277 = vmatprep.mubr.bf16.mxu0 %v927
    %3278 = vmatmul.mubr.bf16.gmra.mrb[0].mxu0 %v926
    %v3279 = vpop.f32.mrb[0].mxu0
    %v3280 = vadd.f32 0.0, %v3279
    %v3281 = vpop.f32.mrb[0].mxu0
    %v3282 = vadd.f32 0.0, %v3281
    %v3283 = vpop.f32.mrb[0].mxu0
    %v3284 = vadd.f32 0.0, %v3283
    %v3285 = vpop.f32.mrb[0].mxu0
    %v3286 = vadd.f32 0.0, %v3285
    %3287 = vdwg.mxu0
    %3288 = vmatprep.subr.bf16.mxu0 %v2799
    %3289 = vmatpush1.bf16.msra.mxu0 %v2798
    %3290 = vmatprep.subr.bf16.mxu0 %v2803
    %3291 = vmatpush1.bf16.msra.mxu0 %v2802
    %3292 = vmatprep.subr.bf16.mxu0 %v2807
    %3293 = vmatpush1.bf16.msra.mxu0 %v2806
    %3294 = vmatprep.subr.bf16.mxu0 %v2811
    %3295 = vmatpush1.bf16.msra.mxu0 %v2810
    %3296 = vmatprep.subr.bf16.mxu0 %v2815
    %3297 = vmatpush1.bf16.msra.mxu0 %v2814
    %3298 = vmatprep.subr.bf16.mxu0 %v2819
    %3299 = vmatpush1.bf16.msra.mxu0 %v2818
    %3300 = vmatprep.subr.bf16.mxu0 %v2823
    %3301 = vmatpush1.bf16.msra.mxu0 %v2822
    %3302 = vmatprep.subr.bf16.mxu0 %v2827
    %3303 = vmatpush1.bf16.msra.mxu0 %v2826
    %3304 = vmatprep.subr.bf16.mxu0 %v2831
    %3305 = vmatpush1.bf16.msra.mxu0 %v2830
    %3306 = vmatprep.subr.bf16.mxu0 %v2835
    %3307 = vmatpush1.bf16.msra.mxu0 %v2834
    %3308 = vmatprep.subr.bf16.mxu0 %v2839
    %3309 = vmatpush1.bf16.msra.mxu0 %v2838
    %3310 = vmatprep.subr.bf16.mxu0 %v2843
    %3311 = vmatpush1.bf16.msra.mxu0 %v2842
    %3312 = vmatprep.subr.bf16.mxu0 %v2847
    %3313 = vmatpush1.bf16.msra.mxu0 %v2846
    %3314 = vmatprep.subr.bf16.mxu0 %v2851
    %3315 = vmatpush1.bf16.msra.mxu0 %v2850
    %3316 = vmatprep.subr.bf16.mxu0 %v2855
    %3317 = vmatpush1.bf16.msra.mxu0 %v2854
    %3318 = vmatprep.subr.bf16.mxu0 %v2859
    %3319 = vmatpush1.bf16.msra.mxu0 %v2858
    %3320 = vmatprep.mubr.bf16.mxu0 %v929
    %3321 = vmatmul.mubr.bf16.gmra.mrb[0].mxu0 %v928
    %v3322 = vpop.f32.mrb[0].mxu0
    %v3323 = vadd.f32 %v3280, %v3322
    %v3324 = vpop.f32.mrb[0].mxu0
    %v3325 = vadd.f32 %v3282, %v3324
    %v3326 = vpop.f32.mrb[0].mxu0
    %v3327 = vadd.f32 %v3284, %v3326
    %v3328 = vpop.f32.mrb[0].mxu0
    %v3329 = vadd.f32 %v3286, %v3328
    %3330 = vdwg.mxu0
    %3331 = vmatprep.subr.bf16.mxu0 %v2863
    %3332 = vmatpush1.bf16.msra.mxu0 %v2862
    %3333 = vmatprep.subr.bf16.mxu0 %v2867
    %3334 = vmatpush1.bf16.msra.mxu0 %v2866
    %3335 = vmatprep.subr.bf16.mxu0 %v2871
    %3336 = vmatpush1.bf16.msra.mxu0 %v2870
    %3337 = vmatprep.subr.bf16.mxu0 %v2875
    %3338 = vmatpush1.bf16.msra.mxu0 %v2874
    %3339 = vmatprep.subr.bf16.mxu0 %v2879
    %3340 = vmatpush1.bf16.msra.mxu0 %v2878
    %3341 = vmatprep.subr.bf16.mxu0 %v2883
    %3342 = vmatpush1.bf16.msra.mxu0 %v2882
    %3343 = vmatprep.subr.bf16.mxu0 %v2887
    %3344 = vmatpush1.bf16.msra.mxu0 %v2886
    %3345 = vmatprep.subr.bf16.mxu0 %v2891
    %3346 = vmatpush1.bf16.msra.mxu0 %v2890
    %3347 = vmatprep.subr.bf16.mxu0 %v2895
    %3348 = vmatpush1.bf16.msra.mxu0 %v2894
    %3349 = vmatprep.subr.bf16.mxu0 %v2899
    %3350 = vmatpush1.bf16.msra.mxu0 %v2898
    %3351 = vmatprep.subr.bf16.mxu0 %v2903
    %3352 = vmatpush1.bf16.msra.mxu0 %v2902
    %3353 = vmatprep.subr.bf16.mxu0 %v2907
    %3354 = vmatpush1.bf16.msra.mxu0 %v2906
    %3355 = vmatprep.subr.bf16.mxu0 %v2911
    %3356 = vmatpush1.bf16.msra.mxu0 %v2910
    %3357 = vmatprep.subr.bf16.mxu0 %v2915
    %3358 = vmatpush1.bf16.msra.mxu0 %v2914
    %3359 = vmatprep.subr.bf16.mxu0 %v2919
    %3360 = vmatpush1.bf16.msra.mxu0 %v2918
    %3361 = vmatprep.subr.bf16.mxu0 %v2923
    %3362 = vmatpush1.bf16.msra.mxu0 %v2922
    %3363 = vmatprep.mubr.bf16.mxu0 %v931
    %3364 = vmatmul.mubr.bf16.gmra.mrb[0].mxu0 %v930
    %v3365 = vpop.f32.mrb[0].mxu0
    %v3366 = vadd.f32 %v3323, %v3365
    %v3367 = vpop.f32.mrb[0].mxu0
    %v3368 = vadd.f32 %v3325, %v3367
    %v3369 = vpop.f32.mrb[0].mxu0
    %v3370 = vadd.f32 %v3327, %v3369
    %v3371 = vpop.f32.mrb[0].mxu0
    %v3372 = vadd.f32 %v3329, %v3371
    %3373 = vdwg.mxu0
    %v3374 = vmax.f32 %v2019, %v3237
    %v3375 = vmax.f32 %v2021, %v3239
    %v3376 = vmax.f32 %v2148, %v3366
    %v3377 = vmax.f32 %v2150, %v3368
    %v3378 = vmax.f32 %v2023, %v3241
    %v3379 = vmax.f32 %v2025, %v3243
    %v3380 = vmax.f32 %v2152, %v3370
    %v3381 = vmax.f32 %v2154, %v3372
    %v3574 = vunpack.c.l.b16 %v144
    %v3575 = vunpack.c.h.b16 %v144
    %v3576 = vunpack.c.l.b16 %v145
    %v3577 = vunpack.c.h.b16 %v145
    %v3578 = vunpack.c.l.b16 %v152
    %v3579 = vunpack.c.h.b16 %v152
    %v3580 = vunpack.c.l.b16 %v153
    %v3581 = vunpack.c.h.b16 %v153
    %v3582 = vunpack.c.l.b16 %v160
    %v3583 = vunpack.c.h.b16 %v160
    %v3584 = vunpack.c.l.b16 %v161
    %v3585 = vunpack.c.h.b16 %v161
    %v3586 = vunpack.c.l.b16 %v168
    %v3587 = vunpack.c.h.b16 %v168
    %v3588 = vunpack.c.l.b16 %v169
    %v3589 = vunpack.c.h.b16 %v169
    %v3590 = vunpack.c.l.b16 %v176
    %v3591 = vunpack.c.h.b16 %v176
    %v3592 = vunpack.c.l.b16 %v177
    %v3593 = vunpack.c.h.b16 %v177
    %v3594 = vunpack.c.l.b16 %v184
    %v3595 = vunpack.c.h.b16 %v184
    %v3596 = vunpack.c.l.b16 %v185
    %v3597 = vunpack.c.h.b16 %v185
    %v3598 = vunpack.c.l.b16 %v192
    %v3599 = vunpack.c.h.b16 %v192
    %v3600 = vunpack.c.l.b16 %v193
    %v3601 = vunpack.c.h.b16 %v193
    %v3602 = vunpack.c.l.b16 %v200
    %v3603 = vunpack.c.h.b16 %v200
    %v3604 = vunpack.c.l.b16 %v201
    %v3605 = vunpack.c.h.b16 %v201
    %v3606 = vunpack.c.l.b16 %v208
    %v3607 = vunpack.c.h.b16 %v208
    %v3608 = vunpack.c.l.b16 %v209
    %v3609 = vunpack.c.h.b16 %v209
    %v3610 = vunpack.c.l.b16 %v216
    %v3611 = vunpack.c.h.b16 %v216
    %v3612 = vunpack.c.l.b16 %v217
    %v3613 = vunpack.c.h.b16 %v217
    %v3614 = vunpack.c.l.b16 %v224
    %v3615 = vunpack.c.h.b16 %v224
    %v3616 = vunpack.c.l.b16 %v225
    %v3617 = vunpack.c.h.b16 %v225
    %v3618 = vunpack.c.l.b16 %v232
    %v3619 = vunpack.c.h.b16 %v232
    %v3620 = vunpack.c.l.b16 %v233
    %v3621 = vunpack.c.h.b16 %v233
    %v3622 = vunpack.c.l.b16 %v240
    %v3623 = vunpack.c.h.b16 %v240
    %v3624 = vunpack.c.l.b16 %v241
    %v3625 = vunpack.c.h.b16 %v241
    %v3626 = vunpack.c.l.b16 %v248
    %v3627 = vunpack.c.h.b16 %v248
    %v3628 = vunpack.c.l.b16 %v249
    %v3629 = vunpack.c.h.b16 %v249
    %v3630 = vunpack.c.l.b16 %v256
    %v3631 = vunpack.c.h.b16 %v256
    %v3632 = vunpack.c.l.b16 %v257
    %v3633 = vunpack.c.h.b16 %v257
    %v3634 = vunpack.c.l.b16 %v264
    %v3635 = vunpack.c.h.b16 %v264
    %v3636 = vunpack.c.l.b16 %v265
    %v3637 = vunpack.c.h.b16 %v265
    %v3638 = vunpack.c.l.b16 %v272
    %v3639 = vunpack.c.h.b16 %v272
    %v3640 = vunpack.c.l.b16 %v273
    %v3641 = vunpack.c.h.b16 %v273
    %v3642 = vunpack.c.l.b16 %v280
    %v3643 = vunpack.c.h.b16 %v280
    %v3644 = vunpack.c.l.b16 %v281
    %v3645 = vunpack.c.h.b16 %v281
    %v3646 = vunpack.c.l.b16 %v288
    %v3647 = vunpack.c.h.b16 %v288
    %v3648 = vunpack.c.l.b16 %v289
    %v3649 = vunpack.c.h.b16 %v289
    %v3650 = vunpack.c.l.b16 %v296
    %v3651 = vunpack.c.h.b16 %v296
    %v3652 = vunpack.c.l.b16 %v297
    %v3653 = vunpack.c.h.b16 %v297
    %v3654 = vunpack.c.l.b16 %v304
    %v3655 = vunpack.c.h.b16 %v304
    %v3656 = vunpack.c.l.b16 %v305
    %v3657 = vunpack.c.h.b16 %v305
    %v3658 = vunpack.c.l.b16 %v312
    %v3659 = vunpack.c.h.b16 %v312
    %v3660 = vunpack.c.l.b16 %v313
    %v3661 = vunpack.c.h.b16 %v313
    %v3662 = vunpack.c.l.b16 %v320
    %v3663 = vunpack.c.h.b16 %v320
    %v3664 = vunpack.c.l.b16 %v321
    %v3665 = vunpack.c.h.b16 %v321
    %v3666 = vunpack.c.l.b16 %v328
    %v3667 = vunpack.c.h.b16 %v328
    %v3668 = vunpack.c.l.b16 %v329
    %v3669 = vunpack.c.h.b16 %v329
    %v3670 = vunpack.c.l.b16 %v336
    %v3671 = vunpack.c.h.b16 %v336
    %v3672 = vunpack.c.l.b16 %v337
    %v3673 = vunpack.c.h.b16 %v337
    %v3674 = vunpack.c.l.b16 %v344
    %v3675 = vunpack.c.h.b16 %v344
    %v3676 = vunpack.c.l.b16 %v345
    %v3677 = vunpack.c.h.b16 %v345
    %v3678 = vunpack.c.l.b16 %v352
    %v3679 = vunpack.c.h.b16 %v352
    %v3680 = vunpack.c.l.b16 %v353
    %v3681 = vunpack.c.h.b16 %v353
    %v3682 = vunpack.c.l.b16 %v360
    %v3683 = vunpack.c.h.b16 %v360
    %v3684 = vunpack.c.l.b16 %v361
    %v3685 = vunpack.c.h.b16 %v361
    %v3686 = vunpack.c.l.b16 %v368
    %v3687 = vunpack.c.h.b16 %v368
    %v3688 = vunpack.c.l.b16 %v369
    %v3689 = vunpack.c.h.b16 %v369
    %v3690 = vunpack.c.l.b16 %v376
    %v3691 = vunpack.c.h.b16 %v376
    %v3692 = vunpack.c.l.b16 %v377
    %v3693 = vunpack.c.h.b16 %v377
    %v3694 = vunpack.c.l.b16 %v384
    %v3695 = vunpack.c.h.b16 %v384
    %v3696 = vunpack.c.l.b16 %v385
    %v3697 = vunpack.c.h.b16 %v385
    %v3698 = vunpack.c.l.b16 %v392
    %v3699 = vunpack.c.h.b16 %v392
    %v3700 = vunpack.c.l.b16 %v393
    %v3701 = vunpack.c.h.b16 %v393
    %v3702 = vunpack.c.l.b16 %v400
    %v3703 = vunpack.c.h.b16 %v400
    %v3704 = vunpack.c.l.b16 %v401
    %v3705 = vunpack.c.h.b16 %v401
    %v3706 = vunpack.c.l.b16 %v408
    %v3707 = vunpack.c.h.b16 %v408
    %v3708 = vunpack.c.l.b16 %v409
    %v3709 = vunpack.c.h.b16 %v409
    %v3710 = vunpack.c.l.b16 %v416
    %v3711 = vunpack.c.h.b16 %v416
    %v3712 = vunpack.c.l.b16 %v417
    %v3713 = vunpack.c.h.b16 %v417
    %v3714 = vunpack.c.l.b16 %v424
    %v3715 = vunpack.c.h.b16 %v424
    %v3716 = vunpack.c.l.b16 %v425
    %v3717 = vunpack.c.h.b16 %v425
    %v3718 = vunpack.c.l.b16 %v432
    %v3719 = vunpack.c.h.b16 %v432
    %v3720 = vunpack.c.l.b16 %v433
    %v3721 = vunpack.c.h.b16 %v433
    %v3722 = vunpack.c.l.b16 %v440
    %v3723 = vunpack.c.h.b16 %v440
    %v3724 = vunpack.c.l.b16 %v441
    %v3725 = vunpack.c.h.b16 %v441
    %v3726 = vunpack.c.l.b16 %v448
    %v3727 = vunpack.c.h.b16 %v448
    %v3728 = vunpack.c.l.b16 %v449
    %v3729 = vunpack.c.h.b16 %v449
    %v3730 = vunpack.c.l.b16 %v456
    %v3731 = vunpack.c.h.b16 %v456
    %v3732 = vunpack.c.l.b16 %v457
    %v3733 = vunpack.c.h.b16 %v457
    %v3734 = vunpack.c.l.b16 %v464
    %v3735 = vunpack.c.h.b16 %v464
    %v3736 = vunpack.c.l.b16 %v465
    %v3737 = vunpack.c.h.b16 %v465
    %v3738 = vunpack.c.l.b16 %v472
    %v3739 = vunpack.c.h.b16 %v472
    %v3740 = vunpack.c.l.b16 %v473
    %v3741 = vunpack.c.h.b16 %v473
    %v3742 = vunpack.c.l.b16 %v480
    %v3743 = vunpack.c.h.b16 %v480
    %v3744 = vunpack.c.l.b16 %v481
    %v3745 = vunpack.c.h.b16 %v481
    %v3746 = vunpack.c.l.b16 %v488
    %v3747 = vunpack.c.h.b16 %v488
    %v3748 = vunpack.c.l.b16 %v489
    %v3749 = vunpack.c.h.b16 %v489
    %v3750 = vunpack.c.l.b16 %v496
    %v3751 = vunpack.c.h.b16 %v496
    %v3752 = vunpack.c.l.b16 %v497
    %v3753 = vunpack.c.h.b16 %v497
    %v3754 = vunpack.c.l.b16 %v504
    %v3755 = vunpack.c.h.b16 %v504
    %v3756 = vunpack.c.l.b16 %v505
    %v3757 = vunpack.c.h.b16 %v505
    %v3758 = vunpack.c.l.b16 %v512
    %v3759 = vunpack.c.h.b16 %v512
    %v3760 = vunpack.c.l.b16 %v513
    %v3761 = vunpack.c.h.b16 %v513
    %v3762 = vunpack.c.l.b16 %v520
    %v3763 = vunpack.c.h.b16 %v520
    %v3764 = vunpack.c.l.b16 %v521
    %v3765 = vunpack.c.h.b16 %v521
    %v3766 = vunpack.c.l.b16 %v528
    %v3767 = vunpack.c.h.b16 %v528
    %v3768 = vunpack.c.l.b16 %v529
    %v3769 = vunpack.c.h.b16 %v529
    %v3770 = vunpack.c.l.b16 %v536
    %v3771 = vunpack.c.h.b16 %v536
    %v3772 = vunpack.c.l.b16 %v537
    %v3773 = vunpack.c.h.b16 %v537
    %v3774 = vunpack.c.l.b16 %v544
    %v3775 = vunpack.c.h.b16 %v544
    %v3776 = vunpack.c.l.b16 %v545
    %v3777 = vunpack.c.h.b16 %v545
    %v3778 = vunpack.c.l.b16 %v552
    %v3779 = vunpack.c.h.b16 %v552
    %v3780 = vunpack.c.l.b16 %v553
    %v3781 = vunpack.c.h.b16 %v553
    %v3782 = vunpack.c.l.b16 %v560
    %v3783 = vunpack.c.h.b16 %v560
    %v3784 = vunpack.c.l.b16 %v561
    %v3785 = vunpack.c.h.b16 %v561
    %v3786 = vunpack.c.l.b16 %v568
    %v3787 = vunpack.c.h.b16 %v568
    %v3788 = vunpack.c.l.b16 %v569
    %v3789 = vunpack.c.h.b16 %v569
    %v3790 = vunpack.c.l.b16 %v576
    %v3791 = vunpack.c.h.b16 %v576
    %v3792 = vunpack.c.l.b16 %v577
    %v3793 = vunpack.c.h.b16 %v577
    %v3794 = vunpack.c.l.b16 %v584
    %v3795 = vunpack.c.h.b16 %v584
    %v3796 = vunpack.c.l.b16 %v585
    %v3797 = vunpack.c.h.b16 %v585
    %v3798 = vunpack.c.l.b16 %v592
    %v3799 = vunpack.c.h.b16 %v592
    %v3800 = vunpack.c.l.b16 %v593
    %v3801 = vunpack.c.h.b16 %v593
    %v3802 = vunpack.c.l.b16 %v600
    %v3803 = vunpack.c.h.b16 %v600
    %v3804 = vunpack.c.l.b16 %v601
    %v3805 = vunpack.c.h.b16 %v601
    %v3806 = vunpack.c.l.b16 %v608
    %v3807 = vunpack.c.h.b16 %v608
    %v3808 = vunpack.c.l.b16 %v609
    %v3809 = vunpack.c.h.b16 %v609
    %v3810 = vunpack.c.l.b16 %v616
    %v3811 = vunpack.c.h.b16 %v616
    %v3812 = vunpack.c.l.b16 %v617
    %v3813 = vunpack.c.h.b16 %v617
    %v3814 = vunpack.c.l.b16 %v624
    %v3815 = vunpack.c.h.b16 %v624
    %v3816 = vunpack.c.l.b16 %v625
    %v3817 = vunpack.c.h.b16 %v625
    %v3818 = vunpack.c.l.b16 %v632
    %v3819 = vunpack.c.h.b16 %v632
    %v3820 = vunpack.c.l.b16 %v633
    %v3821 = vunpack.c.h.b16 %v633
    %v3822 = vunpack.c.l.b16 %v640
    %v3823 = vunpack.c.h.b16 %v640
    %v3824 = vunpack.c.l.b16 %v641
    %v3825 = vunpack.c.h.b16 %v641
    %v3826 = vunpack.c.l.b16 %v648
    %v3827 = vunpack.c.h.b16 %v648
    %v3828 = vunpack.c.l.b16 %v649
    %v3829 = vunpack.c.h.b16 %v649
    %v3830 = vunpack.c.l.b16 %v656
    %v3831 = vunpack.c.h.b16 %v656
    %v3832 = vunpack.c.l.b16 %v657
    %v3833 = vunpack.c.h.b16 %v657
    %v3834 = vunpack.c.l.b16 %v664
    %v3835 = vunpack.c.h.b16 %v664
    %v3836 = vunpack.c.l.b16 %v665
    %v3837 = vunpack.c.h.b16 %v665
    %v3838 = vunpack.c.l.b16 %v672
    %v3839 = vunpack.c.h.b16 %v672
    %v3840 = vunpack.c.l.b16 %v673
    %v3841 = vunpack.c.h.b16 %v673
    %v3842 = vunpack.c.l.b16 %v680
    %v3843 = vunpack.c.h.b16 %v680
    %v3844 = vunpack.c.l.b16 %v681
    %v3845 = vunpack.c.h.b16 %v681
    %v3846 = vunpack.c.l.b16 %v688
    %v3847 = vunpack.c.h.b16 %v688
    %v3848 = vunpack.c.l.b16 %v689
    %v3849 = vunpack.c.h.b16 %v689
    %v3850 = vunpack.c.l.b16 %v696
    %v3851 = vunpack.c.h.b16 %v696
    %v3852 = vunpack.c.l.b16 %v697
    %v3853 = vunpack.c.h.b16 %v697
    %v3854 = vunpack.c.l.b16 %v704
    %v3855 = vunpack.c.h.b16 %v704
    %v3856 = vunpack.c.l.b16 %v705
    %v3857 = vunpack.c.h.b16 %v705
    %v3858 = vunpack.c.l.b16 %v712
    %v3859 = vunpack.c.h.b16 %v712
    %v3860 = vunpack.c.l.b16 %v713
    %v3861 = vunpack.c.h.b16 %v713
    %v3862 = vunpack.c.l.b16 %v720
    %v3863 = vunpack.c.h.b16 %v720
    %v3864 = vunpack.c.l.b16 %v721
    %v3865 = vunpack.c.h.b16 %v721
    %v3866 = vunpack.c.l.b16 %v728
    %v3867 = vunpack.c.h.b16 %v728
    %v3868 = vunpack.c.l.b16 %v729
    %v3869 = vunpack.c.h.b16 %v729
    %v3870 = vunpack.c.l.b16 %v736
    %v3871 = vunpack.c.h.b16 %v736
    %v3872 = vunpack.c.l.b16 %v737
    %v3873 = vunpack.c.h.b16 %v737
    %v3874 = vunpack.c.l.b16 %v744
    %v3875 = vunpack.c.h.b16 %v744
    %v3876 = vunpack.c.l.b16 %v745
    %v3877 = vunpack.c.h.b16 %v745
    %v3878 = vunpack.c.l.b16 %v752
    %v3879 = vunpack.c.h.b16 %v752
    %v3880 = vunpack.c.l.b16 %v753
    %v3881 = vunpack.c.h.b16 %v753
    %v3882 = vunpack.c.l.b16 %v760
    %v3883 = vunpack.c.h.b16 %v760
    %v3884 = vunpack.c.l.b16 %v761
    %v3885 = vunpack.c.h.b16 %v761
    %v3886 = vunpack.c.l.b16 %v768
    %v3887 = vunpack.c.h.b16 %v768
    %v3888 = vunpack.c.l.b16 %v769
    %v3889 = vunpack.c.h.b16 %v769
    %v3890 = vunpack.c.l.b16 %v776
    %v3891 = vunpack.c.h.b16 %v776
    %v3892 = vunpack.c.l.b16 %v777
    %v3893 = vunpack.c.h.b16 %v777
    %v3894 = vunpack.c.l.b16 %v784
    %v3895 = vunpack.c.h.b16 %v784
    %v3896 = vunpack.c.l.b16 %v785
    %v3897 = vunpack.c.h.b16 %v785
    %v3898 = vunpack.c.l.b16 %v792
    %v3899 = vunpack.c.h.b16 %v792
    %v3900 = vunpack.c.l.b16 %v793
    %v3901 = vunpack.c.h.b16 %v793
    %v3902 = vunpack.c.l.b16 %v800
    %v3903 = vunpack.c.h.b16 %v800
    %v3904 = vunpack.c.l.b16 %v801
    %v3905 = vunpack.c.h.b16 %v801
    %v3906 = vunpack.c.l.b16 %v808
    %v3907 = vunpack.c.h.b16 %v808
    %v3908 = vunpack.c.l.b16 %v809
    %v3909 = vunpack.c.h.b16 %v809
    %v3910 = vunpack.c.l.b16 %v816
    %v3911 = vunpack.c.h.b16 %v816
    %v3912 = vunpack.c.l.b16 %v817
    %v3913 = vunpack.c.h.b16 %v817
    %v3914 = vunpack.c.l.b16 %v824
    %v3915 = vunpack.c.h.b16 %v824
    %v3916 = vunpack.c.l.b16 %v825
    %v3917 = vunpack.c.h.b16 %v825
    %v3918 = vunpack.c.l.b16 %v832
    %v3919 = vunpack.c.h.b16 %v832
    %v3920 = vunpack.c.l.b16 %v833
    %v3921 = vunpack.c.h.b16 %v833
    %v3922 = vunpack.c.l.b16 %v840
    %v3923 = vunpack.c.h.b16 %v840
    %v3924 = vunpack.c.l.b16 %v841
    %v3925 = vunpack.c.h.b16 %v841
    %v3926 = vunpack.c.l.b16 %v848
    %v3927 = vunpack.c.h.b16 %v848
    %v3928 = vunpack.c.l.b16 %v849
    %v3929 = vunpack.c.h.b16 %v849
    %v3930 = vunpack.c.l.b16 %v856
    %v3931 = vunpack.c.h.b16 %v856
    %v3932 = vunpack.c.l.b16 %v857
    %v3933 = vunpack.c.h.b16 %v857
    %v3934 = vunpack.c.l.b16 %v864
    %v3935 = vunpack.c.h.b16 %v864
    %v3936 = vunpack.c.l.b16 %v865
    %v3937 = vunpack.c.h.b16 %v865
    %v3938 = vunpack.c.l.b16 %v872
    %v3939 = vunpack.c.h.b16 %v872
    %v3940 = vunpack.c.l.b16 %v873
    %v3941 = vunpack.c.h.b16 %v873
    %v3942 = vunpack.c.l.b16 %v880
    %v3943 = vunpack.c.h.b16 %v880
    %v3944 = vunpack.c.l.b16 %v881
    %v3945 = vunpack.c.h.b16 %v881
    %v3946 = vunpack.c.l.b16 %v888
    %v3947 = vunpack.c.h.b16 %v888
    %v3948 = vunpack.c.l.b16 %v889
    %v3949 = vunpack.c.h.b16 %v889
    %v3950 = vunpack.c.l.b16 %v896
    %v3951 = vunpack.c.h.b16 %v896
    %v3952 = vunpack.c.l.b16 %v897
    %v3953 = vunpack.c.h.b16 %v897
    %v3954 = vunpack.c.l.b16 %v904
    %v3955 = vunpack.c.h.b16 %v904
    %v3956 = vunpack.c.l.b16 %v905
    %v3957 = vunpack.c.h.b16 %v905
    %v3958 = vpack.c.b16 %v3578, %v3574
    %v3959 = vpack.c.b16 %v3579, %v3575
    %v3960 = vpack.c.b16 %v3580, %v3576
    %v3961 = vpack.c.b16 %v3581, %v3577
    %v3962 = vpack.c.b16 %v3586, %v3582
    %v3963 = vpack.c.b16 %v3587, %v3583
    %v3964 = vpack.c.b16 %v3588, %v3584
    %v3965 = vpack.c.b16 %v3589, %v3585
    %v3966 = vpack.c.b16 %v3594, %v3590
    %v3967 = vpack.c.b16 %v3595, %v3591
    %v3968 = vpack.c.b16 %v3596, %v3592
    %v3969 = vpack.c.b16 %v3597, %v3593
    %v3970 = vpack.c.b16 %v3602, %v3598
    %v3971 = vpack.c.b16 %v3603, %v3599
    %v3972 = vpack.c.b16 %v3604, %v3600
    %v3973 = vpack.c.b16 %v3605, %v3601
    %v3974 = vpack.c.b16 %v3610, %v3606
    %v3975 = vpack.c.b16 %v3611, %v3607
    %v3976 = vpack.c.b16 %v3612, %v3608
    %v3977 = vpack.c.b16 %v3613, %v3609
    %v3978 = vpack.c.b16 %v3618, %v3614
    %v3979 = vpack.c.b16 %v3619, %v3615
    %v3980 = vpack.c.b16 %v3620, %v3616
    %v3981 = vpack.c.b16 %v3621, %v3617
    %v3982 = vpack.c.b16 %v3626, %v3622
    %v3983 = vpack.c.b16 %v3627, %v3623
    %v3984 = vpack.c.b16 %v3628, %v3624
    %v3985 = vpack.c.b16 %v3629, %v3625
    %v3986 = vpack.c.b16 %v3634, %v3630
    %v3987 = vpack.c.b16 %v3635, %v3631
    %v3988 = vpack.c.b16 %v3636, %v3632
    %v3989 = vpack.c.b16 %v3637, %v3633
    %v3990 = vpack.c.b16 %v3642, %v3638
    %v3991 = vpack.c.b16 %v3643, %v3639
    %v3992 = vpack.c.b16 %v3644, %v3640
    %v3993 = vpack.c.b16 %v3645, %v3641
    %v3994 = vpack.c.b16 %v3650, %v3646
    %v3995 = vpack.c.b16 %v3651, %v3647
    %v3996 = vpack.c.b16 %v3652, %v3648
    %v3997 = vpack.c.b16 %v3653, %v3649
    %v3998 = vpack.c.b16 %v3658, %v3654
    %v3999 = vpack.c.b16 %v3659, %v3655
    %v4000 = vpack.c.b16 %v3660, %v3656
    %v4001 = vpack.c.b16 %v3661, %v3657
    %v4002 = vpack.c.b16 %v3666, %v3662
    %v4003 = vpack.c.b16 %v3667, %v3663
    %v4004 = vpack.c.b16 %v3668, %v3664
    %v4005 = vpack.c.b16 %v3669, %v3665
    %v4006 = vpack.c.b16 %v3674, %v3670
    %v4007 = vpack.c.b16 %v3675, %v3671
    %v4008 = vpack.c.b16 %v3676, %v3672
    %v4009 = vpack.c.b16 %v3677, %v3673
    %v4010 = vpack.c.b16 %v3682, %v3678
    %v4011 = vpack.c.b16 %v3683, %v3679
    %v4012 = vpack.c.b16 %v3684, %v3680
    %v4013 = vpack.c.b16 %v3685, %v3681
    %v4014 = vpack.c.b16 %v3690, %v3686
    %v4015 = vpack.c.b16 %v3691, %v3687
    %v4016 = vpack.c.b16 %v3692, %v3688
    %v4017 = vpack.c.b16 %v3693, %v3689
    %v4018 = vpack.c.b16 %v3698, %v3694
    %v4019 = vpack.c.b16 %v3699, %v3695
    %v4020 = vpack.c.b16 %v3700, %v3696
    %v4021 = vpack.c.b16 %v3701, %v3697
    %v4022 = vpack.c.b16 %v3706, %v3702
    %v4023 = vpack.c.b16 %v3707, %v3703
    %v4024 = vpack.c.b16 %v3708, %v3704
    %v4025 = vpack.c.b16 %v3709, %v3705
    %v4026 = vpack.c.b16 %v3714, %v3710
    %v4027 = vpack.c.b16 %v3715, %v3711
    %v4028 = vpack.c.b16 %v3716, %v3712
    %v4029 = vpack.c.b16 %v3717, %v3713
    %v4030 = vpack.c.b16 %v3722, %v3718
    %v4031 = vpack.c.b16 %v3723, %v3719
    %v4032 = vpack.c.b16 %v3724, %v3720
    %v4033 = vpack.c.b16 %v3725, %v3721
    %v4034 = vpack.c.b16 %v3730, %v3726
    %v4035 = vpack.c.b16 %v3731, %v3727
    %v4036 = vpack.c.b16 %v3732, %v3728
    %v4037 = vpack.c.b16 %v3733, %v3729
    %v4038 = vpack.c.b16 %v3738, %v3734
    %v4039 = vpack.c.b16 %v3739, %v3735
    %v4040 = vpack.c.b16 %v3740, %v3736
    %v4041 = vpack.c.b16 %v3741, %v3737
    %v4042 = vpack.c.b16 %v3746, %v3742
    %v4043 = vpack.c.b16 %v3747, %v3743
    %v4044 = vpack.c.b16 %v3748, %v3744
    %v4045 = vpack.c.b16 %v3749, %v3745
    %v4046 = vpack.c.b16 %v3754, %v3750
    %v4047 = vpack.c.b16 %v3755, %v3751
    %v4048 = vpack.c.b16 %v3756, %v3752
    %v4049 = vpack.c.b16 %v3757, %v3753
    %v4050 = vpack.c.b16 %v3762, %v3758
    %v4051 = vpack.c.b16 %v3763, %v3759
    %v4052 = vpack.c.b16 %v3764, %v3760
    %v4053 = vpack.c.b16 %v3765, %v3761
    %v4054 = vpack.c.b16 %v3770, %v3766
    %v4055 = vpack.c.b16 %v3771, %v3767
    %v4056 = vpack.c.b16 %v3772, %v3768
    %v4057 = vpack.c.b16 %v3773, %v3769
    %v4058 = vpack.c.b16 %v3778, %v3774
    %v4059 = vpack.c.b16 %v3779, %v3775
    %v4060 = vpack.c.b16 %v3780, %v3776
    %v4061 = vpack.c.b16 %v3781, %v3777
    %v4062 = vpack.c.b16 %v3786, %v3782
    %v4063 = vpack.c.b16 %v3787, %v3783
    %v4064 = vpack.c.b16 %v3788, %v3784
    %v4065 = vpack.c.b16 %v3789, %v3785
    %v4066 = vpack.c.b16 %v3794, %v3790
    %v4067 = vpack.c.b16 %v3795, %v3791
    %v4068 = vpack.c.b16 %v3796, %v3792
    %v4069 = vpack.c.b16 %v3797, %v3793
    %v4070 = vpack.c.b16 %v3802, %v3798
    %v4071 = vpack.c.b16 %v3803, %v3799
    %v4072 = vpack.c.b16 %v3804, %v3800
    %v4073 = vpack.c.b16 %v3805, %v3801
    %v4074 = vpack.c.b16 %v3810, %v3806
    %v4075 = vpack.c.b16 %v3811, %v3807
    %v4076 = vpack.c.b16 %v3812, %v3808
    %v4077 = vpack.c.b16 %v3813, %v3809
    %v4078 = vpack.c.b16 %v3818, %v3814
    %v4079 = vpack.c.b16 %v3819, %v3815
    %v4080 = vpack.c.b16 %v3820, %v3816
    %v4081 = vpack.c.b16 %v3821, %v3817
    %v4082 = vpack.c.b16 %v3826, %v3822
    %v4083 = vpack.c.b16 %v3827, %v3823
    %v4084 = vpack.c.b16 %v3828, %v3824
    %v4085 = vpack.c.b16 %v3829, %v3825
    %v4086 = vpack.c.b16 %v3834, %v3830
    %v4087 = vpack.c.b16 %v3835, %v3831
    %v4088 = vpack.c.b16 %v3836, %v3832
    %v4089 = vpack.c.b16 %v3837, %v3833
    %v4090 = vpack.c.b16 %v3842, %v3838
    %v4091 = vpack.c.b16 %v3843, %v3839
    %v4092 = vpack.c.b16 %v3844, %v3840
    %v4093 = vpack.c.b16 %v3845, %v3841
    %v4094 = vpack.c.b16 %v3850, %v3846
    %v4095 = vpack.c.b16 %v3851, %v3847
    %v4096 = vpack.c.b16 %v3852, %v3848
    %v4097 = vpack.c.b16 %v3853, %v3849
    %v4098 = vpack.c.b16 %v3858, %v3854
    %v4099 = vpack.c.b16 %v3859, %v3855
    %v4100 = vpack.c.b16 %v3860, %v3856
    %v4101 = vpack.c.b16 %v3861, %v3857
    %v4102 = vpack.c.b16 %v3866, %v3862
    %v4103 = vpack.c.b16 %v3867, %v3863
    %v4104 = vpack.c.b16 %v3868, %v3864
    %v4105 = vpack.c.b16 %v3869, %v3865
    %v4106 = vpack.c.b16 %v3874, %v3870
    %v4107 = vpack.c.b16 %v3875, %v3871
    %v4108 = vpack.c.b16 %v3876, %v3872
    %v4109 = vpack.c.b16 %v3877, %v3873
    %v4110 = vpack.c.b16 %v3882, %v3878
    %v4111 = vpack.c.b16 %v3883, %v3879
    %v4112 = vpack.c.b16 %v3884, %v3880
    %v4113 = vpack.c.b16 %v3885, %v3881
    %v4114 = vpack.c.b16 %v3890, %v3886
    %v4115 = vpack.c.b16 %v3891, %v3887
    %v4116 = vpack.c.b16 %v3892, %v3888
    %v4117 = vpack.c.b16 %v3893, %v3889
    %v4118 = vpack.c.b16 %v3898, %v3894
    %v4119 = vpack.c.b16 %v3899, %v3895
    %v4120 = vpack.c.b16 %v3900, %v3896
    %v4121 = vpack.c.b16 %v3901, %v3897
    %v4122 = vpack.c.b16 %v3906, %v3902
    %v4123 = vpack.c.b16 %v3907, %v3903
    %v4124 = vpack.c.b16 %v3908, %v3904
    %v4125 = vpack.c.b16 %v3909, %v3905
    %v4126 = vpack.c.b16 %v3914, %v3910
    %v4127 = vpack.c.b16 %v3915, %v3911
    %v4128 = vpack.c.b16 %v3916, %v3912
    %v4129 = vpack.c.b16 %v3917, %v3913
    %v4130 = vpack.c.b16 %v3922, %v3918
    %v4131 = vpack.c.b16 %v3923, %v3919
    %v4132 = vpack.c.b16 %v3924, %v3920
    %v4133 = vpack.c.b16 %v3925, %v3921
    %v4134 = vpack.c.b16 %v3930, %v3926
    %v4135 = vpack.c.b16 %v3931, %v3927
    %v4136 = vpack.c.b16 %v3932, %v3928
    %v4137 = vpack.c.b16 %v3933, %v3929
    %v4138 = vpack.c.b16 %v3938, %v3934
    %v4139 = vpack.c.b16 %v3939, %v3935
    %v4140 = vpack.c.b16 %v3940, %v3936
    %v4141 = vpack.c.b16 %v3941, %v3937
    %v4142 = vpack.c.b16 %v3946, %v3942
    %v4143 = vpack.c.b16 %v3947, %v3943
    %v4144 = vpack.c.b16 %v3948, %v3944
    %v4145 = vpack.c.b16 %v3949, %v3945
    %v4146 = vpack.c.b16 %v3954, %v3950
    %v4147 = vpack.c.b16 %v3955, %v3951
    %v4148 = vpack.c.b16 %v3956, %v3952
    %v4149 = vpack.c.b16 %v3957, %v3953
    %4342 = vmatprep.subr.bf16.mxu0 %v3959
    %4343 = vmatpush1.bf16.msra.mxu0 %v3958
    %4344 = vmatprep.subr.bf16.mxu0 %v3963
    %4345 = vmatpush1.bf16.msra.mxu0 %v3962
    %4346 = vmatprep.subr.bf16.mxu0 %v3967
    %4347 = vmatpush1.bf16.msra.mxu0 %v3966
    %4348 = vmatprep.subr.bf16.mxu0 %v3971
    %4349 = vmatpush1.bf16.msra.mxu0 %v3970
    %4350 = vmatprep.subr.bf16.mxu0 %v3975
    %4351 = vmatpush1.bf16.msra.mxu0 %v3974
    %4352 = vmatprep.subr.bf16.mxu0 %v3979
    %4353 = vmatpush1.bf16.msra.mxu0 %v3978
    %4354 = vmatprep.subr.bf16.mxu0 %v3983
    %4355 = vmatpush1.bf16.msra.mxu0 %v3982
    %4356 = vmatprep.subr.bf16.mxu0 %v3987
    %4357 = vmatpush1.bf16.msra.mxu0 %v3986
    %4358 = vmatprep.subr.bf16.mxu0 %v3991
    %4359 = vmatpush1.bf16.msra.mxu0 %v3990
    %4360 = vmatprep.subr.bf16.mxu0 %v3995
    %4361 = vmatpush1.bf16.msra.mxu0 %v3994
    %4362 = vmatprep.subr.bf16.mxu0 %v3999
    %4363 = vmatpush1.bf16.msra.mxu0 %v3998
    %4364 = vmatprep.subr.bf16.mxu0 %v4003
    %4365 = vmatpush1.bf16.msra.mxu0 %v4002
    %4366 = vmatprep.subr.bf16.mxu0 %v4007
    %4367 = vmatpush1.bf16.msra.mxu0 %v4006
    %4368 = vmatprep.subr.bf16.mxu0 %v4011
    %4369 = vmatpush1.bf16.msra.mxu0 %v4010
    %4370 = vmatprep.subr.bf16.mxu0 %v4015
    %4371 = vmatpush1.bf16.msra.mxu0 %v4014
    %4372 = vmatprep.subr.bf16.mxu0 %v4019
    %4373 = vmatpush1.bf16.msra.mxu0 %v4018
    %4374 = vmatprep.mubr.bf16.mxu0 %v927
    %4375 = vmatmul.mubr.bf16.gmra.mrb[0].mxu0 %v926
    %v4376 = vpop.f32.mrb[0].mxu0
    %v4377 = vadd.f32 0.0, %v4376
    %v4378 = vpop.f32.mrb[0].mxu0
    %v4379 = vadd.f32 0.0, %v4378
    %v4380 = vpop.f32.mrb[0].mxu0
    %v4381 = vadd.f32 0.0, %v4380
    %v4382 = vpop.f32.mrb[0].mxu0
    %v4383 = vadd.f32 0.0, %v4382
    %4384 = vdwg.mxu0
    %4385 = vmatprep.subr.bf16.mxu0 %v4023
    %4386 = vmatpush1.bf16.msra.mxu0 %v4022
    %4387 = vmatprep.subr.bf16.mxu0 %v4027
    %4388 = vmatpush1.bf16.msra.mxu0 %v4026
    %4389 = vmatprep.subr.bf16.mxu0 %v4031
    %4390 = vmatpush1.bf16.msra.mxu0 %v4030
    %4391 = vmatprep.subr.bf16.mxu0 %v4035
    %4392 = vmatpush1.bf16.msra.mxu0 %v4034
    %4393 = vmatprep.subr.bf16.mxu0 %v4039
    %4394 = vmatpush1.bf16.msra.mxu0 %v4038
    %4395 = vmatprep.subr.bf16.mxu0 %v4043
    %4396 = vmatpush1.bf16.msra.mxu0 %v4042
    %4397 = vmatprep.subr.bf16.mxu0 %v4047
    %4398 = vmatpush1.bf16.msra.mxu0 %v4046
    %4399 = vmatprep.subr.bf16.mxu0 %v4051
    %4400 = vmatpush1.bf16.msra.mxu0 %v4050
    %4401 = vmatprep.subr.bf16.mxu0 %v4055
    %4402 = vmatpush1.bf16.msra.mxu0 %v4054
    %4403 = vmatprep.subr.bf16.mxu0 %v4059
    %4404 = vmatpush1.bf16.msra.mxu0 %v4058
    %4405 = vmatprep.subr.bf16.mxu0 %v4063
    %4406 = vmatpush1.bf16.msra.mxu0 %v4062
    %4407 = vmatprep.subr.bf16.mxu0 %v4067
    %4408 = vmatpush1.bf16.msra.mxu0 %v4066
    %4409 = vmatprep.subr.bf16.mxu0 %v4071
    %4410 = vmatpush1.bf16.msra.mxu0 %v4070
    %4411 = vmatprep.subr.bf16.mxu0 %v4075
    %4412 = vmatpush1.bf16.msra.mxu0 %v4074
    %4413 = vmatprep.subr.bf16.mxu0 %v4079
    %4414 = vmatpush1.bf16.msra.mxu0 %v4078
    %4415 = vmatprep.subr.bf16.mxu0 %v4083
    %4416 = vmatpush1.bf16.msra.mxu0 %v4082
    %4417 = vmatprep.mubr.bf16.mxu0 %v929
    %4418 = vmatmul.mubr.bf16.gmra.mrb[0].mxu0 %v928
    %v4419 = vpop.f32.mrb[0].mxu0
    %v4420 = vadd.f32 %v4377, %v4419
    %v4421 = vpop.f32.mrb[0].mxu0
    %v4422 = vadd.f32 %v4379, %v4421
    %v4423 = vpop.f32.mrb[0].mxu0
    %v4424 = vadd.f32 %v4381, %v4423
    %v4425 = vpop.f32.mrb[0].mxu0
    %v4426 = vadd.f32 %v4383, %v4425
    %4427 = vdwg.mxu0
    %4428 = vmatprep.subr.bf16.mxu0 %v4087
    %4429 = vmatpush1.bf16.msra.mxu0 %v4086
    %4430 = vmatprep.subr.bf16.mxu0 %v4091
    %4431 = vmatpush1.bf16.msra.mxu0 %v4090
    %4432 = vmatprep.subr.bf16.mxu0 %v4095
    %4433 = vmatpush1.bf16.msra.mxu0 %v4094
    %4434 = vmatprep.subr.bf16.mxu0 %v4099
    %4435 = vmatpush1.bf16.msra.mxu0 %v4098
    %4436 = vmatprep.subr.bf16.mxu0 %v4103
    %4437 = vmatpush1.bf16.msra.mxu0 %v4102
    %4438 = vmatprep.subr.bf16.mxu0 %v4107
    %4439 = vmatpush1.bf16.msra.mxu0 %v4106
    %4440 = vmatprep.subr.bf16.mxu0 %v4111
    %4441 = vmatpush1.bf16.msra.mxu0 %v4110
    %4442 = vmatprep.subr.bf16.mxu0 %v4115
    %4443 = vmatpush1.bf16.msra.mxu0 %v4114
    %4444 = vmatprep.subr.bf16.mxu0 %v4119
    %4445 = vmatpush1.bf16.msra.mxu0 %v4118
    %4446 = vmatprep.subr.bf16.mxu0 %v4123
    %4447 = vmatpush1.bf16.msra.mxu0 %v4122
    %4448 = vmatprep.subr.bf16.mxu0 %v4127
    %4449 = vmatpush1.bf16.msra.mxu0 %v4126
    %4450 = vmatprep.subr.bf16.mxu0 %v4131
    %4451 = vmatpush1.bf16.msra.mxu0 %v4130
    %4452 = vmatprep.subr.bf16.mxu0 %v4135
    %4453 = vmatpush1.bf16.msra.mxu0 %v4134
    %4454 = vmatprep.subr.bf16.mxu0 %v4139
    %4455 = vmatpush1.bf16.msra.mxu0 %v4138
    %4456 = vmatprep.subr.bf16.mxu0 %v4143
    %4457 = vmatpush1.bf16.msra.mxu0 %v4142
    %4458 = vmatprep.subr.bf16.mxu0 %v4147
    %4459 = vmatpush1.bf16.msra.mxu0 %v4146
    %4460 = vmatprep.mubr.bf16.mxu0 %v931
    %4461 = vmatmul.mubr.bf16.gmra.mrb[0].mxu0 %v930
    %v4462 = vpop.f32.mrb[0].mxu0
    %v4463 = vadd.f32 %v4420, %v4462
    %v4464 = vpop.f32.mrb[0].mxu0
    %v4465 = vadd.f32 %v4422, %v4464
    %v4466 = vpop.f32.mrb[0].mxu0
    %v4467 = vadd.f32 %v4424, %v4466
    %v4468 = vpop.f32.mrb[0].mxu0
    %v4469 = vadd.f32 %v4426, %v4468
    %4470 = vdwg.mxu0
    %4471 = vmatprep.subr.bf16.mxu0 %v3961
    %4472 = vmatpush1.bf16.msra.mxu0 %v3960
    %4473 = vmatprep.subr.bf16.mxu0 %v3965
    %4474 = vmatpush1.bf16.msra.mxu0 %v3964
    %4475 = vmatprep.subr.bf16.mxu0 %v3969
    %4476 = vmatpush1.bf16.msra.mxu0 %v3968
    %4477 = vmatprep.subr.bf16.mxu0 %v3973
    %4478 = vmatpush1.bf16.msra.mxu0 %v3972
    %4479 = vmatprep.subr.bf16.mxu0 %v3977
    %4480 = vmatpush1.bf16.msra.mxu0 %v3976
    %4481 = vmatprep.subr.bf16.mxu0 %v3981
    %4482 = vmatpush1.bf16.msra.mxu0 %v3980
    %4483 = vmatprep.subr.bf16.mxu0 %v3985
    %4484 = vmatpush1.bf16.msra.mxu0 %v3984
    %4485 = vmatprep.subr.bf16.mxu0 %v3989
    %4486 = vmatpush1.bf16.msra.mxu0 %v3988
    %4487 = vmatprep.subr.bf16.mxu0 %v3993
    %4488 = vmatpush1.bf16.msra.mxu0 %v3992
    %4489 = vmatprep.subr.bf16.mxu0 %v3997
    %4490 = vmatpush1.bf16.msra.mxu0 %v3996
    %4491 = vmatprep.subr.bf16.mxu0 %v4001
    %4492 = vmatpush1.bf16.msra.mxu0 %v4000
    %4493 = vmatprep.subr.bf16.mxu0 %v4005
    %4494 = vmatpush1.bf16.msra.mxu0 %v4004
    %4495 = vmatprep.subr.bf16.mxu0 %v4009
    %4496 = vmatpush1.bf16.msra.mxu0 %v4008
    %4497 = vmatprep.subr.bf16.mxu0 %v4013
    %4498 = vmatpush1.bf16.msra.mxu0 %v4012
    %4499 = vmatprep.subr.bf16.mxu0 %v4017
    %4500 = vmatpush1.bf16.msra.mxu0 %v4016
    %4501 = vmatprep.subr.bf16.mxu0 %v4021
    %4502 = vmatpush1.bf16.msra.mxu0 %v4020
    %4503 = vmatprep.mubr.bf16.mxu0 %v927
    %4504 = vmatmul.mubr.bf16.gmra.mrb[0].mxu0 %v926
    %v4505 = vpop.f32.mrb[0].mxu0
    %v4506 = vadd.f32 0.0, %v4505
    %v4507 = vpop.f32.mrb[0].mxu0
    %v4508 = vadd.f32 0.0, %v4507
    %v4509 = vpop.f32.mrb[0].mxu0
    %v4510 = vadd.f32 0.0, %v4509
    %v4511 = vpop.f32.mrb[0].mxu0
    %v4512 = vadd.f32 0.0, %v4511
    %4513 = vdwg.mxu0
    %4514 = vmatprep.subr.bf16.mxu0 %v4025
    %4515 = vmatpush1.bf16.msra.mxu0 %v4024
    %4516 = vmatprep.subr.bf16.mxu0 %v4029
    %4517 = vmatpush1.bf16.msra.mxu0 %v4028
    %4518 = vmatprep.subr.bf16.mxu0 %v4033
    %4519 = vmatpush1.bf16.msra.mxu0 %v4032
    %4520 = vmatprep.subr.bf16.mxu0 %v4037
    %4521 = vmatpush1.bf16.msra.mxu0 %v4036
    %4522 = vmatprep.subr.bf16.mxu0 %v4041
    %4523 = vmatpush1.bf16.msra.mxu0 %v4040
    %4524 = vmatprep.subr.bf16.mxu0 %v4045
    %4525 = vmatpush1.bf16.msra.mxu0 %v4044
    %4526 = vmatprep.subr.bf16.mxu0 %v4049
    %4527 = vmatpush1.bf16.msra.mxu0 %v4048
    %4528 = vmatprep.subr.bf16.mxu0 %v4053
    %4529 = vmatpush1.bf16.msra.mxu0 %v4052
    %4530 = vmatprep.subr.bf16.mxu0 %v4057
    %4531 = vmatpush1.bf16.msra.mxu0 %v4056
    %4532 = vmatprep.subr.bf16.mxu0 %v4061
    %4533 = vmatpush1.bf16.msra.mxu0 %v4060
    %4534 = vmatprep.subr.bf16.mxu0 %v4065
    %4535 = vmatpush1.bf16.msra.mxu0 %v4064
    %4536 = vmatprep.subr.bf16.mxu0 %v4069
    %4537 = vmatpush1.bf16.msra.mxu0 %v4068
    %4538 = vmatprep.subr.bf16.mxu0 %v4073
    %4539 = vmatpush1.bf16.msra.mxu0 %v4072
    %4540 = vmatprep.subr.bf16.mxu0 %v4077
    %4541 = vmatpush1.bf16.msra.mxu0 %v4076
    %4542 = vmatprep.subr.bf16.mxu0 %v4081
    %4543 = vmatpush1.bf16.msra.mxu0 %v4080
    %4544 = vmatprep.subr.bf16.mxu0 %v4085
    %4545 = vmatpush1.bf16.msra.mxu0 %v4084
    %4546 = vmatprep.mubr.bf16.mxu0 %v929
    %4547 = vmatmul.mubr.bf16.gmra.mrb[0].mxu0 %v928
    %v4548 = vpop.f32.mrb[0].mxu0
    %v4549 = vadd.f32 %v4506, %v4548
    %v4550 = vpop.f32.mrb[0].mxu0
    %v4551 = vadd.f32 %v4508, %v4550
    %v4552 = vpop.f32.mrb[0].mxu0
    %v4553 = vadd.f32 %v4510, %v4552
    %v4554 = vpop.f32.mrb[0].mxu0
    %v4555 = vadd.f32 %v4512, %v4554
    %4556 = vdwg.mxu0
    %4557 = vmatprep.subr.bf16.mxu0 %v4089
    %4558 = vmatpush1.bf16.msra.mxu0 %v4088
    %4559 = vmatprep.subr.bf16.mxu0 %v4093
    %4560 = vmatpush1.bf16.msra.mxu0 %v4092
    %4561 = vmatprep.subr.bf16.mxu0 %v4097
    %4562 = vmatpush1.bf16.msra.mxu0 %v4096
    %4563 = vmatprep.subr.bf16.mxu0 %v4101
    %4564 = vmatpush1.bf16.msra.mxu0 %v4100
    %4565 = vmatprep.subr.bf16.mxu0 %v4105
    %4566 = vmatpush1.bf16.msra.mxu0 %v4104
    %4567 = vmatprep.subr.bf16.mxu0 %v4109
    %4568 = vmatpush1.bf16.msra.mxu0 %v4108
    %4569 = vmatprep.subr.bf16.mxu0 %v4113
    %4570 = vmatpush1.bf16.msra.mxu0 %v4112
    %4571 = vmatprep.subr.bf16.mxu0 %v4117
    %4572 = vmatpush1.bf16.msra.mxu0 %v4116
    %4573 = vmatprep.subr.bf16.mxu0 %v4121
    %4574 = vmatpush1.bf16.msra.mxu0 %v4120
    %4575 = vmatprep.subr.bf16.mxu0 %v4125
    %4576 = vmatpush1.bf16.msra.mxu0 %v4124
    %4577 = vmatprep.subr.bf16.mxu0 %v4129
    %4578 = vmatpush1.bf16.msra.mxu0 %v4128
    %4579 = vmatprep.subr.bf16.mxu0 %v4133
    %4580 = vmatpush1.bf16.msra.mxu0 %v4132
    %4581 = vmatprep.subr.bf16.mxu0 %v4137
    %4582 = vmatpush1.bf16.msra.mxu0 %v4136
    %4583 = vmatprep.subr.bf16.mxu0 %v4141
    %4584 = vmatpush1.bf16.msra.mxu0 %v4140
    %4585 = vmatprep.subr.bf16.mxu0 %v4145
    %4586 = vmatpush1.bf16.msra.mxu0 %v4144
    %4587 = vmatprep.subr.bf16.mxu0 %v4149
    %4588 = vmatpush1.bf16.msra.mxu0 %v4148
    %4589 = vmatprep.mubr.bf16.mxu0 %v931
    %4590 = vmatmul.mubr.bf16.gmra.mrb[0].mxu0 %v930
    %v4591 = vpop.f32.mrb[0].mxu0
    %v4592 = vadd.f32 %v4549, %v4591
    %v4593 = vpop.f32.mrb[0].mxu0
    %v4594 = vadd.f32 %v4551, %v4593
    %v4595 = vpop.f32.mrb[0].mxu0
    %v4596 = vadd.f32 %v4553, %v4595
    %v4597 = vpop.f32.mrb[0].mxu0
    %v4598 = vadd.f32 %v4555, %v4597
    %4599 = vdwg.mxu0
    %v4600 = vmax.f32 %v3374, %v4463
    %v4601 = vmax.f32 %v3375, %v4465
    %v4602 = vmax.f32 %v3376, %v4592
    %v4603 = vmax.f32 %v3377, %v4594
    %v4604 = vmax.f32 %v3378, %v4467
    %v4605 = vmax.f32 %v3379, %v4469
    %v4606 = vmax.f32 %v3380, %v4596
    %v4607 = vmax.f32 %v3381, %v4598
    %v4800 = vunpack.c.l.b16 %v146
    %v4801 = vunpack.c.h.b16 %v146
    %v4802 = vunpack.c.l.b16 %v147
    %v4803 = vunpack.c.h.b16 %v147
    %v4804 = vunpack.c.l.b16 %v154
    %v4805 = vunpack.c.h.b16 %v154
    %v4806 = vunpack.c.l.b16 %v155
    %v4807 = vunpack.c.h.b16 %v155
    %v4808 = vunpack.c.l.b16 %v162
    %v4809 = vunpack.c.h.b16 %v162
    %v4810 = vunpack.c.l.b16 %v163
    %v4811 = vunpack.c.h.b16 %v163
    %v4812 = vunpack.c.l.b16 %v170
    %v4813 = vunpack.c.h.b16 %v170
    %v4814 = vunpack.c.l.b16 %v171
    %v4815 = vunpack.c.h.b16 %v171
    %v4816 = vunpack.c.l.b16 %v178
    %v4817 = vunpack.c.h.b16 %v178
    %v4818 = vunpack.c.l.b16 %v179
    %v4819 = vunpack.c.h.b16 %v179
    %v4820 = vunpack.c.l.b16 %v186
    %v4821 = vunpack.c.h.b16 %v186
    %v4822 = vunpack.c.l.b16 %v187
    %v4823 = vunpack.c.h.b16 %v187
    %v4824 = vunpack.c.l.b16 %v194
    %v4825 = vunpack.c.h.b16 %v194
    %v4826 = vunpack.c.l.b16 %v195
    %v4827 = vunpack.c.h.b16 %v195
    %v4828 = vunpack.c.l.b16 %v202
    %v4829 = vunpack.c.h.b16 %v202
    %v4830 = vunpack.c.l.b16 %v203
    %v4831 = vunpack.c.h.b16 %v203
    %v4832 = vunpack.c.l.b16 %v210
    %v4833 = vunpack.c.h.b16 %v210
    %v4834 = vunpack.c.l.b16 %v211
    %v4835 = vunpack.c.h.b16 %v211
    %v4836 = vunpack.c.l.b16 %v218
    %v4837 = vunpack.c.h.b16 %v218
    %v4838 = vunpack.c.l.b16 %v219
    %v4839 = vunpack.c.h.b16 %v219
    %v4840 = vunpack.c.l.b16 %v226
    %v4841 = vunpack.c.h.b16 %v226
    %v4842 = vunpack.c.l.b16 %v227
    %v4843 = vunpack.c.h.b16 %v227
    %v4844 = vunpack.c.l.b16 %v234
    %v4845 = vunpack.c.h.b16 %v234
    %v4846 = vunpack.c.l.b16 %v235
    %v4847 = vunpack.c.h.b16 %v235
    %v4848 = vunpack.c.l.b16 %v242
    %v4849 = vunpack.c.h.b16 %v242
    %v4850 = vunpack.c.l.b16 %v243
    %v4851 = vunpack.c.h.b16 %v243
    %v4852 = vunpack.c.l.b16 %v250
    %v4853 = vunpack.c.h.b16 %v250
    %v4854 = vunpack.c.l.b16 %v251
    %v4855 = vunpack.c.h.b16 %v251
    %v4856 = vunpack.c.l.b16 %v258
    %v4857 = vunpack.c.h.b16 %v258
    %v4858 = vunpack.c.l.b16 %v259
    %v4859 = vunpack.c.h.b16 %v259
    %v4860 = vunpack.c.l.b16 %v266
    %v4861 = vunpack.c.h.b16 %v266
    %v4862 = vunpack.c.l.b16 %v267
    %v4863 = vunpack.c.h.b16 %v267
    %v4864 = vunpack.c.l.b16 %v274
    %v4865 = vunpack.c.h.b16 %v274
    %v4866 = vunpack.c.l.b16 %v275
    %v4867 = vunpack.c.h.b16 %v275
    %v4868 = vunpack.c.l.b16 %v282
    %v4869 = vunpack.c.h.b16 %v282
    %v4870 = vunpack.c.l.b16 %v283
    %v4871 = vunpack.c.h.b16 %v283
    %v4872 = vunpack.c.l.b16 %v290
    %v4873 = vunpack.c.h.b16 %v290
    %v4874 = vunpack.c.l.b16 %v291
    %v4875 = vunpack.c.h.b16 %v291
    %v4876 = vunpack.c.l.b16 %v298
    %v4877 = vunpack.c.h.b16 %v298
    %v4878 = vunpack.c.l.b16 %v299
    %v4879 = vunpack.c.h.b16 %v299
    %v4880 = vunpack.c.l.b16 %v306
    %v4881 = vunpack.c.h.b16 %v306
    %v4882 = vunpack.c.l.b16 %v307
    %v4883 = vunpack.c.h.b16 %v307
    %v4884 = vunpack.c.l.b16 %v314
    %v4885 = vunpack.c.h.b16 %v314
    %v4886 = vunpack.c.l.b16 %v315
    %v4887 = vunpack.c.h.b16 %v315
    %v4888 = vunpack.c.l.b16 %v322
    %v4889 = vunpack.c.h.b16 %v322
    %v4890 = vunpack.c.l.b16 %v323
    %v4891 = vunpack.c.h.b16 %v323
    %v4892 = vunpack.c.l.b16 %v330
    %v4893 = vunpack.c.h.b16 %v330
    %v4894 = vunpack.c.l.b16 %v331
    %v4895 = vunpack.c.h.b16 %v331
    %v4896 = vunpack.c.l.b16 %v338
    %v4897 = vunpack.c.h.b16 %v338
    %v4898 = vunpack.c.l.b16 %v339
    %v4899 = vunpack.c.h.b16 %v339
    %v4900 = vunpack.c.l.b16 %v346
    %v4901 = vunpack.c.h.b16 %v346
    %v4902 = vunpack.c.l.b16 %v347
    %v4903 = vunpack.c.h.b16 %v347
    %v4904 = vunpack.c.l.b16 %v354
    %v4905 = vunpack.c.h.b16 %v354
    %v4906 = vunpack.c.l.b16 %v355
    %v4907 = vunpack.c.h.b16 %v355
    %v4908 = vunpack.c.l.b16 %v362
    %v4909 = vunpack.c.h.b16 %v362
    %v4910 = vunpack.c.l.b16 %v363
    %v4911 = vunpack.c.h.b16 %v363
    %v4912 = vunpack.c.l.b16 %v370
    %v4913 = vunpack.c.h.b16 %v370
    %v4914 = vunpack.c.l.b16 %v371
    %v4915 = vunpack.c.h.b16 %v371
    %v4916 = vunpack.c.l.b16 %v378
    %v4917 = vunpack.c.h.b16 %v378
    %v4918 = vunpack.c.l.b16 %v379
    %v4919 = vunpack.c.h.b16 %v379
    %v4920 = vunpack.c.l.b16 %v386
    %v4921 = vunpack.c.h.b16 %v386
    %v4922 = vunpack.c.l.b16 %v387
    %v4923 = vunpack.c.h.b16 %v387
    %v4924 = vunpack.c.l.b16 %v394
    %v4925 = vunpack.c.h.b16 %v394
    %v4926 = vunpack.c.l.b16 %v395
    %v4927 = vunpack.c.h.b16 %v395
    %v4928 = vunpack.c.l.b16 %v402
    %v4929 = vunpack.c.h.b16 %v402
    %v4930 = vunpack.c.l.b16 %v403
    %v4931 = vunpack.c.h.b16 %v403
    %v4932 = vunpack.c.l.b16 %v410
    %v4933 = vunpack.c.h.b16 %v410
    %v4934 = vunpack.c.l.b16 %v411
    %v4935 = vunpack.c.h.b16 %v411
    %v4936 = vunpack.c.l.b16 %v418
    %v4937 = vunpack.c.h.b16 %v418
    %v4938 = vunpack.c.l.b16 %v419
    %v4939 = vunpack.c.h.b16 %v419
    %v4940 = vunpack.c.l.b16 %v426
    %v4941 = vunpack.c.h.b16 %v426
    %v4942 = vunpack.c.l.b16 %v427
    %v4943 = vunpack.c.h.b16 %v427
    %v4944 = vunpack.c.l.b16 %v434
    %v4945 = vunpack.c.h.b16 %v434
    %v4946 = vunpack.c.l.b16 %v435
    %v4947 = vunpack.c.h.b16 %v435
    %v4948 = vunpack.c.l.b16 %v442
    %v4949 = vunpack.c.h.b16 %v442
    %v4950 = vunpack.c.l.b16 %v443
    %v4951 = vunpack.c.h.b16 %v443
    %v4952 = vunpack.c.l.b16 %v450
    %v4953 = vunpack.c.h.b16 %v450
    %v4954 = vunpack.c.l.b16 %v451
    %v4955 = vunpack.c.h.b16 %v451
    %v4956 = vunpack.c.l.b16 %v458
    %v4957 = vunpack.c.h.b16 %v458
    %v4958 = vunpack.c.l.b16 %v459
    %v4959 = vunpack.c.h.b16 %v459
    %v4960 = vunpack.c.l.b16 %v466
    %v4961 = vunpack.c.h.b16 %v466
    %v4962 = vunpack.c.l.b16 %v467
    %v4963 = vunpack.c.h.b16 %v467
    %v4964 = vunpack.c.l.b16 %v474
    %v4965 = vunpack.c.h.b16 %v474
    %v4966 = vunpack.c.l.b16 %v475
    %v4967 = vunpack.c.h.b16 %v475
    %v4968 = vunpack.c.l.b16 %v482
    %v4969 = vunpack.c.h.b16 %v482
    %v4970 = vunpack.c.l.b16 %v483
    %v4971 = vunpack.c.h.b16 %v483
    %v4972 = vunpack.c.l.b16 %v490
    %v4973 = vunpack.c.h.b16 %v490
    %v4974 = vunpack.c.l.b16 %v491
    %v4975 = vunpack.c.h.b16 %v491
    %v4976 = vunpack.c.l.b16 %v498
    %v4977 = vunpack.c.h.b16 %v498
    %v4978 = vunpack.c.l.b16 %v499
    %v4979 = vunpack.c.h.b16 %v499
    %v4980 = vunpack.c.l.b16 %v506
    %v4981 = vunpack.c.h.b16 %v506
    %v4982 = vunpack.c.l.b16 %v507
    %v4983 = vunpack.c.h.b16 %v507
    %v4984 = vunpack.c.l.b16 %v514
    %v4985 = vunpack.c.h.b16 %v514
    %v4986 = vunpack.c.l.b16 %v515
    %v4987 = vunpack.c.h.b16 %v515
    %v4988 = vunpack.c.l.b16 %v522
    %v4989 = vunpack.c.h.b16 %v522
    %v4990 = vunpack.c.l.b16 %v523
    %v4991 = vunpack.c.h.b16 %v523
    %v4992 = vunpack.c.l.b16 %v530
    %v4993 = vunpack.c.h.b16 %v530
    %v4994 = vunpack.c.l.b16 %v531
    %v4995 = vunpack.c.h.b16 %v531
    %v4996 = vunpack.c.l.b16 %v538
    %v4997 = vunpack.c.h.b16 %v538
    %v4998 = vunpack.c.l.b16 %v539
    %v4999 = vunpack.c.h.b16 %v539
    %v5000 = vunpack.c.l.b16 %v546
    %v5001 = vunpack.c.h.b16 %v546
    %v5002 = vunpack.c.l.b16 %v547
    %v5003 = vunpack.c.h.b16 %v547
    %v5004 = vunpack.c.l.b16 %v554
    %v5005 = vunpack.c.h.b16 %v554
    %v5006 = vunpack.c.l.b16 %v555
    %v5007 = vunpack.c.h.b16 %v555
    %v5008 = vunpack.c.l.b16 %v562
    %v5009 = vunpack.c.h.b16 %v562
    %v5010 = vunpack.c.l.b16 %v563
    %v5011 = vunpack.c.h.b16 %v563
    %v5012 = vunpack.c.l.b16 %v570
    %v5013 = vunpack.c.h.b16 %v570
    %v5014 = vunpack.c.l.b16 %v571
    %v5015 = vunpack.c.h.b16 %v571
    %v5016 = vunpack.c.l.b16 %v578
    %v5017 = vunpack.c.h.b16 %v578
    %v5018 = vunpack.c.l.b16 %v579
    %v5019 = vunpack.c.h.b16 %v579
    %v5020 = vunpack.c.l.b16 %v586
    %v5021 = vunpack.c.h.b16 %v586
    %v5022 = vunpack.c.l.b16 %v587
    %v5023 = vunpack.c.h.b16 %v587
    %v5024 = vunpack.c.l.b16 %v594
    %v5025 = vunpack.c.h.b16 %v594
    %v5026 = vunpack.c.l.b16 %v595
    %v5027 = vunpack.c.h.b16 %v595
    %v5028 = vunpack.c.l.b16 %v602
    %v5029 = vunpack.c.h.b16 %v602
    %v5030 = vunpack.c.l.b16 %v603
    %v5031 = vunpack.c.h.b16 %v603
    %v5032 = vunpack.c.l.b16 %v610
    %v5033 = vunpack.c.h.b16 %v610
    %v5034 = vunpack.c.l.b16 %v611
    %v5035 = vunpack.c.h.b16 %v611
    %v5036 = vunpack.c.l.b16 %v618
    %v5037 = vunpack.c.h.b16 %v618
    %v5038 = vunpack.c.l.b16 %v619
    %v5039 = vunpack.c.h.b16 %v619
    %v5040 = vunpack.c.l.b16 %v626
    %v5041 = vunpack.c.h.b16 %v626
    %v5042 = vunpack.c.l.b16 %v627
    %v5043 = vunpack.c.h.b16 %v627
    %v5044 = vunpack.c.l.b16 %v634
    %v5045 = vunpack.c.h.b16 %v634
    %v5046 = vunpack.c.l.b16 %v635
    %v5047 = vunpack.c.h.b16 %v635
    %v5048 = vunpack.c.l.b16 %v642
    %v5049 = vunpack.c.h.b16 %v642
    %v5050 = vunpack.c.l.b16 %v643
    %v5051 = vunpack.c.h.b16 %v643
    %v5052 = vunpack.c.l.b16 %v650
    %v5053 = vunpack.c.h.b16 %v650
    %v5054 = vunpack.c.l.b16 %v651
    %v5055 = vunpack.c.h.b16 %v651
    %v5056 = vunpack.c.l.b16 %v658
    %v5057 = vunpack.c.h.b16 %v658
    %v5058 = vunpack.c.l.b16 %v659
    %v5059 = vunpack.c.h.b16 %v659
    %v5060 = vunpack.c.l.b16 %v666
    %v5061 = vunpack.c.h.b16 %v666
    %v5062 = vunpack.c.l.b16 %v667
    %v5063 = vunpack.c.h.b16 %v667
    %v5064 = vunpack.c.l.b16 %v674
    %v5065 = vunpack.c.h.b16 %v674
    %v5066 = vunpack.c.l.b16 %v675
    %v5067 = vunpack.c.h.b16 %v675
    %v5068 = vunpack.c.l.b16 %v682
    %v5069 = vunpack.c.h.b16 %v682
    %v5070 = vunpack.c.l.b16 %v683
    %v5071 = vunpack.c.h.b16 %v683
    %v5072 = vunpack.c.l.b16 %v690
    %v5073 = vunpack.c.h.b16 %v690
    %v5074 = vunpack.c.l.b16 %v691
    %v5075 = vunpack.c.h.b16 %v691
    %v5076 = vunpack.c.l.b16 %v698
    %v5077 = vunpack.c.h.b16 %v698
    %v5078 = vunpack.c.l.b16 %v699
    %v5079 = vunpack.c.h.b16 %v699
    %v5080 = vunpack.c.l.b16 %v706
    %v5081 = vunpack.c.h.b16 %v706
    %v5082 = vunpack.c.l.b16 %v707
    %v5083 = vunpack.c.h.b16 %v707
    %v5084 = vunpack.c.l.b16 %v714
    %v5085 = vunpack.c.h.b16 %v714
    %v5086 = vunpack.c.l.b16 %v715
    %v5087 = vunpack.c.h.b16 %v715
    %v5088 = vunpack.c.l.b16 %v722
    %v5089 = vunpack.c.h.b16 %v722
    %v5090 = vunpack.c.l.b16 %v723
    %v5091 = vunpack.c.h.b16 %v723
    %v5092 = vunpack.c.l.b16 %v730
    %v5093 = vunpack.c.h.b16 %v730
    %v5094 = vunpack.c.l.b16 %v731
    %v5095 = vunpack.c.h.b16 %v731
    %v5096 = vunpack.c.l.b16 %v738
    %v5097 = vunpack.c.h.b16 %v738
    %v5098 = vunpack.c.l.b16 %v739
    %v5099 = vunpack.c.h.b16 %v739
    %v5100 = vunpack.c.l.b16 %v746
    %v5101 = vunpack.c.h.b16 %v746
    %v5102 = vunpack.c.l.b16 %v747
    %v5103 = vunpack.c.h.b16 %v747
    %v5104 = vunpack.c.l.b16 %v754
    %v5105 = vunpack.c.h.b16 %v754
    %v5106 = vunpack.c.l.b16 %v755
    %v5107 = vunpack.c.h.b16 %v755
    %v5108 = vunpack.c.l.b16 %v762
    %v5109 = vunpack.c.h.b16 %v762
    %v5110 = vunpack.c.l.b16 %v763
    %v5111 = vunpack.c.h.b16 %v763
    %v5112 = vunpack.c.l.b16 %v770
    %v5113 = vunpack.c.h.b16 %v770
    %v5114 = vunpack.c.l.b16 %v771
    %v5115 = vunpack.c.h.b16 %v771
    %v5116 = vunpack.c.l.b16 %v778
    %v5117 = vunpack.c.h.b16 %v778
    %v5118 = vunpack.c.l.b16 %v779
    %v5119 = vunpack.c.h.b16 %v779
    %v5120 = vunpack.c.l.b16 %v786
    %v5121 = vunpack.c.h.b16 %v786
    %v5122 = vunpack.c.l.b16 %v787
    %v5123 = vunpack.c.h.b16 %v787
    %v5124 = vunpack.c.l.b16 %v794
    %v5125 = vunpack.c.h.b16 %v794
    %v5126 = vunpack.c.l.b16 %v795
    %v5127 = vunpack.c.h.b16 %v795
    %v5128 = vunpack.c.l.b16 %v802
    %v5129 = vunpack.c.h.b16 %v802
    %v5130 = vunpack.c.l.b16 %v803
    %v5131 = vunpack.c.h.b16 %v803
    %v5132 = vunpack.c.l.b16 %v810
    %v5133 = vunpack.c.h.b16 %v810
    %v5134 = vunpack.c.l.b16 %v811
    %v5135 = vunpack.c.h.b16 %v811
    %v5136 = vunpack.c.l.b16 %v818
    %v5137 = vunpack.c.h.b16 %v818
    %v5138 = vunpack.c.l.b16 %v819
    %v5139 = vunpack.c.h.b16 %v819
    %v5140 = vunpack.c.l.b16 %v826
    %v5141 = vunpack.c.h.b16 %v826
    %v5142 = vunpack.c.l.b16 %v827
    %v5143 = vunpack.c.h.b16 %v827
    %v5144 = vunpack.c.l.b16 %v834
    %v5145 = vunpack.c.h.b16 %v834
    %v5146 = vunpack.c.l.b16 %v835
    %v5147 = vunpack.c.h.b16 %v835
    %v5148 = vunpack.c.l.b16 %v842
    %v5149 = vunpack.c.h.b16 %v842
    %v5150 = vunpack.c.l.b16 %v843
    %v5151 = vunpack.c.h.b16 %v843
    %v5152 = vunpack.c.l.b16 %v850
    %v5153 = vunpack.c.h.b16 %v850
    %v5154 = vunpack.c.l.b16 %v851
    %v5155 = vunpack.c.h.b16 %v851
    %v5156 = vunpack.c.l.b16 %v858
    %v5157 = vunpack.c.h.b16 %v858
    %v5158 = vunpack.c.l.b16 %v859
    %v5159 = vunpack.c.h.b16 %v859
    %v5160 = vunpack.c.l.b16 %v866
    %v5161 = vunpack.c.h.b16 %v866
    %v5162 = vunpack.c.l.b16 %v867
    %v5163 = vunpack.c.h.b16 %v867
    %v5164 = vunpack.c.l.b16 %v874
    %v5165 = vunpack.c.h.b16 %v874
    %v5166 = vunpack.c.l.b16 %v875
    %v5167 = vunpack.c.h.b16 %v875
    %v5168 = vunpack.c.l.b16 %v882
    %v5169 = vunpack.c.h.b16 %v882
    %v5170 = vunpack.c.l.b16 %v883
    %v5171 = vunpack.c.h.b16 %v883
    %v5172 = vunpack.c.l.b16 %v890
    %v5173 = vunpack.c.h.b16 %v890
    %v5174 = vunpack.c.l.b16 %v891
    %v5175 = vunpack.c.h.b16 %v891
    %v5176 = vunpack.c.l.b16 %v898
    %v5177 = vunpack.c.h.b16 %v898
    %v5178 = vunpack.c.l.b16 %v899
    %v5179 = vunpack.c.h.b16 %v899
    %v5180 = vunpack.c.l.b16 %v906
    %v5181 = vunpack.c.h.b16 %v906
    %v5182 = vunpack.c.l.b16 %v907
    %v5183 = vunpack.c.h.b16 %v907
    %v5184 = vpack.c.b16 %v4804, %v4800
    %v5185 = vpack.c.b16 %v4805, %v4801
    %v5186 = vpack.c.b16 %v4806, %v4802
    %v5187 = vpack.c.b16 %v4807, %v4803
    %v5188 = vpack.c.b16 %v4812, %v4808
    %v5189 = vpack.c.b16 %v4813, %v4809
    %v5190 = vpack.c.b16 %v4814, %v4810
    %v5191 = vpack.c.b16 %v4815, %v4811
    %v5192 = vpack.c.b16 %v4820, %v4816
    %v5193 = vpack.c.b16 %v4821, %v4817
    %v5194 = vpack.c.b16 %v4822, %v4818
    %v5195 = vpack.c.b16 %v4823, %v4819
    %v5196 = vpack.c.b16 %v4828, %v4824
    %v5197 = vpack.c.b16 %v4829, %v4825
    %v5198 = vpack.c.b16 %v4830, %v4826
    %v5199 = vpack.c.b16 %v4831, %v4827
    %v5200 = vpack.c.b16 %v4836, %v4832
    %v5201 = vpack.c.b16 %v4837, %v4833
    %v5202 = vpack.c.b16 %v4838, %v4834
    %v5203 = vpack.c.b16 %v4839, %v4835
    %v5204 = vpack.c.b16 %v4844, %v4840
    %v5205 = vpack.c.b16 %v4845, %v4841
    %v5206 = vpack.c.b16 %v4846, %v4842
    %v5207 = vpack.c.b16 %v4847, %v4843
    %v5208 = vpack.c.b16 %v4852, %v4848
    %v5209 = vpack.c.b16 %v4853, %v4849
    %v5210 = vpack.c.b16 %v4854, %v4850
    %v5211 = vpack.c.b16 %v4855, %v4851
    %v5212 = vpack.c.b16 %v4860, %v4856
    %v5213 = vpack.c.b16 %v4861, %v4857
    %v5214 = vpack.c.b16 %v4862, %v4858
    %v5215 = vpack.c.b16 %v4863, %v4859
    %v5216 = vpack.c.b16 %v4868, %v4864
    %v5217 = vpack.c.b16 %v4869, %v4865
    %v5218 = vpack.c.b16 %v4870, %v4866
    %v5219 = vpack.c.b16 %v4871, %v4867
    %v5220 = vpack.c.b16 %v4876, %v4872
    %v5221 = vpack.c.b16 %v4877, %v4873
    %v5222 = vpack.c.b16 %v4878, %v4874
    %v5223 = vpack.c.b16 %v4879, %v4875
    %v5224 = vpack.c.b16 %v4884, %v4880
    %v5225 = vpack.c.b16 %v4885, %v4881
    %v5226 = vpack.c.b16 %v4886, %v4882
    %v5227 = vpack.c.b16 %v4887, %v4883
    %v5228 = vpack.c.b16 %v4892, %v4888
    %v5229 = vpack.c.b16 %v4893, %v4889
    %v5230 = vpack.c.b16 %v4894, %v4890
    %v5231 = vpack.c.b16 %v4895, %v4891
    %v5232 = vpack.c.b16 %v4900, %v4896
    %v5233 = vpack.c.b16 %v4901, %v4897
    %v5234 = vpack.c.b16 %v4902, %v4898
    %v5235 = vpack.c.b16 %v4903, %v4899
    %v5236 = vpack.c.b16 %v4908, %v4904
    %v5237 = vpack.c.b16 %v4909, %v4905
    %v5238 = vpack.c.b16 %v4910, %v4906
    %v5239 = vpack.c.b16 %v4911, %v4907
    %v5240 = vpack.c.b16 %v4916, %v4912
    %v5241 = vpack.c.b16 %v4917, %v4913
    %v5242 = vpack.c.b16 %v4918, %v4914
    %v5243 = vpack.c.b16 %v4919, %v4915
    %v5244 = vpack.c.b16 %v4924, %v4920
    %v5245 = vpack.c.b16 %v4925, %v4921
    %v5246 = vpack.c.b16 %v4926, %v4922
    %v5247 = vpack.c.b16 %v4927, %v4923
    %v5248 = vpack.c.b16 %v4932, %v4928
    %v5249 = vpack.c.b16 %v4933, %v4929
    %v5250 = vpack.c.b16 %v4934, %v4930
    %v5251 = vpack.c.b16 %v4935, %v4931
    %v5252 = vpack.c.b16 %v4940, %v4936
    %v5253 = vpack.c.b16 %v4941, %v4937
    %v5254 = vpack.c.b16 %v4942, %v4938
    %v5255 = vpack.c.b16 %v4943, %v4939
    %v5256 = vpack.c.b16 %v4948, %v4944
    %v5257 = vpack.c.b16 %v4949, %v4945
    %v5258 = vpack.c.b16 %v4950, %v4946
    %v5259 = vpack.c.b16 %v4951, %v4947
    %v5260 = vpack.c.b16 %v4956, %v4952
    %v5261 = vpack.c.b16 %v4957, %v4953
    %v5262 = vpack.c.b16 %v4958, %v4954
    %v5263 = vpack.c.b16 %v4959, %v4955
    %v5264 = vpack.c.b16 %v4964, %v4960
    %v5265 = vpack.c.b16 %v4965, %v4961
    %v5266 = vpack.c.b16 %v4966, %v4962
    %v5267 = vpack.c.b16 %v4967, %v4963
    %v5268 = vpack.c.b16 %v4972, %v4968
    %v5269 = vpack.c.b16 %v4973, %v4969
    %v5270 = vpack.c.b16 %v4974, %v4970
    %v5271 = vpack.c.b16 %v4975, %v4971
    %v5272 = vpack.c.b16 %v4980, %v4976
    %v5273 = vpack.c.b16 %v4981, %v4977
    %v5274 = vpack.c.b16 %v4982, %v4978
    %v5275 = vpack.c.b16 %v4983, %v4979
    %v5276 = vpack.c.b16 %v4988, %v4984
    %v5277 = vpack.c.b16 %v4989, %v4985
    %v5278 = vpack.c.b16 %v4990, %v4986
    %v5279 = vpack.c.b16 %v4991, %v4987
    %v5280 = vpack.c.b16 %v4996, %v4992
    %v5281 = vpack.c.b16 %v4997, %v4993
    %v5282 = vpack.c.b16 %v4998, %v4994
    %v5283 = vpack.c.b16 %v4999, %v4995
    %v5284 = vpack.c.b16 %v5004, %v5000
    %v5285 = vpack.c.b16 %v5005, %v5001
    %v5286 = vpack.c.b16 %v5006, %v5002
    %v5287 = vpack.c.b16 %v5007, %v5003
    %v5288 = vpack.c.b16 %v5012, %v5008
    %v5289 = vpack.c.b16 %v5013, %v5009
    %v5290 = vpack.c.b16 %v5014, %v5010
    %v5291 = vpack.c.b16 %v5015, %v5011
    %v5292 = vpack.c.b16 %v5020, %v5016
    %v5293 = vpack.c.b16 %v5021, %v5017
    %v5294 = vpack.c.b16 %v5022, %v5018
    %v5295 = vpack.c.b16 %v5023, %v5019
    %v5296 = vpack.c.b16 %v5028, %v5024
    %v5297 = vpack.c.b16 %v5029, %v5025
    %v5298 = vpack.c.b16 %v5030, %v5026
    %v5299 = vpack.c.b16 %v5031, %v5027
    %v5300 = vpack.c.b16 %v5036, %v5032
    %v5301 = vpack.c.b16 %v5037, %v5033
    %v5302 = vpack.c.b16 %v5038, %v5034
    %v5303 = vpack.c.b16 %v5039, %v5035
    %v5304 = vpack.c.b16 %v5044, %v5040
    %v5305 = vpack.c.b16 %v5045, %v5041
    %v5306 = vpack.c.b16 %v5046, %v5042
    %v5307 = vpack.c.b16 %v5047, %v5043
    %v5308 = vpack.c.b16 %v5052, %v5048
    %v5309 = vpack.c.b16 %v5053, %v5049
    %v5310 = vpack.c.b16 %v5054, %v5050
    %v5311 = vpack.c.b16 %v5055, %v5051
    %v5312 = vpack.c.b16 %v5060, %v5056
    %v5313 = vpack.c.b16 %v5061, %v5057
    %v5314 = vpack.c.b16 %v5062, %v5058
    %v5315 = vpack.c.b16 %v5063, %v5059
    %v5316 = vpack.c.b16 %v5068, %v5064
    %v5317 = vpack.c.b16 %v5069, %v5065
    %v5318 = vpack.c.b16 %v5070, %v5066
    %v5319 = vpack.c.b16 %v5071, %v5067
    %v5320 = vpack.c.b16 %v5076, %v5072
    %v5321 = vpack.c.b16 %v5077, %v5073
    %v5322 = vpack.c.b16 %v5078, %v5074
    %v5323 = vpack.c.b16 %v5079, %v5075
    %v5324 = vpack.c.b16 %v5084, %v5080
    %v5325 = vpack.c.b16 %v5085, %v5081
    %v5326 = vpack.c.b16 %v5086, %v5082
    %v5327 = vpack.c.b16 %v5087, %v5083
    %v5328 = vpack.c.b16 %v5092, %v5088
    %v5329 = vpack.c.b16 %v5093, %v5089
    %v5330 = vpack.c.b16 %v5094, %v5090
    %v5331 = vpack.c.b16 %v5095, %v5091
    %v5332 = vpack.c.b16 %v5100, %v5096
    %v5333 = vpack.c.b16 %v5101, %v5097
    %v5334 = vpack.c.b16 %v5102, %v5098
    %v5335 = vpack.c.b16 %v5103, %v5099
    %v5336 = vpack.c.b16 %v5108, %v5104
    %v5337 = vpack.c.b16 %v5109, %v5105
    %v5338 = vpack.c.b16 %v5110, %v5106
    %v5339 = vpack.c.b16 %v5111, %v5107
    %v5340 = vpack.c.b16 %v5116, %v5112
    %v5341 = vpack.c.b16 %v5117, %v5113
    %v5342 = vpack.c.b16 %v5118, %v5114
    %v5343 = vpack.c.b16 %v5119, %v5115
    %v5344 = vpack.c.b16 %v5124, %v5120
    %v5345 = vpack.c.b16 %v5125, %v5121
    %v5346 = vpack.c.b16 %v5126, %v5122
    %v5347 = vpack.c.b16 %v5127, %v5123
    %v5348 = vpack.c.b16 %v5132, %v5128
    %v5349 = vpack.c.b16 %v5133, %v5129
    %v5350 = vpack.c.b16 %v5134, %v5130
    %v5351 = vpack.c.b16 %v5135, %v5131
    %v5352 = vpack.c.b16 %v5140, %v5136
    %v5353 = vpack.c.b16 %v5141, %v5137
    %v5354 = vpack.c.b16 %v5142, %v5138
    %v5355 = vpack.c.b16 %v5143, %v5139
    %v5356 = vpack.c.b16 %v5148, %v5144
    %v5357 = vpack.c.b16 %v5149, %v5145
    %v5358 = vpack.c.b16 %v5150, %v5146
    %v5359 = vpack.c.b16 %v5151, %v5147
    %v5360 = vpack.c.b16 %v5156, %v5152
    %v5361 = vpack.c.b16 %v5157, %v5153
    %v5362 = vpack.c.b16 %v5158, %v5154
    %v5363 = vpack.c.b16 %v5159, %v5155
    %v5364 = vpack.c.b16 %v5164, %v5160
    %v5365 = vpack.c.b16 %v5165, %v5161
    %v5366 = vpack.c.b16 %v5166, %v5162
    %v5367 = vpack.c.b16 %v5167, %v5163
    %v5368 = vpack.c.b16 %v5172, %v5168
    %v5369 = vpack.c.b16 %v5173, %v5169
    %v5370 = vpack.c.b16 %v5174, %v5170
    %v5371 = vpack.c.b16 %v5175, %v5171
    %v5372 = vpack.c.b16 %v5180, %v5176
    %v5373 = vpack.c.b16 %v5181, %v5177
    %v5374 = vpack.c.b16 %v5182, %v5178
    %v5375 = vpack.c.b16 %v5183, %v5179
    %5568 = vmatprep.subr.bf16.mxu0 %v5185
    %5569 = vmatpush1.bf16.msra.mxu0 %v5184
    %5570 = vmatprep.subr.bf16.mxu0 %v5189
    %5571 = vmatpush1.bf16.msra.mxu0 %v5188
    %5572 = vmatprep.subr.bf16.mxu0 %v5193
    %5573 = vmatpush1.bf16.msra.mxu0 %v5192
    %5574 = vmatprep.subr.bf16.mxu0 %v5197
    %5575 = vmatpush1.bf16.msra.mxu0 %v5196
    %5576 = vmatprep.subr.bf16.mxu0 %v5201
    %5577 = vmatpush1.bf16.msra.mxu0 %v5200
    %5578 = vmatprep.subr.bf16.mxu0 %v5205
    %5579 = vmatpush1.bf16.msra.mxu0 %v5204
    %5580 = vmatprep.subr.bf16.mxu0 %v5209
    %5581 = vmatpush1.bf16.msra.mxu0 %v5208
    %5582 = vmatprep.subr.bf16.mxu0 %v5213
    %5583 = vmatpush1.bf16.msra.mxu0 %v5212
    %5584 = vmatprep.subr.bf16.mxu0 %v5217
    %5585 = vmatpush1.bf16.msra.mxu0 %v5216
    %5586 = vmatprep.subr.bf16.mxu0 %v5221
    %5587 = vmatpush1.bf16.msra.mxu0 %v5220
    %5588 = vmatprep.subr.bf16.mxu0 %v5225
    %5589 = vmatpush1.bf16.msra.mxu0 %v5224
    %5590 = vmatprep.subr.bf16.mxu0 %v5229
    %5591 = vmatpush1.bf16.msra.mxu0 %v5228
    %5592 = vmatprep.subr.bf16.mxu0 %v5233
    %5593 = vmatpush1.bf16.msra.mxu0 %v5232
    %5594 = vmatprep.subr.bf16.mxu0 %v5237
    %5595 = vmatpush1.bf16.msra.mxu0 %v5236
    %5596 = vmatprep.subr.bf16.mxu0 %v5241
    %5597 = vmatpush1.bf16.msra.mxu0 %v5240
    %5598 = vmatprep.subr.bf16.mxu0 %v5245
    %5599 = vmatpush1.bf16.msra.mxu0 %v5244
    %5600 = vmatprep.mubr.bf16.mxu0 %v927
    %5601 = vmatmul.mubr.bf16.gmra.mrb[0].mxu0 %v926
    %v5602 = vpop.f32.mrb[0].mxu0
    %v5603 = vadd.f32 0.0, %v5602
    %v5604 = vpop.f32.mrb[0].mxu0
    %v5605 = vadd.f32 0.0, %v5604
    %v5606 = vpop.f32.mrb[0].mxu0
    %v5607 = vadd.f32 0.0, %v5606
    %v5608 = vpop.f32.mrb[0].mxu0
    %v5609 = vadd.f32 0.0, %v5608
    %5610 = vdwg.mxu0
    %5611 = vmatprep.subr.bf16.mxu0 %v5249
    %5612 = vmatpush1.bf16.msra.mxu0 %v5248
    %5613 = vmatprep.subr.bf16.mxu0 %v5253
    %5614 = vmatpush1.bf16.msra.mxu0 %v5252
    %5615 = vmatprep.subr.bf16.mxu0 %v5257
    %5616 = vmatpush1.bf16.msra.mxu0 %v5256
    %5617 = vmatprep.subr.bf16.mxu0 %v5261
    %5618 = vmatpush1.bf16.msra.mxu0 %v5260
    %5619 = vmatprep.subr.bf16.mxu0 %v5265
    %5620 = vmatpush1.bf16.msra.mxu0 %v5264
    %5621 = vmatprep.subr.bf16.mxu0 %v5269
    %5622 = vmatpush1.bf16.msra.mxu0 %v5268
    %5623 = vmatprep.subr.bf16.mxu0 %v5273
    %5624 = vmatpush1.bf16.msra.mxu0 %v5272
    %5625 = vmatprep.subr.bf16.mxu0 %v5277
    %5626 = vmatpush1.bf16.msra.mxu0 %v5276
    %5627 = vmatprep.subr.bf16.mxu0 %v5281
    %5628 = vmatpush1.bf16.msra.mxu0 %v5280
    %5629 = vmatprep.subr.bf16.mxu0 %v5285
    %5630 = vmatpush1.bf16.msra.mxu0 %v5284
    %5631 = vmatprep.subr.bf16.mxu0 %v5289
    %5632 = vmatpush1.bf16.msra.mxu0 %v5288
    %5633 = vmatprep.subr.bf16.mxu0 %v5293
    %5634 = vmatpush1.bf16.msra.mxu0 %v5292
    %5635 = vmatprep.subr.bf16.mxu0 %v5297
    %5636 = vmatpush1.bf16.msra.mxu0 %v5296
    %5637 = vmatprep.subr.bf16.mxu0 %v5301
    %5638 = vmatpush1.bf16.msra.mxu0 %v5300
    %5639 = vmatprep.subr.bf16.mxu0 %v5305
    %5640 = vmatpush1.bf16.msra.mxu0 %v5304
    %5641 = vmatprep.subr.bf16.mxu0 %v5309
    %5642 = vmatpush1.bf16.msra.mxu0 %v5308
    %5643 = vmatprep.mubr.bf16.mxu0 %v929
    %5644 = vmatmul.mubr.bf16.gmra.mrb[0].mxu0 %v928
    %v5645 = vpop.f32.mrb[0].mxu0
    %v5646 = vadd.f32 %v5603, %v5645
    %v5647 = vpop.f32.mrb[0].mxu0
    %v5648 = vadd.f32 %v5605, %v5647
    %v5649 = vpop.f32.mrb[0].mxu0
    %v5650 = vadd.f32 %v5607, %v5649
    %v5651 = vpop.f32.mrb[0].mxu0
    %v5652 = vadd.f32 %v5609, %v5651
    %5653 = vdwg.mxu0
    %5654 = vmatprep.subr.bf16.mxu0 %v5313
    %5655 = vmatpush1.bf16.msra.mxu0 %v5312
    %5656 = vmatprep.subr.bf16.mxu0 %v5317
    %5657 = vmatpush1.bf16.msra.mxu0 %v5316
    %5658 = vmatprep.subr.bf16.mxu0 %v5321
    %5659 = vmatpush1.bf16.msra.mxu0 %v5320
    %5660 = vmatprep.subr.bf16.mxu0 %v5325
    %5661 = vmatpush1.bf16.msra.mxu0 %v5324
    %5662 = vmatprep.subr.bf16.mxu0 %v5329
    %5663 = vmatpush1.bf16.msra.mxu0 %v5328
    %5664 = vmatprep.subr.bf16.mxu0 %v5333
    %5665 = vmatpush1.bf16.msra.mxu0 %v5332
    %5666 = vmatprep.subr.bf16.mxu0 %v5337
    %5667 = vmatpush1.bf16.msra.mxu0 %v5336
    %5668 = vmatprep.subr.bf16.mxu0 %v5341
    %5669 = vmatpush1.bf16.msra.mxu0 %v5340
    %5670 = vmatprep.subr.bf16.mxu0 %v5345
    %5671 = vmatpush1.bf16.msra.mxu0 %v5344
    %5672 = vmatprep.subr.bf16.mxu0 %v5349
    %5673 = vmatpush1.bf16.msra.mxu0 %v5348
    %5674 = vmatprep.subr.bf16.mxu0 %v5353
    %5675 = vmatpush1.bf16.msra.mxu0 %v5352
    %5676 = vmatprep.subr.bf16.mxu0 %v5357
    %5677 = vmatpush1.bf16.msra.mxu0 %v5356
    %5678 = vmatprep.subr.bf16.mxu0 %v5361
    %5679 = vmatpush1.bf16.msra.mxu0 %v5360
    %5680 = vmatprep.subr.bf16.mxu0 %v5365
    %5681 = vmatpush1.bf16.msra.mxu0 %v5364
    %5682 = vmatprep.subr.bf16.mxu0 %v5369
    %5683 = vmatpush1.bf16.msra.mxu0 %v5368
    %5684 = vmatprep.subr.bf16.mxu0 %v5373
    %5685 = vmatpush1.bf16.msra.mxu0 %v5372
    %5686 = vmatprep.mubr.bf16.mxu0 %v931
    %5687 = vmatmul.mubr.bf16.gmra.mrb[0].mxu0 %v930
    %v5688 = vpop.f32.mrb[0].mxu0
    %v5689 = vadd.f32 %v5646, %v5688
    %v5690 = vpop.f32.mrb[0].mxu0
    %v5691 = vadd.f32 %v5648, %v5690
    %v5692 = vpop.f32.mrb[0].mxu0
    %v5693 = vadd.f32 %v5650, %v5692
    %v5694 = vpop.f32.mrb[0].mxu0
    %v5695 = vadd.f32 %v5652, %v5694
    %5696 = vdwg.mxu0
    %5697 = vmatprep.subr.bf16.mxu0 %v5187
    %5698 = vmatpush1.bf16.msra.mxu0 %v5186
    %5699 = vmatprep.subr.bf16.mxu0 %v5191
    %5700 = vmatpush1.bf16.msra.mxu0 %v5190
    %5701 = vmatprep.subr.bf16.mxu0 %v5195
    %5702 = vmatpush1.bf16.msra.mxu0 %v5194
    %5703 = vmatprep.subr.bf16.mxu0 %v5199
    %5704 = vmatpush1.bf16.msra.mxu0 %v5198
    %5705 = vmatprep.subr.bf16.mxu0 %v5203
    %5706 = vmatpush1.bf16.msra.mxu0 %v5202
    %5707 = vmatprep.subr.bf16.mxu0 %v5207
    %5708 = vmatpush1.bf16.msra.mxu0 %v5206
    %5709 = vmatprep.subr.bf16.mxu0 %v5211
    %5710 = vmatpush1.bf16.msra.mxu0 %v5210
    %5711 = vmatprep.subr.bf16.mxu0 %v5215
    %5712 = vmatpush1.bf16.msra.mxu0 %v5214
    %5713 = vmatprep.subr.bf16.mxu0 %v5219
    %5714 = vmatpush1.bf16.msra.mxu0 %v5218
    %5715 = vmatprep.subr.bf16.mxu0 %v5223
    %5716 = vmatpush1.bf16.msra.mxu0 %v5222
    %5717 = vmatprep.subr.bf16.mxu0 %v5227
    %5718 = vmatpush1.bf16.msra.mxu0 %v5226
    %5719 = vmatprep.subr.bf16.mxu0 %v5231
    %5720 = vmatpush1.bf16.msra.mxu0 %v5230
    %5721 = vmatprep.subr.bf16.mxu0 %v5235
    %5722 = vmatpush1.bf16.msra.mxu0 %v5234
    %5723 = vmatprep.subr.bf16.mxu0 %v5239
    %5724 = vmatpush1.bf16.msra.mxu0 %v5238
    %5725 = vmatprep.subr.bf16.mxu0 %v5243
    %5726 = vmatpush1.bf16.msra.mxu0 %v5242
    %5727 = vmatprep.subr.bf16.mxu0 %v5247
    %5728 = vmatpush1.bf16.msra.mxu0 %v5246
    %5729 = vmatprep.mubr.bf16.mxu0 %v927
    %5730 = vmatmul.mubr.bf16.gmra.mrb[0].mxu0 %v926
    %v5731 = vpop.f32.mrb[0].mxu0
    %v5732 = vadd.f32 0.0, %v5731
    %v5733 = vpop.f32.mrb[0].mxu0
    %v5734 = vadd.f32 0.0, %v5733
    %v5735 = vpop.f32.mrb[0].mxu0
    %v5736 = vadd.f32 0.0, %v5735
    %v5737 = vpop.f32.mrb[0].mxu0
    %v5738 = vadd.f32 0.0, %v5737
    %5739 = vdwg.mxu0
    %5740 = vmatprep.subr.bf16.mxu0 %v5251
    %5741 = vmatpush1.bf16.msra.mxu0 %v5250
    %5742 = vmatprep.subr.bf16.mxu0 %v5255
    %5743 = vmatpush1.bf16.msra.mxu0 %v5254
    %5744 = vmatprep.subr.bf16.mxu0 %v5259
    %5745 = vmatpush1.bf16.msra.mxu0 %v5258
    %5746 = vmatprep.subr.bf16.mxu0 %v5263
    %5747 = vmatpush1.bf16.msra.mxu0 %v5262
    %5748 = vmatprep.subr.bf16.mxu0 %v5267
    %5749 = vmatpush1.bf16.msra.mxu0 %v5266
    %5750 = vmatprep.subr.bf16.mxu0 %v5271
    %5751 = vmatpush1.bf16.msra.mxu0 %v5270
    %5752 = vmatprep.subr.bf16.mxu0 %v5275
    %5753 = vmatpush1.bf16.msra.mxu0 %v5274
    %5754 = vmatprep.subr.bf16.mxu0 %v5279
    %5755 = vmatpush1.bf16.msra.mxu0 %v5278
    %5756 = vmatprep.subr.bf16.mxu0 %v5283
    %5757 = vmatpush1.bf16.msra.mxu0 %v5282
    %5758 = vmatprep.subr.bf16.mxu0 %v5287
    %5759 = vmatpush1.bf16.msra.mxu0 %v5286
    %5760 = vmatprep.subr.bf16.mxu0 %v5291
    %5761 = vmatpush1.bf16.msra.mxu0 %v5290
    %5762 = vmatprep.subr.bf16.mxu0 %v5295
    %5763 = vmatpush1.bf16.msra.mxu0 %v5294
    %5764 = vmatprep.subr.bf16.mxu0 %v5299
    %5765 = vmatpush1.bf16.msra.mxu0 %v5298
    %5766 = vmatprep.subr.bf16.mxu0 %v5303
    %5767 = vmatpush1.bf16.msra.mxu0 %v5302
    %5768 = vmatprep.subr.bf16.mxu0 %v5307
    %5769 = vmatpush1.bf16.msra.mxu0 %v5306
    %5770 = vmatprep.subr.bf16.mxu0 %v5311
    %5771 = vmatpush1.bf16.msra.mxu0 %v5310
    %5772 = vmatprep.mubr.bf16.mxu0 %v929
    %5773 = vmatmul.mubr.bf16.gmra.mrb[0].mxu0 %v928
    %v5774 = vpop.f32.mrb[0].mxu0
    %v5775 = vadd.f32 %v5732, %v5774
    %v5776 = vpop.f32.mrb[0].mxu0
    %v5777 = vadd.f32 %v5734, %v5776
    %v5778 = vpop.f32.mrb[0].mxu0
    %v5779 = vadd.f32 %v5736, %v5778
    %v5780 = vpop.f32.mrb[0].mxu0
    %v5781 = vadd.f32 %v5738, %v5780
    %5782 = vdwg.mxu0
    %5783 = vmatprep.subr.bf16.mxu0 %v5315
    %5784 = vmatpush1.bf16.msra.mxu0 %v5314
    %5785 = vmatprep.subr.bf16.mxu0 %v5319
    %5786 = vmatpush1.bf16.msra.mxu0 %v5318
    %5787 = vmatprep.subr.bf16.mxu0 %v5323
    %5788 = vmatpush1.bf16.msra.mxu0 %v5322
    %5789 = vmatprep.subr.bf16.mxu0 %v5327
    %5790 = vmatpush1.bf16.msra.mxu0 %v5326
    %5791 = vmatprep.subr.bf16.mxu0 %v5331
    %5792 = vmatpush1.bf16.msra.mxu0 %v5330
    %5793 = vmatprep.subr.bf16.mxu0 %v5335
    %5794 = vmatpush1.bf16.msra.mxu0 %v5334
    %5795 = vmatprep.subr.bf16.mxu0 %v5339
    %5796 = vmatpush1.bf16.msra.mxu0 %v5338
    %5797 = vmatprep.subr.bf16.mxu0 %v5343
    %5798 = vmatpush1.bf16.msra.mxu0 %v5342
    %5799 = vmatprep.subr.bf16.mxu0 %v5347
    %5800 = vmatpush1.bf16.msra.mxu0 %v5346
    %5801 = vmatprep.subr.bf16.mxu0 %v5351
    %5802 = vmatpush1.bf16.msra.mxu0 %v5350
    %5803 = vmatprep.subr.bf16.mxu0 %v5355
    %5804 = vmatpush1.bf16.msra.mxu0 %v5354
    %5805 = vmatprep.subr.bf16.mxu0 %v5359
    %5806 = vmatpush1.bf16.msra.mxu0 %v5358
    %5807 = vmatprep.subr.bf16.mxu0 %v5363
    %5808 = vmatpush1.bf16.msra.mxu0 %v5362
    %5809 = vmatprep.subr.bf16.mxu0 %v5367
    %5810 = vmatpush1.bf16.msra.mxu0 %v5366
    %5811 = vmatprep.subr.bf16.mxu0 %v5371
    %5812 = vmatpush1.bf16.msra.mxu0 %v5370
    %5813 = vmatprep.subr.bf16.mxu0 %v5375
    %5814 = vmatpush1.bf16.msra.mxu0 %v5374
    %5815 = vmatprep.mubr.bf16.mxu0 %v931
    %5816 = vmatmul.mubr.bf16.gmra.mrb[0].mxu0 %v930
    %v5817 = vpop.f32.mrb[0].mxu0
    %v5818 = vadd.f32 %v5775, %v5817
    %v5819 = vpop.f32.mrb[0].mxu0
    %v5820 = vadd.f32 %v5777, %v5819
    %v5821 = vpop.f32.mrb[0].mxu0
    %v5822 = vadd.f32 %v5779, %v5821
    %v5823 = vpop.f32.mrb[0].mxu0
    %v5824 = vadd.f32 %v5781, %v5823
    %5825 = vdwg.mxu0
    %v5826 = vmax.f32 %v4600, %v5689
    %v5827 = vmax.f32 %v4601, %v5691
    %v5828 = vmax.f32 %v4602, %v5818
    %v5829 = vmax.f32 %v4603, %v5820
    %v5830 = vmax.f32 %v4604, %v5693
    %v5831 = vmax.f32 %v4605, %v5695
    %v5832 = vmax.f32 %v4606, %v5822
    %v5833 = vmax.f32 %v4607, %v5824
    %v5834 = vld [vmem:[#allocation4] sm:$0xf]
    %v5836 = vlaneseq
    %v5837 = vshrl.u32 %v5836, 7
    %v5838 = vsub.s32 0, %v5837
    %v5839 = vrot.slane %v5834, %v5838
    %v5840 = vlaneseq
    %v5841 = vshrl.u32 %v5840, 7
    %v5842 = vsub.s32 1, %v5841
    %v5843 = vrot.slane %v5834, %v5842
    %v5844 = vlaneseq
    %v5845 = vshrl.u32 %v5844, 7
    %v5846 = vsub.s32 2, %v5845
    %v5847 = vrot.slane %v5834, %v5846
    %v5848 = vlaneseq
    %v5849 = vshrl.u32 %v5848, 7
    %v5850 = vsub.s32 3, %v5849
    %v5851 = vrot.slane %v5834, %v5850
    %v5856 = vadd.f32 %v5826, %v5839
    %v5857 = vadd.f32 %v5827, %v5843
    %v5858 = vadd.f32 %v5828, %v5847
    %v5859 = vadd.f32 %v5829, %v5851
    %v5860 = vadd.f32 %v5830, %v5839
    %v5861 = vadd.f32 %v5831, %v5843
    %v5862 = vadd.f32 %v5832, %v5847
    %v5863 = vadd.f32 %v5833, %v5851
    %v5864 = vmax.f32 %v5856, 0.0
    %v5865 = vmax.f32 %v5857, 0.0
    %v5866 = vmax.f32 %v5858, 0.0
    %v5867 = vmax.f32 %v5859, 0.0
    %v5868 = vmax.f32 %v5860, 0.0
    %v5869 = vmax.f32 %v5861, 0.0
    %v5870 = vmax.f32 %v5862, 0.0
    %v5871 = vmax.f32 %v5863, 0.0
    %v5872 = vpack.c.bf16 %v5868, %v5864
    %v5873 = vpack.c.bf16 %v5869, %v5865
    %v5874 = vpack.c.bf16 %v5870, %v5866
    %v5875 = vpack.c.bf16 %v5871, %v5867
    %v5876 = vld [vmem:[#allocation6] sm:$0xff]
    %v5877 = vld [vmem:[#allocation6 + $0x8] sm:$0xff]
    %v5878 = vld [vmem:[#allocation6 + $0x10] sm:$0xff]
    %v5879 = vld [vmem:[#allocation6 + $0x18] sm:$0xff]
    %v5880 = vld [vmem:[#allocation6 + $0x20] sm:$0xff]
    %v5881 = vld [vmem:[#allocation6 + $0x28] sm:$0xff]
    %v5882 = vld [vmem:[#allocation6 + $0x30] sm:$0xff]
    %v5883 = vld [vmem:[#allocation6 + $0x38] sm:$0xff]
    %v5884 = vld [vmem:[#allocation6 + $0x40] sm:$0xff]
    %v5885 = vld [vmem:[#allocation6 + $0x48] sm:$0xff]
    %v5886 = vld [vmem:[#allocation6 + $0x50] sm:$0xff]
    %v5887 = vld [vmem:[#allocation6 + $0x58] sm:$0xff]
    %v5888 = vld [vmem:[#allocation6 + $0x60] sm:$0xff]
    %v5889 = vld [vmem:[#allocation6 + $0x68] sm:$0xff]
    %v5890 = vld [vmem:[#allocation6 + $0x70] sm:$0xff]
    %v5891 = vld [vmem:[#allocation6 + $0x78] sm:$0xff]
    %v5892 = vld [vmem:[#allocation6 + $0x80] sm:$0xff]
    %v5893 = vld [vmem:[#allocation6 + $0x88] sm:$0xff]
    %v5894 = vld [vmem:[#allocation6 + $0x90] sm:$0xff]
    %v5895 = vld [vmem:[#allocation6 + $0x98] sm:$0xff]
    %v5896 = vld [vmem:[#allocation6 + $0xa0] sm:$0xff]
    %v5897 = vld [vmem:[#allocation6 + $0xa8] sm:$0xff]
    %v5898 = vld [vmem:[#allocation6 + $0xb0] sm:$0xff]
    %v5899 = vld [vmem:[#allocation6 + $0xb8] sm:$0xff]
    %v5900 = vld [vmem:[#allocation6 + $0xc0] sm:$0xff]
    %v5901 = vld [vmem:[#allocation6 + $0xc8] sm:$0xff]
    %v5902 = vld [vmem:[#allocation6 + $0xd0] sm:$0xff]
    %v5903 = vld [vmem:[#allocation6 + $0xd8] sm:$0xff]
    %v5904 = vld [vmem:[#allocation6 + $0xe0] sm:$0xff]
    %v5905 = vld [vmem:[#allocation6 + $0xe8] sm:$0xff]
    %v5906 = vld [vmem:[#allocation6 + $0xf0] sm:$0xff]
    %v5907 = vld [vmem:[#allocation6 + $0xf8] sm:$0xff]
    %v5908 = vld [vmem:[#allocation6 + $0x100] sm:$0xff]
    %v5909 = vld [vmem:[#allocation6 + $0x108] sm:$0xff]
    %v5910 = vld [vmem:[#allocation6 + $0x110] sm:$0xff]
    %v5911 = vld [vmem:[#allocation6 + $0x118] sm:$0xff]
    %v5912 = vld [vmem:[#allocation6 + $0x120] sm:$0xff]
    %v5913 = vld [vmem:[#allocation6 + $0x128] sm:$0xff]
    %v5914 = vld [vmem:[#allocation6 + $0x130] sm:$0xff]
    %v5915 = vld [vmem:[#allocation6 + $0x138] sm:$0xff]
    %v5916 = vld [vmem:[#allocation6 + $0x140] sm:$0xff]
    %v5917 = vld [vmem:[#allocation6 + $0x148] sm:$0xff]
    %v5918 = vld [vmem:[#allocation6 + $0x150] sm:$0xff]
    %v5919 = vld [vmem:[#allocation6 + $0x158] sm:$0xff]
    %v5920 = vld [vmem:[#allocation6 + $0x160] sm:$0xff]
    %v5921 = vld [vmem:[#allocation6 + $0x168] sm:$0xff]
    %v5922 = vld [vmem:[#allocation6 + $0x170] sm:$0xff]
    %v5923 = vld [vmem:[#allocation6 + $0x178] sm:$0xff]
    %v5924 = vld [vmem:[#allocation6 + $0x180] sm:$0xff]
    %v5925 = vld [vmem:[#allocation6 + $0x188] sm:$0xff]
    %v5926 = vld [vmem:[#allocation6 + $0x190] sm:$0xff]
    %v5927 = vld [vmem:[#allocation6 + $0x198] sm:$0xff]
    %v5928 = vld [vmem:[#allocation6 + $0x1a0] sm:$0xff]
    %v5929 = vld [vmem:[#allocation6 + $0x1a8] sm:$0xff]
    %v5930 = vld [vmem:[#allocation6 + $0x1b0] sm:$0xff]
    %v5931 = vld [vmem:[#allocation6 + $0x1b8] sm:$0xff]
    %v5932 = vld [vmem:[#allocation6 + $0x1c0] sm:$0xff]
    %v5933 = vld [vmem:[#allocation6 + $0x1c8] sm:$0xff]
    %v5934 = vld [vmem:[#allocation6 + $0x1d0] sm:$0xff]
    %v5935 = vld [vmem:[#allocation6 + $0x1d8] sm:$0xff]
    %v5936 = vld [vmem:[#allocation6 + $0x1e0] sm:$0xff]
    %v5937 = vld [vmem:[#allocation6 + $0x1e8] sm:$0xff]
    %v5938 = vld [vmem:[#allocation6 + $0x1f0] sm:$0xff]
    %v5939 = vld [vmem:[#allocation6 + $0x1f8] sm:$0xff]
    %v5940 = vld [vmem:[#allocation6 + $0x200] sm:$0xff]
    %v5941 = vld [vmem:[#allocation6 + $0x208] sm:$0xff]
    %v5942 = vld [vmem:[#allocation6 + $0x210] sm:$0xff]
    %v5943 = vld [vmem:[#allocation6 + $0x218] sm:$0xff]
    %v5944 = vld [vmem:[#allocation6 + $0x220] sm:$0xff]
    %v5945 = vld [vmem:[#allocation6 + $0x228] sm:$0xff]
    %v5946 = vld [vmem:[#allocation6 + $0x230] sm:$0xff]
    %v5947 = vld [vmem:[#allocation6 + $0x238] sm:$0xff]
    %v5948 = vld [vmem:[#allocation6 + $0x240] sm:$0xff]
    %v5949 = vld [vmem:[#allocation6 + $0x248] sm:$0xff]
    %v5950 = vld [vmem:[#allocation6 + $0x250] sm:$0xff]
    %v5951 = vld [vmem:[#allocation6 + $0x258] sm:$0xff]
    %v5952 = vld [vmem:[#allocation6 + $0x260] sm:$0xff]
    %v5953 = vld [vmem:[#allocation6 + $0x268] sm:$0xff]
    %v5954 = vld [vmem:[#allocation6 + $0x270] sm:$0xff]
    %v5955 = vld [vmem:[#allocation6 + $0x278] sm:$0xff]
    %v5956 = vld [vmem:[#allocation6 + $0x280] sm:$0xff]
    %v5957 = vld [vmem:[#allocation6 + $0x288] sm:$0xff]
    %v5958 = vld [vmem:[#allocation6 + $0x290] sm:$0xff]
    %v5959 = vld [vmem:[#allocation6 + $0x298] sm:$0xff]
    %v5960 = vld [vmem:[#allocation6 + $0x2a0] sm:$0xff]
    %v5961 = vld [vmem:[#allocation6 + $0x2a8] sm:$0xff]
    %v5962 = vld [vmem:[#allocation6 + $0x2b0] sm:$0xff]
    %v5963 = vld [vmem:[#allocation6 + $0x2b8] sm:$0xff]
    %v5964 = vld [vmem:[#allocation6 + $0x2c0] sm:$0xff]
    %v5965 = vld [vmem:[#allocation6 + $0x2c8] sm:$0xff]
    %v5966 = vld [vmem:[#allocation6 + $0x2d0] sm:$0xff]
    %v5967 = vld [vmem:[#allocation6 + $0x2d8] sm:$0xff]
    %v5968 = vld [vmem:[#allocation6 + $0x2e0] sm:$0xff]
    %v5969 = vld [vmem:[#allocation6 + $0x2e8] sm:$0xff]
    %v5970 = vld [vmem:[#allocation6 + $0x2f0] sm:$0xff]
    %v5971 = vld [vmem:[#allocation6 + $0x2f8] sm:$0xff]
    %v5972 = vld [vmem:[#allocation6 + $0x300] sm:$0xff]
    %v5973 = vld [vmem:[#allocation6 + $0x308] sm:$0xff]
    %v5974 = vld [vmem:[#allocation6 + $0x310] sm:$0xff]
    %v5975 = vld [vmem:[#allocation6 + $0x318] sm:$0xff]
    %v5976 = vld [vmem:[#allocation6 + $0x320] sm:$0xff]
    %v5977 = vld [vmem:[#allocation6 + $0x328] sm:$0xff]
    %v5978 = vld [vmem:[#allocation6 + $0x330] sm:$0xff]
    %v5979 = vld [vmem:[#allocation6 + $0x338] sm:$0xff]
    %v5980 = vld [vmem:[#allocation6 + $0x340] sm:$0xff]
    %v5981 = vld [vmem:[#allocation6 + $0x348] sm:$0xff]
    %v5982 = vld [vmem:[#allocation6 + $0x350] sm:$0xff]
    %v5983 = vld [vmem:[#allocation6 + $0x358] sm:$0xff]
    %v5984 = vld [vmem:[#allocation6 + $0x360] sm:$0xff]
    %v5985 = vld [vmem:[#allocation6 + $0x368] sm:$0xff]
    %v5986 = vld [vmem:[#allocation6 + $0x370] sm:$0xff]
    %v5987 = vld [vmem:[#allocation6 + $0x378] sm:$0xff]
    %v5988 = vld [vmem:[#allocation6 + $0x380] sm:$0xff]
    %v5989 = vld [vmem:[#allocation6 + $0x388] sm:$0xff]
    %v5990 = vld [vmem:[#allocation6 + $0x390] sm:$0xff]
    %v5991 = vld [vmem:[#allocation6 + $0x398] sm:$0xff]
    %v5992 = vld [vmem:[#allocation6 + $0x3a0] sm:$0xff]
    %v5993 = vld [vmem:[#allocation6 + $0x3a8] sm:$0xff]
    %v5994 = vld [vmem:[#allocation6 + $0x3b0] sm:$0xff]
    %v5995 = vld [vmem:[#allocation6 + $0x3b8] sm:$0xff]
    %v5996 = vld [vmem:[#allocation6 + $0x3c0] sm:$0xff]
    %v5997 = vld [vmem:[#allocation6 + $0x3c8] sm:$0xff]
    %v5998 = vld [vmem:[#allocation6 + $0x3d0] sm:$0xff]
    %v5999 = vld [vmem:[#allocation6 + $0x3d8] sm:$0xff]
    %v6000 = vld [vmem:[#allocation6 + $0x3e0] sm:$0xff]
    %v6001 = vld [vmem:[#allocation6 + $0x3e8] sm:$0xff]
    %v6002 = vld [vmem:[#allocation6 + $0x3f0] sm:$0xff]
    %v6003 = vld [vmem:[#allocation6 + $0x3f8] sm:$0xff]
    %v6004 = vld [vmem:[#allocation6 + $0x400] sm:$0xff]
    %v6005 = vld [vmem:[#allocation6 + $0x408] sm:$0xff]
    %v6006 = vld [vmem:[#allocation6 + $0x410] sm:$0xff]
    %v6007 = vld [vmem:[#allocation6 + $0x418] sm:$0xff]
    %v6008 = vld [vmem:[#allocation6 + $0x420] sm:$0xff]
    %v6009 = vld [vmem:[#allocation6 + $0x428] sm:$0xff]
    %v6010 = vld [vmem:[#allocation6 + $0x430] sm:$0xff]
    %v6011 = vld [vmem:[#allocation6 + $0x438] sm:$0xff]
    %v6012 = vld [vmem:[#allocation6 + $0x440] sm:$0xff]
    %v6013 = vld [vmem:[#allocation6 + $0x448] sm:$0xff]
    %v6014 = vld [vmem:[#allocation6 + $0x450] sm:$0xff]
    %v6015 = vld [vmem:[#allocation6 + $0x458] sm:$0xff]
    %v6016 = vld [vmem:[#allocation6 + $0x460] sm:$0xff]
    %v6017 = vld [vmem:[#allocation6 + $0x468] sm:$0xff]
    %v6018 = vld [vmem:[#allocation6 + $0x470] sm:$0xff]
    %v6019 = vld [vmem:[#allocation6 + $0x478] sm:$0xff]
    %v6020 = vld [vmem:[#allocation6 + $0x480] sm:$0xff]
    %v6021 = vld [vmem:[#allocation6 + $0x488] sm:$0xff]
    %v6022 = vld [vmem:[#allocation6 + $0x490] sm:$0xff]
    %v6023 = vld [vmem:[#allocation6 + $0x498] sm:$0xff]
    %v6024 = vld [vmem:[#allocation6 + $0x4a0] sm:$0xff]
    %v6025 = vld [vmem:[#allocation6 + $0x4a8] sm:$0xff]
    %v6026 = vld [vmem:[#allocation6 + $0x4b0] sm:$0xff]
    %v6027 = vld [vmem:[#allocation6 + $0x4b8] sm:$0xff]
    %v6028 = vld [vmem:[#allocation6 + $0x4c0] sm:$0xff]
    %v6029 = vld [vmem:[#allocation6 + $0x4c8] sm:$0xff]
    %v6030 = vld [vmem:[#allocation6 + $0x4d0] sm:$0xff]
    %v6031 = vld [vmem:[#allocation6 + $0x4d8] sm:$0xff]
    %v6032 = vld [vmem:[#allocation6 + $0x4e0] sm:$0xff]
    %v6033 = vld [vmem:[#allocation6 + $0x4e8] sm:$0xff]
    %v6034 = vld [vmem:[#allocation6 + $0x4f0] sm:$0xff]
    %v6035 = vld [vmem:[#allocation6 + $0x4f8] sm:$0xff]
    %v6036 = vld [vmem:[#allocation6 + $0x500] sm:$0xff]
    %v6037 = vld [vmem:[#allocation6 + $0x508] sm:$0xff]
    %v6038 = vld [vmem:[#allocation6 + $0x510] sm:$0xff]
    %v6039 = vld [vmem:[#allocation6 + $0x518] sm:$0xff]
    %v6040 = vld [vmem:[#allocation6 + $0x520] sm:$0xff]
    %v6041 = vld [vmem:[#allocation6 + $0x528] sm:$0xff]
    %v6042 = vld [vmem:[#allocation6 + $0x530] sm:$0xff]
    %v6043 = vld [vmem:[#allocation6 + $0x538] sm:$0xff]
    %v6044 = vld [vmem:[#allocation6 + $0x540] sm:$0xff]
    %v6045 = vld [vmem:[#allocation6 + $0x548] sm:$0xff]
    %v6046 = vld [vmem:[#allocation6 + $0x550] sm:$0xff]
    %v6047 = vld [vmem:[#allocation6 + $0x558] sm:$0xff]
    %v6048 = vld [vmem:[#allocation6 + $0x560] sm:$0xff]
    %v6049 = vld [vmem:[#allocation6 + $0x568] sm:$0xff]
    %v6050 = vld [vmem:[#allocation6 + $0x570] sm:$0xff]
    %v6051 = vld [vmem:[#allocation6 + $0x578] sm:$0xff]
    %v6052 = vld [vmem:[#allocation6 + $0x580] sm:$0xff]
    %v6053 = vld [vmem:[#allocation6 + $0x588] sm:$0xff]
    %v6054 = vld [vmem:[#allocation6 + $0x590] sm:$0xff]
    %v6055 = vld [vmem:[#allocation6 + $0x598] sm:$0xff]
    %v6056 = vld [vmem:[#allocation6 + $0x5a0] sm:$0xff]
    %v6057 = vld [vmem:[#allocation6 + $0x5a8] sm:$0xff]
    %v6058 = vld [vmem:[#allocation6 + $0x5b0] sm:$0xff]
    %v6059 = vld [vmem:[#allocation6 + $0x5b8] sm:$0xff]
    %v6060 = vld [vmem:[#allocation6 + $0x5c0] sm:$0xff]
    %v6061 = vld [vmem:[#allocation6 + $0x5c8] sm:$0xff]
    %v6062 = vld [vmem:[#allocation6 + $0x5d0] sm:$0xff]
    %v6063 = vld [vmem:[#allocation6 + $0x5d8] sm:$0xff]
    %v6064 = vld [vmem:[#allocation6 + $0x5e0] sm:$0xff]
    %v6065 = vld [vmem:[#allocation6 + $0x5e8] sm:$0xff]
    %v6066 = vld [vmem:[#allocation6 + $0x5f0] sm:$0xff]
    %v6067 = vld [vmem:[#allocation6 + $0x5f8] sm:$0xff]
    %v6068 = vld [vmem:[#allocation6 + $0x600] sm:$0xff]
    %v6069 = vld [vmem:[#allocation6 + $0x608] sm:$0xff]
    %v6070 = vld [vmem:[#allocation6 + $0x610] sm:$0xff]
    %v6071 = vld [vmem:[#allocation6 + $0x618] sm:$0xff]
    %v6072 = vld [vmem:[#allocation6 + $0x620] sm:$0xff]
    %v6073 = vld [vmem:[#allocation6 + $0x628] sm:$0xff]
    %v6074 = vld [vmem:[#allocation6 + $0x630] sm:$0xff]
    %v6075 = vld [vmem:[#allocation6 + $0x638] sm:$0xff]
    %v6076 = vld [vmem:[#allocation6 + $0x640] sm:$0xff]
    %v6077 = vld [vmem:[#allocation6 + $0x648] sm:$0xff]
    %v6078 = vld [vmem:[#allocation6 + $0x650] sm:$0xff]
    %v6079 = vld [vmem:[#allocation6 + $0x658] sm:$0xff]
    %v6080 = vld [vmem:[#allocation6 + $0x660] sm:$0xff]
    %v6081 = vld [vmem:[#allocation6 + $0x668] sm:$0xff]
    %v6082 = vld [vmem:[#allocation6 + $0x670] sm:$0xff]
    %v6083 = vld [vmem:[#allocation6 + $0x678] sm:$0xff]
    %v6084 = vld [vmem:[#allocation6 + $0x680] sm:$0xff]
    %v6085 = vld [vmem:[#allocation6 + $0x688] sm:$0xff]
    %v6086 = vld [vmem:[#allocation6 + $0x690] sm:$0xff]
    %v6087 = vld [vmem:[#allocation6 + $0x698] sm:$0xff]
    %v6088 = vld [vmem:[#allocation6 + $0x6a0] sm:$0xff]
    %v6089 = vld [vmem:[#allocation6 + $0x6a8] sm:$0xff]
    %v6090 = vld [vmem:[#allocation6 + $0x6b0] sm:$0xff]
    %v6091 = vld [vmem:[#allocation6 + $0x6b8] sm:$0xff]
    %v6092 = vld [vmem:[#allocation6 + $0x6c0] sm:$0xff]
    %v6093 = vld [vmem:[#allocation6 + $0x6c8] sm:$0xff]
    %v6094 = vld [vmem:[#allocation6 + $0x6d0] sm:$0xff]
    %v6095 = vld [vmem:[#allocation6 + $0x6d8] sm:$0xff]
    %v6096 = vld [vmem:[#allocation6 + $0x6e0] sm:$0xff]
    %v6097 = vld [vmem:[#allocation6 + $0x6e8] sm:$0xff]
    %v6098 = vld [vmem:[#allocation6 + $0x6f0] sm:$0xff]
    %v6099 = vld [vmem:[#allocation6 + $0x6f8] sm:$0xff]
    %v6100 = vld [vmem:[#allocation6 + $0x700] sm:$0xff]
    %v6101 = vld [vmem:[#allocation6 + $0x708] sm:$0xff]
    %v6102 = vld [vmem:[#allocation6 + $0x710] sm:$0xff]
    %v6103 = vld [vmem:[#allocation6 + $0x718] sm:$0xff]
    %v6104 = vld [vmem:[#allocation6 + $0x720] sm:$0xff]
    %v6105 = vld [vmem:[#allocation6 + $0x728] sm:$0xff]
    %v6106 = vld [vmem:[#allocation6 + $0x730] sm:$0xff]
    %v6107 = vld [vmem:[#allocation6 + $0x738] sm:$0xff]
    %v6108 = vld [vmem:[#allocation6 + $0x740] sm:$0xff]
    %v6109 = vld [vmem:[#allocation6 + $0x748] sm:$0xff]
    %v6110 = vld [vmem:[#allocation6 + $0x750] sm:$0xff]
    %v6111 = vld [vmem:[#allocation6 + $0x758] sm:$0xff]
    %v6112 = vld [vmem:[#allocation6 + $0x760] sm:$0xff]
    %v6113 = vld [vmem:[#allocation6 + $0x768] sm:$0xff]
    %v6114 = vld [vmem:[#allocation6 + $0x770] sm:$0xff]
    %v6115 = vld [vmem:[#allocation6 + $0x778] sm:$0xff]
    %v6116 = vld [vmem:[#allocation6 + $0x780] sm:$0xff]
    %v6117 = vld [vmem:[#allocation6 + $0x788] sm:$0xff]
    %v6118 = vld [vmem:[#allocation6 + $0x790] sm:$0xff]
    %v6119 = vld [vmem:[#allocation6 + $0x798] sm:$0xff]
    %v6120 = vld [vmem:[#allocation6 + $0x7a0] sm:$0xff]
    %v6121 = vld [vmem:[#allocation6 + $0x7a8] sm:$0xff]
    %v6122 = vld [vmem:[#allocation6 + $0x7b0] sm:$0xff]
    %v6123 = vld [vmem:[#allocation6 + $0x7b8] sm:$0xff]
    %v6124 = vld [vmem:[#allocation6 + $0x7c0] sm:$0xff]
    %v6125 = vld [vmem:[#allocation6 + $0x7c8] sm:$0xff]
    %v6126 = vld [vmem:[#allocation6 + $0x7d0] sm:$0xff]
    %v6127 = vld [vmem:[#allocation6 + $0x7d8] sm:$0xff]
    %v6128 = vld [vmem:[#allocation6 + $0x7e0] sm:$0xff]
    %v6129 = vld [vmem:[#allocation6 + $0x7e8] sm:$0xff]
    %v6130 = vld [vmem:[#allocation6 + $0x7f0] sm:$0xff]
    %v6131 = vld [vmem:[#allocation6 + $0x7f8] sm:$0xff]
    %v6196 = vunpack.c.l.b16 %v5876
    %v6197 = vunpack.c.h.b16 %v5876
    %v6198 = vunpack.c.l.b16 %v5880
    %v6199 = vunpack.c.h.b16 %v5880
    %v6200 = vunpack.c.l.b16 %v5884
    %v6201 = vunpack.c.h.b16 %v5884
    %v6202 = vunpack.c.l.b16 %v5888
    %v6203 = vunpack.c.h.b16 %v5888
    %v6204 = vunpack.c.l.b16 %v5892
    %v6205 = vunpack.c.h.b16 %v5892
    %v6206 = vunpack.c.l.b16 %v5896
    %v6207 = vunpack.c.h.b16 %v5896
    %v6208 = vunpack.c.l.b16 %v5900
    %v6209 = vunpack.c.h.b16 %v5900
    %v6210 = vunpack.c.l.b16 %v5904
    %v6211 = vunpack.c.h.b16 %v5904
    %v6212 = vunpack.c.l.b16 %v5908
    %v6213 = vunpack.c.h.b16 %v5908
    %v6214 = vunpack.c.l.b16 %v5912
    %v6215 = vunpack.c.h.b16 %v5912
    %v6216 = vunpack.c.l.b16 %v5916
    %v6217 = vunpack.c.h.b16 %v5916
    %v6218 = vunpack.c.l.b16 %v5920
    %v6219 = vunpack.c.h.b16 %v5920
    %v6220 = vunpack.c.l.b16 %v5924
    %v6221 = vunpack.c.h.b16 %v5924
    %v6222 = vunpack.c.l.b16 %v5928
    %v6223 = vunpack.c.h.b16 %v5928
    %v6224 = vunpack.c.l.b16 %v5932
    %v6225 = vunpack.c.h.b16 %v5932
    %v6226 = vunpack.c.l.b16 %v5936
    %v6227 = vunpack.c.h.b16 %v5936
    %v6228 = vunpack.c.l.b16 %v5940
    %v6229 = vunpack.c.h.b16 %v5940
    %v6230 = vunpack.c.l.b16 %v5944
    %v6231 = vunpack.c.h.b16 %v5944
    %v6232 = vunpack.c.l.b16 %v5948
    %v6233 = vunpack.c.h.b16 %v5948
    %v6234 = vunpack.c.l.b16 %v5952
    %v6235 = vunpack.c.h.b16 %v5952
    %v6236 = vunpack.c.l.b16 %v5956
    %v6237 = vunpack.c.h.b16 %v5956
    %v6238 = vunpack.c.l.b16 %v5960
    %v6239 = vunpack.c.h.b16 %v5960
    %v6240 = vunpack.c.l.b16 %v5964
    %v6241 = vunpack.c.h.b16 %v5964
    %v6242 = vunpack.c.l.b16 %v5968
    %v6243 = vunpack.c.h.b16 %v5968
    %v6244 = vunpack.c.l.b16 %v5972
    %v6245 = vunpack.c.h.b16 %v5972
    %v6246 = vunpack.c.l.b16 %v5976
    %v6247 = vunpack.c.h.b16 %v5976
    %v6248 = vunpack.c.l.b16 %v5980
    %v6249 = vunpack.c.h.b16 %v5980
    %v6250 = vunpack.c.l.b16 %v5984
    %v6251 = vunpack.c.h.b16 %v5984
    %v6252 = vunpack.c.l.b16 %v5988
    %v6253 = vunpack.c.h.b16 %v5988
    %v6254 = vunpack.c.l.b16 %v5992
    %v6255 = vunpack.c.h.b16 %v5992
    %v6256 = vunpack.c.l.b16 %v5996
    %v6257 = vunpack.c.h.b16 %v5996
    %v6258 = vunpack.c.l.b16 %v6000
    %v6259 = vunpack.c.h.b16 %v6000
    %v6260 = vunpack.c.l.b16 %v6004
    %v6261 = vunpack.c.h.b16 %v6004
    %v6262 = vunpack.c.l.b16 %v6008
    %v6263 = vunpack.c.h.b16 %v6008
    %v6264 = vunpack.c.l.b16 %v6012
    %v6265 = vunpack.c.h.b16 %v6012
    %v6266 = vunpack.c.l.b16 %v6016
    %v6267 = vunpack.c.h.b16 %v6016
    %v6268 = vunpack.c.l.b16 %v6020
    %v6269 = vunpack.c.h.b16 %v6020
    %v6270 = vunpack.c.l.b16 %v6024
    %v6271 = vunpack.c.h.b16 %v6024
    %v6272 = vunpack.c.l.b16 %v6028
    %v6273 = vunpack.c.h.b16 %v6028
    %v6274 = vunpack.c.l.b16 %v6032
    %v6275 = vunpack.c.h.b16 %v6032
    %v6276 = vunpack.c.l.b16 %v6036
    %v6277 = vunpack.c.h.b16 %v6036
    %v6278 = vunpack.c.l.b16 %v6040
    %v6279 = vunpack.c.h.b16 %v6040
    %v6280 = vunpack.c.l.b16 %v6044
    %v6281 = vunpack.c.h.b16 %v6044
    %v6282 = vunpack.c.l.b16 %v6048
    %v6283 = vunpack.c.h.b16 %v6048
    %v6284 = vunpack.c.l.b16 %v6052
    %v6285 = vunpack.c.h.b16 %v6052
    %v6286 = vunpack.c.l.b16 %v6056
    %v6287 = vunpack.c.h.b16 %v6056
    %v6288 = vunpack.c.l.b16 %v6060
    %v6289 = vunpack.c.h.b16 %v6060
    %v6290 = vunpack.c.l.b16 %v6064
    %v6291 = vunpack.c.h.b16 %v6064
    %v6292 = vunpack.c.l.b16 %v6068
    %v6293 = vunpack.c.h.b16 %v6068
    %v6294 = vunpack.c.l.b16 %v6072
    %v6295 = vunpack.c.h.b16 %v6072
    %v6296 = vunpack.c.l.b16 %v6076
    %v6297 = vunpack.c.h.b16 %v6076
    %v6298 = vunpack.c.l.b16 %v6080
    %v6299 = vunpack.c.h.b16 %v6080
    %v6300 = vunpack.c.l.b16 %v6084
    %v6301 = vunpack.c.h.b16 %v6084
    %v6302 = vunpack.c.l.b16 %v6088
    %v6303 = vunpack.c.h.b16 %v6088
    %v6304 = vunpack.c.l.b16 %v6092
    %v6305 = vunpack.c.h.b16 %v6092
    %v6306 = vunpack.c.l.b16 %v6096
    %v6307 = vunpack.c.h.b16 %v6096
    %v6308 = vunpack.c.l.b16 %v6100
    %v6309 = vunpack.c.h.b16 %v6100
    %v6310 = vunpack.c.l.b16 %v6104
    %v6311 = vunpack.c.h.b16 %v6104
    %v6312 = vunpack.c.l.b16 %v6108
    %v6313 = vunpack.c.h.b16 %v6108
    %v6314 = vunpack.c.l.b16 %v6112
    %v6315 = vunpack.c.h.b16 %v6112
    %v6316 = vunpack.c.l.b16 %v6116
    %v6317 = vunpack.c.h.b16 %v6116
    %v6318 = vunpack.c.l.b16 %v6120
    %v6319 = vunpack.c.h.b16 %v6120
    %v6320 = vunpack.c.l.b16 %v6124
    %v6321 = vunpack.c.h.b16 %v6124
    %v6322 = vunpack.c.l.b16 %v6128
    %v6323 = vunpack.c.h.b16 %v6128
    %v6324 = vpack.c.b16 %v6198, %v6196
    %v6325 = vpack.c.b16 %v6199, %v6197
    %v6326 = vpack.c.b16 %v6202, %v6200
    %v6327 = vpack.c.b16 %v6203, %v6201
    %v6328 = vpack.c.b16 %v6206, %v6204
    %v6329 = vpack.c.b16 %v6207, %v6205
    %v6330 = vpack.c.b16 %v6210, %v6208
    %v6331 = vpack.c.b16 %v6211, %v6209
    %v6332 = vpack.c.b16 %v6214, %v6212
    %v6333 = vpack.c.b16 %v6215, %v6213
    %v6334 = vpack.c.b16 %v6218, %v6216
    %v6335 = vpack.c.b16 %v6219, %v6217
    %v6336 = vpack.c.b16 %v6222, %v6220
    %v6337 = vpack.c.b16 %v6223, %v6221
    %v6338 = vpack.c.b16 %v6226, %v6224
    %v6339 = vpack.c.b16 %v6227, %v6225
    %v6340 = vpack.c.b16 %v6230, %v6228
    %v6341 = vpack.c.b16 %v6231, %v6229
    %v6342 = vpack.c.b16 %v6234, %v6232
    %v6343 = vpack.c.b16 %v6235, %v6233
    %v6344 = vpack.c.b16 %v6238, %v6236
    %v6345 = vpack.c.b16 %v6239, %v6237
    %v6346 = vpack.c.b16 %v6242, %v6240
    %v6347 = vpack.c.b16 %v6243, %v6241
    %v6348 = vpack.c.b16 %v6246, %v6244
    %v6349 = vpack.c.b16 %v6247, %v6245
    %v6350 = vpack.c.b16 %v6250, %v6248
    %v6351 = vpack.c.b16 %v6251, %v6249
    %v6352 = vpack.c.b16 %v6254, %v6252
    %v6353 = vpack.c.b16 %v6255, %v6253
    %v6354 = vpack.c.b16 %v6258, %v6256
    %v6355 = vpack.c.b16 %v6259, %v6257
    %v6356 = vpack.c.b16 %v6262, %v6260
    %v6357 = vpack.c.b16 %v6263, %v6261
    %v6358 = vpack.c.b16 %v6266, %v6264
    %v6359 = vpack.c.b16 %v6267, %v6265
    %v6360 = vpack.c.b16 %v6270, %v6268
    %v6361 = vpack.c.b16 %v6271, %v6269
    %v6362 = vpack.c.b16 %v6274, %v6272
    %v6363 = vpack.c.b16 %v6275, %v6273
    %v6364 = vpack.c.b16 %v6278, %v6276
    %v6365 = vpack.c.b16 %v6279, %v6277
    %v6366 = vpack.c.b16 %v6282, %v6280
    %v6367 = vpack.c.b16 %v6283, %v6281
    %v6368 = vpack.c.b16 %v6286, %v6284
    %v6369 = vpack.c.b16 %v6287, %v6285
    %v6370 = vpack.c.b16 %v6290, %v6288
    %v6371 = vpack.c.b16 %v6291, %v6289
    %v6372 = vpack.c.b16 %v6294, %v6292
    %v6373 = vpack.c.b16 %v6295, %v6293
    %v6374 = vpack.c.b16 %v6298, %v6296
    %v6375 = vpack.c.b16 %v6299, %v6297
    %v6376 = vpack.c.b16 %v6302, %v6300
    %v6377 = vpack.c.b16 %v6303, %v6301
    %v6378 = vpack.c.b16 %v6306, %v6304
    %v6379 = vpack.c.b16 %v6307, %v6305
    %v6380 = vpack.c.b16 %v6310, %v6308
    %v6381 = vpack.c.b16 %v6311, %v6309
    %v6382 = vpack.c.b16 %v6314, %v6312
    %v6383 = vpack.c.b16 %v6315, %v6313
    %v6384 = vpack.c.b16 %v6318, %v6316
    %v6385 = vpack.c.b16 %v6319, %v6317
    %v6386 = vpack.c.b16 %v6322, %v6320
    %v6387 = vpack.c.b16 %v6323, %v6321
    %6452 = vmatprep.subr.bf16.mxu0 %v6325
    %6453 = vmatpush1.bf16.msra.mxu0 %v6324
    %6454 = vmatprep.subr.bf16.mxu0 %v6327
    %6455 = vmatpush1.bf16.msra.mxu0 %v6326
    %6456 = vmatprep.subr.bf16.mxu0 %v6329
    %6457 = vmatpush1.bf16.msra.mxu0 %v6328
    %6458 = vmatprep.subr.bf16.mxu0 %v6331
    %6459 = vmatpush1.bf16.msra.mxu0 %v6330
    %6460 = vmatprep.subr.bf16.mxu0 %v6333
    %6461 = vmatpush1.bf16.msra.mxu0 %v6332
    %6462 = vmatprep.subr.bf16.mxu0 %v6335
    %6463 = vmatpush1.bf16.msra.mxu0 %v6334
    %6464 = vmatprep.subr.bf16.mxu0 %v6337
    %6465 = vmatpush1.bf16.msra.mxu0 %v6336
    %6466 = vmatprep.subr.bf16.mxu0 %v6339
    %6467 = vmatpush1.bf16.msra.mxu0 %v6338
    %6468 = vmatprep.subr.bf16.mxu0 %v6341
    %6469 = vmatpush1.bf16.msra.mxu0 %v6340
    %6470 = vmatprep.subr.bf16.mxu0 %v6343
    %6471 = vmatpush1.bf16.msra.mxu0 %v6342
    %6472 = vmatprep.subr.bf16.mxu0 %v6345
    %6473 = vmatpush1.bf16.msra.mxu0 %v6344
    %6474 = vmatprep.subr.bf16.mxu0 %v6347
    %6475 = vmatpush1.bf16.msra.mxu0 %v6346
    %6476 = vmatprep.subr.bf16.mxu0 %v6349
    %6477 = vmatpush1.bf16.msra.mxu0 %v6348
    %6478 = vmatprep.subr.bf16.mxu0 %v6351
    %6479 = vmatpush1.bf16.msra.mxu0 %v6350
    %6480 = vmatprep.subr.bf16.mxu0 %v6353
    %6481 = vmatpush1.bf16.msra.mxu0 %v6352
    %6482 = vmatprep.subr.bf16.mxu0 %v6355
    %6483 = vmatpush1.bf16.msra.mxu0 %v6354
    %6484 = vmatprep.mubr.bf16.mxu0 %v5873
    %6485 = vmatmul.mubr.bf16.gmra.mrb[0].mxu0 %v5872
    %v6486 = vpop.f32.mrb[0].mxu0
    %v6487 = vadd.f32 0.0, %v6486
    %v6488 = vpop.f32.mrb[0].mxu0
    %v6489 = vadd.f32 0.0, %v6488
    %v6490 = vpop.f32.mrb[0].mxu0
    %v6491 = vadd.f32 0.0, %v6490
    %v6492 = vpop.f32.mrb[0].mxu0
    %v6493 = vadd.f32 0.0, %v6492
    %6494 = vdwg.mxu0
    %6495 = vmatprep.subr.bf16.mxu0 %v6357
    %6496 = vmatpush1.bf16.msra.mxu0 %v6356
    %6497 = vmatprep.subr.bf16.mxu0 %v6359
    %6498 = vmatpush1.bf16.msra.mxu0 %v6358
    %6499 = vmatprep.subr.bf16.mxu0 %v6361
    %6500 = vmatpush1.bf16.msra.mxu0 %v6360
    %6501 = vmatprep.subr.bf16.mxu0 %v6363
    %6502 = vmatpush1.bf16.msra.mxu0 %v6362
    %6503 = vmatprep.subr.bf16.mxu0 %v6365
    %6504 = vmatpush1.bf16.msra.mxu0 %v6364
    %6505 = vmatprep.subr.bf16.mxu0 %v6367
    %6506 = vmatpush1.bf16.msra.mxu0 %v6366
    %6507 = vmatprep.subr.bf16.mxu0 %v6369
    %6508 = vmatpush1.bf16.msra.mxu0 %v6368
    %6509 = vmatprep.subr.bf16.mxu0 %v6371
    %6510 = vmatpush1.bf16.msra.mxu0 %v6370
    %6511 = vmatprep.subr.bf16.mxu0 %v6373
    %6512 = vmatpush1.bf16.msra.mxu0 %v6372
    %6513 = vmatprep.subr.bf16.mxu0 %v6375
    %6514 = vmatpush1.bf16.msra.mxu0 %v6374
    %6515 = vmatprep.subr.bf16.mxu0 %v6377
    %6516 = vmatpush1.bf16.msra.mxu0 %v6376
    %6517 = vmatprep.subr.bf16.mxu0 %v6379
    %6518 = vmatpush1.bf16.msra.mxu0 %v6378
    %6519 = vmatprep.subr.bf16.mxu0 %v6381
    %6520 = vmatpush1.bf16.msra.mxu0 %v6380
    %6521 = vmatprep.subr.bf16.mxu0 %v6383
    %6522 = vmatpush1.bf16.msra.mxu0 %v6382
    %6523 = vmatprep.subr.bf16.mxu0 %v6385
    %6524 = vmatpush1.bf16.msra.mxu0 %v6384
    %6525 = vmatprep.subr.bf16.mxu0 %v6387
    %6526 = vmatpush1.bf16.msra.mxu0 %v6386
    %6527 = vmatprep.mubr.bf16.mxu0 %v5875
    %6528 = vmatmul.mubr.bf16.gmra.mrb[0].mxu0 %v5874
    %v6529 = vpop.f32.mrb[0].mxu0
    %v6530 = vadd.f32 %v6487, %v6529
    %v6531 = vpop.f32.mrb[0].mxu0
    %v6532 = vadd.f32 %v6489, %v6531
    %v6533 = vpop.f32.mrb[0].mxu0
    %v6534 = vadd.f32 %v6491, %v6533
    %v6535 = vpop.f32.mrb[0].mxu0
    %v6536 = vadd.f32 %v6493, %v6535
    %6537 = vdwg.mxu0
    %v6602 = vunpack.c.l.b16 %v5877
    %v6603 = vunpack.c.h.b16 %v5877
    %v6604 = vunpack.c.l.b16 %v5881
    %v6605 = vunpack.c.h.b16 %v5881
    %v6606 = vunpack.c.l.b16 %v5885
    %v6607 = vunpack.c.h.b16 %v5885
    %v6608 = vunpack.c.l.b16 %v5889
    %v6609 = vunpack.c.h.b16 %v5889
    %v6610 = vunpack.c.l.b16 %v5893
    %v6611 = vunpack.c.h.b16 %v5893
    %v6612 = vunpack.c.l.b16 %v5897
    %v6613 = vunpack.c.h.b16 %v5897
    %v6614 = vunpack.c.l.b16 %v5901
    %v6615 = vunpack.c.h.b16 %v5901
    %v6616 = vunpack.c.l.b16 %v5905
    %v6617 = vunpack.c.h.b16 %v5905
    %v6618 = vunpack.c.l.b16 %v5909
    %v6619 = vunpack.c.h.b16 %v5909
    %v6620 = vunpack.c.l.b16 %v5913
    %v6621 = vunpack.c.h.b16 %v5913
    %v6622 = vunpack.c.l.b16 %v5917
    %v6623 = vunpack.c.h.b16 %v5917
    %v6624 = vunpack.c.l.b16 %v5921
    %v6625 = vunpack.c.h.b16 %v5921
    %v6626 = vunpack.c.l.b16 %v5925
    %v6627 = vunpack.c.h.b16 %v5925
    %v6628 = vunpack.c.l.b16 %v5929
    %v6629 = vunpack.c.h.b16 %v5929
    %v6630 = vunpack.c.l.b16 %v5933
    %v6631 = vunpack.c.h.b16 %v5933
    %v6632 = vunpack.c.l.b16 %v5937
    %v6633 = vunpack.c.h.b16 %v5937
    %v6634 = vunpack.c.l.b16 %v5941
    %v6635 = vunpack.c.h.b16 %v5941
    %v6636 = vunpack.c.l.b16 %v5945
    %v6637 = vunpack.c.h.b16 %v5945
    %v6638 = vunpack.c.l.b16 %v5949
    %v6639 = vunpack.c.h.b16 %v5949
    %v6640 = vunpack.c.l.b16 %v5953
    %v6641 = vunpack.c.h.b16 %v5953
    %v6642 = vunpack.c.l.b16 %v5957
    %v6643 = vunpack.c.h.b16 %v5957
    %v6644 = vunpack.c.l.b16 %v5961
    %v6645 = vunpack.c.h.b16 %v5961
    %v6646 = vunpack.c.l.b16 %v5965
    %v6647 = vunpack.c.h.b16 %v5965
    %v6648 = vunpack.c.l.b16 %v5969
    %v6649 = vunpack.c.h.b16 %v5969
    %v6650 = vunpack.c.l.b16 %v5973
    %v6651 = vunpack.c.h.b16 %v5973
    %v6652 = vunpack.c.l.b16 %v5977
    %v6653 = vunpack.c.h.b16 %v5977
    %v6654 = vunpack.c.l.b16 %v5981
    %v6655 = vunpack.c.h.b16 %v5981
    %v6656 = vunpack.c.l.b16 %v5985
    %v6657 = vunpack.c.h.b16 %v5985
    %v6658 = vunpack.c.l.b16 %v5989
    %v6659 = vunpack.c.h.b16 %v5989
    %v6660 = vunpack.c.l.b16 %v5993
    %v6661 = vunpack.c.h.b16 %v5993
    %v6662 = vunpack.c.l.b16 %v5997
    %v6663 = vunpack.c.h.b16 %v5997
    %v6664 = vunpack.c.l.b16 %v6001
    %v6665 = vunpack.c.h.b16 %v6001
    %v6666 = vunpack.c.l.b16 %v6005
    %v6667 = vunpack.c.h.b16 %v6005
    %v6668 = vunpack.c.l.b16 %v6009
    %v6669 = vunpack.c.h.b16 %v6009
    %v6670 = vunpack.c.l.b16 %v6013
    %v6671 = vunpack.c.h.b16 %v6013
    %v6672 = vunpack.c.l.b16 %v6017
    %v6673 = vunpack.c.h.b16 %v6017
    %v6674 = vunpack.c.l.b16 %v6021
    %v6675 = vunpack.c.h.b16 %v6021
    %v6676 = vunpack.c.l.b16 %v6025
    %v6677 = vunpack.c.h.b16 %v6025
    %v6678 = vunpack.c.l.b16 %v6029
    %v6679 = vunpack.c.h.b16 %v6029
    %v6680 = vunpack.c.l.b16 %v6033
    %v6681 = vunpack.c.h.b16 %v6033
    %v6682 = vunpack.c.l.b16 %v6037
    %v6683 = vunpack.c.h.b16 %v6037
    %v6684 = vunpack.c.l.b16 %v6041
    %v6685 = vunpack.c.h.b16 %v6041
    %v6686 = vunpack.c.l.b16 %v6045
    %v6687 = vunpack.c.h.b16 %v6045
    %v6688 = vunpack.c.l.b16 %v6049
    %v6689 = vunpack.c.h.b16 %v6049
    %v6690 = vunpack.c.l.b16 %v6053
    %v6691 = vunpack.c.h.b16 %v6053
    %v6692 = vunpack.c.l.b16 %v6057
    %v6693 = vunpack.c.h.b16 %v6057
    %v6694 = vunpack.c.l.b16 %v6061
    %v6695 = vunpack.c.h.b16 %v6061
    %v6696 = vunpack.c.l.b16 %v6065
    %v6697 = vunpack.c.h.b16 %v6065
    %v6698 = vunpack.c.l.b16 %v6069
    %v6699 = vunpack.c.h.b16 %v6069
    %v6700 = vunpack.c.l.b16 %v6073
    %v6701 = vunpack.c.h.b16 %v6073
    %v6702 = vunpack.c.l.b16 %v6077
    %v6703 = vunpack.c.h.b16 %v6077
    %v6704 = vunpack.c.l.b16 %v6081
    %v6705 = vunpack.c.h.b16 %v6081
    %v6706 = vunpack.c.l.b16 %v6085
    %v6707 = vunpack.c.h.b16 %v6085
    %v6708 = vunpack.c.l.b16 %v6089
    %v6709 = vunpack.c.h.b16 %v6089
    %v6710 = vunpack.c.l.b16 %v6093
    %v6711 = vunpack.c.h.b16 %v6093
    %v6712 = vunpack.c.l.b16 %v6097
    %v6713 = vunpack.c.h.b16 %v6097
    %v6714 = vunpack.c.l.b16 %v6101
    %v6715 = vunpack.c.h.b16 %v6101
    %v6716 = vunpack.c.l.b16 %v6105
    %v6717 = vunpack.c.h.b16 %v6105
    %v6718 = vunpack.c.l.b16 %v6109
    %v6719 = vunpack.c.h.b16 %v6109
    %v6720 = vunpack.c.l.b16 %v6113
    %v6721 = vunpack.c.h.b16 %v6113
    %v6722 = vunpack.c.l.b16 %v6117
    %v6723 = vunpack.c.h.b16 %v6117
    %v6724 = vunpack.c.l.b16 %v6121
    %v6725 = vunpack.c.h.b16 %v6121
    %v6726 = vunpack.c.l.b16 %v6125
    %v6727 = vunpack.c.h.b16 %v6125
    %v6728 = vunpack.c.l.b16 %v6129
    %v6729 = vunpack.c.h.b16 %v6129
    %v6730 = vpack.c.b16 %v6604, %v6602
    %v6731 = vpack.c.b16 %v6605, %v6603
    %v6732 = vpack.c.b16 %v6608, %v6606
    %v6733 = vpack.c.b16 %v6609, %v6607
    %v6734 = vpack.c.b16 %v6612, %v6610
    %v6735 = vpack.c.b16 %v6613, %v6611
    %v6736 = vpack.c.b16 %v6616, %v6614
    %v6737 = vpack.c.b16 %v6617, %v6615
    %v6738 = vpack.c.b16 %v6620, %v6618
    %v6739 = vpack.c.b16 %v6621, %v6619
    %v6740 = vpack.c.b16 %v6624, %v6622
    %v6741 = vpack.c.b16 %v6625, %v6623
    %v6742 = vpack.c.b16 %v6628, %v6626
    %v6743 = vpack.c.b16 %v6629, %v6627
    %v6744 = vpack.c.b16 %v6632, %v6630
    %v6745 = vpack.c.b16 %v6633, %v6631
    %v6746 = vpack.c.b16 %v6636, %v6634
    %v6747 = vpack.c.b16 %v6637, %v6635
    %v6748 = vpack.c.b16 %v6640, %v6638
    %v6749 = vpack.c.b16 %v6641, %v6639
    %v6750 = vpack.c.b16 %v6644, %v6642
    %v6751 = vpack.c.b16 %v6645, %v6643
    %v6752 = vpack.c.b16 %v6648, %v6646
    %v6753 = vpack.c.b16 %v6649, %v6647
    %v6754 = vpack.c.b16 %v6652, %v6650
    %v6755 = vpack.c.b16 %v6653, %v6651
    %v6756 = vpack.c.b16 %v6656, %v6654
    %v6757 = vpack.c.b16 %v6657, %v6655
    %v6758 = vpack.c.b16 %v6660, %v6658
    %v6759 = vpack.c.b16 %v6661, %v6659
    %v6760 = vpack.c.b16 %v6664, %v6662
    %v6761 = vpack.c.b16 %v6665, %v6663
    %v6762 = vpack.c.b16 %v6668, %v6666
    %v6763 = vpack.c.b16 %v6669, %v6667
    %v6764 = vpack.c.b16 %v6672, %v6670
    %v6765 = vpack.c.b16 %v6673, %v6671
    %v6766 = vpack.c.b16 %v6676, %v6674
    %v6767 = vpack.c.b16 %v6677, %v6675
    %v6768 = vpack.c.b16 %v6680, %v6678
    %v6769 = vpack.c.b16 %v6681, %v6679
    %v6770 = vpack.c.b16 %v6684, %v6682
    %v6771 = vpack.c.b16 %v6685, %v6683
    %v6772 = vpack.c.b16 %v6688, %v6686
    %v6773 = vpack.c.b16 %v6689, %v6687
    %v6774 = vpack.c.b16 %v6692, %v6690
    %v6775 = vpack.c.b16 %v6693, %v6691
    %v6776 = vpack.c.b16 %v6696, %v6694
    %v6777 = vpack.c.b16 %v6697, %v6695
    %v6778 = vpack.c.b16 %v6700, %v6698
    %v6779 = vpack.c.b16 %v6701, %v6699
    %v6780 = vpack.c.b16 %v6704, %v6702
    %v6781 = vpack.c.b16 %v6705, %v6703
    %v6782 = vpack.c.b16 %v6708, %v6706
    %v6783 = vpack.c.b16 %v6709, %v6707
    %v6784 = vpack.c.b16 %v6712, %v6710
    %v6785 = vpack.c.b16 %v6713, %v6711
    %v6786 = vpack.c.b16 %v6716, %v6714
    %v6787 = vpack.c.b16 %v6717, %v6715
    %v6788 = vpack.c.b16 %v6720, %v6718
    %v6789 = vpack.c.b16 %v6721, %v6719
    %v6790 = vpack.c.b16 %v6724, %v6722
    %v6791 = vpack.c.b16 %v6725, %v6723
    %v6792 = vpack.c.b16 %v6728, %v6726
    %v6793 = vpack.c.b16 %v6729, %v6727
    %6858 = vmatprep.subr.bf16.mxu0 %v6731
    %6859 = vmatpush1.bf16.msra.mxu0 %v6730
    %6860 = vmatprep.subr.bf16.mxu0 %v6733
    %6861 = vmatpush1.bf16.msra.mxu0 %v6732
    %6862 = vmatprep.subr.bf16.mxu0 %v6735
    %6863 = vmatpush1.bf16.msra.mxu0 %v6734
    %6864 = vmatprep.subr.bf16.mxu0 %v6737
    %6865 = vmatpush1.bf16.msra.mxu0 %v6736
    %6866 = vmatprep.subr.bf16.mxu0 %v6739
    %6867 = vmatpush1.bf16.msra.mxu0 %v6738
    %6868 = vmatprep.subr.bf16.mxu0 %v6741
    %6869 = vmatpush1.bf16.msra.mxu0 %v6740
    %6870 = vmatprep.subr.bf16.mxu0 %v6743
    %6871 = vmatpush1.bf16.msra.mxu0 %v6742
    %6872 = vmatprep.subr.bf16.mxu0 %v6745
    %6873 = vmatpush1.bf16.msra.mxu0 %v6744
    %6874 = vmatprep.subr.bf16.mxu0 %v6747
    %6875 = vmatpush1.bf16.msra.mxu0 %v6746
    %6876 = vmatprep.subr.bf16.mxu0 %v6749
    %6877 = vmatpush1.bf16.msra.mxu0 %v6748
    %6878 = vmatprep.subr.bf16.mxu0 %v6751
    %6879 = vmatpush1.bf16.msra.mxu0 %v6750
    %6880 = vmatprep.subr.bf16.mxu0 %v6753
    %6881 = vmatpush1.bf16.msra.mxu0 %v6752
    %6882 = vmatprep.subr.bf16.mxu0 %v6755
    %6883 = vmatpush1.bf16.msra.mxu0 %v6754
    %6884 = vmatprep.subr.bf16.mxu0 %v6757
    %6885 = vmatpush1.bf16.msra.mxu0 %v6756
    %6886 = vmatprep.subr.bf16.mxu0 %v6759
    %6887 = vmatpush1.bf16.msra.mxu0 %v6758
    %6888 = vmatprep.subr.bf16.mxu0 %v6761
    %6889 = vmatpush1.bf16.msra.mxu0 %v6760
    %6890 = vmatprep.mubr.bf16.mxu0 %v5873
    %6891 = vmatmul.mubr.bf16.gmra.mrb[0].mxu0 %v5872
    %v6892 = vpop.f32.mrb[0].mxu0
    %v6893 = vadd.f32 0.0, %v6892
    %v6894 = vpop.f32.mrb[0].mxu0
    %v6895 = vadd.f32 0.0, %v6894
    %v6896 = vpop.f32.mrb[0].mxu0
    %v6897 = vadd.f32 0.0, %v6896
    %v6898 = vpop.f32.mrb[0].mxu0
    %v6899 = vadd.f32 0.0, %v6898
    %6900 = vdwg.mxu0
    %6901 = vmatprep.subr.bf16.mxu0 %v6763
    %6902 = vmatpush1.bf16.msra.mxu0 %v6762
    %6903 = vmatprep.subr.bf16.mxu0 %v6765
    %6904 = vmatpush1.bf16.msra.mxu0 %v6764
    %6905 = vmatprep.subr.bf16.mxu0 %v6767
    %6906 = vmatpush1.bf16.msra.mxu0 %v6766
    %6907 = vmatprep.subr.bf16.mxu0 %v6769
    %6908 = vmatpush1.bf16.msra.mxu0 %v6768
    %6909 = vmatprep.subr.bf16.mxu0 %v6771
    %6910 = vmatpush1.bf16.msra.mxu0 %v6770
    %6911 = vmatprep.subr.bf16.mxu0 %v6773
    %6912 = vmatpush1.bf16.msra.mxu0 %v6772
    %6913 = vmatprep.subr.bf16.mxu0 %v6775
    %6914 = vmatpush1.bf16.msra.mxu0 %v6774
    %6915 = vmatprep.subr.bf16.mxu0 %v6777
    %6916 = vmatpush1.bf16.msra.mxu0 %v6776
    %6917 = vmatprep.subr.bf16.mxu0 %v6779
    %6918 = vmatpush1.bf16.msra.mxu0 %v6778
    %6919 = vmatprep.subr.bf16.mxu0 %v6781
    %6920 = vmatpush1.bf16.msra.mxu0 %v6780
    %6921 = vmatprep.subr.bf16.mxu0 %v6783
    %6922 = vmatpush1.bf16.msra.mxu0 %v6782
    %6923 = vmatprep.subr.bf16.mxu0 %v6785
    %6924 = vmatpush1.bf16.msra.mxu0 %v6784
    %6925 = vmatprep.subr.bf16.mxu0 %v6787
    %6926 = vmatpush1.bf16.msra.mxu0 %v6786
    %6927 = vmatprep.subr.bf16.mxu0 %v6789
    %6928 = vmatpush1.bf16.msra.mxu0 %v6788
    %6929 = vmatprep.subr.bf16.mxu0 %v6791
    %6930 = vmatpush1.bf16.msra.mxu0 %v6790
    %6931 = vmatprep.subr.bf16.mxu0 %v6793
    %6932 = vmatpush1.bf16.msra.mxu0 %v6792
    %6933 = vmatprep.mubr.bf16.mxu0 %v5875
    %6934 = vmatmul.mubr.bf16.gmra.mrb[0].mxu0 %v5874
    %v6935 = vpop.f32.mrb[0].mxu0
    %v6936 = vadd.f32 %v6893, %v6935
    %v6937 = vpop.f32.mrb[0].mxu0
    %v6938 = vadd.f32 %v6895, %v6937
    %v6939 = vpop.f32.mrb[0].mxu0
    %v6940 = vadd.f32 %v6897, %v6939
    %v6941 = vpop.f32.mrb[0].mxu0
    %v6942 = vadd.f32 %v6899, %v6941
    %6943 = vdwg.mxu0
    %v6944 = vmax.f32 %v6530, %v6936
    %v6945 = vmax.f32 %v6532, %v6938
    %v6946 = vmax.f32 %v6534, %v6940
    %v6947 = vmax.f32 %v6536, %v6942
    %v7012 = vunpack.c.l.b16 %v5878
    %v7013 = vunpack.c.h.b16 %v5878
    %v7014 = vunpack.c.l.b16 %v5882
    %v7015 = vunpack.c.h.b16 %v5882
    %v7016 = vunpack.c.l.b16 %v5886
    %v7017 = vunpack.c.h.b16 %v5886
    %v7018 = vunpack.c.l.b16 %v5890
    %v7019 = vunpack.c.h.b16 %v5890
    %v7020 = vunpack.c.l.b16 %v5894
    %v7021 = vunpack.c.h.b16 %v5894
    %v7022 = vunpack.c.l.b16 %v5898
    %v7023 = vunpack.c.h.b16 %v5898
    %v7024 = vunpack.c.l.b16 %v5902
    %v7025 = vunpack.c.h.b16 %v5902
    %v7026 = vunpack.c.l.b16 %v5906
    %v7027 = vunpack.c.h.b16 %v5906
    %v7028 = vunpack.c.l.b16 %v5910
    %v7029 = vunpack.c.h.b16 %v5910
    %v7030 = vunpack.c.l.b16 %v5914
    %v7031 = vunpack.c.h.b16 %v5914
    %v7032 = vunpack.c.l.b16 %v5918
    %v7033 = vunpack.c.h.b16 %v5918
    %v7034 = vunpack.c.l.b16 %v5922
    %v7035 = vunpack.c.h.b16 %v5922
    %v7036 = vunpack.c.l.b16 %v5926
    %v7037 = vunpack.c.h.b16 %v5926
    %v7038 = vunpack.c.l.b16 %v5930
    %v7039 = vunpack.c.h.b16 %v5930
    %v7040 = vunpack.c.l.b16 %v5934
    %v7041 = vunpack.c.h.b16 %v5934
    %v7042 = vunpack.c.l.b16 %v5938
    %v7043 = vunpack.c.h.b16 %v5938
    %v7044 = vunpack.c.l.b16 %v5942
    %v7045 = vunpack.c.h.b16 %v5942
    %v7046 = vunpack.c.l.b16 %v5946
    %v7047 = vunpack.c.h.b16 %v5946
    %v7048 = vunpack.c.l.b16 %v5950
    %v7049 = vunpack.c.h.b16 %v5950
    %v7050 = vunpack.c.l.b16 %v5954
    %v7051 = vunpack.c.h.b16 %v5954
    %v7052 = vunpack.c.l.b16 %v5958
    %v7053 = vunpack.c.h.b16 %v5958
    %v7054 = vunpack.c.l.b16 %v5962
    %v7055 = vunpack.c.h.b16 %v5962
    %v7056 = vunpack.c.l.b16 %v5966
    %v7057 = vunpack.c.h.b16 %v5966
    %v7058 = vunpack.c.l.b16 %v5970
    %v7059 = vunpack.c.h.b16 %v5970
    %v7060 = vunpack.c.l.b16 %v5974
    %v7061 = vunpack.c.h.b16 %v5974
    %v7062 = vunpack.c.l.b16 %v5978
    %v7063 = vunpack.c.h.b16 %v5978
    %v7064 = vunpack.c.l.b16 %v5982
    %v7065 = vunpack.c.h.b16 %v5982
    %v7066 = vunpack.c.l.b16 %v5986
    %v7067 = vunpack.c.h.b16 %v5986
    %v7068 = vunpack.c.l.b16 %v5990
    %v7069 = vunpack.c.h.b16 %v5990
    %v7070 = vunpack.c.l.b16 %v5994
    %v7071 = vunpack.c.h.b16 %v5994
    %v7072 = vunpack.c.l.b16 %v5998
    %v7073 = vunpack.c.h.b16 %v5998
    %v7074 = vunpack.c.l.b16 %v6002
    %v7075 = vunpack.c.h.b16 %v6002
    %v7076 = vunpack.c.l.b16 %v6006
    %v7077 = vunpack.c.h.b16 %v6006
    %v7078 = vunpack.c.l.b16 %v6010
    %v7079 = vunpack.c.h.b16 %v6010
    %v7080 = vunpack.c.l.b16 %v6014
    %v7081 = vunpack.c.h.b16 %v6014
    %v7082 = vunpack.c.l.b16 %v6018
    %v7083 = vunpack.c.h.b16 %v6018
    %v7084 = vunpack.c.l.b16 %v6022
    %v7085 = vunpack.c.h.b16 %v6022
    %v7086 = vunpack.c.l.b16 %v6026
    %v7087 = vunpack.c.h.b16 %v6026
    %v7088 = vunpack.c.l.b16 %v6030
    %v7089 = vunpack.c.h.b16 %v6030
    %v7090 = vunpack.c.l.b16 %v6034
    %v7091 = vunpack.c.h.b16 %v6034
    %v7092 = vunpack.c.l.b16 %v6038
    %v7093 = vunpack.c.h.b16 %v6038
    %v7094 = vunpack.c.l.b16 %v6042
    %v7095 = vunpack.c.h.b16 %v6042
    %v7096 = vunpack.c.l.b16 %v6046
    %v7097 = vunpack.c.h.b16 %v6046
    %v7098 = vunpack.c.l.b16 %v6050
    %v7099 = vunpack.c.h.b16 %v6050
    %v7100 = vunpack.c.l.b16 %v6054
    %v7101 = vunpack.c.h.b16 %v6054
    %v7102 = vunpack.c.l.b16 %v6058
    %v7103 = vunpack.c.h.b16 %v6058
    %v7104 = vunpack.c.l.b16 %v6062
    %v7105 = vunpack.c.h.b16 %v6062
    %v7106 = vunpack.c.l.b16 %v6066
    %v7107 = vunpack.c.h.b16 %v6066
    %v7108 = vunpack.c.l.b16 %v6070
    %v7109 = vunpack.c.h.b16 %v6070
    %v7110 = vunpack.c.l.b16 %v6074
    %v7111 = vunpack.c.h.b16 %v6074
    %v7112 = vunpack.c.l.b16 %v6078
    %v7113 = vunpack.c.h.b16 %v6078
    %v7114 = vunpack.c.l.b16 %v6082
    %v7115 = vunpack.c.h.b16 %v6082
    %v7116 = vunpack.c.l.b16 %v6086
    %v7117 = vunpack.c.h.b16 %v6086
    %v7118 = vunpack.c.l.b16 %v6090
    %v7119 = vunpack.c.h.b16 %v6090
    %v7120 = vunpack.c.l.b16 %v6094
    %v7121 = vunpack.c.h.b16 %v6094
    %v7122 = vunpack.c.l.b16 %v6098
    %v7123 = vunpack.c.h.b16 %v6098
    %v7124 = vunpack.c.l.b16 %v6102
    %v7125 = vunpack.c.h.b16 %v6102
    %v7126 = vunpack.c.l.b16 %v6106
    %v7127 = vunpack.c.h.b16 %v6106
    %v7128 = vunpack.c.l.b16 %v6110
    %v7129 = vunpack.c.h.b16 %v6110
    %v7130 = vunpack.c.l.b16 %v6114
    %v7131 = vunpack.c.h.b16 %v6114
    %v7132 = vunpack.c.l.b16 %v6118
    %v7133 = vunpack.c.h.b16 %v6118
    %v7134 = vunpack.c.l.b16 %v6122
    %v7135 = vunpack.c.h.b16 %v6122
    %v7136 = vunpack.c.l.b16 %v6126
    %v7137 = vunpack.c.h.b16 %v6126
    %v7138 = vunpack.c.l.b16 %v6130
    %v7139 = vunpack.c.h.b16 %v6130
    %v7140 = vpack.c.b16 %v7014, %v7012
    %v7141 = vpack.c.b16 %v7015, %v7013
    %v7142 = vpack.c.b16 %v7018, %v7016
    %v7143 = vpack.c.b16 %v7019, %v7017
    %v7144 = vpack.c.b16 %v7022, %v7020
    %v7145 = vpack.c.b16 %v7023, %v7021
    %v7146 = vpack.c.b16 %v7026, %v7024
    %v7147 = vpack.c.b16 %v7027, %v7025
    %v7148 = vpack.c.b16 %v7030, %v7028
    %v7149 = vpack.c.b16 %v7031, %v7029
    %v7150 = vpack.c.b16 %v7034, %v7032
    %v7151 = vpack.c.b16 %v7035, %v7033
    %v7152 = vpack.c.b16 %v7038, %v7036
    %v7153 = vpack.c.b16 %v7039, %v7037
    %v7154 = vpack.c.b16 %v7042, %v7040
    %v7155 = vpack.c.b16 %v7043, %v7041
    %v7156 = vpack.c.b16 %v7046, %v7044
    %v7157 = vpack.c.b16 %v7047, %v7045
    %v7158 = vpack.c.b16 %v7050, %v7048
    %v7159 = vpack.c.b16 %v7051, %v7049
    %v7160 = vpack.c.b16 %v7054, %v7052
    %v7161 = vpack.c.b16 %v7055, %v7053
    %v7162 = vpack.c.b16 %v7058, %v7056
    %v7163 = vpack.c.b16 %v7059, %v7057
    %v7164 = vpack.c.b16 %v7062, %v7060
    %v7165 = vpack.c.b16 %v7063, %v7061
    %v7166 = vpack.c.b16 %v7066, %v7064
    %v7167 = vpack.c.b16 %v7067, %v7065
    %v7168 = vpack.c.b16 %v7070, %v7068
    %v7169 = vpack.c.b16 %v7071, %v7069
    %v7170 = vpack.c.b16 %v7074, %v7072
    %v7171 = vpack.c.b16 %v7075, %v7073
    %v7172 = vpack.c.b16 %v7078, %v7076
    %v7173 = vpack.c.b16 %v7079, %v7077
    %v7174 = vpack.c.b16 %v7082, %v7080
    %v7175 = vpack.c.b16 %v7083, %v7081
    %v7176 = vpack.c.b16 %v7086, %v7084
    %v7177 = vpack.c.b16 %v7087, %v7085
    %v7178 = vpack.c.b16 %v7090, %v7088
    %v7179 = vpack.c.b16 %v7091, %v7089
    %v7180 = vpack.c.b16 %v7094, %v7092
    %v7181 = vpack.c.b16 %v7095, %v7093
    %v7182 = vpack.c.b16 %v7098, %v7096
    %v7183 = vpack.c.b16 %v7099, %v7097
    %v7184 = vpack.c.b16 %v7102, %v7100
    %v7185 = vpack.c.b16 %v7103, %v7101
    %v7186 = vpack.c.b16 %v7106, %v7104
    %v7187 = vpack.c.b16 %v7107, %v7105
    %v7188 = vpack.c.b16 %v7110, %v7108
    %v7189 = vpack.c.b16 %v7111, %v7109
    %v7190 = vpack.c.b16 %v7114, %v7112
    %v7191 = vpack.c.b16 %v7115, %v7113
    %v7192 = vpack.c.b16 %v7118, %v7116
    %v7193 = vpack.c.b16 %v7119, %v7117
    %v7194 = vpack.c.b16 %v7122, %v7120
    %v7195 = vpack.c.b16 %v7123, %v7121
    %v7196 = vpack.c.b16 %v7126, %v7124
    %v7197 = vpack.c.b16 %v7127, %v7125
    %v7198 = vpack.c.b16 %v7130, %v7128
    %v7199 = vpack.c.b16 %v7131, %v7129
    %v7200 = vpack.c.b16 %v7134, %v7132
    %v7201 = vpack.c.b16 %v7135, %v7133
    %v7202 = vpack.c.b16 %v7138, %v7136
    %v7203 = vpack.c.b16 %v7139, %v7137
    %7268 = vmatprep.subr.bf16.mxu0 %v7141
    %7269 = vmatpush1.bf16.msra.mxu0 %v7140
    %7270 = vmatprep.subr.bf16.mxu0 %v7143
    %7271 = vmatpush1.bf16.msra.mxu0 %v7142
    %7272 = vmatprep.subr.bf16.mxu0 %v7145
    %7273 = vmatpush1.bf16.msra.mxu0 %v7144
    %7274 = vmatprep.subr.bf16.mxu0 %v7147
    %7275 = vmatpush1.bf16.msra.mxu0 %v7146
    %7276 = vmatprep.subr.bf16.mxu0 %v7149
    %7277 = vmatpush1.bf16.msra.mxu0 %v7148
    %7278 = vmatprep.subr.bf16.mxu0 %v7151
    %7279 = vmatpush1.bf16.msra.mxu0 %v7150
    %7280 = vmatprep.subr.bf16.mxu0 %v7153
    %7281 = vmatpush1.bf16.msra.mxu0 %v7152
    %7282 = vmatprep.subr.bf16.mxu0 %v7155
    %7283 = vmatpush1.bf16.msra.mxu0 %v7154
    %7284 = vmatprep.subr.bf16.mxu0 %v7157
    %7285 = vmatpush1.bf16.msra.mxu0 %v7156
    %7286 = vmatprep.subr.bf16.mxu0 %v7159
    %7287 = vmatpush1.bf16.msra.mxu0 %v7158
    %7288 = vmatprep.subr.bf16.mxu0 %v7161
    %7289 = vmatpush1.bf16.msra.mxu0 %v7160
    %7290 = vmatprep.subr.bf16.mxu0 %v7163
    %7291 = vmatpush1.bf16.msra.mxu0 %v7162
    %7292 = vmatprep.subr.bf16.mxu0 %v7165
    %7293 = vmatpush1.bf16.msra.mxu0 %v7164
    %7294 = vmatprep.subr.bf16.mxu0 %v7167
    %7295 = vmatpush1.bf16.msra.mxu0 %v7166
    %7296 = vmatprep.subr.bf16.mxu0 %v7169
    %7297 = vmatpush1.bf16.msra.mxu0 %v7168
    %7298 = vmatprep.subr.bf16.mxu0 %v7171
    %7299 = vmatpush1.bf16.msra.mxu0 %v7170
    %7300 = vmatprep.mubr.bf16.mxu0 %v5873
    %7301 = vmatmul.mubr.bf16.gmra.mrb[0].mxu0 %v5872
    %v7302 = vpop.f32.mrb[0].mxu0
    %v7303 = vadd.f32 0.0, %v7302
    %v7304 = vpop.f32.mrb[0].mxu0
    %v7305 = vadd.f32 0.0, %v7304
    %v7306 = vpop.f32.mrb[0].mxu0
    %v7307 = vadd.f32 0.0, %v7306
    %v7308 = vpop.f32.mrb[0].mxu0
    %v7309 = vadd.f32 0.0, %v7308
    %7310 = vdwg.mxu0
    %7311 = vmatprep.subr.bf16.mxu0 %v7173
    %7312 = vmatpush1.bf16.msra.mxu0 %v7172
    %7313 = vmatprep.subr.bf16.mxu0 %v7175
    %7314 = vmatpush1.bf16.msra.mxu0 %v7174
    %7315 = vmatprep.subr.bf16.mxu0 %v7177
    %7316 = vmatpush1.bf16.msra.mxu0 %v7176
    %7317 = vmatprep.subr.bf16.mxu0 %v7179
    %7318 = vmatpush1.bf16.msra.mxu0 %v7178
    %7319 = vmatprep.subr.bf16.mxu0 %v7181
    %7320 = vmatpush1.bf16.msra.mxu0 %v7180
    %7321 = vmatprep.subr.bf16.mxu0 %v7183
    %7322 = vmatpush1.bf16.msra.mxu0 %v7182
    %7323 = vmatprep.subr.bf16.mxu0 %v7185
    %7324 = vmatpush1.bf16.msra.mxu0 %v7184
    %7325 = vmatprep.subr.bf16.mxu0 %v7187
    %7326 = vmatpush1.bf16.msra.mxu0 %v7186
    %7327 = vmatprep.subr.bf16.mxu0 %v7189
    %7328 = vmatpush1.bf16.msra.mxu0 %v7188
    %7329 = vmatprep.subr.bf16.mxu0 %v7191
    %7330 = vmatpush1.bf16.msra.mxu0 %v7190
    %7331 = vmatprep.subr.bf16.mxu0 %v7193
    %7332 = vmatpush1.bf16.msra.mxu0 %v7192
    %7333 = vmatprep.subr.bf16.mxu0 %v7195
    %7334 = vmatpush1.bf16.msra.mxu0 %v7194
    %7335 = vmatprep.subr.bf16.mxu0 %v7197
    %7336 = vmatpush1.bf16.msra.mxu0 %v7196
    %7337 = vmatprep.subr.bf16.mxu0 %v7199
    %7338 = vmatpush1.bf16.msra.mxu0 %v7198
    %7339 = vmatprep.subr.bf16.mxu0 %v7201
    %7340 = vmatpush1.bf16.msra.mxu0 %v7200
    %7341 = vmatprep.subr.bf16.mxu0 %v7203
    %7342 = vmatpush1.bf16.msra.mxu0 %v7202
    %7343 = vmatprep.mubr.bf16.mxu0 %v5875
    %7344 = vmatmul.mubr.bf16.gmra.mrb[0].mxu0 %v5874
    %v7345 = vpop.f32.mrb[0].mxu0
    %v7346 = vadd.f32 %v7303, %v7345
    %v7347 = vpop.f32.mrb[0].mxu0
    %v7348 = vadd.f32 %v7305, %v7347
    %v7349 = vpop.f32.mrb[0].mxu0
    %v7350 = vadd.f32 %v7307, %v7349
    %v7351 = vpop.f32.mrb[0].mxu0
    %v7352 = vadd.f32 %v7309, %v7351
    %7353 = vdwg.mxu0
    %v7354 = vmax.f32 %v6944, %v7346
    %v7355 = vmax.f32 %v6945, %v7348
    %v7356 = vmax.f32 %v6946, %v7350
    %v7357 = vmax.f32 %v6947, %v7352
    %v7422 = vunpack.c.l.b16 %v5879
    %v7423 = vunpack.c.h.b16 %v5879
    %v7424 = vunpack.c.l.b16 %v5883
    %v7425 = vunpack.c.h.b16 %v5883
    %v7426 = vunpack.c.l.b16 %v5887
    %v7427 = vunpack.c.h.b16 %v5887
    %v7428 = vunpack.c.l.b16 %v5891
    %v7429 = vunpack.c.h.b16 %v5891
    %v7430 = vunpack.c.l.b16 %v5895
    %v7431 = vunpack.c.h.b16 %v5895
    %v7432 = vunpack.c.l.b16 %v5899
    %v7433 = vunpack.c.h.b16 %v5899
    %v7434 = vunpack.c.l.b16 %v5903
    %v7435 = vunpack.c.h.b16 %v5903
    %v7436 = vunpack.c.l.b16 %v5907
    %v7437 = vunpack.c.h.b16 %v5907
    %v7438 = vunpack.c.l.b16 %v5911
    %v7439 = vunpack.c.h.b16 %v5911
    %v7440 = vunpack.c.l.b16 %v5915
    %v7441 = vunpack.c.h.b16 %v5915
    %v7442 = vunpack.c.l.b16 %v5919
    %v7443 = vunpack.c.h.b16 %v5919
    %v7444 = vunpack.c.l.b16 %v5923
    %v7445 = vunpack.c.h.b16 %v5923
    %v7446 = vunpack.c.l.b16 %v5927
    %v7447 = vunpack.c.h.b16 %v5927
    %v7448 = vunpack.c.l.b16 %v5931
    %v7449 = vunpack.c.h.b16 %v5931
    %v7450 = vunpack.c.l.b16 %v5935
    %v7451 = vunpack.c.h.b16 %v5935
    %v7452 = vunpack.c.l.b16 %v5939
    %v7453 = vunpack.c.h.b16 %v5939
    %v7454 = vunpack.c.l.b16 %v5943
    %v7455 = vunpack.c.h.b16 %v5943
    %v7456 = vunpack.c.l.b16 %v5947
    %v7457 = vunpack.c.h.b16 %v5947
    %v7458 = vunpack.c.l.b16 %v5951
    %v7459 = vunpack.c.h.b16 %v5951
    %v7460 = vunpack.c.l.b16 %v5955
    %v7461 = vunpack.c.h.b16 %v5955
    %v7462 = vunpack.c.l.b16 %v5959
    %v7463 = vunpack.c.h.b16 %v5959
    %v7464 = vunpack.c.l.b16 %v5963
    %v7465 = vunpack.c.h.b16 %v5963
    %v7466 = vunpack.c.l.b16 %v5967
    %v7467 = vunpack.c.h.b16 %v5967
    %v7468 = vunpack.c.l.b16 %v5971
    %v7469 = vunpack.c.h.b16 %v5971
    %v7470 = vunpack.c.l.b16 %v5975
    %v7471 = vunpack.c.h.b16 %v5975
    %v7472 = vunpack.c.l.b16 %v5979
    %v7473 = vunpack.c.h.b16 %v5979
    %v7474 = vunpack.c.l.b16 %v5983
    %v7475 = vunpack.c.h.b16 %v5983
    %v7476 = vunpack.c.l.b16 %v5987
    %v7477 = vunpack.c.h.b16 %v5987
    %v7478 = vunpack.c.l.b16 %v5991
    %v7479 = vunpack.c.h.b16 %v5991
    %v7480 = vunpack.c.l.b16 %v5995
    %v7481 = vunpack.c.h.b16 %v5995
    %v7482 = vunpack.c.l.b16 %v5999
    %v7483 = vunpack.c.h.b16 %v5999
    %v7484 = vunpack.c.l.b16 %v6003
    %v7485 = vunpack.c.h.b16 %v6003
    %v7486 = vunpack.c.l.b16 %v6007
    %v7487 = vunpack.c.h.b16 %v6007
    %v7488 = vunpack.c.l.b16 %v6011
    %v7489 = vunpack.c.h.b16 %v6011
    %v7490 = vunpack.c.l.b16 %v6015
    %v7491 = vunpack.c.h.b16 %v6015
    %v7492 = vunpack.c.l.b16 %v6019
    %v7493 = vunpack.c.h.b16 %v6019
    %v7494 = vunpack.c.l.b16 %v6023
    %v7495 = vunpack.c.h.b16 %v6023
    %v7496 = vunpack.c.l.b16 %v6027
    %v7497 = vunpack.c.h.b16 %v6027
    %v7498 = vunpack.c.l.b16 %v6031
    %v7499 = vunpack.c.h.b16 %v6031
    %v7500 = vunpack.c.l.b16 %v6035
    %v7501 = vunpack.c.h.b16 %v6035
    %v7502 = vunpack.c.l.b16 %v6039
    %v7503 = vunpack.c.h.b16 %v6039
    %v7504 = vunpack.c.l.b16 %v6043
    %v7505 = vunpack.c.h.b16 %v6043
    %v7506 = vunpack.c.l.b16 %v6047
    %v7507 = vunpack.c.h.b16 %v6047
    %v7508 = vunpack.c.l.b16 %v6051
    %v7509 = vunpack.c.h.b16 %v6051
    %v7510 = vunpack.c.l.b16 %v6055
    %v7511 = vunpack.c.h.b16 %v6055
    %v7512 = vunpack.c.l.b16 %v6059
    %v7513 = vunpack.c.h.b16 %v6059
    %v7514 = vunpack.c.l.b16 %v6063
    %v7515 = vunpack.c.h.b16 %v6063
    %v7516 = vunpack.c.l.b16 %v6067
    %v7517 = vunpack.c.h.b16 %v6067
    %v7518 = vunpack.c.l.b16 %v6071
    %v7519 = vunpack.c.h.b16 %v6071
    %v7520 = vunpack.c.l.b16 %v6075
    %v7521 = vunpack.c.h.b16 %v6075
    %v7522 = vunpack.c.l.b16 %v6079
    %v7523 = vunpack.c.h.b16 %v6079
    %v7524 = vunpack.c.l.b16 %v6083
    %v7525 = vunpack.c.h.b16 %v6083
    %v7526 = vunpack.c.l.b16 %v6087
    %v7527 = vunpack.c.h.b16 %v6087
    %v7528 = vunpack.c.l.b16 %v6091
    %v7529 = vunpack.c.h.b16 %v6091
    %v7530 = vunpack.c.l.b16 %v6095
    %v7531 = vunpack.c.h.b16 %v6095
    %v7532 = vunpack.c.l.b16 %v6099
    %v7533 = vunpack.c.h.b16 %v6099
    %v7534 = vunpack.c.l.b16 %v6103
    %v7535 = vunpack.c.h.b16 %v6103
    %v7536 = vunpack.c.l.b16 %v6107
    %v7537 = vunpack.c.h.b16 %v6107
    %v7538 = vunpack.c.l.b16 %v6111
    %v7539 = vunpack.c.h.b16 %v6111
    %v7540 = vunpack.c.l.b16 %v6115
    %v7541 = vunpack.c.h.b16 %v6115
    %v7542 = vunpack.c.l.b16 %v6119
    %v7543 = vunpack.c.h.b16 %v6119
    %v7544 = vunpack.c.l.b16 %v6123
    %v7545 = vunpack.c.h.b16 %v6123
    %v7546 = vunpack.c.l.b16 %v6127
    %v7547 = vunpack.c.h.b16 %v6127
    %v7548 = vunpack.c.l.b16 %v6131
    %v7549 = vunpack.c.h.b16 %v6131
    %v7550 = vpack.c.b16 %v7424, %v7422
    %v7551 = vpack.c.b16 %v7425, %v7423
    %v7552 = vpack.c.b16 %v7428, %v7426
    %v7553 = vpack.c.b16 %v7429, %v7427
    %v7554 = vpack.c.b16 %v7432, %v7430
    %v7555 = vpack.c.b16 %v7433, %v7431
    %v7556 = vpack.c.b16 %v7436, %v7434
    %v7557 = vpack.c.b16 %v7437, %v7435
    %v7558 = vpack.c.b16 %v7440, %v7438
    %v7559 = vpack.c.b16 %v7441, %v7439
    %v7560 = vpack.c.b16 %v7444, %v7442
    %v7561 = vpack.c.b16 %v7445, %v7443
    %v7562 = vpack.c.b16 %v7448, %v7446
    %v7563 = vpack.c.b16 %v7449, %v7447
    %v7564 = vpack.c.b16 %v7452, %v7450
    %v7565 = vpack.c.b16 %v7453, %v7451
    %v7566 = vpack.c.b16 %v7456, %v7454
    %v7567 = vpack.c.b16 %v7457, %v7455
    %v7568 = vpack.c.b16 %v7460, %v7458
    %v7569 = vpack.c.b16 %v7461, %v7459
    %v7570 = vpack.c.b16 %v7464, %v7462
    %v7571 = vpack.c.b16 %v7465, %v7463
    %v7572 = vpack.c.b16 %v7468, %v7466
    %v7573 = vpack.c.b16 %v7469, %v7467
    %v7574 = vpack.c.b16 %v7472, %v7470
    %v7575 = vpack.c.b16 %v7473, %v7471
    %v7576 = vpack.c.b16 %v7476, %v7474
    %v7577 = vpack.c.b16 %v7477, %v7475
    %v7578 = vpack.c.b16 %v7480, %v7478
    %v7579 = vpack.c.b16 %v7481, %v7479
    %v7580 = vpack.c.b16 %v7484, %v7482
    %v7581 = vpack.c.b16 %v7485, %v7483
    %v7582 = vpack.c.b16 %v7488, %v7486
    %v7583 = vpack.c.b16 %v7489, %v7487
    %v7584 = vpack.c.b16 %v7492, %v7490
    %v7585 = vpack.c.b16 %v7493, %v7491
    %v7586 = vpack.c.b16 %v7496, %v7494
    %v7587 = vpack.c.b16 %v7497, %v7495
    %v7588 = vpack.c.b16 %v7500, %v7498
    %v7589 = vpack.c.b16 %v7501, %v7499
    %v7590 = vpack.c.b16 %v7504, %v7502
    %v7591 = vpack.c.b16 %v7505, %v7503
    %v7592 = vpack.c.b16 %v7508, %v7506
    %v7593 = vpack.c.b16 %v7509, %v7507
    %v7594 = vpack.c.b16 %v7512, %v7510
    %v7595 = vpack.c.b16 %v7513, %v7511
    %v7596 = vpack.c.b16 %v7516, %v7514
    %v7597 = vpack.c.b16 %v7517, %v7515
    %v7598 = vpack.c.b16 %v7520, %v7518
    %v7599 = vpack.c.b16 %v7521, %v7519
    %v7600 = vpack.c.b16 %v7524, %v7522
    %v7601 = vpack.c.b16 %v7525, %v7523
    %v7602 = vpack.c.b16 %v7528, %v7526
    %v7603 = vpack.c.b16 %v7529, %v7527
    %v7604 = vpack.c.b16 %v7532, %v7530
    %v7605 = vpack.c.b16 %v7533, %v7531
    %v7606 = vpack.c.b16 %v7536, %v7534
    %v7607 = vpack.c.b16 %v7537, %v7535
    %v7608 = vpack.c.b16 %v7540, %v7538
    %v7609 = vpack.c.b16 %v7541, %v7539
    %v7610 = vpack.c.b16 %v7544, %v7542
    %v7611 = vpack.c.b16 %v7545, %v7543
    %v7612 = vpack.c.b16 %v7548, %v7546
    %v7613 = vpack.c.b16 %v7549, %v7547
    %7678 = vmatprep.subr.bf16.mxu0 %v7551
    %7679 = vmatpush1.bf16.msra.mxu0 %v7550
    %7680 = vmatprep.subr.bf16.mxu0 %v7553
    %7681 = vmatpush1.bf16.msra.mxu0 %v7552
    %7682 = vmatprep.subr.bf16.mxu0 %v7555
    %7683 = vmatpush1.bf16.msra.mxu0 %v7554
    %7684 = vmatprep.subr.bf16.mxu0 %v7557
    %7685 = vmatpush1.bf16.msra.mxu0 %v7556
    %7686 = vmatprep.subr.bf16.mxu0 %v7559
    %7687 = vmatpush1.bf16.msra.mxu0 %v7558
    %7688 = vmatprep.subr.bf16.mxu0 %v7561
    %7689 = vmatpush1.bf16.msra.mxu0 %v7560
    %7690 = vmatprep.subr.bf16.mxu0 %v7563
    %7691 = vmatpush1.bf16.msra.mxu0 %v7562
    %7692 = vmatprep.subr.bf16.mxu0 %v7565
    %7693 = vmatpush1.bf16.msra.mxu0 %v7564
    %7694 = vmatprep.subr.bf16.mxu0 %v7567
    %7695 = vmatpush1.bf16.msra.mxu0 %v7566
    %7696 = vmatprep.subr.bf16.mxu0 %v7569
    %7697 = vmatpush1.bf16.msra.mxu0 %v7568
    %7698 = vmatprep.subr.bf16.mxu0 %v7571
    %7699 = vmatpush1.bf16.msra.mxu0 %v7570
    %7700 = vmatprep.subr.bf16.mxu0 %v7573
    %7701 = vmatpush1.bf16.msra.mxu0 %v7572
    %7702 = vmatprep.subr.bf16.mxu0 %v7575
    %7703 = vmatpush1.bf16.msra.mxu0 %v7574
    %7704 = vmatprep.subr.bf16.mxu0 %v7577
    %7705 = vmatpush1.bf16.msra.mxu0 %v7576
    %7706 = vmatprep.subr.bf16.mxu0 %v7579
    %7707 = vmatpush1.bf16.msra.mxu0 %v7578
    %7708 = vmatprep.subr.bf16.mxu0 %v7581
    %7709 = vmatpush1.bf16.msra.mxu0 %v7580
    %7710 = vmatprep.mubr.bf16.mxu0 %v5873
    %7711 = vmatmul.mubr.bf16.gmra.mrb[0].mxu0 %v5872
    %v7712 = vpop.f32.mrb[0].mxu0
    %v7713 = vadd.f32 0.0, %v7712
    %v7714 = vpop.f32.mrb[0].mxu0
    %v7715 = vadd.f32 0.0, %v7714
    %v7716 = vpop.f32.mrb[0].mxu0
    %v7717 = vadd.f32 0.0, %v7716
    %v7718 = vpop.f32.mrb[0].mxu0
    %v7719 = vadd.f32 0.0, %v7718
    %7720 = vdwg.mxu0
    %7721 = vmatprep.subr.bf16.mxu0 %v7583
    %7722 = vmatpush1.bf16.msra.mxu0 %v7582
    %7723 = vmatprep.subr.bf16.mxu0 %v7585
    %7724 = vmatpush1.bf16.msra.mxu0 %v7584
    %7725 = vmatprep.subr.bf16.mxu0 %v7587
    %7726 = vmatpush1.bf16.msra.mxu0 %v7586
    %7727 = vmatprep.subr.bf16.mxu0 %v7589
    %7728 = vmatpush1.bf16.msra.mxu0 %v7588
    %7729 = vmatprep.subr.bf16.mxu0 %v7591
    %7730 = vmatpush1.bf16.msra.mxu0 %v7590
    %7731 = vmatprep.subr.bf16.mxu0 %v7593
    %7732 = vmatpush1.bf16.msra.mxu0 %v7592
    %7733 = vmatprep.subr.bf16.mxu0 %v7595
    %7734 = vmatpush1.bf16.msra.mxu0 %v7594
    %7735 = vmatprep.subr.bf16.mxu0 %v7597
    %7736 = vmatpush1.bf16.msra.mxu0 %v7596
    %7737 = vmatprep.subr.bf16.mxu0 %v7599
    %7738 = vmatpush1.bf16.msra.mxu0 %v7598
    %7739 = vmatprep.subr.bf16.mxu0 %v7601
    %7740 = vmatpush1.bf16.msra.mxu0 %v7600
    %7741 = vmatprep.subr.bf16.mxu0 %v7603
    %7742 = vmatpush1.bf16.msra.mxu0 %v7602
    %7743 = vmatprep.subr.bf16.mxu0 %v7605
    %7744 = vmatpush1.bf16.msra.mxu0 %v7604
    %7745 = vmatprep.subr.bf16.mxu0 %v7607
    %7746 = vmatpush1.bf16.msra.mxu0 %v7606
    %7747 = vmatprep.subr.bf16.mxu0 %v7609
    %7748 = vmatpush1.bf16.msra.mxu0 %v7608
    %7749 = vmatprep.subr.bf16.mxu0 %v7611
    %7750 = vmatpush1.bf16.msra.mxu0 %v7610
    %7751 = vmatprep.subr.bf16.mxu0 %v7613
    %7752 = vmatpush1.bf16.msra.mxu0 %v7612
    %7753 = vmatprep.mubr.bf16.mxu0 %v5875
    %7754 = vmatmul.mubr.bf16.gmra.mrb[0].mxu0 %v5874
    %v7755 = vpop.f32.mrb[0].mxu0
    %v7756 = vadd.f32 %v7713, %v7755
    %v7757 = vpop.f32.mrb[0].mxu0
    %v7758 = vadd.f32 %v7715, %v7757
    %v7759 = vpop.f32.mrb[0].mxu0
    %v7760 = vadd.f32 %v7717, %v7759
    %v7761 = vpop.f32.mrb[0].mxu0
    %v7762 = vadd.f32 %v7719, %v7761
    %7763 = vdwg.mxu0
    %v7764 = vmax.f32 %v7354, %v7756
    %v7765 = vmax.f32 %v7355, %v7758
    %v7766 = vmax.f32 %v7356, %v7760
    %v7767 = vmax.f32 %v7357, %v7762
    %v7768 = vld [vmem:[#allocation7] sm:$0x3]
    %v7770 = vlaneseq
    %v7771 = vshrl.u32 %v7770, 7
    %v7772 = vsub.s32 0, %v7771
    %v7773 = vrot.slane %v7768, %v7772
    %v7774 = vlaneseq
    %v7775 = vshrl.u32 %v7774, 7
    %v7776 = vsub.s32 1, %v7775
    %v7777 = vrot.slane %v7768, %v7776
    %v7780 = vadd.f32 %v7764, %v7773
    %v7781 = vadd.f32 %v7765, %v7777
    %v7782 = vadd.f32 %v7766, %v7773
    %v7783 = vadd.f32 %v7767, %v7777
    %v7784 = vmax.f32 %v7780, 0.0
    %v7785 = vmax.f32 %v7781, 0.0
    %v7786 = vmax.f32 %v7782, 0.0
    %v7787 = vmax.f32 %v7783, 0.0
    %v7788 = vpack.c.bf16 %v7786, %v7784
    %v7789 = vpack.c.bf16 %v7787, %v7785
    %v7790 = vld [vmem:[#allocation9] sm:$0xf]
    %v7791 = vld [vmem:[#allocation9 + $0x4] sm:$0xf]
    %v7792 = vld [vmem:[#allocation9 + $0x8] sm:$0xf]
    %v7793 = vld [vmem:[#allocation9 + $0xc] sm:$0xf]
    %v7794 = vld [vmem:[#allocation9 + $0x10] sm:$0xf]
    %v7795 = vld [vmem:[#allocation9 + $0x14] sm:$0xf]
    %v7796 = vld [vmem:[#allocation9 + $0x18] sm:$0xf]
    %v7797 = vld [vmem:[#allocation9 + $0x1c] sm:$0xf]
    %v7798 = vld [vmem:[#allocation9 + $0x20] sm:$0xf]
    %v7799 = vld [vmem:[#allocation9 + $0x24] sm:$0xf]
    %v7800 = vld [vmem:[#allocation9 + $0x28] sm:$0xf]
    %v7801 = vld [vmem:[#allocation9 + $0x2c] sm:$0xf]
    %v7802 = vld [vmem:[#allocation9 + $0x30] sm:$0xf]
    %v7803 = vld [vmem:[#allocation9 + $0x34] sm:$0xf]
    %v7804 = vld [vmem:[#allocation9 + $0x38] sm:$0xf]
    %v7805 = vld [vmem:[#allocation9 + $0x3c] sm:$0xf]
    %v7806 = vld [vmem:[#allocation9 + $0x40] sm:$0xf]
    %v7807 = vld [vmem:[#allocation9 + $0x44] sm:$0xf]
    %v7808 = vld [vmem:[#allocation9 + $0x48] sm:$0xf]
    %v7809 = vld [vmem:[#allocation9 + $0x4c] sm:$0xf]
    %v7810 = vld [vmem:[#allocation9 + $0x50] sm:$0xf]
    %v7811 = vld [vmem:[#allocation9 + $0x54] sm:$0xf]
    %v7812 = vld [vmem:[#allocation9 + $0x58] sm:$0xf]
    %v7813 = vld [vmem:[#allocation9 + $0x5c] sm:$0xf]
    %v7814 = vld [vmem:[#allocation9 + $0x60] sm:$0xf]
    %v7815 = vld [vmem:[#allocation9 + $0x64] sm:$0xf]
    %v7816 = vld [vmem:[#allocation9 + $0x68] sm:$0xf]
    %v7817 = vld [vmem:[#allocation9 + $0x6c] sm:$0xf]
    %v7818 = vld [vmem:[#allocation9 + $0x70] sm:$0xf]
    %v7819 = vld [vmem:[#allocation9 + $0x74] sm:$0xf]
    %v7820 = vld [vmem:[#allocation9 + $0x78] sm:$0xf]
    %v7821 = vld [vmem:[#allocation9 + $0x7c] sm:$0xf]
    %v7854 = vunpack.c.l.b16 %v7790
    %v7855 = vunpack.c.l.b16 %v7791
    %v7856 = vunpack.c.l.b16 %v7792
    %v7857 = vunpack.c.l.b16 %v7793
    %v7858 = vunpack.c.l.b16 %v7794
    %v7859 = vunpack.c.l.b16 %v7795
    %v7860 = vunpack.c.l.b16 %v7796
    %v7861 = vunpack.c.l.b16 %v7797
    %v7862 = vunpack.c.l.b16 %v7798
    %v7863 = vunpack.c.l.b16 %v7799
    %v7864 = vunpack.c.l.b16 %v7800
    %v7865 = vunpack.c.l.b16 %v7801
    %v7866 = vunpack.c.l.b16 %v7802
    %v7867 = vunpack.c.l.b16 %v7803
    %v7868 = vunpack.c.l.b16 %v7804
    %v7869 = vunpack.c.l.b16 %v7805
    %v7870 = vunpack.c.l.b16 %v7806
    %v7871 = vunpack.c.l.b16 %v7807
    %v7872 = vunpack.c.l.b16 %v7808
    %v7873 = vunpack.c.l.b16 %v7809
    %v7874 = vunpack.c.l.b16 %v7810
    %v7875 = vunpack.c.l.b16 %v7811
    %v7876 = vunpack.c.l.b16 %v7812
    %v7877 = vunpack.c.l.b16 %v7813
    %v7878 = vunpack.c.l.b16 %v7814
    %v7879 = vunpack.c.l.b16 %v7815
    %v7880 = vunpack.c.l.b16 %v7816
    %v7881 = vunpack.c.l.b16 %v7817
    %v7882 = vunpack.c.l.b16 %v7818
    %v7883 = vunpack.c.l.b16 %v7819
    %v7884 = vunpack.c.l.b16 %v7820
    %v7885 = vunpack.c.l.b16 %v7821
    %v7886 = vpack.c.b16 %v7855, %v7854
    %v7887 = vpack.c.b16 %v7857, %v7856
    %v7888 = vpack.c.b16 %v7859, %v7858
    %v7889 = vpack.c.b16 %v7861, %v7860
    %v7890 = vpack.c.b16 %v7863, %v7862
    %v7891 = vpack.c.b16 %v7865, %v7864
    %v7892 = vpack.c.b16 %v7867, %v7866
    %v7893 = vpack.c.b16 %v7869, %v7868
    %v7894 = vpack.c.b16 %v7871, %v7870
    %v7895 = vpack.c.b16 %v7873, %v7872
    %v7896 = vpack.c.b16 %v7875, %v7874
    %v7897 = vpack.c.b16 %v7877, %v7876
    %v7898 = vpack.c.b16 %v7879, %v7878
    %v7899 = vpack.c.b16 %v7881, %v7880
    %v7900 = vpack.c.b16 %v7883, %v7882
    %v7901 = vpack.c.b16 %v7885, %v7884
    %7918 = vmatprep.subr.bf16.mxu0 0
    %7919 = vmatpush1.bf16.msra.mxu0 %v7886
    %7920 = vmatprep.subr.bf16.mxu0 0
    %7921 = vmatpush1.bf16.msra.mxu0 %v7887
    %7922 = vmatprep.subr.bf16.mxu0 0
    %7923 = vmatpush1.bf16.msra.mxu0 %v7888
    %7924 = vmatprep.subr.bf16.mxu0 0
    %7925 = vmatpush1.bf16.msra.mxu0 %v7889
    %7926 = vmatprep.subr.bf16.mxu0 0
    %7927 = vmatpush1.bf16.msra.mxu0 %v7890
    %7928 = vmatprep.subr.bf16.mxu0 0
    %7929 = vmatpush1.bf16.msra.mxu0 %v7891
    %7930 = vmatprep.subr.bf16.mxu0 0
    %7931 = vmatpush1.bf16.msra.mxu0 %v7892
    %7932 = vmatprep.subr.bf16.mxu0 0
    %7933 = vmatpush1.bf16.msra.mxu0 %v7893
    %7934 = vmatprep.subr.bf16.mxu0 0
    %7935 = vmatpush1.bf16.msra.mxu0 %v7894
    %7936 = vmatprep.subr.bf16.mxu0 0
    %7937 = vmatpush1.bf16.msra.mxu0 %v7895
    %7938 = vmatprep.subr.bf16.mxu0 0
    %7939 = vmatpush1.bf16.msra.mxu0 %v7896
    %7940 = vmatprep.subr.bf16.mxu0 0
    %7941 = vmatpush1.bf16.msra.mxu0 %v7897
    %7942 = vmatprep.subr.bf16.mxu0 0
    %7943 = vmatpush1.bf16.msra.mxu0 %v7898
    %7944 = vmatprep.subr.bf16.mxu0 0
    %7945 = vmatpush1.bf16.msra.mxu0 %v7899
    %7946 = vmatprep.subr.bf16.mxu0 0
    %7947 = vmatpush1.bf16.msra.mxu0 %v7900
    %7948 = vmatprep.subr.bf16.mxu0 0
    %7949 = vmatpush1.bf16.msra.mxu0 %v7901
    %7950 = vmatprep.mubr.bf16.mxu0 %v7789
    %7951 = vmatmul.mubr.bf16.gmra.mrb[0].mxu0 %v7788
    %v7952 = vpop.f32.mrb[0].mxu0
    %v7953 = vadd.f32 0.0, %v7952
    %v7954 = vpop.f32.mrb[0].mxu0
    %v7955 = vpop.f32.mrb[0].mxu0
    %v7956 = vadd.f32 0.0, %v7955
    %v7957 = vpop.f32.mrb[0].mxu0
    %7958 = vdwg.mxu0
    %7959 = vrot.lane.b32.xlu0 %v7953, 32
    %v7960 = vpop.permute.xlu0 %7959
    %7961 = vrot.lane.b32.xlu0 %v7956, 32
    %v7962 = vpop.permute.xlu0 %7961
    %v7963 = vmax.f32 %v7953, %v7960
    %v7964 = vmax.f32 %v7956, %v7962
    %7965 = vrot.lane.b32.xlu0 %v7953, 64
    %v7966 = vpop.permute.xlu0 %7965
    %7967 = vrot.lane.b32.xlu0 %v7956, 64
    %v7968 = vpop.permute.xlu0 %7967
    %7969 = vrot.lane.b32.xlu0 %v7953, 96
    %v7970 = vpop.permute.xlu0 %7969
    %7971 = vrot.lane.b32.xlu0 %v7956, 96
    %v7972 = vpop.permute.xlu0 %7971
    %v7973 = vmax.f32 %v7966, %v7970
    %v7974 = vmax.f32 %v7968, %v7972
    %v7975 = vmax.f32 %v7963, %v7973
    %v7976 = vmax.f32 %v7964, %v7974
    %v7977 = vld [vmem:[#allocation10] sm:$0x1]
    %v7979 = vlaneseq
    %v7980 = vshrl.u32 %v7979, 7
    %v7981 = vsub.s32 0, %v7980
    %v7982 = vrot.slane %v7977, %v7981
    %v7984 = vadd.f32 %v7975, %v7982
    %v7985 = vadd.f32 %v7976, %v7982
    %v7986 = vmax.f32 %v7984, 0.0
    %v7987 = vmax.f32 %v7985, 0.0
    %v7988 = vld [vmem:[#allocation12] sm:$0xff]
    %v7989 = vld [vmem:[#allocation12 + $0x8] sm:$0xff]
    %v7990 = vld [vmem:[#allocation12 + $0x10] sm:$0xff]
    %v7991 = vld [vmem:[#allocation12 + $0x18] sm:$0xff]
    %v7992 = vld [vmem:[#allocation12 + $0x20] sm:$0xff]
    %v7993 = vld [vmem:[#allocation12 + $0x28] sm:$0xff]
    %v7994 = vld [vmem:[#allocation12 + $0x30] sm:$0xff]
    %v7995 = vld [vmem:[#allocation12 + $0x38] sm:$0xff]
    %v7996 = vld [vmem:[#allocation12 + $0x40] sm:$0xff]
    %v7997 = vld [vmem:[#allocation12 + $0x48] sm:$0xff]
    %v7998 = vld [vmem:[#allocation12 + $0x50] sm:$0xff]
    %v7999 = vld [vmem:[#allocation12 + $0x58] sm:$0xff]
    %v8000 = vld [vmem:[#allocation12 + $0x60] sm:$0xff]
    %v8001 = vld [vmem:[#allocation12 + $0x68] sm:$0xff]
    %v8002 = vld [vmem:[#allocation12 + $0x70] sm:$0xff]
    %v8003 = vld [vmem:[#allocation12 + $0x78] sm:$0xff]
    %v8004 = vld [vmem:[#allocation13] sm:$0x1]
    %v8006 = vlaneseq
    %v8007 = vshrl.u32 %v8006, 7
    %v8008 = vsub.s32 0, %v8007
    %v8009 = vrot.slane %v8004, %v8008
    %8011 = vmatprep.subr.mxu0 0.0
    %8012 = vmatpush1.msra.mxu0 %v7988
    %8013 = vmatprep.subr.mxu0 0.0
    %8014 = vmatpush1.msra.mxu0 %v7989
    %8015 = vmatprep.subr.mxu0 0.0
    %8016 = vmatpush1.msra.mxu0 %v7990
    %8017 = vmatprep.subr.mxu0 0.0
    %8018 = vmatpush1.msra.mxu0 %v7991
    %8019 = vmatprep.subr.mxu0 0.0
    %8020 = vmatpush1.msra.mxu0 %v7992
    %8021 = vmatprep.subr.mxu0 0.0
    %8022 = vmatpush1.msra.mxu0 %v7993
    %8023 = vmatprep.subr.mxu0 0.0
    %8024 = vmatpush1.msra.mxu0 %v7994
    %8025 = vmatprep.subr.mxu0 0.0
    %8026 = vmatpush1.msra.mxu0 %v7995
    %8027 = vmatprep.subr.mxu0 0.0
    %8028 = vmatpush1.msra.mxu0 %v7996
    %8029 = vmatprep.subr.mxu0 0.0
    %8030 = vmatpush1.msra.mxu0 %v7997
    %8031 = vmatprep.subr.mxu0 0.0
    %8032 = vmatpush1.msra.mxu0 %v7998
    %8033 = vmatprep.subr.mxu0 0.0
    %8034 = vmatpush1.msra.mxu0 %v7999
    %8035 = vmatprep.subr.mxu0 0.0
    %8036 = vmatpush1.msra.mxu0 %v8000
    %8037 = vmatprep.subr.mxu0 0.0
    %8038 = vmatpush1.msra.mxu0 %v8001
    %8039 = vmatprep.subr.mxu0 0.0
    %8040 = vmatpush1.msra.mxu0 %v8002
    %8041 = vmatprep.subr.mxu0 0.0
    %8042 = vmatpush1.msra.mxu0 %v8003
    %8043 = vmatprep.subr.mxu0 0.0
    %8044 = vmatpush1.msra.mxu0 0.0
    %8045 = vmatprep.subr.mxu0 0.0
    %8046 = vmatpush1.msra.mxu0 0.0
    %8047 = vmatprep.subr.mxu0 0.0
    %8048 = vmatpush1.msra.mxu0 0.0
    %8049 = vmatprep.subr.mxu0 0.0
    %8050 = vmatpush1.msra.mxu0 0.0
    %8051 = vmatprep.subr.mxu0 0.0
    %8052 = vmatpush1.msra.mxu0 0.0
    %8053 = vmatprep.subr.mxu0 0.0
    %8054 = vmatpush1.msra.mxu0 0.0
    %8055 = vmatprep.subr.mxu0 0.0
    %8056 = vmatpush1.msra.mxu0 0.0
    %8057 = vmatprep.subr.mxu0 0.0
    %8058 = vmatpush1.msra.mxu0 0.0
    %8059 = vmatprep.subr.mxu0 0.0
    %8060 = vmatpush1.msra.mxu0 0.0
    %8061 = vmatprep.subr.mxu0 0.0
    %8062 = vmatpush1.msra.mxu0 0.0
    %8063 = vmatprep.subr.mxu0 0.0
    %8064 = vmatpush1.msra.mxu0 0.0
    %8065 = vmatprep.subr.mxu0 0.0
    %8066 = vmatpush1.msra.mxu0 0.0
    %8067 = vmatprep.subr.mxu0 0.0
    %8068 = vmatpush1.msra.mxu0 0.0
    %8069 = vmatprep.subr.mxu0 0.0
    %8070 = vmatpush1.msra.mxu0 0.0
    %8071 = vmatprep.subr.mxu0 0.0
    %8072 = vmatpush1.msra.mxu0 0.0
    %8073 = vmatprep.subr.mxu0 0.0
    %8074 = vmatpush1.msra.mxu0 0.0
    %8075 = vmatprep.mubr.f32.mxu0 0.0
    %8076 = vmatmul.mubr.f32.gmra.mrb[0].mxu0 %v7986
    %v8077 = vpop.f32.mrb[0].mxu0
    %v8078 = vadd.f32 %v8009, %v8077
    %v8079 = vpop.f32.mrb[0].mxu0
    %8080 = vmatprep.mubr.f32.mxu0 0.0
    %8081 = vmatmul.mubr.f32.gmra.mrb[0].mxu0 %v7987
    %v8082 = vpop.f32.mrb[0].mxu0
    %v8083 = vadd.f32 %v8009, %v8082
    %v8084 = vpop.f32.mrb[0].mxu0
    %8085 = vdwg.mxu0
    %8086 = vst [vmem:[%s9] sm:$0xff] %v8078
    %8087 = vst [vmem:[%s9 + $0x8] sm:$0xff] %v8083
    // Predicated region
    $region70: #{svhn_forward.1} parent=1 // pred_check
      _
    $region71: #{svhn_forward.1} parent=1 // pred_check_branch
      %8089 = sbr.rel (0) target = $region73
    $region72: #{svhn_forward.1} parent=1 // pred_region
      _
    $region73: #{svhn_forward.1} parent=1 // pred_fallthru
      _
    // Predicated region
    $region74: #{svhn_forward.1} parent=1 // pred_check
      _
    $region75: #{svhn_forward.1} parent=1 // pred_check_branch
      %8091 = sbr.rel (0) target = $region77
    $region76: #{svhn_forward.1} parent=1 // pred_region
      _
    $region77: #{svhn_forward.1} parent=1 // pred_fallthru
      _
    %8092 = vsyncpa [#allocation3], 1
    %8093 = vsyncpa [#allocation5], 1
    %8094 = vsyncpa [#allocation8], 1
    %8095 = vsyncpa [#allocation11], 1
    %8096 = vsyncpa [#allocation14], 1

</llo_original>
